<compile_context>
chip_gen: v7x
topology: tpu7x:2x2x1
jax: 0.10.0
libtpu: 0.0.40
codegen_flags: <defaults>
</compile_context>

<pallas_src>
import functools

import jax
import jax.numpy as jnp
from jax.experimental import pallas as pl
from jax.experimental.pallas import tpu as pltpu

KSIZE = 4
BN_EPS = 1e-5
LANES = 128
VMEM_LIMIT = 32 * 1024 * 1024


def _round_up(x, m):
    return (x + m - 1) // m * m


def _pick_row_tile(m):
    if m % 8 != 0:
        return m
    for tm in (1024, 512, 2048, 4096, 256, 128, 64, 32, 16, 8):
        if m % tm == 0:
            return tm
    return m


# ---------------------------------------------------------------------------
# Kernel A: per-phase matmul + BatchNorm(batch stats) + ReLU.
# Grid iterates over phases; the output block (constant index map) stays
# resident in VMEM and is used to stash the pre-BN result until the final
# phase, where global stats are applied and the activated result is written.
# ---------------------------------------------------------------------------
def _phase_mm_bn_relu_kernel(p_ref, w_ref, g_ref, b_ref, o_ref, s_ref, ss_ref,
                             *, n_phases, rows_total, eps):
    p = pl.program_id(0)
    # (M, K) @ (K, C): bf16 MXU inputs, f32 accumulation.
    y = jnp.dot(p_ref[0], w_ref[0], preferred_element_type=jnp.float32)

    @pl.when(p == 0)
    def _():
        s_ref[...] = jnp.zeros_like(s_ref)
        ss_ref[...] = jnp.zeros_like(ss_ref)

    # Single pass: per-channel sum and sum of squares (f32).
    s_ref[...] += jnp.sum(y, axis=0, keepdims=True)
    ss_ref[...] += jnp.sum(y * y, axis=0, keepdims=True)

    # Stash pre-BN values in the resident output block.
    o_ref[p] = y.astype(o_ref.dtype)

    @pl.when(p == n_phases - 1)
    def _():
        cnt = jnp.float32(rows_total)
        mean = s_ref[...] / cnt
        var = jnp.maximum(ss_ref[...] / cnt - mean * mean, 0.0)
        scale = g_ref[...] * jax.lax.rsqrt(var + eps)        # (1, C)
        shift = b_ref[...] - mean * scale                    # (1, C)
        yall = o_ref[...].astype(jnp.float32)                # (P, M, C)
        z = yall * scale[None] + shift[None]
        o_ref[...] = jnp.maximum(z, 0.0).astype(o_ref.dtype)  # ReLU


def phase_matmul_bn_relu(patches, weights, gamma, beta, out_dtype):
    """patches: (1 or P, M, K) bf16; weights: (P, K, C) bf16; gamma/beta (1, C) f32."""
    P, K, C = weights.shape
    M = patches.shape[1]
    share_patches = patches.shape[0] == 1
    kernel = functools.partial(_phase_mm_bn_relu_kernel, n_phases=P,
                               rows_total=P * M, eps=BN_EPS)
    return pl.pallas_call(
        kernel,
        out_shape=jax.ShapeDtypeStruct((P, M, C), out_dtype),
        grid=(P,),
        in_specs=[
            pl.BlockSpec((1, M, K),
                         (lambda p: (0, 0, 0)) if share_patches
                         else (lambda p: (p, 0, 0))),
            pl.BlockSpec((1, K, C), lambda p: (p, 0, 0)),
            pl.BlockSpec((1, C), lambda p: (0, 0)),
            pl.BlockSpec((1, C), lambda p: (0, 0)),
        ],
        # Constant index map -> output resident in VMEM across all phases.
        out_specs=pl.BlockSpec((P, M, C), lambda p: (0, 0, 0)),
        scratch_shapes=[pltpu.VMEM((1, C), jnp.float32),
                        pltpu.VMEM((1, C), jnp.float32)],
        compiler_params=pltpu.CompilerParams(
            dimension_semantics=("arbitrary",),
            vmem_limit_bytes=VMEM_LIMIT),
    )(patches, weights, gamma, beta)


# ---------------------------------------------------------------------------
# Kernel B: per-phase matmul + tanh (no BN).  Rows are tiled so the BlockSpec
# pipeline double-buffers DMA against MXU work; both grid axes are parallel.
# ---------------------------------------------------------------------------
def _phase_mm_tanh_kernel(p_ref, w_ref, o_ref):
    y = jnp.dot(p_ref[0], w_ref[0], preferred_element_type=jnp.float32)
    o_ref[0] = jnp.tanh(y).astype(o_ref.dtype)   # tanh in f32 on the EUP


def phase_matmul_tanh(patches, weights, out_dtype):
    P, K, C = weights.shape
    M = patches.shape[1]
    tm = _pick_row_tile(M)
    return pl.pallas_call(
        _phase_mm_tanh_kernel,
        out_shape=jax.ShapeDtypeStruct((P, M, C), out_dtype),
        grid=(P, M // tm),
        in_specs=[
            pl.BlockSpec((1, tm, K), lambda p, m: (p, m, 0)),
            pl.BlockSpec((1, K, C), lambda p, m: (p, 0, 0)),
        ],
        out_specs=pl.BlockSpec((1, tm, C), lambda p, m: (p, m, 0)),
        compiler_params=pltpu.CompilerParams(
            dimension_semantics=("parallel", "parallel"),
            vmem_limit_bytes=VMEM_LIMIT),
    )(patches, weights)


# ---------------------------------------------------------------------------
# Layer wrappers (JAX glue: padding, phase/patch construction, reassembly)
# ---------------------------------------------------------------------------
def first_layer(x2d, w_pt, gamma, beta):
    """ConvT(z->dim, k=4, s=1, p=0) from 1x1 input + BN + ReLU.
    x2d: (N, Z) bf16.  w_pt: (Z, Cout, 4, 4).  Returns (N, 4, 4, Cout) bf16."""
    N = x2d.shape[0]
    Z, Cout = w_pt.shape[0], w_pt.shape[1]
    Cop = _round_up(Cout, LANES)
    # One "phase" per output pixel (kh, kw): 16 plain (N,Z)@(Z,Cout) matmuls.
    wp = jnp.transpose(w_pt, (2, 3, 0, 1)).reshape(16, Z, Cout)
    wp = jnp.pad(wp, ((0, 0), (0, 0), (0, Cop - Cout))).astype(jnp.bfloat16)
    g = jnp.pad(gamma, (0, Cop - Cout)).reshape(1, Cop).astype(jnp.float32)
    b = jnp.pad(beta, (0, Cop - Cout)).reshape(1, Cop).astype(jnp.float32)
    patches = x2d[None]                                       # (1, N, Z), shared
    out = phase_matmul_bn_relu(patches, wp, g, b, jnp.bfloat16)  # (16, N, Cop)
    out = out.reshape(4, 4, N, Cop).transpose(2, 0, 1, 3)     # (N, 4, 4, Cop)
    return out[..., :Cout]


def upconv2x_layer(h, w_pt, gamma, beta, *, bn):
    """ConvTranspose2d(k=4, s=2, p=1) via 4-phase sub-pixel decomposition.
    h: (N, H, W, Cin) bf16.  w_pt: (Cin, Cout, 4, 4).
    bn=True -> BN + ReLU (bf16 out); bn=False -> tanh (f32 out)."""
    N, H, W, Cin = h.shape
    Cout = w_pt.shape[1]
    Cop = _round_up(Cout, LANES)
    M = N * H * W

    xpad = jnp.pad(h, ((0, 0), (1, 1), (1, 1), (0, 0)))

    # For output parity q along an axis, contributing (kernel idx, padded slice
    # start): even rows use kh in {3,1} reading input m-1 / m; odd rows use
    # kh in {2,0} reading m / m+1.  Only 2x2 taps per phase (no zero MACs).
    taps = {0: ((3, 0), (1, 1)), 1: ((2, 1), (0, 2))}

    patches, weights = [], []
    for ph in (0, 1):
        for pw in (0, 1):
            cols, wrows = [], []
            for kh, sh in taps[ph]:
                for kw, sw in taps[pw]:
                    cols.append(xpad[:, sh:sh + H, sw:sw + W, :])
                    wrows.append(w_pt[:, :, kh, kw])           # (Cin, Cout)
            patches.append(jnp.concatenate(cols, axis=-1).reshape(M, 4 * Cin))
            weights.append(jnp.concatenate(wrows, axis=0))     # (4*Cin, Cout)
    patches = jnp.stack(patches, axis=0).astype(jnp.bfloat16)  # (4, M, 4*Cin)
    weights = jnp.stack(weights, axis=0)                       # (4, 4*Cin, Cout)
    weights = jnp.pad(weights, ((0, 0), (0, 0), (0, Cop - Cout)))
    weights = weights.astype(jnp.bfloat16)

    if bn:
        g = jnp.pad(gamma, (0, Cop - Cout)).reshape(1, Cop).astype(jnp.float32)
        b = jnp.pad(beta, (0, Cop - Cout)).reshape(1, Cop).astype(jnp.float32)
        out = phase_matmul_bn_relu(patches, weights, g, b, jnp.bfloat16)
    else:
        out = phase_matmul_tanh(patches, weights, jnp.float32)

    # Interleave the 4 phases back into the full-resolution output.
    out = out.reshape(2, 2, N, H, W, Cop).transpose(2, 3, 0, 4, 1, 5)
    out = out.reshape(N, 2 * H, 2 * W, Cop)
    return out[..., :Cout]


# ---------------------------------------------------------------------------
# Generator forward
# ---------------------------------------------------------------------------
def init_generator_params(key, z_dim, dim):
    layer_channels = [(z_dim, dim), (dim, dim // 2), (dim // 2, dim // 4),
                      (dim // 4, dim // 8), (dim // 8, 3)]
    params = []
    for cin, cout in layer_channels:
        key, sub = jax.random.split(key)
        w = 0.02 * jax.random.normal(sub, (cin, cout, KSIZE, KSIZE), jnp.float32)
        gamma = jnp.ones((cout,), jnp.float32)   # BN weight (PyTorch default)
        beta = jnp.zeros((cout,), jnp.float32)   # BN bias   (PyTorch default)
        params.append((w, gamma, beta))
    return params


@jax.jit
def generator_forward(x_nchw, params):
    N, z = x_nchw.shape[0], x_nchw.shape[1]
    x2d = x_nchw.reshape(N, z).astype(jnp.bfloat16)

    w1, g1, b1 = params[0]
    h = first_layer(x2d, w1, g1, b1)                     # (N, 4, 4, dim)
    for i in (1, 2, 3):                                  # BN + ReLU layers
        w, g, b = params[i]
        h = upconv2x_layer(h, w, g, b, bn=True)
    w5, g5, b5 = params[4]                               # final tanh layer
    h = upconv2x_layer(h, w5, g5, b5, bn=False)          # (N, 64, 64, 3) f32
    return jnp.transpose(h, (0, 3, 1, 2))                # NHWC -> NCHW


if __name__ == "__main__":
    z_dim, dim = 8, 32
    key = jax.random.PRNGKey(0)
    key_p, key_x = jax.random.split(key)

    params = init_generator_params(key_p, z_dim, dim)
    x = jax.random.normal(key_x, (2, z_dim, 1, 1), jnp.float32)

    out = generator_forward(x, params)
    out = jax.block_until_ready(out)

    assert out.shape == (2, 3, 64, 64), out.shape
    assert out.dtype == jnp.float32
    assert bool(jnp.all(jnp.isfinite(out)))
    assert bool(jnp.all(jnp.abs(out) <= 1.0))  # tanh output range
    print("KERNEL_OK")
</pallas_src>

<mosaic_0001>
module attributes {stable_mosaic.version = 11 : i64} {
  func.func @_phase_mm_bn_relu_kernel(%arg0: i32, %arg1: memref<1x2x8xbf16, #tpu.memory_space<vmem>>, %arg2: memref<1x8x128xbf16, #tpu.memory_space<vmem>>, %arg3: memref<1x128xf32, #tpu.memory_space<vmem>>, %arg4: memref<1x128xf32, #tpu.memory_space<vmem>>, %arg5: memref<16x2x128xbf16, #tpu.memory_space<vmem>>, %arg6: memref<1x128xf32, #tpu.memory_space<vmem>>, %arg7: memref<1x128xf32, #tpu.memory_space<vmem>>) attributes {dimension_semantics = [#tpu.dimension_semantics<arbitrary>], iteration_bounds = array<i64: 16>, scalar_prefetch = 0 : i64, scratch_operands = 2 : i64, tpu.core_type = #tpu.core_type<tc>, window_params = [{pipeline_mode = #tpu.pipeline_mode<synchronous>, transform_indices = @transform_0, window_bounds = array<i64: 1, 2, 8>}, {transform_indices = @transform_1, window_bounds = array<i64: 1, 8, 128>}, {pipeline_mode = #tpu.pipeline_mode<synchronous>, transform_indices = @transform_2, window_bounds = array<i64: 1, 128>}, {pipeline_mode = #tpu.pipeline_mode<synchronous>, transform_indices = @transform_3, window_bounds = array<i64: 1, 128>}, {pipeline_mode = #tpu.pipeline_mode<synchronous>, transform_indices = @transform_4, window_bounds = array<i64: 16, 2, 128>}]} {
    %c0 = arith.constant 0 : index
    %c0_0 = arith.constant 0 : index
    %c0_1 = arith.constant 0 : index
    %0 = vector.load %arg1[%c0, %c0_0, %c0_1] : memref<1x2x8xbf16, #tpu.memory_space<vmem>>, vector<1x2x8xbf16>
    %1 = vector.shape_cast %0 : vector<1x2x8xbf16> to vector<2x8xbf16>
    %c0_2 = arith.constant 0 : index
    %c0_3 = arith.constant 0 : index
    %c0_4 = arith.constant 0 : index
    %2 = vector.load %arg2[%c0_2, %c0_3, %c0_4] : memref<1x8x128xbf16, #tpu.memory_space<vmem>>, vector<1x8x128xbf16>
    %3 = vector.shape_cast %2 : vector<1x8x128xbf16> to vector<8x128xbf16>
    %cst = arith.constant dense<0.000000e+00> : vector<2x128xf32>
    %4 = tpu.matmul %1, %3, %cst {dimension_numbers = #tpu.dot_dimension_numbers<[1], [0], [0], [1], [0, 0, 1, 1], [], []>} : vector<2x8xbf16>, vector<8x128xbf16>, vector<2x128xf32> -> vector<2x128xf32>
    %c0_i32 = arith.constant 0 : i32
    %5 = arith.cmpi eq, %arg0, %c0_i32 : i32
    %6 = arith.extui %5 : i1 to i32
    %c0_i32_5 = arith.constant 0 : i32
    %7 = arith.cmpi ne, %6, %c0_i32_5 : i32
    scf.if %7 {
      %cst_19 = arith.constant 0.000000e+00 : f32
      %27 = vector.broadcast %cst_19 : f32 to vector<1x128xf32>
      %c0_20 = arith.constant 0 : index
      %c0_21 = arith.constant 0 : index
      %28 = vector.load %arg6[%c0_20, %c0_21] : memref<1x128xf32, #tpu.memory_space<vmem>>, vector<1x128xf32>
      tpu.vector_store %arg6[%c0_20, %c0_21], %27 {strides = array<i32>} : memref<1x128xf32, #tpu.memory_space<vmem>>, vector<1x128xf32>,
      %cst_22 = arith.constant 0.000000e+00 : f32
      %29 = vector.broadcast %cst_22 : f32 to vector<1x128xf32>
      %c0_23 = arith.constant 0 : index
      %c0_24 = arith.constant 0 : index
      %30 = vector.load %arg7[%c0_23, %c0_24] : memref<1x128xf32, #tpu.memory_space<vmem>>, vector<1x128xf32>
      tpu.vector_store %arg7[%c0_23, %c0_24], %29 {strides = array<i32>} : memref<1x128xf32, #tpu.memory_space<vmem>>, vector<1x128xf32>,
    } else {
    }
    %c0_6 = arith.constant 0 : index
    %c0_7 = arith.constant 0 : index
    %8 = vector.load %arg6[%c0_6, %c0_7] : memref<1x128xf32, #tpu.memory_space<vmem>>, vector<1x128xf32>
    %cst_8 = arith.constant dense<0.000000e+00> : vector<128xf32>
    %9 = vector.multi_reduction <add>, %4, %cst_8 [0] : vector<2x128xf32> to vector<128xf32>
    %10 = vector.shape_cast %9 : vector<128xf32> to vector<1x128xf32>
    %11 = arith.addf %8, %10 : vector<1x128xf32>
    %c0_9 = arith.constant 0 : index
    %c0_10 = arith.constant 0 : index
    %12 = vector.load %arg6[%c0_9, %c0_10] : memref<1x128xf32, #tpu.memory_space<vmem>>, vector<1x128xf32>
    tpu.vector_store %arg6[%c0_9, %c0_10], %11 {strides = array<i32>} : memref<1x128xf32, #tpu.memory_space<vmem>>, vector<1x128xf32>,
    %c0_11 = arith.constant 0 : index
    %c0_12 = arith.constant 0 : index
    %13 = vector.load %arg7[%c0_11, %c0_12] : memref<1x128xf32, #tpu.memory_space<vmem>>, vector<1x128xf32>
    %14 = arith.mulf %4, %4 : vector<2x128xf32>
    %cst_13 = arith.constant dense<0.000000e+00> : vector<128xf32>
    %15 = vector.multi_reduction <add>, %14, %cst_13 [0] : vector<2x128xf32> to vector<128xf32>
    %16 = vector.shape_cast %15 : vector<128xf32> to vector<1x128xf32>
    %17 = arith.addf %13, %16 : vector<1x128xf32>
    %c0_14 = arith.constant 0 : index
    %c0_15 = arith.constant 0 : index
    %18 = vector.load %arg7[%c0_14, %c0_15] : memref<1x128xf32, #tpu.memory_space<vmem>>, vector<1x128xf32>
    tpu.vector_store %arg7[%c0_14, %c0_15], %17 {strides = array<i32>} : memref<1x128xf32, #tpu.memory_space<vmem>>, vector<1x128xf32>,
    %19 = arith.truncf %4 : vector<2x128xf32> to vector<2x128xbf16>
    %20 = arith.index_cast %arg0 : i32 to index
    %c0_16 = arith.constant 0 : index
    %c0_17 = arith.constant 0 : index
    %21 = vector.load %arg5[%20, %c0_16, %c0_17] : memref<16x2x128xbf16, #tpu.memory_space<vmem>>, vector<1x2x128xbf16>
    %22 = vector.shape_cast %21 : vector<1x2x128xbf16> to vector<2x128xbf16>
    %23 = vector.shape_cast %19 : vector<2x128xbf16> to vector<1x2x128xbf16>
    tpu.vector_store %arg5[%20, %c0_16, %c0_17], %23 {strides = array<i32>} : memref<16x2x128xbf16, #tpu.memory_space<vmem>>, vector<1x2x128xbf16>,
    %c15_i32 = arith.constant 15 : i32
    %24 = arith.cmpi eq, %arg0, %c15_i32 : i32
    %25 = arith.extui %24 : i1 to i32
    %c0_i32_18 = arith.constant 0 : i32
    %26 = arith.cmpi ne, %25, %c0_i32_18 : i32
    scf.if %26 {
      %c0_19 = arith.constant 0 : index
      %c0_20 = arith.constant 0 : index
      %27 = vector.load %arg6[%c0_19, %c0_20] : memref<1x128xf32, #tpu.memory_space<vmem>>, vector<1x128xf32>
      %cst_21 = arith.constant 3.200000e+01 : f32
      %28 = vector.broadcast %cst_21 : f32 to vector<1x128xf32>
      %29 = arith.divf %27, %28 : vector<1x128xf32>
      %c0_22 = arith.constant 0 : index
      %c0_23 = arith.constant 0 : index
      %30 = vector.load %arg7[%c0_22, %c0_23] : memref<1x128xf32, #tpu.memory_space<vmem>>, vector<1x128xf32>
      %cst_24 = arith.constant 3.200000e+01 : f32
      %31 = vector.broadcast %cst_24 : f32 to vector<1x128xf32>
      %32 = arith.divf %30, %31 : vector<1x128xf32>
      %33 = arith.mulf %29, %29 : vector<1x128xf32>
      %34 = arith.subf %32, %33 : vector<1x128xf32>
      %cst_25 = arith.constant 0.000000e+00 : f32
      %35 = vector.broadcast %cst_25 : f32 to vector<1x128xf32>
      %36 = arith.maximumf %34, %35 : vector<1x128xf32>
      %c0_26 = arith.constant 0 : index
      %c0_27 = arith.constant 0 : index
      %37 = vector.load %arg3[%c0_26, %c0_27] : memref<1x128xf32, #tpu.memory_space<vmem>>, vector<1x128xf32>
      %cst_28 = arith.constant 9.99999974E-6 : f32
      %38 = vector.broadcast %cst_28 : f32 to vector<1x128xf32>
      %39 = arith.addf %36, %38 : vector<1x128xf32>
      %40 = math.rsqrt %39 : vector<1x128xf32>
      %41 = arith.mulf %37, %40 : vector<1x128xf32>
      %c0_29 = arith.constant 0 : index
      %c0_30 = arith.constant 0 : index
      %42 = vector.load %arg4[%c0_29, %c0_30] : memref<1x128xf32, #tpu.memory_space<vmem>>, vector<1x128xf32>
      %43 = arith.mulf %29, %41 : vector<1x128xf32>
      %44 = arith.subf %42, %43 : vector<1x128xf32>
      %c0_31 = arith.constant 0 : index
      %c0_32 = arith.constant 0 : index
      %c0_33 = arith.constant 0 : index
      %45 = vector.load %arg5[%c0_31, %c0_32, %c0_33] : memref<16x2x128xbf16, #tpu.memory_space<vmem>>, vector<16x2x128xbf16>
      %46 = arith.extf %45 : vector<16x2x128xbf16> to vector<16x2x128xf32>
      %47 = vector.shape_cast %41 : vector<1x128xf32> to vector<1x1x128xf32>
      %48 = vector.broadcast %47 : vector<1x1x128xf32> to vector<16x2x128xf32>
      %49 = arith.mulf %46, %48 : vector<16x2x128xf32>
      %50 = vector.shape_cast %44 : vector<1x128xf32> to vector<1x1x128xf32>
      %51 = vector.broadcast %50 : vector<1x1x128xf32> to vector<16x2x128xf32>
      %52 = arith.addf %49, %51 : vector<16x2x128xf32>
      %cst_34 = arith.constant 0.000000e+00 : f32
      %53 = vector.broadcast %cst_34 : f32 to vector<16x2x128xf32>
      %54 = arith.maximumf %52, %53 : vector<16x2x128xf32>
      %55 = arith.truncf %54 : vector<16x2x128xf32> to vector<16x2x128xbf16>
      %c0_35 = arith.constant 0 : index
      %c0_36 = arith.constant 0 : index
      %c0_37 = arith.constant 0 : index
      %56 = vector.load %arg5[%c0_35, %c0_36, %c0_37] : memref<16x2x128xbf16, #tpu.memory_space<vmem>>, vector<16x2x128xbf16>
      tpu.vector_store %arg5[%c0_35, %c0_36, %c0_37], %55 {strides = array<i32>} : memref<16x2x128xbf16, #tpu.memory_space<vmem>>, vector<16x2x128xbf16>,
    } else {
    }
    return
  }
  func.func @transform_0(%arg0: i32) -> (i32, i32, i32) {
    %c0_i32 = arith.constant 0 : i32
    %c0_i32_0 = arith.constant 0 : i32
    %c0_i32_1 = arith.constant 0 : i32
    %c0_i32_2 = arith.constant 0 : i32
    return %c0_i32, %c0_i32_0, %c0_i32_1 : i32, i32, i32
  }
  func.func @transform_1(%arg0: i32) -> (i32, i32, i32) {
    %c0_i32 = arith.constant 0 : i32
    %c0_i32_0 = arith.constant 0 : i32
    %c0_i32_1 = arith.constant 0 : i32
    return %arg0, %c0_i32, %c0_i32_0 : i32, i32, i32
  }
  func.func @transform_2(%arg0: i32) -> (i32, i32) {
    %c0_i32 = arith.constant 0 : i32
    %c0_i32_0 = arith.constant 0 : i32
    %c0_i32_1 = arith.constant 0 : i32
    return %c0_i32, %c0_i32_0 : i32, i32
  }
  func.func @transform_3(%arg0: i32) -> (i32, i32) {
    %c0_i32 = arith.constant 0 : i32
    %c0_i32_0 = arith.constant 0 : i32
    %c0_i32_1 = arith.constant 0 : i32
    return %c0_i32, %c0_i32_0 : i32, i32
  }
  func.func @transform_4(%arg0: i32) -> (i32, i32, i32) {
    %c0_i32 = arith.constant 0 : i32
    %c0_i32_0 = arith.constant 0 : i32
    %c0_i32_1 = arith.constant 0 : i32
    %c0_i32_2 = arith.constant 0 : i32
    return %c0_i32, %c0_i32_0, %c0_i32_1 : i32, i32, i32
  }
}

module attributes {stable_mosaic.version = 11 : i64} {
  func.func @_phase_mm_bn_relu_kernel(%arg0: i32, %arg1: memref<1x32x128xbf16, #tpu.memory_space<vmem>>, %arg2: memref<1x128x128xbf16, #tpu.memory_space<vmem>>, %arg3: memref<1x128xf32, #tpu.memory_space<vmem>>, %arg4: memref<1x128xf32, #tpu.memory_space<vmem>>, %arg5: memref<4x32x128xbf16, #tpu.memory_space<vmem>>, %arg6: memref<1x128xf32, #tpu.memory_space<vmem>>, %arg7: memref<1x128xf32, #tpu.memory_space<vmem>>) attributes {dimension_semantics = [#tpu.dimension_semantics<arbitrary>], iteration_bounds = array<i64: 4>, scalar_prefetch = 0 : i64, scratch_operands = 2 : i64, tpu.core_type = #tpu.core_type<tc>, window_params = [{transform_indices = @transform_0, window_bounds = array<i64: 1, 32, 128>}, {transform_indices = @transform_1, window_bounds = array<i64: 1, 128, 128>}, {pipeline_mode = #tpu.pipeline_mode<synchronous>, transform_indices = @transform_2, window_bounds = array<i64: 1, 128>}, {pipeline_mode = #tpu.pipeline_mode<synchronous>, transform_indices = @transform_3, window_bounds = array<i64: 1, 128>}, {pipeline_mode = #tpu.pipeline_mode<synchronous>, transform_indices = @transform_4, window_bounds = array<i64: 4, 32, 128>}]} {
    %c0 = arith.constant 0 : index
    %c0_0 = arith.constant 0 : index
    %c0_1 = arith.constant 0 : index
    %0 = vector.load %arg1[%c0, %c0_0, %c0_1] : memref<1x32x128xbf16, #tpu.memory_space<vmem>>, vector<1x32x128xbf16>
    %1 = vector.shape_cast %0 : vector<1x32x128xbf16> to vector<32x128xbf16>
    %c0_2 = arith.constant 0 : index
    %c0_3 = arith.constant 0 : index
    %c0_4 = arith.constant 0 : index
    %2 = vector.load %arg2[%c0_2, %c0_3, %c0_4] : memref<1x128x128xbf16, #tpu.memory_space<vmem>>, vector<1x128x128xbf16>
    %3 = vector.shape_cast %2 : vector<1x128x128xbf16> to vector<128x128xbf16>
    %cst = arith.constant dense<0.000000e+00> : vector<32x128xf32>
    %4 = tpu.matmul %1, %3, %cst {dimension_numbers = #tpu.dot_dimension_numbers<[1], [0], [0], [1], [0, 0, 1, 1], [], []>} : vector<32x128xbf16>, vector<128x128xbf16>, vector<32x128xf32> -> vector<32x128xf32>
    %c0_i32 = arith.constant 0 : i32
    %5 = arith.cmpi eq, %arg0, %c0_i32 : i32
    %6 = arith.extui %5 : i1 to i32
    %c0_i32_5 = arith.constant 0 : i32
    %7 = arith.cmpi ne, %6, %c0_i32_5 : i32
    scf.if %7 {
      %cst_19 = arith.constant 0.000000e+00 : f32
      %27 = vector.broadcast %cst_19 : f32 to vector<1x128xf32>
      %c0_20 = arith.constant 0 : index
      %c0_21 = arith.constant 0 : index
      %28 = vector.load %arg6[%c0_20, %c0_21] : memref<1x128xf32, #tpu.memory_space<vmem>>, vector<1x128xf32>
      tpu.vector_store %arg6[%c0_20, %c0_21], %27 {strides = array<i32>} : memref<1x128xf32, #tpu.memory_space<vmem>>, vector<1x128xf32>,
      %cst_22 = arith.constant 0.000000e+00 : f32
      %29 = vector.broadcast %cst_22 : f32 to vector<1x128xf32>
      %c0_23 = arith.constant 0 : index
      %c0_24 = arith.constant 0 : index
      %30 = vector.load %arg7[%c0_23, %c0_24] : memref<1x128xf32, #tpu.memory_space<vmem>>, vector<1x128xf32>
      tpu.vector_store %arg7[%c0_23, %c0_24], %29 {strides = array<i32>} : memref<1x128xf32, #tpu.memory_space<vmem>>, vector<1x128xf32>,
    } else {
    }
    %c0_6 = arith.constant 0 : index
    %c0_7 = arith.constant 0 : index
    %8 = vector.load %arg6[%c0_6, %c0_7] : memref<1x128xf32, #tpu.memory_space<vmem>>, vector<1x128xf32>
    %cst_8 = arith.constant dense<0.000000e+00> : vector<128xf32>
    %9 = vector.multi_reduction <add>, %4, %cst_8 [0] : vector<32x128xf32> to vector<128xf32>
    %10 = vector.shape_cast %9 : vector<128xf32> to vector<1x128xf32>
    %11 = arith.addf %8, %10 : vector<1x128xf32>
    %c0_9 = arith.constant 0 : index
    %c0_10 = arith.constant 0 : index
    %12 = vector.load %arg6[%c0_9, %c0_10] : memref<1x128xf32, #tpu.memory_space<vmem>>, vector<1x128xf32>
    tpu.vector_store %arg6[%c0_9, %c0_10], %11 {strides = array<i32>} : memref<1x128xf32, #tpu.memory_space<vmem>>, vector<1x128xf32>,
    %c0_11 = arith.constant 0 : index
    %c0_12 = arith.constant 0 : index
    %13 = vector.load %arg7[%c0_11, %c0_12] : memref<1x128xf32, #tpu.memory_space<vmem>>, vector<1x128xf32>
    %14 = arith.mulf %4, %4 : vector<32x128xf32>
    %cst_13 = arith.constant dense<0.000000e+00> : vector<128xf32>
    %15 = vector.multi_reduction <add>, %14, %cst_13 [0] : vector<32x128xf32> to vector<128xf32>
    %16 = vector.shape_cast %15 : vector<128xf32> to vector<1x128xf32>
    %17 = arith.addf %13, %16 : vector<1x128xf32>
    %c0_14 = arith.constant 0 : index
    %c0_15 = arith.constant 0 : index
    %18 = vector.load %arg7[%c0_14, %c0_15] : memref<1x128xf32, #tpu.memory_space<vmem>>, vector<1x128xf32>
    tpu.vector_store %arg7[%c0_14, %c0_15], %17 {strides = array<i32>} : memref<1x128xf32, #tpu.memory_space<vmem>>, vector<1x128xf32>,
    %19 = arith.truncf %4 : vector<32x128xf32> to vector<32x128xbf16>
    %20 = arith.index_cast %arg0 : i32 to index
    %c0_16 = arith.constant 0 : index
    %c0_17 = arith.constant 0 : index
    %21 = vector.load %arg5[%20, %c0_16, %c0_17] : memref<4x32x128xbf16, #tpu.memory_space<vmem>>, vector<1x32x128xbf16>
    %22 = vector.shape_cast %21 : vector<1x32x128xbf16> to vector<32x128xbf16>
    %23 = vector.shape_cast %19 : vector<32x128xbf16> to vector<1x32x128xbf16>
    tpu.vector_store %arg5[%20, %c0_16, %c0_17], %23 {strides = array<i32>} : memref<4x32x128xbf16, #tpu.memory_space<vmem>>, vector<1x32x128xbf16>,
    %c3_i32 = arith.constant 3 : i32
    %24 = arith.cmpi eq, %arg0, %c3_i32 : i32
    %25 = arith.extui %24 : i1 to i32
    %c0_i32_18 = arith.constant 0 : i32
    %26 = arith.cmpi ne, %25, %c0_i32_18 : i32
    scf.if %26 {
      %c0_19 = arith.constant 0 : index
      %c0_20 = arith.constant 0 : index
      %27 = vector.load %arg6[%c0_19, %c0_20] : memref<1x128xf32, #tpu.memory_space<vmem>>, vector<1x128xf32>
      %cst_21 = arith.constant 1.280000e+02 : f32
      %28 = vector.broadcast %cst_21 : f32 to vector<1x128xf32>
      %29 = arith.divf %27, %28 : vector<1x128xf32>
      %c0_22 = arith.constant 0 : index
      %c0_23 = arith.constant 0 : index
      %30 = vector.load %arg7[%c0_22, %c0_23] : memref<1x128xf32, #tpu.memory_space<vmem>>, vector<1x128xf32>
      %cst_24 = arith.constant 1.280000e+02 : f32
      %31 = vector.broadcast %cst_24 : f32 to vector<1x128xf32>
      %32 = arith.divf %30, %31 : vector<1x128xf32>
      %33 = arith.mulf %29, %29 : vector<1x128xf32>
      %34 = arith.subf %32, %33 : vector<1x128xf32>
      %cst_25 = arith.constant 0.000000e+00 : f32
      %35 = vector.broadcast %cst_25 : f32 to vector<1x128xf32>
      %36 = arith.maximumf %34, %35 : vector<1x128xf32>
      %c0_26 = arith.constant 0 : index
      %c0_27 = arith.constant 0 : index
      %37 = vector.load %arg3[%c0_26, %c0_27] : memref<1x128xf32, #tpu.memory_space<vmem>>, vector<1x128xf32>
      %cst_28 = arith.constant 9.99999974E-6 : f32
      %38 = vector.broadcast %cst_28 : f32 to vector<1x128xf32>
      %39 = arith.addf %36, %38 : vector<1x128xf32>
      %40 = math.rsqrt %39 : vector<1x128xf32>
      %41 = arith.mulf %37, %40 : vector<1x128xf32>
      %c0_29 = arith.constant 0 : index
      %c0_30 = arith.constant 0 : index
      %42 = vector.load %arg4[%c0_29, %c0_30] : memref<1x128xf32, #tpu.memory_space<vmem>>, vector<1x128xf32>
      %43 = arith.mulf %29, %41 : vector<1x128xf32>
      %44 = arith.subf %42, %43 : vector<1x128xf32>
      %c0_31 = arith.constant 0 : index
      %c0_32 = arith.constant 0 : index
      %c0_33 = arith.constant 0 : index
      %45 = vector.load %arg5[%c0_31, %c0_32, %c0_33] : memref<4x32x128xbf16, #tpu.memory_space<vmem>>, vector<4x32x128xbf16>
      %46 = arith.extf %45 : vector<4x32x128xbf16> to vector<4x32x128xf32>
      %47 = vector.shape_cast %41 : vector<1x128xf32> to vector<1x1x128xf32>
      %48 = vector.broadcast %47 : vector<1x1x128xf32> to vector<4x32x128xf32>
      %49 = arith.mulf %46, %48 : vector<4x32x128xf32>
      %50 = vector.shape_cast %44 : vector<1x128xf32> to vector<1x1x128xf32>
      %51 = vector.broadcast %50 : vector<1x1x128xf32> to vector<4x32x128xf32>
      %52 = arith.addf %49, %51 : vector<4x32x128xf32>
      %cst_34 = arith.constant 0.000000e+00 : f32
      %53 = vector.broadcast %cst_34 : f32 to vector<4x32x128xf32>
      %54 = arith.maximumf %52, %53 : vector<4x32x128xf32>
      %55 = arith.truncf %54 : vector<4x32x128xf32> to vector<4x32x128xbf16>
      %c0_35 = arith.constant 0 : index
      %c0_36 = arith.constant 0 : index
      %c0_37 = arith.constant 0 : index
      %56 = vector.load %arg5[%c0_35, %c0_36, %c0_37] : memref<4x32x128xbf16, #tpu.memory_space<vmem>>, vector<4x32x128xbf16>
      tpu.vector_store %arg5[%c0_35, %c0_36, %c0_37], %55 {strides = array<i32>} : memref<4x32x128xbf16, #tpu.memory_space<vmem>>, vector<4x32x128xbf16>,
    } else {
    }
    return
  }
  func.func @transform_0(%arg0: i32) -> (i32, i32, i32) {
    %c0_i32 = arith.constant 0 : i32
    %c0_i32_0 = arith.constant 0 : i32
    %c0_i32_1 = arith.constant 0 : i32
    return %arg0, %c0_i32, %c0_i32_0 : i32, i32, i32
  }
  func.func @transform_1(%arg0: i32) -> (i32, i32, i32) {
    %c0_i32 = arith.constant 0 : i32
    %c0_i32_0 = arith.constant 0 : i32
    %c0_i32_1 = arith.constant 0 : i32
    return %arg0, %c0_i32, %c0_i32_0 : i32, i32, i32
  }
  func.func @transform_2(%arg0: i32) -> (i32, i32) {
    %c0_i32 = arith.constant 0 : i32
    %c0_i32_0 = arith.constant 0 : i32
    %c0_i32_1 = arith.constant 0 : i32
    return %c0_i32, %c0_i32_0 : i32, i32
  }
  func.func @transform_3(%arg0: i32) -> (i32, i32) {
    %c0_i32 = arith.constant 0 : i32
    %c0_i32_0 = arith.constant 0 : i32
    %c0_i32_1 = arith.constant 0 : i32
    return %c0_i32, %c0_i32_0 : i32, i32
  }
  func.func @transform_4(%arg0: i32) -> (i32, i32, i32) {
    %c0_i32 = arith.constant 0 : i32
    %c0_i32_0 = arith.constant 0 : i32
    %c0_i32_1 = arith.constant 0 : i32
    %c0_i32_2 = arith.constant 0 : i32
    return %c0_i32, %c0_i32_0, %c0_i32_1 : i32, i32, i32
  }
}

module attributes {stable_mosaic.version = 11 : i64} {
  func.func @_phase_mm_bn_relu_kernel(%arg0: i32, %arg1: memref<1x128x64xbf16, #tpu.memory_space<vmem>>, %arg2: memref<1x64x128xbf16, #tpu.memory_space<vmem>>, %arg3: memref<1x128xf32, #tpu.memory_space<vmem>>, %arg4: memref<1x128xf32, #tpu.memory_space<vmem>>, %arg5: memref<4x128x128xbf16, #tpu.memory_space<vmem>>, %arg6: memref<1x128xf32, #tpu.memory_space<vmem>>, %arg7: memref<1x128xf32, #tpu.memory_space<vmem>>) attributes {dimension_semantics = [#tpu.dimension_semantics<arbitrary>], iteration_bounds = array<i64: 4>, scalar_prefetch = 0 : i64, scratch_operands = 2 : i64, tpu.core_type = #tpu.core_type<tc>, window_params = [{transform_indices = @transform_0, window_bounds = array<i64: 1, 128, 64>}, {transform_indices = @transform_1, window_bounds = array<i64: 1, 64, 128>}, {pipeline_mode = #tpu.pipeline_mode<synchronous>, transform_indices = @transform_2, window_bounds = array<i64: 1, 128>}, {pipeline_mode = #tpu.pipeline_mode<synchronous>, transform_indices = @transform_3, window_bounds = array<i64: 1, 128>}, {pipeline_mode = #tpu.pipeline_mode<synchronous>, transform_indices = @transform_4, window_bounds = array<i64: 4, 128, 128>}]} {
    %c0 = arith.constant 0 : index
    %c0_0 = arith.constant 0 : index
    %c0_1 = arith.constant 0 : index
    %0 = vector.load %arg1[%c0, %c0_0, %c0_1] : memref<1x128x64xbf16, #tpu.memory_space<vmem>>, vector<1x128x64xbf16>
    %1 = vector.shape_cast %0 : vector<1x128x64xbf16> to vector<128x64xbf16>
    %c0_2 = arith.constant 0 : index
    %c0_3 = arith.constant 0 : index
    %c0_4 = arith.constant 0 : index
    %2 = vector.load %arg2[%c0_2, %c0_3, %c0_4] : memref<1x64x128xbf16, #tpu.memory_space<vmem>>, vector<1x64x128xbf16>
    %3 = vector.shape_cast %2 : vector<1x64x128xbf16> to vector<64x128xbf16>
    %cst = arith.constant dense<0.000000e+00> : vector<128x128xf32>
    %4 = tpu.matmul %1, %3, %cst {dimension_numbers = #tpu.dot_dimension_numbers<[1], [0], [0], [1], [0, 0, 1, 1], [], []>} : vector<128x64xbf16>, vector<64x128xbf16>, vector<128x128xf32> -> vector<128x128xf32>
    %c0_i32 = arith.constant 0 : i32
    %5 = arith.cmpi eq, %arg0, %c0_i32 : i32
    %6 = arith.extui %5 : i1 to i32
    %c0_i32_5 = arith.constant 0 : i32
    %7 = arith.cmpi ne, %6, %c0_i32_5 : i32
    scf.if %7 {
      %cst_19 = arith.constant 0.000000e+00 : f32
      %27 = vector.broadcast %cst_19 : f32 to vector<1x128xf32>
      %c0_20 = arith.constant 0 : index
      %c0_21 = arith.constant 0 : index
      %28 = vector.load %arg6[%c0_20, %c0_21] : memref<1x128xf32, #tpu.memory_space<vmem>>, vector<1x128xf32>
      tpu.vector_store %arg6[%c0_20, %c0_21], %27 {strides = array<i32>} : memref<1x128xf32, #tpu.memory_space<vmem>>, vector<1x128xf32>,
      %cst_22 = arith.constant 0.000000e+00 : f32
      %29 = vector.broadcast %cst_22 : f32 to vector<1x128xf32>
      %c0_23 = arith.constant 0 : index
      %c0_24 = arith.constant 0 : index
      %30 = vector.load %arg7[%c0_23, %c0_24] : memref<1x128xf32, #tpu.memory_space<vmem>>, vector<1x128xf32>
      tpu.vector_store %arg7[%c0_23, %c0_24], %29 {strides = array<i32>} : memref<1x128xf32, #tpu.memory_space<vmem>>, vector<1x128xf32>,
    } else {
    }
    %c0_6 = arith.constant 0 : index
    %c0_7 = arith.constant 0 : index
    %8 = vector.load %arg6[%c0_6, %c0_7] : memref<1x128xf32, #tpu.memory_space<vmem>>, vector<1x128xf32>
    %cst_8 = arith.constant dense<0.000000e+00> : vector<128xf32>
    %9 = vector.multi_reduction <add>, %4, %cst_8 [0] : vector<128x128xf32> to vector<128xf32>
    %10 = vector.shape_cast %9 : vector<128xf32> to vector<1x128xf32>
    %11 = arith.addf %8, %10 : vector<1x128xf32>
    %c0_9 = arith.constant 0 : index
    %c0_10 = arith.constant 0 : index
    %12 = vector.load %arg6[%c0_9, %c0_10] : memref<1x128xf32, #tpu.memory_space<vmem>>, vector<1x128xf32>
    tpu.vector_store %arg6[%c0_9, %c0_10], %11 {strides = array<i32>} : memref<1x128xf32, #tpu.memory_space<vmem>>, vector<1x128xf32>,
    %c0_11 = arith.constant 0 : index
    %c0_12 = arith.constant 0 : index
    %13 = vector.load %arg7[%c0_11, %c0_12] : memref<1x128xf32, #tpu.memory_space<vmem>>, vector<1x128xf32>
    %14 = arith.mulf %4, %4 : vector<128x128xf32>
    %cst_13 = arith.constant dense<0.000000e+00> : vector<128xf32>
    %15 = vector.multi_reduction <add>, %14, %cst_13 [0] : vector<128x128xf32> to vector<128xf32>
    %16 = vector.shape_cast %15 : vector<128xf32> to vector<1x128xf32>
    %17 = arith.addf %13, %16 : vector<1x128xf32>
    %c0_14 = arith.constant 0 : index
    %c0_15 = arith.constant 0 : index
    %18 = vector.load %arg7[%c0_14, %c0_15] : memref<1x128xf32, #tpu.memory_space<vmem>>, vector<1x128xf32>
    tpu.vector_store %arg7[%c0_14, %c0_15], %17 {strides = array<i32>} : memref<1x128xf32, #tpu.memory_space<vmem>>, vector<1x128xf32>,
    %19 = arith.truncf %4 : vector<128x128xf32> to vector<128x128xbf16>
    %20 = arith.index_cast %arg0 : i32 to index
    %c0_16 = arith.constant 0 : index
    %c0_17 = arith.constant 0 : index
    %21 = vector.load %arg5[%20, %c0_16, %c0_17] : memref<4x128x128xbf16, #tpu.memory_space<vmem>>, vector<1x128x128xbf16>
    %22 = vector.shape_cast %21 : vector<1x128x128xbf16> to vector<128x128xbf16>
    %23 = vector.shape_cast %19 : vector<128x128xbf16> to vector<1x128x128xbf16>
    tpu.vector_store %arg5[%20, %c0_16, %c0_17], %23 {strides = array<i32>} : memref<4x128x128xbf16, #tpu.memory_space<vmem>>, vector<1x128x128xbf16>,
    %c3_i32 = arith.constant 3 : i32
    %24 = arith.cmpi eq, %arg0, %c3_i32 : i32
    %25 = arith.extui %24 : i1 to i32
    %c0_i32_18 = arith.constant 0 : i32
    %26 = arith.cmpi ne, %25, %c0_i32_18 : i32
    scf.if %26 {
      %c0_19 = arith.constant 0 : index
      %c0_20 = arith.constant 0 : index
      %27 = vector.load %arg6[%c0_19, %c0_20] : memref<1x128xf32, #tpu.memory_space<vmem>>, vector<1x128xf32>
      %cst_21 = arith.constant 5.120000e+02 : f32
      %28 = vector.broadcast %cst_21 : f32 to vector<1x128xf32>
      %29 = arith.divf %27, %28 : vector<1x128xf32>
      %c0_22 = arith.constant 0 : index
      %c0_23 = arith.constant 0 : index
      %30 = vector.load %arg7[%c0_22, %c0_23] : memref<1x128xf32, #tpu.memory_space<vmem>>, vector<1x128xf32>
      %cst_24 = arith.constant 5.120000e+02 : f32
      %31 = vector.broadcast %cst_24 : f32 to vector<1x128xf32>
      %32 = arith.divf %30, %31 : vector<1x128xf32>
      %33 = arith.mulf %29, %29 : vector<1x128xf32>
      %34 = arith.subf %32, %33 : vector<1x128xf32>
      %cst_25 = arith.constant 0.000000e+00 : f32
      %35 = vector.broadcast %cst_25 : f32 to vector<1x128xf32>
      %36 = arith.maximumf %34, %35 : vector<1x128xf32>
      %c0_26 = arith.constant 0 : index
      %c0_27 = arith.constant 0 : index
      %37 = vector.load %arg3[%c0_26, %c0_27] : memref<1x128xf32, #tpu.memory_space<vmem>>, vector<1x128xf32>
      %cst_28 = arith.constant 9.99999974E-6 : f32
      %38 = vector.broadcast %cst_28 : f32 to vector<1x128xf32>
      %39 = arith.addf %36, %38 : vector<1x128xf32>
      %40 = math.rsqrt %39 : vector<1x128xf32>
      %41 = arith.mulf %37, %40 : vector<1x128xf32>
      %c0_29 = arith.constant 0 : index
      %c0_30 = arith.constant 0 : index
      %42 = vector.load %arg4[%c0_29, %c0_30] : memref<1x128xf32, #tpu.memory_space<vmem>>, vector<1x128xf32>
      %43 = arith.mulf %29, %41 : vector<1x128xf32>
      %44 = arith.subf %42, %43 : vector<1x128xf32>
      %c0_31 = arith.constant 0 : index
      %c0_32 = arith.constant 0 : index
      %c0_33 = arith.constant 0 : index
      %45 = vector.load %arg5[%c0_31, %c0_32, %c0_33] : memref<4x128x128xbf16, #tpu.memory_space<vmem>>, vector<4x128x128xbf16>
      %46 = arith.extf %45 : vector<4x128x128xbf16> to vector<4x128x128xf32>
      %47 = vector.shape_cast %41 : vector<1x128xf32> to vector<1x1x128xf32>
      %48 = vector.broadcast %47 : vector<1x1x128xf32> to vector<4x128x128xf32>
      %49 = arith.mulf %46, %48 : vector<4x128x128xf32>
      %50 = vector.shape_cast %44 : vector<1x128xf32> to vector<1x1x128xf32>
      %51 = vector.broadcast %50 : vector<1x1x128xf32> to vector<4x128x128xf32>
      %52 = arith.addf %49, %51 : vector<4x128x128xf32>
      %cst_34 = arith.constant 0.000000e+00 : f32
      %53 = vector.broadcast %cst_34 : f32 to vector<4x128x128xf32>
      %54 = arith.maximumf %52, %53 : vector<4x128x128xf32>
      %55 = arith.truncf %54 : vector<4x128x128xf32> to vector<4x128x128xbf16>
      %c0_35 = arith.constant 0 : index
      %c0_36 = arith.constant 0 : index
      %c0_37 = arith.constant 0 : index
      %56 = vector.load %arg5[%c0_35, %c0_36, %c0_37] : memref<4x128x128xbf16, #tpu.memory_space<vmem>>, vector<4x128x128xbf16>
      tpu.vector_store %arg5[%c0_35, %c0_36, %c0_37], %55 {strides = array<i32>} : memref<4x128x128xbf16, #tpu.memory_space<vmem>>, vector<4x128x128xbf16>,
    } else {
    }
    return
  }
  func.func @transform_0(%arg0: i32) -> (i32, i32, i32) {
    %c0_i32 = arith.constant 0 : i32
    %c0_i32_0 = arith.constant 0 : i32
    %c0_i32_1 = arith.constant 0 : i32
    return %arg0, %c0_i32, %c0_i32_0 : i32, i32, i32
  }
  func.func @transform_1(%arg0: i32) -> (i32, i32, i32) {
    %c0_i32 = arith.constant 0 : i32
    %c0_i32_0 = arith.constant 0 : i32
    %c0_i32_1 = arith.constant 0 : i32
    return %arg0, %c0_i32, %c0_i32_0 : i32, i32, i32
  }
  func.func @transform_2(%arg0: i32) -> (i32, i32) {
    %c0_i32 = arith.constant 0 : i32
    %c0_i32_0 = arith.constant 0 : i32
    %c0_i32_1 = arith.constant 0 : i32
    return %c0_i32, %c0_i32_0 : i32, i32
  }
  func.func @transform_3(%arg0: i32) -> (i32, i32) {
    %c0_i32 = arith.constant 0 : i32
    %c0_i32_0 = arith.constant 0 : i32
    %c0_i32_1 = arith.constant 0 : i32
    return %c0_i32, %c0_i32_0 : i32, i32
  }
  func.func @transform_4(%arg0: i32) -> (i32, i32, i32) {
    %c0_i32 = arith.constant 0 : i32
    %c0_i32_0 = arith.constant 0 : i32
    %c0_i32_1 = arith.constant 0 : i32
    %c0_i32_2 = arith.constant 0 : i32
    return %c0_i32, %c0_i32_0, %c0_i32_1 : i32, i32, i32
  }
}

module attributes {stable_mosaic.version = 11 : i64} {
  func.func @_phase_mm_bn_relu_kernel(%arg0: i32, %arg1: memref<1x512x32xbf16, #tpu.memory_space<vmem>>, %arg2: memref<1x32x128xbf16, #tpu.memory_space<vmem>>, %arg3: memref<1x128xf32, #tpu.memory_space<vmem>>, %arg4: memref<1x128xf32, #tpu.memory_space<vmem>>, %arg5: memref<4x512x128xbf16, #tpu.memory_space<vmem>>, %arg6: memref<1x128xf32, #tpu.memory_space<vmem>>, %arg7: memref<1x128xf32, #tpu.memory_space<vmem>>) attributes {dimension_semantics = [#tpu.dimension_semantics<arbitrary>], iteration_bounds = array<i64: 4>, scalar_prefetch = 0 : i64, scratch_operands = 2 : i64, tpu.core_type = #tpu.core_type<tc>, window_params = [{transform_indices = @transform_0, window_bounds = array<i64: 1, 512, 32>}, {transform_indices = @transform_1, window_bounds = array<i64: 1, 32, 128>}, {pipeline_mode = #tpu.pipeline_mode<synchronous>, transform_indices = @transform_2, window_bounds = array<i64: 1, 128>}, {pipeline_mode = #tpu.pipeline_mode<synchronous>, transform_indices = @transform_3, window_bounds = array<i64: 1, 128>}, {pipeline_mode = #tpu.pipeline_mode<synchronous>, transform_indices = @transform_4, window_bounds = array<i64: 4, 512, 128>}]} {
    %c0 = arith.constant 0 : index
    %c0_0 = arith.constant 0 : index
    %c0_1 = arith.constant 0 : index
    %0 = vector.load %arg1[%c0, %c0_0, %c0_1] : memref<1x512x32xbf16, #tpu.memory_space<vmem>>, vector<1x512x32xbf16>
    %1 = vector.shape_cast %0 : vector<1x512x32xbf16> to vector<512x32xbf16>
    %c0_2 = arith.constant 0 : index
    %c0_3 = arith.constant 0 : index
    %c0_4 = arith.constant 0 : index
    %2 = vector.load %arg2[%c0_2, %c0_3, %c0_4] : memref<1x32x128xbf16, #tpu.memory_space<vmem>>, vector<1x32x128xbf16>
    %3 = vector.shape_cast %2 : vector<1x32x128xbf16> to vector<32x128xbf16>
    %cst = arith.constant dense<0.000000e+00> : vector<512x128xf32>
    %4 = tpu.matmul %1, %3, %cst {dimension_numbers = #tpu.dot_dimension_numbers<[1], [0], [0], [1], [0, 0, 1, 1], [], []>} : vector<512x32xbf16>, vector<32x128xbf16>, vector<512x128xf32> -> vector<512x128xf32>
    %c0_i32 = arith.constant 0 : i32
    %5 = arith.cmpi eq, %arg0, %c0_i32 : i32
    %6 = arith.extui %5 : i1 to i32
    %c0_i32_5 = arith.constant 0 : i32
    %7 = arith.cmpi ne, %6, %c0_i32_5 : i32
    scf.if %7 {
      %cst_19 = arith.constant 0.000000e+00 : f32
      %27 = vector.broadcast %cst_19 : f32 to vector<1x128xf32>
      %c0_20 = arith.constant 0 : index
      %c0_21 = arith.constant 0 : index
      %28 = vector.load %arg6[%c0_20, %c0_21] : memref<1x128xf32, #tpu.memory_space<vmem>>, vector<1x128xf32>
      tpu.vector_store %arg6[%c0_20, %c0_21], %27 {strides = array<i32>} : memref<1x128xf32, #tpu.memory_space<vmem>>, vector<1x128xf32>,
      %cst_22 = arith.constant 0.000000e+00 : f32
      %29 = vector.broadcast %cst_22 : f32 to vector<1x128xf32>
      %c0_23 = arith.constant 0 : index
      %c0_24 = arith.constant 0 : index
      %30 = vector.load %arg7[%c0_23, %c0_24] : memref<1x128xf32, #tpu.memory_space<vmem>>, vector<1x128xf32>
      tpu.vector_store %arg7[%c0_23, %c0_24], %29 {strides = array<i32>} : memref<1x128xf32, #tpu.memory_space<vmem>>, vector<1x128xf32>,
    } else {
    }
    %c0_6 = arith.constant 0 : index
    %c0_7 = arith.constant 0 : index
    %8 = vector.load %arg6[%c0_6, %c0_7] : memref<1x128xf32, #tpu.memory_space<vmem>>, vector<1x128xf32>
    %cst_8 = arith.constant dense<0.000000e+00> : vector<128xf32>
    %9 = vector.multi_reduction <add>, %4, %cst_8 [0] : vector<512x128xf32> to vector<128xf32>
    %10 = vector.shape_cast %9 : vector<128xf32> to vector<1x128xf32>
    %11 = arith.addf %8, %10 : vector<1x128xf32>
    %c0_9 = arith.constant 0 : index
    %c0_10 = arith.constant 0 : index
    %12 = vector.load %arg6[%c0_9, %c0_10] : memref<1x128xf32, #tpu.memory_space<vmem>>, vector<1x128xf32>
    tpu.vector_store %arg6[%c0_9, %c0_10], %11 {strides = array<i32>} : memref<1x128xf32, #tpu.memory_space<vmem>>, vector<1x128xf32>,
    %c0_11 = arith.constant 0 : index
    %c0_12 = arith.constant 0 : index
    %13 = vector.load %arg7[%c0_11, %c0_12] : memref<1x128xf32, #tpu.memory_space<vmem>>, vector<1x128xf32>
    %14 = arith.mulf %4, %4 : vector<512x128xf32>
    %cst_13 = arith.constant dense<0.000000e+00> : vector<128xf32>
    %15 = vector.multi_reduction <add>, %14, %cst_13 [0] : vector<512x128xf32> to vector<128xf32>
    %16 = vector.shape_cast %15 : vector<128xf32> to vector<1x128xf32>
    %17 = arith.addf %13, %16 : vector<1x128xf32>
    %c0_14 = arith.constant 0 : index
    %c0_15 = arith.constant 0 : index
    %18 = vector.load %arg7[%c0_14, %c0_15] : memref<1x128xf32, #tpu.memory_space<vmem>>, vector<1x128xf32>
    tpu.vector_store %arg7[%c0_14, %c0_15], %17 {strides = array<i32>} : memref<1x128xf32, #tpu.memory_space<vmem>>, vector<1x128xf32>,
    %19 = arith.truncf %4 : vector<512x128xf32> to vector<512x128xbf16>
    %20 = arith.index_cast %arg0 : i32 to index
    %c0_16 = arith.constant 0 : index
    %c0_17 = arith.constant 0 : index
    %21 = vector.load %arg5[%20, %c0_16, %c0_17] : memref<4x512x128xbf16, #tpu.memory_space<vmem>>, vector<1x512x128xbf16>
    %22 = vector.shape_cast %21 : vector<1x512x128xbf16> to vector<512x128xbf16>
    %23 = vector.shape_cast %19 : vector<512x128xbf16> to vector<1x512x128xbf16>
    tpu.vector_store %arg5[%20, %c0_16, %c0_17], %23 {strides = array<i32>} : memref<4x512x128xbf16, #tpu.memory_space<vmem>>, vector<1x512x128xbf16>,
    %c3_i32 = arith.constant 3 : i32
    %24 = arith.cmpi eq, %arg0, %c3_i32 : i32
    %25 = arith.extui %24 : i1 to i32
    %c0_i32_18 = arith.constant 0 : i32
    %26 = arith.cmpi ne, %25, %c0_i32_18 : i32
    scf.if %26 {
      %c0_19 = arith.constant 0 : index
      %c0_20 = arith.constant 0 : index
      %27 = vector.load %arg6[%c0_19, %c0_20] : memref<1x128xf32, #tpu.memory_space<vmem>>, vector<1x128xf32>
      %cst_21 = arith.constant 2.048000e+03 : f32
      %28 = vector.broadcast %cst_21 : f32 to vector<1x128xf32>
      %29 = arith.divf %27, %28 : vector<1x128xf32>
      %c0_22 = arith.constant 0 : index
      %c0_23 = arith.constant 0 : index
      %30 = vector.load %arg7[%c0_22, %c0_23] : memref<1x128xf32, #tpu.memory_space<vmem>>, vector<1x128xf32>
      %cst_24 = arith.constant 2.048000e+03 : f32
      %31 = vector.broadcast %cst_24 : f32 to vector<1x128xf32>
      %32 = arith.divf %30, %31 : vector<1x128xf32>
      %33 = arith.mulf %29, %29 : vector<1x128xf32>
      %34 = arith.subf %32, %33 : vector<1x128xf32>
      %cst_25 = arith.constant 0.000000e+00 : f32
      %35 = vector.broadcast %cst_25 : f32 to vector<1x128xf32>
      %36 = arith.maximumf %34, %35 : vector<1x128xf32>
      %c0_26 = arith.constant 0 : index
      %c0_27 = arith.constant 0 : index
      %37 = vector.load %arg3[%c0_26, %c0_27] : memref<1x128xf32, #tpu.memory_space<vmem>>, vector<1x128xf32>
      %cst_28 = arith.constant 9.99999974E-6 : f32
      %38 = vector.broadcast %cst_28 : f32 to vector<1x128xf32>
      %39 = arith.addf %36, %38 : vector<1x128xf32>
      %40 = math.rsqrt %39 : vector<1x128xf32>
      %41 = arith.mulf %37, %40 : vector<1x128xf32>
      %c0_29 = arith.constant 0 : index
      %c0_30 = arith.constant 0 : index
      %42 = vector.load %arg4[%c0_29, %c0_30] : memref<1x128xf32, #tpu.memory_space<vmem>>, vector<1x128xf32>
      %43 = arith.mulf %29, %41 : vector<1x128xf32>
      %44 = arith.subf %42, %43 : vector<1x128xf32>
      %c0_31 = arith.constant 0 : index
      %c0_32 = arith.constant 0 : index
      %c0_33 = arith.constant 0 : index
      %45 = vector.load %arg5[%c0_31, %c0_32, %c0_33] : memref<4x512x128xbf16, #tpu.memory_space<vmem>>, vector<4x512x128xbf16>
      %46 = arith.extf %45 : vector<4x512x128xbf16> to vector<4x512x128xf32>
      %47 = vector.shape_cast %41 : vector<1x128xf32> to vector<1x1x128xf32>
      %48 = vector.broadcast %47 : vector<1x1x128xf32> to vector<4x512x128xf32>
      %49 = arith.mulf %46, %48 : vector<4x512x128xf32>
      %50 = vector.shape_cast %44 : vector<1x128xf32> to vector<1x1x128xf32>
      %51 = vector.broadcast %50 : vector<1x1x128xf32> to vector<4x512x128xf32>
      %52 = arith.addf %49, %51 : vector<4x512x128xf32>
      %cst_34 = arith.constant 0.000000e+00 : f32
      %53 = vector.broadcast %cst_34 : f32 to vector<4x512x128xf32>
      %54 = arith.maximumf %52, %53 : vector<4x512x128xf32>
      %55 = arith.truncf %54 : vector<4x512x128xf32> to vector<4x512x128xbf16>
      %c0_35 = arith.constant 0 : index
      %c0_36 = arith.constant 0 : index
      %c0_37 = arith.constant 0 : index
      %56 = vector.load %arg5[%c0_35, %c0_36, %c0_37] : memref<4x512x128xbf16, #tpu.memory_space<vmem>>, vector<4x512x128xbf16>
      tpu.vector_store %arg5[%c0_35, %c0_36, %c0_37], %55 {strides = array<i32>} : memref<4x512x128xbf16, #tpu.memory_space<vmem>>, vector<4x512x128xbf16>,
    } else {
    }
    return
  }
  func.func @transform_0(%arg0: i32) -> (i32, i32, i32) {
    %c0_i32 = arith.constant 0 : i32
    %c0_i32_0 = arith.constant 0 : i32
    %c0_i32_1 = arith.constant 0 : i32
    return %arg0, %c0_i32, %c0_i32_0 : i32, i32, i32
  }
  func.func @transform_1(%arg0: i32) -> (i32, i32, i32) {
    %c0_i32 = arith.constant 0 : i32
    %c0_i32_0 = arith.constant 0 : i32
    %c0_i32_1 = arith.constant 0 : i32
    return %arg0, %c0_i32, %c0_i32_0 : i32, i32, i32
  }
  func.func @transform_2(%arg0: i32) -> (i32, i32) {
    %c0_i32 = arith.constant 0 : i32
    %c0_i32_0 = arith.constant 0 : i32
    %c0_i32_1 = arith.constant 0 : i32
    return %c0_i32, %c0_i32_0 : i32, i32
  }
  func.func @transform_3(%arg0: i32) -> (i32, i32) {
    %c0_i32 = arith.constant 0 : i32
    %c0_i32_0 = arith.constant 0 : i32
    %c0_i32_1 = arith.constant 0 : i32
    return %c0_i32, %c0_i32_0 : i32, i32
  }
  func.func @transform_4(%arg0: i32) -> (i32, i32, i32) {
    %c0_i32 = arith.constant 0 : i32
    %c0_i32_0 = arith.constant 0 : i32
    %c0_i32_1 = arith.constant 0 : i32
    %c0_i32_2 = arith.constant 0 : i32
    return %c0_i32, %c0_i32_0, %c0_i32_1 : i32, i32, i32
  }
}

module attributes {stable_mosaic.version = 11 : i64} {
  func.func @_phase_mm_tanh_kernel(%arg0: i32, %arg1: i32, %arg2: memref<1x1024x16xbf16, #tpu.memory_space<vmem>>, %arg3: memref<1x16x128xbf16, #tpu.memory_space<vmem>>, %arg4: memref<1x1024x128xf32, #tpu.memory_space<vmem>>) attributes {dimension_semantics = [#tpu.dimension_semantics<parallel>, #tpu.dimension_semantics<parallel>], iteration_bounds = array<i64: 4, 2>, scalar_prefetch = 0 : i64, scratch_operands = 0 : i64, tpu.core_type = #tpu.core_type<tc>, window_params = [{transform_indices = @transform_0, window_bounds = array<i64: 1, 1024, 16>}, {transform_indices = @transform_1, window_bounds = array<i64: 1, 16, 128>}, {transform_indices = @transform_2, window_bounds = array<i64: 1, 1024, 128>}]} {
    %c0 = arith.constant 0 : index
    %c0_0 = arith.constant 0 : index
    %c0_1 = arith.constant 0 : index
    %0 = vector.load %arg2[%c0, %c0_0, %c0_1] : memref<1x1024x16xbf16, #tpu.memory_space<vmem>>, vector<1x1024x16xbf16>
    %1 = vector.shape_cast %0 : vector<1x1024x16xbf16> to vector<1024x16xbf16>
    %c0_2 = arith.constant 0 : index
    %c0_3 = arith.constant 0 : index
    %c0_4 = arith.constant 0 : index
    %2 = vector.load %arg3[%c0_2, %c0_3, %c0_4] : memref<1x16x128xbf16, #tpu.memory_space<vmem>>, vector<1x16x128xbf16>
    %3 = vector.shape_cast %2 : vector<1x16x128xbf16> to vector<16x128xbf16>
    %cst = arith.constant dense<0.000000e+00> : vector<1024x128xf32>
    %4 = tpu.matmul %1, %3, %cst {dimension_numbers = #tpu.dot_dimension_numbers<[1], [0], [0], [1], [0, 0, 1, 1], [], []>} : vector<1024x16xbf16>, vector<16x128xbf16>, vector<1024x128xf32> -> vector<1024x128xf32>
    %5 = math.tanh %4 : vector<1024x128xf32>
    %c0_5 = arith.constant 0 : index
    %c0_6 = arith.constant 0 : index
    %c0_7 = arith.constant 0 : index
    %6 = vector.load %arg4[%c0_5, %c0_6, %c0_7] : memref<1x1024x128xf32, #tpu.memory_space<vmem>>, vector<1x1024x128xf32>
    %7 = vector.shape_cast %6 : vector<1x1024x128xf32> to vector<1024x128xf32>
    %8 = vector.shape_cast %5 : vector<1024x128xf32> to vector<1x1024x128xf32>
    tpu.vector_store %arg4[%c0_5, %c0_6, %c0_7], %8 {strides = array<i32>} : memref<1x1024x128xf32, #tpu.memory_space<vmem>>, vector<1x1024x128xf32>,
    return
  }
  func.func @transform_0(%arg0: i32, %arg1: i32) -> (i32, i32, i32) {
    %c0_i32 = arith.constant 0 : i32
    %c0_i32_0 = arith.constant 0 : i32
    return %arg0, %arg1, %c0_i32 : i32, i32, i32
  }
  func.func @transform_1(%arg0: i32, %arg1: i32) -> (i32, i32, i32) {
    %c0_i32 = arith.constant 0 : i32
    %c0_i32_0 = arith.constant 0 : i32
    %c0_i32_1 = arith.constant 0 : i32
    return %arg0, %c0_i32, %c0_i32_0 : i32, i32, i32
  }
  func.func @transform_2(%arg0: i32, %arg1: i32) -> (i32, i32, i32) {
    %c0_i32 = arith.constant 0 : i32
    %c0_i32_0 = arith.constant 0 : i32
    return %arg0, %arg1, %c0_i32 : i32, i32, i32
  }
}

</mosaic_0001>

<llo_original>
// kernel: generator_forward.5
$region0: #{generator_forward.5}
  #allocation0 [shape = 'u32[]', space=smem, size = 0x4, offset = 0x4, fixed_abs, tag = 'smem constant byte address 0x4 - core index']
  #allocation1 [shape = 'u32[144,128]{1,0:T(1,128)}', space=vmem, size = 0x12000, scoped, tag = 'internal scratch']
  #allocation2 [shape = 'f32[1,128]{1,0:T(1,128)}', space=vmem, size = 0x200, scoped, tag = 'scratch operand']
  #allocation3 [shape = 'f32[1,128]{1,0:T(1,128)}', space=vmem, size = 0x200, scoped, tag = 'scratch operand']
  %s0 = inlined_call_operand.vmem [shape: bf16[1,2,8], index: 0, kind: input, shape index: {}]
  %s1 = inlined_call_operand.vmem [shape: bf16[16,8,128], index: 1, kind: input, shape index: {}]
  %s2 = inlined_call_operand.vmem [shape: f32[1,128], index: 2, kind: input, shape index: {}]
  %s3 = inlined_call_operand.vmem [shape: f32[1,128], index: 3, kind: input, shape index: {}]
  %s4 = inlined_call_operand.vmem [shape: bf16[16,2,128], index: 4, kind: output, shape index: {}]
  %s5 = sld [smem:[#allocation0]]
  $region57: #{generator_forward.5} parent=0
    _
  %s7 = ssub.s32 1, %s5
  %s8 = scalar_select 0, %s7, %s5
  loop: start=0, step=1, limit=18
  $region2: #{generator_forward.5} parent=0 // loop_pre_header
    _
  $region3: #{generator_forward.5} parent=0 // loop_header
    %s10 = sphi 0, %s14
    %p11 = scmp.ge.s32.totalorder %s10, 18
    %s18 = sphi 0, %s18
    %s20 = sphi 0, %s18
    %s21 = sphi 0, %s20
    %s35 = sphi 0, %s21
    %s41 = sphi 0, %s43
    %s44 = sphi 0, %s41
    %s45 = sphi 0, %s44
    %s61 = sphi 0, %s45
    %s65 = sphi 0, %s65
    %s67 = sphi 0, %s65
    %s68 = sphi 0, %s67
    %s82 = sphi 0, %s68
    %s86 = sphi 0, %s86
    %s88 = sphi 0, %s86
    %s89 = sphi 0, %s88
    %s103 = sphi 0, %s89
    %s107 = sphi 0, %s107
    %s109 = sphi 0, %s107
    %s110 = sphi 0, %s109
    %s124 = sphi 0, %s110
  $region4: #{generator_forward.5} parent=0 // loop_header_branch
    %13 = sbr.rel (%p11) target = $region8
  $region5: #{generator_forward.5} parent=0 // loop_body
    %s15 = ssub.s32 %s10, 1
    %s16 = ssub.s32 %s10, 2
    %s17 = sadd.s32 %s10, 1
    %s19 = sadd.s32 %s18, 1
    %p22 = scmp.eq.s32.totalorder %s10, 15
    %p23 = scmp.ne.s32.totalorder %s18, %s20
    %p24 = scmp.eq.s32.totalorder %s10, 0
    %p25 = por %p23, %p24
    %p26 = scmp.ne.s32.totalorder %s18, %s20
    %p27 = scmp.eq.s32.totalorder %s15, 15
    %p28 = por %p26, %p27
    %p29 = scmp.ne.s32.totalorder %s20, %s21
    %p30 = scmp.eq.s32.totalorder %s15, 0
    %p31 = por %p29, %p30
    %p32 = scmp.ne.s32.totalorder %s20, %s21
    %p33 = scmp.eq.s32.totalorder %s16, 15
    %p34 = por %p32, %p33
    %p36 = scmp.ne.s32.totalorder %s21, %s35
    %p37 = scmp.eq.s32.totalorder %s16, 0
    %p38 = por %p36, %p37
    %s39 = ssub.s32 %s10, %s17
    %p40 = scmp.eq.s32.totalorder %s39, 0
    %s42 = sadd.s32 %s41, 1
    %s43 = scalar_select %p40, %s41, %s42
    %p46 = pneg %p40
    %p47 = scmp.eq.s32.totalorder %s10, 15
    %p48 = por %p46, %p47
    %p49 = scmp.ne.s32.totalorder %s41, %s44
    %p50 = scmp.eq.s32.totalorder %s10, 0
    %p51 = por %p49, %p50
    %p52 = scmp.ne.s32.totalorder %s41, %s44
    %p53 = scmp.eq.s32.totalorder %s15, 15
    %p54 = por %p52, %p53
    %p55 = scmp.ne.s32.totalorder %s44, %s45
    %p56 = scmp.eq.s32.totalorder %s15, 0
    %p57 = por %p55, %p56
    %p58 = scmp.ne.s32.totalorder %s44, %s45
    %p59 = scmp.eq.s32.totalorder %s16, 15
    %p60 = por %p58, %p59
    %p62 = scmp.ne.s32.totalorder %s45, %s61
    %p63 = scmp.eq.s32.totalorder %s16, 0
    %p64 = por %p62, %p63
    %s66 = sadd.s32 %s65, 1
    %p69 = scmp.eq.s32.totalorder %s10, 15
    %p70 = scmp.ne.s32.totalorder %s65, %s67
    %p71 = scmp.eq.s32.totalorder %s10, 0
    %p72 = por %p70, %p71
    %p73 = scmp.ne.s32.totalorder %s65, %s67
    %p74 = scmp.eq.s32.totalorder %s15, 15
    %p75 = por %p73, %p74
    %p76 = scmp.ne.s32.totalorder %s67, %s68
    %p77 = scmp.eq.s32.totalorder %s15, 0
    %p78 = por %p76, %p77
    %p79 = scmp.ne.s32.totalorder %s67, %s68
    %p80 = scmp.eq.s32.totalorder %s16, 15
    %p81 = por %p79, %p80
    %p83 = scmp.ne.s32.totalorder %s68, %s82
    %p84 = scmp.eq.s32.totalorder %s16, 0
    %p85 = por %p83, %p84
    %s87 = sadd.s32 %s86, 1
    %p90 = scmp.eq.s32.totalorder %s10, 15
    %p91 = scmp.ne.s32.totalorder %s86, %s88
    %p92 = scmp.eq.s32.totalorder %s10, 0
    %p93 = por %p91, %p92
    %p94 = scmp.ne.s32.totalorder %s86, %s88
    %p95 = scmp.eq.s32.totalorder %s15, 15
    %p96 = por %p94, %p95
    %p97 = scmp.ne.s32.totalorder %s88, %s89
    %p98 = scmp.eq.s32.totalorder %s15, 0
    %p99 = por %p97, %p98
    %p100 = scmp.ne.s32.totalorder %s88, %s89
    %p101 = scmp.eq.s32.totalorder %s16, 15
    %p102 = por %p100, %p101
    %p104 = scmp.ne.s32.totalorder %s89, %s103
    %p105 = scmp.eq.s32.totalorder %s16, 0
    %p106 = por %p104, %p105
    %s108 = sadd.s32 %s107, 1
    %p111 = scmp.eq.s32.totalorder %s10, 15
    %p112 = scmp.ne.s32.totalorder %s107, %s109
    %p113 = scmp.eq.s32.totalorder %s10, 0
    %p114 = por %p112, %p113
    %p115 = scmp.ne.s32.totalorder %s107, %s109
    %p116 = scmp.eq.s32.totalorder %s15, 15
    %p117 = por %p115, %p116
    %p118 = scmp.ne.s32.totalorder %s109, %s110
    %p119 = scmp.eq.s32.totalorder %s15, 0
    %p120 = por %p118, %p119
    %p121 = scmp.ne.s32.totalorder %s109, %s110
    %p122 = scmp.eq.s32.totalorder %s16, 15
    %p123 = por %p121, %p122
    %p125 = scmp.ne.s32.totalorder %s110, %s124
    %p126 = scmp.eq.s32.totalorder %s16, 0
    %p127 = por %p125, %p126
    %p128 = scmp.le.s32.totalorder 1, %s10
    %p129 = scmp.lt.s32.totalorder %s10, 17
    %p130 = pnand %p128, %p129
    %p131 = pneg %p130
    // Predicated region
    $region9: #{generator_forward.5} parent=5 // pred_check
      _
    $region10: #{generator_forward.5} parent=5 // pred_check_branch
      %133 = sbr.rel (%p130) target = $region12
    $region11: #{generator_forward.5} parent=5 // pred_region
      %s134 = ssub.s32 %s10, 1
      // Predicated region
      $region13: #{generator_forward.5} parent=11 // pred_check
        %p135 = pneg %p31
      $region14: #{generator_forward.5} parent=11 // pred_check_branch
        %137 = sbr.rel (%p135) target = $region16
      $region15: #{generator_forward.5} parent=11 // pred_region
        _
      $region16: #{generator_forward.5} parent=11 // pred_fallthru
        _
      // Predicated region
      $region17: #{generator_forward.5} parent=11 // pred_check
        %p138 = pneg %p78
      $region18: #{generator_forward.5} parent=11 // pred_check_branch
        %140 = sbr.rel (%p138) target = $region20
      $region19: #{generator_forward.5} parent=11 // pred_region
        _
      $region20: #{generator_forward.5} parent=11 // pred_fallthru
        _
      // Predicated region
      $region21: #{generator_forward.5} parent=11 // pred_check
        %p141 = pneg %p99
      $region22: #{generator_forward.5} parent=11 // pred_check_branch
        %143 = sbr.rel (%p141) target = $region24
      $region23: #{generator_forward.5} parent=11 // pred_region
        _
      $region24: #{generator_forward.5} parent=11 // pred_fallthru
        _
    $region12: #{generator_forward.5} parent=5 // pred_fallthru
      _
    %p144 = scmp.lt.s32.totalorder %s10, 16
    // Predicated region
    $region25: #{generator_forward.5} parent=5 // pred_check
      %p145 = pneg %p144
    $region26: #{generator_forward.5} parent=5 // pred_check_branch
      %147 = sbr.rel (%p145) target = $region28
    $region27: #{generator_forward.5} parent=5 // pred_region
      // Predicated region
      $region29: #{generator_forward.5} parent=27 // pred_check
        %p148 = pneg %p51
      $region30: #{generator_forward.5} parent=27 // pred_check_branch
        %150 = sbr.rel (%p148) target = $region32
      $region31: #{generator_forward.5} parent=27 // pred_region
        %p151 = scmp.lt.s32.totalorder %s10, 15
        %s152 = scalar_select %p151, %s10, 15
        %s153 = smul.addr %s152, 4
        %s154 = scalar_lea.vmem %s1, %s153
      $region32: #{generator_forward.5} parent=27 // pred_fallthru
        _
    $region28: #{generator_forward.5} parent=5 // pred_fallthru
      _
    %p155 = scmp.le.s32.totalorder 1, %s10
    %p156 = scmp.lt.s32.totalorder %s10, 17
    %p157 = pnand %p155, %p156
    %p158 = pneg %p157
    // Predicated region
    $region33: #{generator_forward.5} parent=5 // pred_check
      _
    $region34: #{generator_forward.5} parent=5 // pred_check_branch
      %160 = sbr.rel (%p157) target = $region36
    $region35: #{generator_forward.5} parent=5 // pred_region
      %s161 = ssub.s32 %s10, 1
      %p162 = pneg %p31
      %p163 = pneg %p28
      %p164 = scmp.lt.s32.totalorder %s15, 15
      %s165 = scalar_select %p164, %s15, 15
      %s166 = smul.addr %s165, 4
      %s167 = scalar_lea.vmem %s1, %s166
      %p168 = pneg %p57
      %p169 = pneg %p54
      %p170 = pneg %p78
      %p171 = pneg %p75
      %p172 = pneg %p99
      %p173 = pneg %p96
      %p174 = pneg %p120
      %p175 = pneg %p117
      %p176 = scmp.lt.s32.totalorder %s15, 15
      %s177 = scalar_select %p176, %s15, 15
      %s178 = smul.addr %s177, 4
      %s179 = scalar_lea.vmem %s1, %s178
      %v181 = vld [vmem:[%s0] sm:$0x1]
      %v182 = vld [vmem:[%s179] sm:$0xf]
      %vm183 = vcmask 64512
      %v185 = vsel %vm183, %v181, 0
      %vm187 = vcmask 1043456
      %v189 = vsel %vm187, %v182, 0
      %191 = vmatprep.subr.bf16.mxu0 0
      %192 = vmatpush1.bf16.msra.mxu0 %v189
      %193 = vmatprep.subr.bf16.mxu0 0
      %194 = vmatpush1.bf16.msra.mxu0 0
      %195 = vmatprep.subr.bf16.mxu0 0
      %196 = vmatpush1.bf16.msra.mxu0 0
      %197 = vmatprep.subr.bf16.mxu0 0
      %198 = vmatpush1.bf16.msra.mxu0 0
      %199 = vmatprep.subr.bf16.mxu0 0
      %200 = vmatpush1.bf16.msra.mxu0 0
      %201 = vmatprep.subr.bf16.mxu0 0
      %202 = vmatpush1.bf16.msra.mxu0 0
      %203 = vmatprep.subr.bf16.mxu0 0
      %204 = vmatpush1.bf16.msra.mxu0 0
      %205 = vmatprep.subr.bf16.mxu0 0
      %206 = vmatpush1.bf16.msra.mxu0 0
      %207 = vmatprep.subr.bf16.mxu0 0
      %208 = vmatpush1.bf16.msra.mxu0 0
      %209 = vmatprep.subr.bf16.mxu0 0
      %210 = vmatpush1.bf16.msra.mxu0 0
      %211 = vmatprep.subr.bf16.mxu0 0
      %212 = vmatpush1.bf16.msra.mxu0 0
      %213 = vmatprep.subr.bf16.mxu0 0
      %214 = vmatpush1.bf16.msra.mxu0 0
      %215 = vmatprep.subr.bf16.mxu0 0
      %216 = vmatpush1.bf16.msra.mxu0 0
      %217 = vmatprep.subr.bf16.mxu0 0
      %218 = vmatpush1.bf16.msra.mxu0 0
      %219 = vmatprep.subr.bf16.mxu0 0
      %220 = vmatpush1.bf16.msra.mxu0 0
      %221 = vmatprep.subr.bf16.mxu0 0
      %222 = vmatpush1.bf16.msra.mxu0 0
      %223 = vmatprep.mubr.bf16.mxu0 0
      %224 = vmatmul.mubr.bf16.gmra.mrb[0].mxu0 %v185
      %v225 = vpop.f32.mrb[0].mxu0
      %v226 = vadd.f32 0.0, %v225
      %v227 = vpop.f32.mrb[0].mxu0
      %v228 = vpop.f32.mrb[0].mxu0
      %v229 = vpop.f32.mrb[0].mxu0
      %230 = vdwg.mxu0
      %p231 = scmp.eq.s32.totalorder %s15, 0
      // Predicated region
      $region37: #{generator_forward.5} parent=35 // pred_check
        %p232 = pneg %p231
      $region38: #{generator_forward.5} parent=35 // pred_check_branch
        %234 = sbr.rel (%p232) target = $region40
      $region39: #{generator_forward.5} parent=35 // pred_region
        %235 = vst [vmem:[#allocation2] sm:$0x1] 0.0
        %236 = vst [vmem:[#allocation3] sm:$0x1] 0.0
      $region40: #{generator_forward.5} parent=35 // pred_fallthru
        _
      %v237 = vld [vmem:[#allocation2] sm:$0x1]
      %vm238 = vcmask 1041408
      %v239 = vsel %vm238, %v226, 0.0
      %v240 = vrot.slane %v239, 4
      %v241 = vadd.f32 %v239, %v240
      %v242 = vrot.slane %v241, 2
      %v243 = vadd.f32 %v241, %v242
      %v244 = vrot.slane %v243, 1
      %v245 = vadd.f32 %v243, %v244
      %v246 = vadd.f32 %v237, %v245
      %247 = vst [vmem:[#allocation2] sm:$0x1] %v246
      %v248 = vld [vmem:[#allocation3] sm:$0x1]
      %v249 = vmul.f32 %v226, %v226
      %v250 = vsel %vm238, %v249, 0.0
      %v251 = vrot.slane %v250, 4
      %v252 = vadd.f32 %v250, %v251
      %v253 = vrot.slane %v252, 2
      %v254 = vadd.f32 %v252, %v253
      %v255 = vrot.slane %v254, 1
      %v256 = vadd.f32 %v254, %v255
      %v257 = vadd.f32 %v248, %v256
      %258 = vst [vmem:[#allocation3] sm:$0x1] %v257
      %v259 = vpack.c.bf16 %v226, %v226
      %s260 = scalar_lea.vmem %s4, %s15
      %261 = vst [vmem:[%s260] sm:$0x1] %v259
      %p262 = scmp.eq.s32.totalorder %s15, 15
      // Predicated region
      $region41: #{generator_forward.5} parent=35 // pred_check
        %p263 = pneg %p262
      $region42: #{generator_forward.5} parent=35 // pred_check_branch
        %265 = sbr.rel (%p263) target = $region44
      $region43: #{generator_forward.5} parent=35 // pred_region
        %v266 = vld [vmem:[#allocation2] sm:$0x1]
        %v267 = vrcp.pop 32.0
        %v268 = vmul.f32 %v266, %v267
        %v269 = vld [vmem:[#allocation3] sm:$0x1]
        %v270 = vmul.f32 %v269, %v267
        %v271 = vmul.f32 %v268, %v268
        %v272 = vsub.f32 %v270, %v271
        %v273 = vmax.f32 %v272, 0.0
        %v274 = vld [vmem:[%s2] sm:$0x1]
        %v275 = vadd.f32 %v273, 1e-05
        %v276 = vrsqrt.pop %v275
        %v277 = vmul.f32 %v274, %v276
        %v278 = vld [vmem:[%s3] sm:$0x1]
        %v279 = vmul.f32 %v268, %v277
        %v280 = vsub.f32 %v278, %v279
        %v281 = vld [vmem:[%s4] sm:$0x1]
        %v282 = vld [vmem:[%s4 + $0x1] sm:$0x1]
        %v283 = vld [vmem:[%s4 + $0x2] sm:$0x1]
        %v284 = vld [vmem:[%s4 + $0x3] sm:$0x1]
        %v285 = vld [vmem:[%s4 + $0x4] sm:$0x1]
        %v286 = vld [vmem:[%s4 + $0x5] sm:$0x1]
        %v287 = vld [vmem:[%s4 + $0x6] sm:$0x1]
        %v288 = vld [vmem:[%s4 + $0x7] sm:$0x1]
        %v289 = vld [vmem:[%s4 + $0x8] sm:$0x1]
        %v290 = vld [vmem:[%s4 + $0x9] sm:$0x1]
        %v291 = vld [vmem:[%s4 + $0xa] sm:$0x1]
        %v292 = vld [vmem:[%s4 + $0xb] sm:$0x1]
        %v293 = vld [vmem:[%s4 + $0xc] sm:$0x1]
        %v294 = vld [vmem:[%s4 + $0xd] sm:$0x1]
        %v295 = vld [vmem:[%s4 + $0xe] sm:$0x1]
        %v296 = vld [vmem:[%s4 + $0xf] sm:$0x1]
        %v297 = vunpack.c.l.bf16 %v281
        %v298 = vunpack.c.l.bf16 %v282
        %v299 = vunpack.c.l.bf16 %v283
        %v300 = vunpack.c.l.bf16 %v284
        %v301 = vunpack.c.l.bf16 %v285
        %v302 = vunpack.c.l.bf16 %v286
        %v303 = vunpack.c.l.bf16 %v287
        %v304 = vunpack.c.l.bf16 %v288
        %v305 = vunpack.c.l.bf16 %v289
        %v306 = vunpack.c.l.bf16 %v290
        %v307 = vunpack.c.l.bf16 %v291
        %v308 = vunpack.c.l.bf16 %v292
        %v309 = vunpack.c.l.bf16 %v293
        %v310 = vunpack.c.l.bf16 %v294
        %v311 = vunpack.c.l.bf16 %v295
        %v312 = vunpack.c.l.bf16 %v296
        %v314 = vlaneseq
        %v315 = vshrl.u32 %v314, 7
        %v316 = vsub.s32 0, %v315
        %v317 = vrot.slane %v277, %v316
        %v319 = vmul.f32 %v297, %v317
        %v320 = vmul.f32 %v298, %v317
        %v321 = vmul.f32 %v299, %v317
        %v322 = vmul.f32 %v300, %v317
        %v323 = vmul.f32 %v301, %v317
        %v324 = vmul.f32 %v302, %v317
        %v325 = vmul.f32 %v303, %v317
        %v326 = vmul.f32 %v304, %v317
        %v327 = vmul.f32 %v305, %v317
        %v328 = vmul.f32 %v306, %v317
        %v329 = vmul.f32 %v307, %v317
        %v330 = vmul.f32 %v308, %v317
        %v331 = vmul.f32 %v309, %v317
        %v332 = vmul.f32 %v310, %v317
        %v333 = vmul.f32 %v311, %v317
        %v334 = vmul.f32 %v312, %v317
        %v336 = vlaneseq
        %v337 = vshrl.u32 %v336, 7
        %v338 = vsub.s32 0, %v337
        %v339 = vrot.slane %v280, %v338
        %v341 = vadd.f32 %v319, %v339
        %v342 = vadd.f32 %v320, %v339
        %v343 = vadd.f32 %v321, %v339
        %v344 = vadd.f32 %v322, %v339
        %v345 = vadd.f32 %v323, %v339
        %v346 = vadd.f32 %v324, %v339
        %v347 = vadd.f32 %v325, %v339
        %v348 = vadd.f32 %v326, %v339
        %v349 = vadd.f32 %v327, %v339
        %v350 = vadd.f32 %v328, %v339
        %v351 = vadd.f32 %v329, %v339
        %v352 = vadd.f32 %v330, %v339
        %v353 = vadd.f32 %v331, %v339
        %v354 = vadd.f32 %v332, %v339
        %v355 = vadd.f32 %v333, %v339
        %v356 = vadd.f32 %v334, %v339
        %v357 = vmax.f32 %v341, 0.0
        %v358 = vmax.f32 %v342, 0.0
        %v359 = vmax.f32 %v343, 0.0
        %v360 = vmax.f32 %v344, 0.0
        %v361 = vmax.f32 %v345, 0.0
        %v362 = vmax.f32 %v346, 0.0
        %v363 = vmax.f32 %v347, 0.0
        %v364 = vmax.f32 %v348, 0.0
        %v365 = vmax.f32 %v349, 0.0
        %v366 = vmax.f32 %v350, 0.0
        %v367 = vmax.f32 %v351, 0.0
        %v368 = vmax.f32 %v352, 0.0
        %v369 = vmax.f32 %v353, 0.0
        %v370 = vmax.f32 %v354, 0.0
        %v371 = vmax.f32 %v355, 0.0
        %v372 = vmax.f32 %v356, 0.0
        %v373 = vpack.c.bf16 %v357, %v357
        %v374 = vpack.c.bf16 %v358, %v358
        %v375 = vpack.c.bf16 %v359, %v359
        %v376 = vpack.c.bf16 %v360, %v360
        %v377 = vpack.c.bf16 %v361, %v361
        %v378 = vpack.c.bf16 %v362, %v362
        %v379 = vpack.c.bf16 %v363, %v363
        %v380 = vpack.c.bf16 %v364, %v364
        %v381 = vpack.c.bf16 %v365, %v365
        %v382 = vpack.c.bf16 %v366, %v366
        %v383 = vpack.c.bf16 %v367, %v367
        %v384 = vpack.c.bf16 %v368, %v368
        %v385 = vpack.c.bf16 %v369, %v369
        %v386 = vpack.c.bf16 %v370, %v370
        %v387 = vpack.c.bf16 %v371, %v371
        %v388 = vpack.c.bf16 %v372, %v372
        %389 = vst [vmem:[%s4] sm:$0x1] %v373
        %390 = vst [vmem:[%s4 + $0x1] sm:$0x1] %v374
        %391 = vst [vmem:[%s4 + $0x2] sm:$0x1] %v375
        %392 = vst [vmem:[%s4 + $0x3] sm:$0x1] %v376
        %393 = vst [vmem:[%s4 + $0x4] sm:$0x1] %v377
        %394 = vst [vmem:[%s4 + $0x5] sm:$0x1] %v378
        %395 = vst [vmem:[%s4 + $0x6] sm:$0x1] %v379
        %396 = vst [vmem:[%s4 + $0x7] sm:$0x1] %v380
        %397 = vst [vmem:[%s4 + $0x8] sm:$0x1] %v381
        %398 = vst [vmem:[%s4 + $0x9] sm:$0x1] %v382
        %399 = vst [vmem:[%s4 + $0xa] sm:$0x1] %v383
        %400 = vst [vmem:[%s4 + $0xb] sm:$0x1] %v384
        %401 = vst [vmem:[%s4 + $0xc] sm:$0x1] %v385
        %402 = vst [vmem:[%s4 + $0xd] sm:$0x1] %v386
        %403 = vst [vmem:[%s4 + $0xe] sm:$0x1] %v387
        %404 = vst [vmem:[%s4 + $0xf] sm:$0x1] %v388
      $region44: #{generator_forward.5} parent=35 // pred_fallthru
        _
      // Predicated region
      $region45: #{generator_forward.5} parent=35 // pred_check
        %p405 = pneg %p117
      $region46: #{generator_forward.5} parent=35 // pred_check_branch
        %407 = sbr.rel (%p405) target = $region48
      $region47: #{generator_forward.5} parent=35 // pred_region
        _
      $region48: #{generator_forward.5} parent=35 // pred_fallthru
        _
      // Predicated region
      $region49: #{generator_forward.5} parent=35 // pred_check
        %p408 = pneg %p117
      $region50: #{generator_forward.5} parent=35 // pred_check_branch
        %410 = sbr.rel (%p408) target = $region52
      $region51: #{generator_forward.5} parent=35 // pred_region
        _
      $region52: #{generator_forward.5} parent=35 // pred_fallthru
        _
    $region36: #{generator_forward.5} parent=5 // pred_fallthru
      _
    %p411 = scmp.le.s32.totalorder 2, %s10
    // Predicated region
    $region53: #{generator_forward.5} parent=5 // pred_check
      %p412 = pneg %p411
    $region54: #{generator_forward.5} parent=5 // pred_check_branch
      %414 = sbr.rel (%p412) target = $region56
    $region55: #{generator_forward.5} parent=5 // pred_region
      %s415 = ssub.s32 %s10, 2
    $region56: #{generator_forward.5} parent=5 // pred_fallthru
      _
  $region6: #{generator_forward.5} parent=0 // loop_footer
    %s14 = sadd.s32 1, %s10
  $region7: #{generator_forward.5} parent=0 // loop_footer_branch
    %9 = sbr.rel target = $region3
  $region8: #{generator_forward.5} parent=0 // loop_exit
    _

// kernel: generator_forward.6
$region0: #{generator_forward.6}
  #allocation0 [shape = 'u32[]', space=smem, size = 0x4, offset = 0x4, fixed_abs, tag = 'smem constant byte address 0x4 - core index']
  #allocation1 [shape = 'u32[144,128]{1,0:T(1,128)}', space=vmem, size = 0x12000, scoped, tag = 'internal scratch']
  #allocation2 [shape = 'f32[1,128]{1,0:T(1,128)}', space=vmem, size = 0x200, scoped, tag = 'scratch operand']
  #allocation3 [shape = 'f32[1,128]{1,0:T(1,128)}', space=vmem, size = 0x200, scoped, tag = 'scratch operand']
  %s0 = inlined_call_operand.vmem [shape: bf16[4,32,128], index: 0, kind: input, shape index: {}]
  %s1 = inlined_call_operand.vmem [shape: bf16[4,128,128], index: 1, kind: input, shape index: {}]
  %s2 = inlined_call_operand.vmem [shape: f32[1,128], index: 2, kind: input, shape index: {}]
  %s3 = inlined_call_operand.vmem [shape: f32[1,128], index: 3, kind: input, shape index: {}]
  %s4 = inlined_call_operand.vmem [shape: bf16[4,32,128], index: 4, kind: output, shape index: {}]
  %s5 = sld [smem:[#allocation0]]
  $region57: #{generator_forward.6} parent=0
    _
  %s7 = ssub.s32 1, %s5
  %s8 = scalar_select 0, %s7, %s5
  loop: start=0, step=1, limit=6
  $region2: #{generator_forward.6} parent=0 // loop_pre_header
    _
  $region3: #{generator_forward.6} parent=0 // loop_header
    %s10 = sphi 0, %s14
    %p11 = scmp.ge.s32.totalorder %s10, 6
    %s20 = sphi 0, %s22
    %s23 = sphi 0, %s20
    %s24 = sphi 0, %s23
    %s40 = sphi 0, %s24
    %s46 = sphi 0, %s48
    %s49 = sphi 0, %s46
    %s50 = sphi 0, %s49
    %s66 = sphi 0, %s50
    %s70 = sphi 0, %s70
    %s72 = sphi 0, %s70
    %s73 = sphi 0, %s72
    %s87 = sphi 0, %s73
    %s91 = sphi 0, %s91
    %s93 = sphi 0, %s91
    %s94 = sphi 0, %s93
    %s108 = sphi 0, %s94
    %s112 = sphi 0, %s112
    %s114 = sphi 0, %s112
    %s115 = sphi 0, %s114
    %s129 = sphi 0, %s115
  $region4: #{generator_forward.6} parent=0 // loop_header_branch
    %13 = sbr.rel (%p11) target = $region8
  $region5: #{generator_forward.6} parent=0 // loop_body
    %s15 = ssub.s32 %s10, 1
    %s16 = ssub.s32 %s10, 2
    %s17 = sadd.s32 %s10, 1
    %s18 = ssub.s32 %s10, %s17
    %p19 = scmp.eq.s32.totalorder %s18, 0
    %s21 = sadd.s32 %s20, 1
    %s22 = scalar_select %p19, %s20, %s21
    %p25 = pneg %p19
    %p26 = scmp.eq.s32.totalorder %s10, 3
    %p27 = por %p25, %p26
    %p28 = scmp.ne.s32.totalorder %s20, %s23
    %p29 = scmp.eq.s32.totalorder %s10, 0
    %p30 = por %p28, %p29
    %p31 = scmp.ne.s32.totalorder %s20, %s23
    %p32 = scmp.eq.s32.totalorder %s15, 3
    %p33 = por %p31, %p32
    %p34 = scmp.ne.s32.totalorder %s23, %s24
    %p35 = scmp.eq.s32.totalorder %s15, 0
    %p36 = por %p34, %p35
    %p37 = scmp.ne.s32.totalorder %s23, %s24
    %p38 = scmp.eq.s32.totalorder %s16, 3
    %p39 = por %p37, %p38
    %p41 = scmp.ne.s32.totalorder %s24, %s40
    %p42 = scmp.eq.s32.totalorder %s16, 0
    %p43 = por %p41, %p42
    %s44 = ssub.s32 %s10, %s17
    %p45 = scmp.eq.s32.totalorder %s44, 0
    %s47 = sadd.s32 %s46, 1
    %s48 = scalar_select %p45, %s46, %s47
    %p51 = pneg %p45
    %p52 = scmp.eq.s32.totalorder %s10, 3
    %p53 = por %p51, %p52
    %p54 = scmp.ne.s32.totalorder %s46, %s49
    %p55 = scmp.eq.s32.totalorder %s10, 0
    %p56 = por %p54, %p55
    %p57 = scmp.ne.s32.totalorder %s46, %s49
    %p58 = scmp.eq.s32.totalorder %s15, 3
    %p59 = por %p57, %p58
    %p60 = scmp.ne.s32.totalorder %s49, %s50
    %p61 = scmp.eq.s32.totalorder %s15, 0
    %p62 = por %p60, %p61
    %p63 = scmp.ne.s32.totalorder %s49, %s50
    %p64 = scmp.eq.s32.totalorder %s16, 3
    %p65 = por %p63, %p64
    %p67 = scmp.ne.s32.totalorder %s50, %s66
    %p68 = scmp.eq.s32.totalorder %s16, 0
    %p69 = por %p67, %p68
    %s71 = sadd.s32 %s70, 1
    %p74 = scmp.eq.s32.totalorder %s10, 3
    %p75 = scmp.ne.s32.totalorder %s70, %s72
    %p76 = scmp.eq.s32.totalorder %s10, 0
    %p77 = por %p75, %p76
    %p78 = scmp.ne.s32.totalorder %s70, %s72
    %p79 = scmp.eq.s32.totalorder %s15, 3
    %p80 = por %p78, %p79
    %p81 = scmp.ne.s32.totalorder %s72, %s73
    %p82 = scmp.eq.s32.totalorder %s15, 0
    %p83 = por %p81, %p82
    %p84 = scmp.ne.s32.totalorder %s72, %s73
    %p85 = scmp.eq.s32.totalorder %s16, 3
    %p86 = por %p84, %p85
    %p88 = scmp.ne.s32.totalorder %s73, %s87
    %p89 = scmp.eq.s32.totalorder %s16, 0
    %p90 = por %p88, %p89
    %s92 = sadd.s32 %s91, 1
    %p95 = scmp.eq.s32.totalorder %s10, 3
    %p96 = scmp.ne.s32.totalorder %s91, %s93
    %p97 = scmp.eq.s32.totalorder %s10, 0
    %p98 = por %p96, %p97
    %p99 = scmp.ne.s32.totalorder %s91, %s93
    %p100 = scmp.eq.s32.totalorder %s15, 3
    %p101 = por %p99, %p100
    %p102 = scmp.ne.s32.totalorder %s93, %s94
    %p103 = scmp.eq.s32.totalorder %s15, 0
    %p104 = por %p102, %p103
    %p105 = scmp.ne.s32.totalorder %s93, %s94
    %p106 = scmp.eq.s32.totalorder %s16, 3
    %p107 = por %p105, %p106
    %p109 = scmp.ne.s32.totalorder %s94, %s108
    %p110 = scmp.eq.s32.totalorder %s16, 0
    %p111 = por %p109, %p110
    %s113 = sadd.s32 %s112, 1
    %p116 = scmp.eq.s32.totalorder %s10, 3
    %p117 = scmp.ne.s32.totalorder %s112, %s114
    %p118 = scmp.eq.s32.totalorder %s10, 0
    %p119 = por %p117, %p118
    %p120 = scmp.ne.s32.totalorder %s112, %s114
    %p121 = scmp.eq.s32.totalorder %s15, 3
    %p122 = por %p120, %p121
    %p123 = scmp.ne.s32.totalorder %s114, %s115
    %p124 = scmp.eq.s32.totalorder %s15, 0
    %p125 = por %p123, %p124
    %p126 = scmp.ne.s32.totalorder %s114, %s115
    %p127 = scmp.eq.s32.totalorder %s16, 3
    %p128 = por %p126, %p127
    %p130 = scmp.ne.s32.totalorder %s115, %s129
    %p131 = scmp.eq.s32.totalorder %s16, 0
    %p132 = por %p130, %p131
    %p133 = scmp.le.s32.totalorder 1, %s10
    %p134 = scmp.lt.s32.totalorder %s10, 5
    %p135 = pnand %p133, %p134
    %p136 = pneg %p135
    // Predicated region
    $region9: #{generator_forward.6} parent=5 // pred_check
      _
    $region10: #{generator_forward.6} parent=5 // pred_check_branch
      %138 = sbr.rel (%p135) target = $region12
    $region11: #{generator_forward.6} parent=5 // pred_region
      %s139 = ssub.s32 %s10, 1
      // Predicated region
      $region13: #{generator_forward.6} parent=11 // pred_check
        %p140 = pneg %p83
      $region14: #{generator_forward.6} parent=11 // pred_check_branch
        %142 = sbr.rel (%p140) target = $region16
      $region15: #{generator_forward.6} parent=11 // pred_region
        _
      $region16: #{generator_forward.6} parent=11 // pred_fallthru
        _
      // Predicated region
      $region17: #{generator_forward.6} parent=11 // pred_check
        %p143 = pneg %p104
      $region18: #{generator_forward.6} parent=11 // pred_check_branch
        %145 = sbr.rel (%p143) target = $region20
      $region19: #{generator_forward.6} parent=11 // pred_region
        _
      $region20: #{generator_forward.6} parent=11 // pred_fallthru
        _
    $region12: #{generator_forward.6} parent=5 // pred_fallthru
      _
    %p146 = scmp.lt.s32.totalorder %s10, 4
    // Predicated region
    $region21: #{generator_forward.6} parent=5 // pred_check
      %p147 = pneg %p146
    $region22: #{generator_forward.6} parent=5 // pred_check_branch
      %149 = sbr.rel (%p147) target = $region24
    $region23: #{generator_forward.6} parent=5 // pred_region
      // Predicated region
      $region25: #{generator_forward.6} parent=23 // pred_check
        %p150 = pneg %p30
      $region26: #{generator_forward.6} parent=23 // pred_check_branch
        %152 = sbr.rel (%p150) target = $region28
      $region27: #{generator_forward.6} parent=23 // pred_region
        %p153 = scmp.lt.s32.totalorder %s10, 3
        %s154 = scalar_select %p153, %s10, 3
        %s155 = smul.addr %s154, 4
        %s156 = smul.addr %s155, 4
        %s157 = scalar_lea.vmem %s0, %s156
      $region28: #{generator_forward.6} parent=23 // pred_fallthru
        _
      // Predicated region
      $region29: #{generator_forward.6} parent=23 // pred_check
        %p158 = pneg %p56
      $region30: #{generator_forward.6} parent=23 // pred_check_branch
        %160 = sbr.rel (%p158) target = $region32
      $region31: #{generator_forward.6} parent=23 // pred_region
        %p161 = scmp.lt.s32.totalorder %s10, 3
        %s162 = scalar_select %p161, %s10, 3
        %s163 = smul.addr %s162, 16
        %s164 = smul.addr %s163, 4
        %s165 = scalar_lea.vmem %s1, %s164
      $region32: #{generator_forward.6} parent=23 // pred_fallthru
        _
    $region24: #{generator_forward.6} parent=5 // pred_fallthru
      _
    %p166 = scmp.le.s32.totalorder 1, %s10
    %p167 = scmp.lt.s32.totalorder %s10, 5
    %p168 = pnand %p166, %p167
    %p169 = pneg %p168
    // Predicated region
    $region33: #{generator_forward.6} parent=5 // pred_check
      _
    $region34: #{generator_forward.6} parent=5 // pred_check_branch
      %171 = sbr.rel (%p168) target = $region36
    $region35: #{generator_forward.6} parent=5 // pred_region
      %s172 = ssub.s32 %s10, 1
      %p173 = scmp.lt.s32.totalorder %s15, 3
      %s174 = scalar_select %p173, %s15, 3
      %s175 = smul.addr %s174, 4
      %s176 = smul.addr %s175, 4
      %s177 = scalar_lea.vmem %s0, %s176
      %p178 = pneg %p36
      %p179 = pneg %p33
      %p180 = scmp.lt.s32.totalorder %s15, 3
      %s181 = scalar_select %p180, %s15, 3
      %s182 = smul.addr %s181, 16
      %s183 = smul.addr %s182, 4
      %s184 = scalar_lea.vmem %s1, %s183
      %p185 = pneg %p62
      %p186 = pneg %p59
      %p187 = pneg %p83
      %p188 = pneg %p80
      %p189 = pneg %p104
      %p190 = pneg %p101
      %p191 = pneg %p125
      %p192 = pneg %p122
      %p193 = scmp.lt.s32.totalorder %s15, 3
      %s194 = scalar_select %p193, %s15, 3
      %s195 = smul.addr %s194, 4
      %s196 = smul.addr %s195, 4
      %s197 = scalar_lea.vmem %s0, %s196
      %p198 = scmp.lt.s32.totalorder %s15, 3
      %s199 = scalar_select %p198, %s15, 3
      %s200 = smul.addr %s199, 16
      %s201 = smul.addr %s200, 4
      %s202 = scalar_lea.vmem %s1, %s201
      %v204 = vld [vmem:[%s197] sm:$0xf]
      %v205 = vld [vmem:[%s197 + $0x4] sm:$0xf]
      %v206 = vld [vmem:[%s197 + $0x8] sm:$0xf]
      %v207 = vld [vmem:[%s197 + $0xc] sm:$0xf]
      %v208 = vld [vmem:[%s202] sm:$0xf]
      %v209 = vld [vmem:[%s202 + $0x4] sm:$0xf]
      %v210 = vld [vmem:[%s202 + $0x8] sm:$0xf]
      %v211 = vld [vmem:[%s202 + $0xc] sm:$0xf]
      %v212 = vld [vmem:[%s202 + $0x10] sm:$0xf]
      %v213 = vld [vmem:[%s202 + $0x14] sm:$0xf]
      %v214 = vld [vmem:[%s202 + $0x18] sm:$0xf]
      %v215 = vld [vmem:[%s202 + $0x1c] sm:$0xf]
      %v216 = vld [vmem:[%s202 + $0x20] sm:$0xf]
      %v217 = vld [vmem:[%s202 + $0x24] sm:$0xf]
      %v218 = vld [vmem:[%s202 + $0x28] sm:$0xf]
      %v219 = vld [vmem:[%s202 + $0x2c] sm:$0xf]
      %v220 = vld [vmem:[%s202 + $0x30] sm:$0xf]
      %v221 = vld [vmem:[%s202 + $0x34] sm:$0xf]
      %v222 = vld [vmem:[%s202 + $0x38] sm:$0xf]
      %v223 = vld [vmem:[%s202 + $0x3c] sm:$0xf]
      %v228 = vunpack.c.l.b16 %v204
      %v229 = vunpack.c.l.b16 %v205
      %v230 = vunpack.c.l.b16 %v206
      %v231 = vunpack.c.l.b16 %v207
      %v232 = vpack.c.b16 %v229, %v228
      %v233 = vpack.c.b16 %v231, %v230
      %v252 = vunpack.c.l.b16 %v208
      %v253 = vunpack.c.l.b16 %v209
      %v254 = vunpack.c.l.b16 %v210
      %v255 = vunpack.c.l.b16 %v211
      %v256 = vunpack.c.l.b16 %v212
      %v257 = vunpack.c.l.b16 %v213
      %v258 = vunpack.c.l.b16 %v214
      %v259 = vunpack.c.l.b16 %v215
      %v260 = vunpack.c.l.b16 %v216
      %v261 = vunpack.c.l.b16 %v217
      %v262 = vunpack.c.l.b16 %v218
      %v263 = vunpack.c.l.b16 %v219
      %v264 = vunpack.c.l.b16 %v220
      %v265 = vunpack.c.l.b16 %v221
      %v266 = vunpack.c.l.b16 %v222
      %v267 = vunpack.c.l.b16 %v223
      %v268 = vpack.c.b16 %v253, %v252
      %v269 = vpack.c.b16 %v255, %v254
      %v270 = vpack.c.b16 %v257, %v256
      %v271 = vpack.c.b16 %v259, %v258
      %v272 = vpack.c.b16 %v261, %v260
      %v273 = vpack.c.b16 %v263, %v262
      %v274 = vpack.c.b16 %v265, %v264
      %v275 = vpack.c.b16 %v267, %v266
      %284 = vmatprep.subr.bf16.mxu0 0
      %285 = vmatpush1.bf16.msra.mxu0 %v268
      %286 = vmatprep.subr.bf16.mxu0 0
      %287 = vmatpush1.bf16.msra.mxu0 %v269
      %288 = vmatprep.subr.bf16.mxu0 0
      %289 = vmatpush1.bf16.msra.mxu0 %v270
      %290 = vmatprep.subr.bf16.mxu0 0
      %291 = vmatpush1.bf16.msra.mxu0 %v271
      %292 = vmatprep.subr.bf16.mxu0 0
      %293 = vmatpush1.bf16.msra.mxu0 %v272
      %294 = vmatprep.subr.bf16.mxu0 0
      %295 = vmatpush1.bf16.msra.mxu0 %v273
      %296 = vmatprep.subr.bf16.mxu0 0
      %297 = vmatpush1.bf16.msra.mxu0 %v274
      %298 = vmatprep.subr.bf16.mxu0 0
      %299 = vmatpush1.bf16.msra.mxu0 %v275
      %300 = vmatprep.subr.bf16.mxu0 0
      %301 = vmatpush1.bf16.msra.mxu0 0
      %302 = vmatprep.subr.bf16.mxu0 0
      %303 = vmatpush1.bf16.msra.mxu0 0
      %304 = vmatprep.subr.bf16.mxu0 0
      %305 = vmatpush1.bf16.msra.mxu0 0
      %306 = vmatprep.subr.bf16.mxu0 0
      %307 = vmatpush1.bf16.msra.mxu0 0
      %308 = vmatprep.subr.bf16.mxu0 0
      %309 = vmatpush1.bf16.msra.mxu0 0
      %310 = vmatprep.subr.bf16.mxu0 0
      %311 = vmatpush1.bf16.msra.mxu0 0
      %312 = vmatprep.subr.bf16.mxu0 0
      %313 = vmatpush1.bf16.msra.mxu0 0
      %314 = vmatprep.subr.bf16.mxu0 0
      %315 = vmatpush1.bf16.msra.mxu0 0
      %316 = vmatprep.mubr.bf16.mxu0 0
      %317 = vmatmul.mubr.bf16.gmra.mrb[0].mxu0 %v232
      %v318 = vpop.f32.mrb[0].mxu0
      %v319 = vadd.f32 0.0, %v318
      %v320 = vpop.f32.mrb[0].mxu0
      %v321 = vpop.f32.mrb[0].mxu0
      %v322 = vadd.f32 0.0, %v321
      %v323 = vpop.f32.mrb[0].mxu0
      %324 = vmatprep.mubr.bf16.mxu0 0
      %325 = vmatmul.mubr.bf16.gmra.mrb[0].mxu0 %v233
      %v326 = vpop.f32.mrb[0].mxu0
      %v327 = vadd.f32 0.0, %v326
      %v328 = vpop.f32.mrb[0].mxu0
      %v329 = vpop.f32.mrb[0].mxu0
      %v330 = vadd.f32 0.0, %v329
      %v331 = vpop.f32.mrb[0].mxu0
      %332 = vdwg.mxu0
      %p333 = scmp.eq.s32.totalorder %s15, 0
      // Predicated region
      $region37: #{generator_forward.6} parent=35 // pred_check
        %p334 = pneg %p333
      $region38: #{generator_forward.6} parent=35 // pred_check_branch
        %336 = sbr.rel (%p334) target = $region40
      $region39: #{generator_forward.6} parent=35 // pred_region
        %337 = vst [vmem:[#allocation2] sm:$0x1] 0.0
        %338 = vst [vmem:[#allocation3] sm:$0x1] 0.0
      $region40: #{generator_forward.6} parent=35 // pred_fallthru
        _
      %v339 = vld [vmem:[#allocation2] sm:$0x1]
      %v340 = vadd.f32 %v319, %v322
      %v341 = vadd.f32 %v340, %v327
      %v342 = vadd.f32 %v341, %v330
      %v343 = vrot.slane %v342, 4
      %v344 = vadd.f32 %v342, %v343
      %v345 = vrot.slane %v344, 2
      %v346 = vadd.f32 %v344, %v345
      %v347 = vrot.slane %v346, 1
      %v348 = vadd.f32 %v346, %v347
      %v349 = vadd.f32 %v339, %v348
      %350 = vst [vmem:[#allocation2] sm:$0x1] %v349
      %v351 = vld [vmem:[#allocation3] sm:$0x1]
      %v352 = vmul.f32 %v319, %v319
      %v353 = vmul.f32 %v322, %v322
      %v354 = vmul.f32 %v327, %v327
      %v355 = vmul.f32 %v330, %v330
      %v356 = vadd.f32 %v352, %v353
      %v357 = vadd.f32 %v356, %v354
      %v358 = vadd.f32 %v357, %v355
      %v359 = vrot.slane %v358, 4
      %v360 = vadd.f32 %v358, %v359
      %v361 = vrot.slane %v360, 2
      %v362 = vadd.f32 %v360, %v361
      %v363 = vrot.slane %v362, 1
      %v364 = vadd.f32 %v362, %v363
      %v365 = vadd.f32 %v351, %v364
      %366 = vst [vmem:[#allocation3] sm:$0x1] %v365
      %v367 = vpack.c.bf16 %v322, %v319
      %v368 = vpack.c.bf16 %v330, %v327
      %v371 = vunpack.c.l.b16 %v367
      %v372 = vunpack.c.h.b16 %v367
      %v373 = vunpack.c.l.b16 %v368
      %v374 = vunpack.c.h.b16 %v368
      %v375 = vpack.c.b16 %v371, %v371
      %v376 = vpack.c.b16 %v372, %v372
      %v377 = vpack.c.b16 %v373, %v373
      %v378 = vpack.c.b16 %v374, %v374
      %s383 = smul.u32 %s15, 4
      %s384 = smul.addr %s383, 4
      %s385 = scalar_lea.vmem %s4, %s384
      %386 = vst [vmem:[%s385] sm:$0xf] %v375
      %387 = vst [vmem:[%s385 + $0x4] sm:$0xf] %v376
      %388 = vst [vmem:[%s385 + $0x8] sm:$0xf] %v377
      %389 = vst [vmem:[%s385 + $0xc] sm:$0xf] %v378
      %p390 = scmp.eq.s32.totalorder %s15, 3
      // Predicated region
      $region41: #{generator_forward.6} parent=35 // pred_check
        %p391 = pneg %p390
      $region42: #{generator_forward.6} parent=35 // pred_check_branch
        %393 = sbr.rel (%p391) target = $region44
      $region43: #{generator_forward.6} parent=35 // pred_region
        %v394 = vld [vmem:[#allocation2] sm:$0x1]
        %v395 = vrcp.pop 128.0
        %v396 = vmul.f32 %v394, %v395
        %v397 = vld [vmem:[#allocation3] sm:$0x1]
        %v398 = vmul.f32 %v397, %v395
        %v399 = vmul.f32 %v396, %v396
        %v400 = vsub.f32 %v398, %v399
        %v401 = vmax.f32 %v400, 0.0
        %v402 = vld [vmem:[%s2] sm:$0x1]
        %v403 = vadd.f32 %v401, 1e-05
        %v404 = vrsqrt.pop %v403
        %v405 = vmul.f32 %v402, %v404
        %v406 = vld [vmem:[%s3] sm:$0x1]
        %v407 = vmul.f32 %v396, %v405
        %v408 = vsub.f32 %v406, %v407
        %v409 = vld [vmem:[%s4] sm:$0xf]
        %v410 = vld [vmem:[%s4 + $0x4] sm:$0xf]
        %v411 = vld [vmem:[%s4 + $0x8] sm:$0xf]
        %v412 = vld [vmem:[%s4 + $0xc] sm:$0xf]
        %v413 = vld [vmem:[%s4 + $0x10] sm:$0xf]
        %v414 = vld [vmem:[%s4 + $0x14] sm:$0xf]
        %v415 = vld [vmem:[%s4 + $0x18] sm:$0xf]
        %v416 = vld [vmem:[%s4 + $0x1c] sm:$0xf]
        %v417 = vld [vmem:[%s4 + $0x20] sm:$0xf]
        %v418 = vld [vmem:[%s4 + $0x24] sm:$0xf]
        %v419 = vld [vmem:[%s4 + $0x28] sm:$0xf]
        %v420 = vld [vmem:[%s4 + $0x2c] sm:$0xf]
        %v421 = vld [vmem:[%s4 + $0x30] sm:$0xf]
        %v422 = vld [vmem:[%s4 + $0x34] sm:$0xf]
        %v423 = vld [vmem:[%s4 + $0x38] sm:$0xf]
        %v424 = vld [vmem:[%s4 + $0x3c] sm:$0xf]
        %v425 = vunpack.c.l.bf16 %v409
        %v426 = vunpack.c.l.bf16 %v410
        %v427 = vunpack.c.l.bf16 %v411
        %v428 = vunpack.c.l.bf16 %v412
        %v429 = vunpack.c.l.bf16 %v413
        %v430 = vunpack.c.l.bf16 %v414
        %v431 = vunpack.c.l.bf16 %v415
        %v432 = vunpack.c.l.bf16 %v416
        %v433 = vunpack.c.l.bf16 %v417
        %v434 = vunpack.c.l.bf16 %v418
        %v435 = vunpack.c.l.bf16 %v419
        %v436 = vunpack.c.l.bf16 %v420
        %v437 = vunpack.c.l.bf16 %v421
        %v438 = vunpack.c.l.bf16 %v422
        %v439 = vunpack.c.l.bf16 %v423
        %v440 = vunpack.c.l.bf16 %v424
        %v442 = vlaneseq
        %v443 = vshrl.u32 %v442, 7
        %v444 = vsub.s32 0, %v443
        %v445 = vrot.slane %v405, %v444
        %v447 = vmul.f32 %v425, %v445
        %v448 = vmul.f32 %v426, %v445
        %v449 = vmul.f32 %v427, %v445
        %v450 = vmul.f32 %v428, %v445
        %v451 = vmul.f32 %v429, %v445
        %v452 = vmul.f32 %v430, %v445
        %v453 = vmul.f32 %v431, %v445
        %v454 = vmul.f32 %v432, %v445
        %v455 = vmul.f32 %v433, %v445
        %v456 = vmul.f32 %v434, %v445
        %v457 = vmul.f32 %v435, %v445
        %v458 = vmul.f32 %v436, %v445
        %v459 = vmul.f32 %v437, %v445
        %v460 = vmul.f32 %v438, %v445
        %v461 = vmul.f32 %v439, %v445
        %v462 = vmul.f32 %v440, %v445
        %v464 = vlaneseq
        %v465 = vshrl.u32 %v464, 7
        %v466 = vsub.s32 0, %v465
        %v467 = vrot.slane %v408, %v466
        %v469 = vadd.f32 %v447, %v467
        %v470 = vadd.f32 %v448, %v467
        %v471 = vadd.f32 %v449, %v467
        %v472 = vadd.f32 %v450, %v467
        %v473 = vadd.f32 %v451, %v467
        %v474 = vadd.f32 %v452, %v467
        %v475 = vadd.f32 %v453, %v467
        %v476 = vadd.f32 %v454, %v467
        %v477 = vadd.f32 %v455, %v467
        %v478 = vadd.f32 %v456, %v467
        %v479 = vadd.f32 %v457, %v467
        %v480 = vadd.f32 %v458, %v467
        %v481 = vadd.f32 %v459, %v467
        %v482 = vadd.f32 %v460, %v467
        %v483 = vadd.f32 %v461, %v467
        %v484 = vadd.f32 %v462, %v467
        %v485 = vmax.f32 %v469, 0.0
        %v486 = vmax.f32 %v470, 0.0
        %v487 = vmax.f32 %v471, 0.0
        %v488 = vmax.f32 %v472, 0.0
        %v489 = vmax.f32 %v473, 0.0
        %v490 = vmax.f32 %v474, 0.0
        %v491 = vmax.f32 %v475, 0.0
        %v492 = vmax.f32 %v476, 0.0
        %v493 = vmax.f32 %v477, 0.0
        %v494 = vmax.f32 %v478, 0.0
        %v495 = vmax.f32 %v479, 0.0
        %v496 = vmax.f32 %v480, 0.0
        %v497 = vmax.f32 %v481, 0.0
        %v498 = vmax.f32 %v482, 0.0
        %v499 = vmax.f32 %v483, 0.0
        %v500 = vmax.f32 %v484, 0.0
        %v501 = vpack.c.bf16 %v486, %v485
        %v502 = vpack.c.bf16 %v488, %v487
        %v503 = vpack.c.bf16 %v490, %v489
        %v504 = vpack.c.bf16 %v492, %v491
        %v505 = vpack.c.bf16 %v494, %v493
        %v506 = vpack.c.bf16 %v496, %v495
        %v507 = vpack.c.bf16 %v498, %v497
        %v508 = vpack.c.bf16 %v500, %v499
        %v517 = vunpack.c.l.b16 %v501
        %v518 = vunpack.c.h.b16 %v501
        %v519 = vunpack.c.l.b16 %v502
        %v520 = vunpack.c.h.b16 %v502
        %v521 = vunpack.c.l.b16 %v503
        %v522 = vunpack.c.h.b16 %v503
        %v523 = vunpack.c.l.b16 %v504
        %v524 = vunpack.c.h.b16 %v504
        %v525 = vunpack.c.l.b16 %v505
        %v526 = vunpack.c.h.b16 %v505
        %v527 = vunpack.c.l.b16 %v506
        %v528 = vunpack.c.h.b16 %v506
        %v529 = vunpack.c.l.b16 %v507
        %v530 = vunpack.c.h.b16 %v507
        %v531 = vunpack.c.l.b16 %v508
        %v532 = vunpack.c.h.b16 %v508
        %v533 = vpack.c.b16 %v517, %v517
        %v534 = vpack.c.b16 %v518, %v518
        %v535 = vpack.c.b16 %v519, %v519
        %v536 = vpack.c.b16 %v520, %v520
        %v537 = vpack.c.b16 %v521, %v521
        %v538 = vpack.c.b16 %v522, %v522
        %v539 = vpack.c.b16 %v523, %v523
        %v540 = vpack.c.b16 %v524, %v524
        %v541 = vpack.c.b16 %v525, %v525
        %v542 = vpack.c.b16 %v526, %v526
        %v543 = vpack.c.b16 %v527, %v527
        %v544 = vpack.c.b16 %v528, %v528
        %v545 = vpack.c.b16 %v529, %v529
        %v546 = vpack.c.b16 %v530, %v530
        %v547 = vpack.c.b16 %v531, %v531
        %v548 = vpack.c.b16 %v532, %v532
        %565 = vst [vmem:[%s4] sm:$0xf] %v533
        %566 = vst [vmem:[%s4 + $0x4] sm:$0xf] %v534
        %567 = vst [vmem:[%s4 + $0x8] sm:$0xf] %v535
        %568 = vst [vmem:[%s4 + $0xc] sm:$0xf] %v536
        %569 = vst [vmem:[%s4 + $0x10] sm:$0xf] %v537
        %570 = vst [vmem:[%s4 + $0x14] sm:$0xf] %v538
        %571 = vst [vmem:[%s4 + $0x18] sm:$0xf] %v539
        %572 = vst [vmem:[%s4 + $0x1c] sm:$0xf] %v540
        %573 = vst [vmem:[%s4 + $0x20] sm:$0xf] %v541
        %574 = vst [vmem:[%s4 + $0x24] sm:$0xf] %v542
        %575 = vst [vmem:[%s4 + $0x28] sm:$0xf] %v543
        %576 = vst [vmem:[%s4 + $0x2c] sm:$0xf] %v544
        %577 = vst [vmem:[%s4 + $0x30] sm:$0xf] %v545
        %578 = vst [vmem:[%s4 + $0x34] sm:$0xf] %v546
        %579 = vst [vmem:[%s4 + $0x38] sm:$0xf] %v547
        %580 = vst [vmem:[%s4 + $0x3c] sm:$0xf] %v548
      $region44: #{generator_forward.6} parent=35 // pred_fallthru
        _
      // Predicated region
      $region45: #{generator_forward.6} parent=35 // pred_check
        %p581 = pneg %p122
      $region46: #{generator_forward.6} parent=35 // pred_check_branch
        %583 = sbr.rel (%p581) target = $region48
      $region47: #{generator_forward.6} parent=35 // pred_region
        _
      $region48: #{generator_forward.6} parent=35 // pred_fallthru
        _
      // Predicated region
      $region49: #{generator_forward.6} parent=35 // pred_check
        %p584 = pneg %p122
      $region50: #{generator_forward.6} parent=35 // pred_check_branch
        %586 = sbr.rel (%p584) target = $region52
      $region51: #{generator_forward.6} parent=35 // pred_region
        _
      $region52: #{generator_forward.6} parent=35 // pred_fallthru
        _
    $region36: #{generator_forward.6} parent=5 // pred_fallthru
      _
    %p587 = scmp.le.s32.totalorder 2, %s10
    // Predicated region
    $region53: #{generator_forward.6} parent=5 // pred_check
      %p588 = pneg %p587
    $region54: #{generator_forward.6} parent=5 // pred_check_branch
      %590 = sbr.rel (%p588) target = $region56
    $region55: #{generator_forward.6} parent=5 // pred_region
      %s591 = ssub.s32 %s10, 2
    $region56: #{generator_forward.6} parent=5 // pred_fallthru
      _
  $region6: #{generator_forward.6} parent=0 // loop_footer
    %s14 = sadd.s32 1, %s10
  $region7: #{generator_forward.6} parent=0 // loop_footer_branch
    %9 = sbr.rel target = $region3
  $region8: #{generator_forward.6} parent=0 // loop_exit
    _

// kernel: generator_forward.7
$region0: #{generator_forward.7}
  #allocation0 [shape = 'u32[]', space=smem, size = 0x4, offset = 0x4, fixed_abs, tag = 'smem constant byte address 0x4 - core index']
  #allocation1 [shape = 'u32[144,128]{1,0:T(1,128)}', space=vmem, size = 0x12000, scoped, tag = 'internal scratch']
  #allocation2 [shape = 'f32[1,128]{1,0:T(1,128)}', space=vmem, size = 0x200, scoped, tag = 'scratch operand']
  #allocation3 [shape = 'f32[1,128]{1,0:T(1,128)}', space=vmem, size = 0x200, scoped, tag = 'scratch operand']
  %s0 = inlined_call_operand.vmem [shape: bf16[4,128,64], index: 0, kind: input, shape index: {}]
  %s1 = inlined_call_operand.vmem [shape: bf16[4,64,128], index: 1, kind: input, shape index: {}]
  %s2 = inlined_call_operand.vmem [shape: f32[1,128], index: 2, kind: input, shape index: {}]
  %s3 = inlined_call_operand.vmem [shape: f32[1,128], index: 3, kind: input, shape index: {}]
  %s4 = inlined_call_operand.vmem [shape: bf16[4,128,128], index: 4, kind: output, shape index: {}]
  %s5 = sld [smem:[#allocation0]]
  $region57: #{generator_forward.7} parent=0
    _
  %s7 = ssub.s32 1, %s5
  %s8 = scalar_select 0, %s7, %s5
  loop: start=0, step=1, limit=6
  $region2: #{generator_forward.7} parent=0 // loop_pre_header
    _
  $region3: #{generator_forward.7} parent=0 // loop_header
    %s10 = sphi 0, %s14
    %p11 = scmp.ge.s32.totalorder %s10, 6
    %s20 = sphi 0, %s22
    %s23 = sphi 0, %s20
    %s24 = sphi 0, %s23
    %s40 = sphi 0, %s24
    %s46 = sphi 0, %s48
    %s49 = sphi 0, %s46
    %s50 = sphi 0, %s49
    %s66 = sphi 0, %s50
    %s70 = sphi 0, %s70
    %s72 = sphi 0, %s70
    %s73 = sphi 0, %s72
    %s87 = sphi 0, %s73
    %s91 = sphi 0, %s91
    %s93 = sphi 0, %s91
    %s94 = sphi 0, %s93
    %s108 = sphi 0, %s94
    %s112 = sphi 0, %s112
    %s114 = sphi 0, %s112
    %s115 = sphi 0, %s114
    %s129 = sphi 0, %s115
  $region4: #{generator_forward.7} parent=0 // loop_header_branch
    %13 = sbr.rel (%p11) target = $region8
  $region5: #{generator_forward.7} parent=0 // loop_body
    %s15 = ssub.s32 %s10, 1
    %s16 = ssub.s32 %s10, 2
    %s17 = sadd.s32 %s10, 1
    %s18 = ssub.s32 %s10, %s17
    %p19 = scmp.eq.s32.totalorder %s18, 0
    %s21 = sadd.s32 %s20, 1
    %s22 = scalar_select %p19, %s20, %s21
    %p25 = pneg %p19
    %p26 = scmp.eq.s32.totalorder %s10, 3
    %p27 = por %p25, %p26
    %p28 = scmp.ne.s32.totalorder %s20, %s23
    %p29 = scmp.eq.s32.totalorder %s10, 0
    %p30 = por %p28, %p29
    %p31 = scmp.ne.s32.totalorder %s20, %s23
    %p32 = scmp.eq.s32.totalorder %s15, 3
    %p33 = por %p31, %p32
    %p34 = scmp.ne.s32.totalorder %s23, %s24
    %p35 = scmp.eq.s32.totalorder %s15, 0
    %p36 = por %p34, %p35
    %p37 = scmp.ne.s32.totalorder %s23, %s24
    %p38 = scmp.eq.s32.totalorder %s16, 3
    %p39 = por %p37, %p38
    %p41 = scmp.ne.s32.totalorder %s24, %s40
    %p42 = scmp.eq.s32.totalorder %s16, 0
    %p43 = por %p41, %p42
    %s44 = ssub.s32 %s10, %s17
    %p45 = scmp.eq.s32.totalorder %s44, 0
    %s47 = sadd.s32 %s46, 1
    %s48 = scalar_select %p45, %s46, %s47
    %p51 = pneg %p45
    %p52 = scmp.eq.s32.totalorder %s10, 3
    %p53 = por %p51, %p52
    %p54 = scmp.ne.s32.totalorder %s46, %s49
    %p55 = scmp.eq.s32.totalorder %s10, 0
    %p56 = por %p54, %p55
    %p57 = scmp.ne.s32.totalorder %s46, %s49
    %p58 = scmp.eq.s32.totalorder %s15, 3
    %p59 = por %p57, %p58
    %p60 = scmp.ne.s32.totalorder %s49, %s50
    %p61 = scmp.eq.s32.totalorder %s15, 0
    %p62 = por %p60, %p61
    %p63 = scmp.ne.s32.totalorder %s49, %s50
    %p64 = scmp.eq.s32.totalorder %s16, 3
    %p65 = por %p63, %p64
    %p67 = scmp.ne.s32.totalorder %s50, %s66
    %p68 = scmp.eq.s32.totalorder %s16, 0
    %p69 = por %p67, %p68
    %s71 = sadd.s32 %s70, 1
    %p74 = scmp.eq.s32.totalorder %s10, 3
    %p75 = scmp.ne.s32.totalorder %s70, %s72
    %p76 = scmp.eq.s32.totalorder %s10, 0
    %p77 = por %p75, %p76
    %p78 = scmp.ne.s32.totalorder %s70, %s72
    %p79 = scmp.eq.s32.totalorder %s15, 3
    %p80 = por %p78, %p79
    %p81 = scmp.ne.s32.totalorder %s72, %s73
    %p82 = scmp.eq.s32.totalorder %s15, 0
    %p83 = por %p81, %p82
    %p84 = scmp.ne.s32.totalorder %s72, %s73
    %p85 = scmp.eq.s32.totalorder %s16, 3
    %p86 = por %p84, %p85
    %p88 = scmp.ne.s32.totalorder %s73, %s87
    %p89 = scmp.eq.s32.totalorder %s16, 0
    %p90 = por %p88, %p89
    %s92 = sadd.s32 %s91, 1
    %p95 = scmp.eq.s32.totalorder %s10, 3
    %p96 = scmp.ne.s32.totalorder %s91, %s93
    %p97 = scmp.eq.s32.totalorder %s10, 0
    %p98 = por %p96, %p97
    %p99 = scmp.ne.s32.totalorder %s91, %s93
    %p100 = scmp.eq.s32.totalorder %s15, 3
    %p101 = por %p99, %p100
    %p102 = scmp.ne.s32.totalorder %s93, %s94
    %p103 = scmp.eq.s32.totalorder %s15, 0
    %p104 = por %p102, %p103
    %p105 = scmp.ne.s32.totalorder %s93, %s94
    %p106 = scmp.eq.s32.totalorder %s16, 3
    %p107 = por %p105, %p106
    %p109 = scmp.ne.s32.totalorder %s94, %s108
    %p110 = scmp.eq.s32.totalorder %s16, 0
    %p111 = por %p109, %p110
    %s113 = sadd.s32 %s112, 1
    %p116 = scmp.eq.s32.totalorder %s10, 3
    %p117 = scmp.ne.s32.totalorder %s112, %s114
    %p118 = scmp.eq.s32.totalorder %s10, 0
    %p119 = por %p117, %p118
    %p120 = scmp.ne.s32.totalorder %s112, %s114
    %p121 = scmp.eq.s32.totalorder %s15, 3
    %p122 = por %p120, %p121
    %p123 = scmp.ne.s32.totalorder %s114, %s115
    %p124 = scmp.eq.s32.totalorder %s15, 0
    %p125 = por %p123, %p124
    %p126 = scmp.ne.s32.totalorder %s114, %s115
    %p127 = scmp.eq.s32.totalorder %s16, 3
    %p128 = por %p126, %p127
    %p130 = scmp.ne.s32.totalorder %s115, %s129
    %p131 = scmp.eq.s32.totalorder %s16, 0
    %p132 = por %p130, %p131
    %p133 = scmp.le.s32.totalorder 1, %s10
    %p134 = scmp.lt.s32.totalorder %s10, 5
    %p135 = pnand %p133, %p134
    %p136 = pneg %p135
    // Predicated region
    $region9: #{generator_forward.7} parent=5 // pred_check
      _
    $region10: #{generator_forward.7} parent=5 // pred_check_branch
      %138 = sbr.rel (%p135) target = $region12
    $region11: #{generator_forward.7} parent=5 // pred_region
      %s139 = ssub.s32 %s10, 1
      // Predicated region
      $region13: #{generator_forward.7} parent=11 // pred_check
        %p140 = pneg %p83
      $region14: #{generator_forward.7} parent=11 // pred_check_branch
        %142 = sbr.rel (%p140) target = $region16
      $region15: #{generator_forward.7} parent=11 // pred_region
        _
      $region16: #{generator_forward.7} parent=11 // pred_fallthru
        _
      // Predicated region
      $region17: #{generator_forward.7} parent=11 // pred_check
        %p143 = pneg %p104
      $region18: #{generator_forward.7} parent=11 // pred_check_branch
        %145 = sbr.rel (%p143) target = $region20
      $region19: #{generator_forward.7} parent=11 // pred_region
        _
      $region20: #{generator_forward.7} parent=11 // pred_fallthru
        _
    $region12: #{generator_forward.7} parent=5 // pred_fallthru
      _
    %p146 = scmp.lt.s32.totalorder %s10, 4
    // Predicated region
    $region21: #{generator_forward.7} parent=5 // pred_check
      %p147 = pneg %p146
    $region22: #{generator_forward.7} parent=5 // pred_check_branch
      %149 = sbr.rel (%p147) target = $region24
    $region23: #{generator_forward.7} parent=5 // pred_region
      // Predicated region
      $region25: #{generator_forward.7} parent=23 // pred_check
        %p150 = pneg %p30
      $region26: #{generator_forward.7} parent=23 // pred_check_branch
        %152 = sbr.rel (%p150) target = $region28
      $region27: #{generator_forward.7} parent=23 // pred_region
        %p153 = scmp.lt.s32.totalorder %s10, 3
        %s154 = scalar_select %p153, %s10, 3
        %s155 = smul.addr %s154, 16
        %s156 = smul.addr %s155, 4
        %s157 = scalar_lea.vmem %s0, %s156
      $region28: #{generator_forward.7} parent=23 // pred_fallthru
        _
      // Predicated region
      $region29: #{generator_forward.7} parent=23 // pred_check
        %p158 = pneg %p56
      $region30: #{generator_forward.7} parent=23 // pred_check_branch
        %160 = sbr.rel (%p158) target = $region32
      $region31: #{generator_forward.7} parent=23 // pred_region
        %p161 = scmp.lt.s32.totalorder %s10, 3
        %s162 = scalar_select %p161, %s10, 3
        %s163 = smul.addr %s162, 8
        %s164 = smul.addr %s163, 4
        %s165 = scalar_lea.vmem %s1, %s164
      $region32: #{generator_forward.7} parent=23 // pred_fallthru
        _
    $region24: #{generator_forward.7} parent=5 // pred_fallthru
      _
    %p166 = scmp.le.s32.totalorder 1, %s10
    %p167 = scmp.lt.s32.totalorder %s10, 5
    %p168 = pnand %p166, %p167
    %p169 = pneg %p168
    // Predicated region
    $region33: #{generator_forward.7} parent=5 // pred_check
      _
    $region34: #{generator_forward.7} parent=5 // pred_check_branch
      %171 = sbr.rel (%p168) target = $region36
    $region35: #{generator_forward.7} parent=5 // pred_region
      %s172 = ssub.s32 %s10, 1
      %p173 = scmp.lt.s32.totalorder %s15, 3
      %s174 = scalar_select %p173, %s15, 3
      %s175 = smul.addr %s174, 16
      %s176 = smul.addr %s175, 4
      %s177 = scalar_lea.vmem %s0, %s176
      %p178 = pneg %p36
      %p179 = pneg %p33
      %p180 = scmp.lt.s32.totalorder %s15, 3
      %s181 = scalar_select %p180, %s15, 3
      %s182 = smul.addr %s181, 8
      %s183 = smul.addr %s182, 4
      %s184 = scalar_lea.vmem %s1, %s183
      %p185 = pneg %p62
      %p186 = pneg %p59
      %p187 = pneg %p83
      %p188 = pneg %p80
      %p189 = pneg %p104
      %p190 = pneg %p101
      %p191 = pneg %p125
      %p192 = pneg %p122
      %p193 = scmp.lt.s32.totalorder %s15, 3
      %s194 = scalar_select %p193, %s15, 3
      %s195 = smul.addr %s194, 16
      %s196 = smul.addr %s195, 4
      %s197 = scalar_lea.vmem %s0, %s196
      %p198 = scmp.lt.s32.totalorder %s15, 3
      %s199 = scalar_select %p198, %s15, 3
      %s200 = smul.addr %s199, 8
      %s201 = smul.addr %s200, 4
      %s202 = scalar_lea.vmem %s1, %s201
      %v204 = vld [vmem:[%s197] sm:$0xf]
      %v205 = vld [vmem:[%s197 + $0x4] sm:$0xf]
      %v206 = vld [vmem:[%s197 + $0x8] sm:$0xf]
      %v207 = vld [vmem:[%s197 + $0xc] sm:$0xf]
      %v208 = vld [vmem:[%s197 + $0x10] sm:$0xf]
      %v209 = vld [vmem:[%s197 + $0x14] sm:$0xf]
      %v210 = vld [vmem:[%s197 + $0x18] sm:$0xf]
      %v211 = vld [vmem:[%s197 + $0x1c] sm:$0xf]
      %v212 = vld [vmem:[%s197 + $0x20] sm:$0xf]
      %v213 = vld [vmem:[%s197 + $0x24] sm:$0xf]
      %v214 = vld [vmem:[%s197 + $0x28] sm:$0xf]
      %v215 = vld [vmem:[%s197 + $0x2c] sm:$0xf]
      %v216 = vld [vmem:[%s197 + $0x30] sm:$0xf]
      %v217 = vld [vmem:[%s197 + $0x34] sm:$0xf]
      %v218 = vld [vmem:[%s197 + $0x38] sm:$0xf]
      %v219 = vld [vmem:[%s197 + $0x3c] sm:$0xf]
      %v220 = vld [vmem:[%s202] sm:$0xf]
      %v221 = vld [vmem:[%s202 + $0x4] sm:$0xf]
      %v222 = vld [vmem:[%s202 + $0x8] sm:$0xf]
      %v223 = vld [vmem:[%s202 + $0xc] sm:$0xf]
      %v224 = vld [vmem:[%s202 + $0x10] sm:$0xf]
      %v225 = vld [vmem:[%s202 + $0x14] sm:$0xf]
      %v226 = vld [vmem:[%s202 + $0x18] sm:$0xf]
      %v227 = vld [vmem:[%s202 + $0x1c] sm:$0xf]
      %v244 = vunpack.c.l.b16 %v204
      %v245 = vunpack.c.l.b16 %v205
      %v246 = vunpack.c.l.b16 %v206
      %v247 = vunpack.c.l.b16 %v207
      %v248 = vunpack.c.l.b16 %v208
      %v249 = vunpack.c.l.b16 %v209
      %v250 = vunpack.c.l.b16 %v210
      %v251 = vunpack.c.l.b16 %v211
      %v252 = vunpack.c.l.b16 %v212
      %v253 = vunpack.c.l.b16 %v213
      %v254 = vunpack.c.l.b16 %v214
      %v255 = vunpack.c.l.b16 %v215
      %v256 = vunpack.c.l.b16 %v216
      %v257 = vunpack.c.l.b16 %v217
      %v258 = vunpack.c.l.b16 %v218
      %v259 = vunpack.c.l.b16 %v219
      %v260 = vpack.c.b16 %v245, %v244
      %v261 = vpack.c.b16 %v247, %v246
      %v262 = vpack.c.b16 %v249, %v248
      %v263 = vpack.c.b16 %v251, %v250
      %v264 = vpack.c.b16 %v253, %v252
      %v265 = vpack.c.b16 %v255, %v254
      %v266 = vpack.c.b16 %v257, %v256
      %v267 = vpack.c.b16 %v259, %v258
      %v276 = vunpack.c.l.b16 %v220
      %v277 = vunpack.c.l.b16 %v221
      %v278 = vunpack.c.l.b16 %v222
      %v279 = vunpack.c.l.b16 %v223
      %v280 = vunpack.c.l.b16 %v224
      %v281 = vunpack.c.l.b16 %v225
      %v282 = vunpack.c.l.b16 %v226
      %v283 = vunpack.c.l.b16 %v227
      %v284 = vpack.c.b16 %v277, %v276
      %v285 = vpack.c.b16 %v279, %v278
      %v286 = vpack.c.b16 %v281, %v280
      %v287 = vpack.c.b16 %v283, %v282
      %vm292 = vcmask 523264
      %v294 = vsel %vm292, %v260, 0
      %v297 = vsel %vm292, %v261, 0
      %v300 = vsel %vm292, %v262, 0
      %v303 = vsel %vm292, %v263, 0
      %v306 = vsel %vm292, %v264, 0
      %v309 = vsel %vm292, %v265, 0
      %v312 = vsel %vm292, %v266, 0
      %v315 = vsel %vm292, %v267, 0
      %317 = vmatprep.subr.bf16.mxu0 0
      %318 = vmatpush1.bf16.msra.mxu0 %v284
      %319 = vmatprep.subr.bf16.mxu0 0
      %320 = vmatpush1.bf16.msra.mxu0 %v285
      %321 = vmatprep.subr.bf16.mxu0 0
      %322 = vmatpush1.bf16.msra.mxu0 %v286
      %323 = vmatprep.subr.bf16.mxu0 0
      %324 = vmatpush1.bf16.msra.mxu0 %v287
      %325 = vmatprep.subr.bf16.mxu0 0
      %326 = vmatpush1.bf16.msra.mxu0 0
      %327 = vmatprep.subr.bf16.mxu0 0
      %328 = vmatpush1.bf16.msra.mxu0 0
      %329 = vmatprep.subr.bf16.mxu0 0
      %330 = vmatpush1.bf16.msra.mxu0 0
      %331 = vmatprep.subr.bf16.mxu0 0
      %332 = vmatpush1.bf16.msra.mxu0 0
      %333 = vmatprep.subr.bf16.mxu0 0
      %334 = vmatpush1.bf16.msra.mxu0 0
      %335 = vmatprep.subr.bf16.mxu0 0
      %336 = vmatpush1.bf16.msra.mxu0 0
      %337 = vmatprep.subr.bf16.mxu0 0
      %338 = vmatpush1.bf16.msra.mxu0 0
      %339 = vmatprep.subr.bf16.mxu0 0
      %340 = vmatpush1.bf16.msra.mxu0 0
      %341 = vmatprep.subr.bf16.mxu0 0
      %342 = vmatpush1.bf16.msra.mxu0 0
      %343 = vmatprep.subr.bf16.mxu0 0
      %344 = vmatpush1.bf16.msra.mxu0 0
      %345 = vmatprep.subr.bf16.mxu0 0
      %346 = vmatpush1.bf16.msra.mxu0 0
      %347 = vmatprep.subr.bf16.mxu0 0
      %348 = vmatpush1.bf16.msra.mxu0 0
      %349 = vmatprep.mubr.bf16.mxu0 0
      %350 = vmatmul.mubr.bf16.gmra.mrb[0].mxu0 %v294
      %v351 = vpop.f32.mrb[0].mxu0
      %v352 = vadd.f32 0.0, %v351
      %v353 = vpop.f32.mrb[0].mxu0
      %v354 = vpop.f32.mrb[0].mxu0
      %v355 = vadd.f32 0.0, %v354
      %v356 = vpop.f32.mrb[0].mxu0
      %357 = vmatprep.mubr.bf16.mxu0 0
      %358 = vmatmul.mubr.bf16.gmra.mrb[0].mxu0 %v297
      %v359 = vpop.f32.mrb[0].mxu0
      %v360 = vadd.f32 0.0, %v359
      %v361 = vpop.f32.mrb[0].mxu0
      %v362 = vpop.f32.mrb[0].mxu0
      %v363 = vadd.f32 0.0, %v362
      %v364 = vpop.f32.mrb[0].mxu0
      %365 = vmatprep.mubr.bf16.mxu0 0
      %366 = vmatmul.mubr.bf16.gmra.mrb[0].mxu0 %v300
      %v367 = vpop.f32.mrb[0].mxu0
      %v368 = vadd.f32 0.0, %v367
      %v369 = vpop.f32.mrb[0].mxu0
      %v370 = vpop.f32.mrb[0].mxu0
      %v371 = vadd.f32 0.0, %v370
      %v372 = vpop.f32.mrb[0].mxu0
      %373 = vmatprep.mubr.bf16.mxu0 0
      %374 = vmatmul.mubr.bf16.gmra.mrb[0].mxu0 %v303
      %v375 = vpop.f32.mrb[0].mxu0
      %v376 = vadd.f32 0.0, %v375
      %v377 = vpop.f32.mrb[0].mxu0
      %v378 = vpop.f32.mrb[0].mxu0
      %v379 = vadd.f32 0.0, %v378
      %v380 = vpop.f32.mrb[0].mxu0
      %381 = vmatprep.mubr.bf16.mxu0 0
      %382 = vmatmul.mubr.bf16.gmra.mrb[0].mxu0 %v306
      %v383 = vpop.f32.mrb[0].mxu0
      %v384 = vadd.f32 0.0, %v383
      %v385 = vpop.f32.mrb[0].mxu0
      %v386 = vpop.f32.mrb[0].mxu0
      %v387 = vadd.f32 0.0, %v386
      %v388 = vpop.f32.mrb[0].mxu0
      %389 = vmatprep.mubr.bf16.mxu0 0
      %390 = vmatmul.mubr.bf16.gmra.mrb[0].mxu0 %v309
      %v391 = vpop.f32.mrb[0].mxu0
      %v392 = vadd.f32 0.0, %v391
      %v393 = vpop.f32.mrb[0].mxu0
      %v394 = vpop.f32.mrb[0].mxu0
      %v395 = vadd.f32 0.0, %v394
      %v396 = vpop.f32.mrb[0].mxu0
      %397 = vmatprep.mubr.bf16.mxu0 0
      %398 = vmatmul.mubr.bf16.gmra.mrb[0].mxu0 %v312
      %v399 = vpop.f32.mrb[0].mxu0
      %v400 = vadd.f32 0.0, %v399
      %v401 = vpop.f32.mrb[0].mxu0
      %v402 = vpop.f32.mrb[0].mxu0
      %v403 = vadd.f32 0.0, %v402
      %v404 = vpop.f32.mrb[0].mxu0
      %405 = vmatprep.mubr.bf16.mxu0 0
      %406 = vmatmul.mubr.bf16.gmra.mrb[0].mxu0 %v315
      %v407 = vpop.f32.mrb[0].mxu0
      %v408 = vadd.f32 0.0, %v407
      %v409 = vpop.f32.mrb[0].mxu0
      %v410 = vpop.f32.mrb[0].mxu0
      %v411 = vadd.f32 0.0, %v410
      %v412 = vpop.f32.mrb[0].mxu0
      %413 = vdwg.mxu0
      %p414 = scmp.eq.s32.totalorder %s15, 0
      // Predicated region
      $region37: #{generator_forward.7} parent=35 // pred_check
        %p415 = pneg %p414
      $region38: #{generator_forward.7} parent=35 // pred_check_branch
        %417 = sbr.rel (%p415) target = $region40
      $region39: #{generator_forward.7} parent=35 // pred_region
        %418 = vst [vmem:[#allocation2] sm:$0x1] 0.0
        %419 = vst [vmem:[#allocation3] sm:$0x1] 0.0
      $region40: #{generator_forward.7} parent=35 // pred_fallthru
        _
      %v420 = vld [vmem:[#allocation2] sm:$0x1]
      %v421 = vadd.f32 %v352, %v355
      %v422 = vadd.f32 %v421, %v360
      %v423 = vadd.f32 %v422, %v363
      %v424 = vadd.f32 %v423, %v368
      %v425 = vadd.f32 %v424, %v371
      %v426 = vadd.f32 %v425, %v376
      %v427 = vadd.f32 %v426, %v379
      %v428 = vadd.f32 %v427, %v384
      %v429 = vadd.f32 %v428, %v387
      %v430 = vadd.f32 %v429, %v392
      %v431 = vadd.f32 %v430, %v395
      %v432 = vadd.f32 %v431, %v400
      %v433 = vadd.f32 %v432, %v403
      %v434 = vadd.f32 %v433, %v408
      %v435 = vadd.f32 %v434, %v411
      %v436 = vrot.slane %v435, 4
      %v437 = vadd.f32 %v435, %v436
      %v438 = vrot.slane %v437, 2
      %v439 = vadd.f32 %v437, %v438
      %v440 = vrot.slane %v439, 1
      %v441 = vadd.f32 %v439, %v440
      %v442 = vadd.f32 %v420, %v441
      %443 = vst [vmem:[#allocation2] sm:$0x1] %v442
      %v444 = vld [vmem:[#allocation3] sm:$0x1]
      %v445 = vmul.f32 %v352, %v352
      %v446 = vmul.f32 %v355, %v355
      %v447 = vmul.f32 %v360, %v360
      %v448 = vmul.f32 %v363, %v363
      %v449 = vmul.f32 %v368, %v368
      %v450 = vmul.f32 %v371, %v371
      %v451 = vmul.f32 %v376, %v376
      %v452 = vmul.f32 %v379, %v379
      %v453 = vmul.f32 %v384, %v384
      %v454 = vmul.f32 %v387, %v387
      %v455 = vmul.f32 %v392, %v392
      %v456 = vmul.f32 %v395, %v395
      %v457 = vmul.f32 %v400, %v400
      %v458 = vmul.f32 %v403, %v403
      %v459 = vmul.f32 %v408, %v408
      %v460 = vmul.f32 %v411, %v411
      %v461 = vadd.f32 %v445, %v446
      %v462 = vadd.f32 %v461, %v447
      %v463 = vadd.f32 %v462, %v448
      %v464 = vadd.f32 %v463, %v449
      %v465 = vadd.f32 %v464, %v450
      %v466 = vadd.f32 %v465, %v451
      %v467 = vadd.f32 %v466, %v452
      %v468 = vadd.f32 %v467, %v453
      %v469 = vadd.f32 %v468, %v454
      %v470 = vadd.f32 %v469, %v455
      %v471 = vadd.f32 %v470, %v456
      %v472 = vadd.f32 %v471, %v457
      %v473 = vadd.f32 %v472, %v458
      %v474 = vadd.f32 %v473, %v459
      %v475 = vadd.f32 %v474, %v460
      %v476 = vrot.slane %v475, 4
      %v477 = vadd.f32 %v475, %v476
      %v478 = vrot.slane %v477, 2
      %v479 = vadd.f32 %v477, %v478
      %v480 = vrot.slane %v479, 1
      %v481 = vadd.f32 %v479, %v480
      %v482 = vadd.f32 %v444, %v481
      %483 = vst [vmem:[#allocation3] sm:$0x1] %v482
      %v484 = vpack.c.bf16 %v355, %v352
      %v485 = vpack.c.bf16 %v363, %v360
      %v486 = vpack.c.bf16 %v371, %v368
      %v487 = vpack.c.bf16 %v379, %v376
      %v488 = vpack.c.bf16 %v387, %v384
      %v489 = vpack.c.bf16 %v395, %v392
      %v490 = vpack.c.bf16 %v403, %v400
      %v491 = vpack.c.bf16 %v411, %v408
      %v500 = vunpack.c.l.b16 %v484
      %v501 = vunpack.c.h.b16 %v484
      %v502 = vunpack.c.l.b16 %v485
      %v503 = vunpack.c.h.b16 %v485
      %v504 = vunpack.c.l.b16 %v486
      %v505 = vunpack.c.h.b16 %v486
      %v506 = vunpack.c.l.b16 %v487
      %v507 = vunpack.c.h.b16 %v487
      %v508 = vunpack.c.l.b16 %v488
      %v509 = vunpack.c.h.b16 %v488
      %v510 = vunpack.c.l.b16 %v489
      %v511 = vunpack.c.h.b16 %v489
      %v512 = vunpack.c.l.b16 %v490
      %v513 = vunpack.c.h.b16 %v490
      %v514 = vunpack.c.l.b16 %v491
      %v515 = vunpack.c.h.b16 %v491
      %v516 = vpack.c.b16 %v500, %v500
      %v517 = vpack.c.b16 %v501, %v501
      %v518 = vpack.c.b16 %v502, %v502
      %v519 = vpack.c.b16 %v503, %v503
      %v520 = vpack.c.b16 %v504, %v504
      %v521 = vpack.c.b16 %v505, %v505
      %v522 = vpack.c.b16 %v506, %v506
      %v523 = vpack.c.b16 %v507, %v507
      %v524 = vpack.c.b16 %v508, %v508
      %v525 = vpack.c.b16 %v509, %v509
      %v526 = vpack.c.b16 %v510, %v510
      %v527 = vpack.c.b16 %v511, %v511
      %v528 = vpack.c.b16 %v512, %v512
      %v529 = vpack.c.b16 %v513, %v513
      %v530 = vpack.c.b16 %v514, %v514
      %v531 = vpack.c.b16 %v515, %v515
      %s548 = smul.u32 %s15, 16
      %s549 = smul.addr %s548, 4
      %s550 = scalar_lea.vmem %s4, %s549
      %551 = vst [vmem:[%s550] sm:$0xf] %v516
      %552 = vst [vmem:[%s550 + $0x4] sm:$0xf] %v517
      %553 = vst [vmem:[%s550 + $0x8] sm:$0xf] %v518
      %554 = vst [vmem:[%s550 + $0xc] sm:$0xf] %v519
      %555 = vst [vmem:[%s550 + $0x10] sm:$0xf] %v520
      %556 = vst [vmem:[%s550 + $0x14] sm:$0xf] %v521
      %557 = vst [vmem:[%s550 + $0x18] sm:$0xf] %v522
      %558 = vst [vmem:[%s550 + $0x1c] sm:$0xf] %v523
      %559 = vst [vmem:[%s550 + $0x20] sm:$0xf] %v524
      %560 = vst [vmem:[%s550 + $0x24] sm:$0xf] %v525
      %561 = vst [vmem:[%s550 + $0x28] sm:$0xf] %v526
      %562 = vst [vmem:[%s550 + $0x2c] sm:$0xf] %v527
      %563 = vst [vmem:[%s550 + $0x30] sm:$0xf] %v528
      %564 = vst [vmem:[%s550 + $0x34] sm:$0xf] %v529
      %565 = vst [vmem:[%s550 + $0x38] sm:$0xf] %v530
      %566 = vst [vmem:[%s550 + $0x3c] sm:$0xf] %v531
      %p567 = scmp.eq.s32.totalorder %s15, 3
      // Predicated region
      $region41: #{generator_forward.7} parent=35 // pred_check
        %p568 = pneg %p567
      $region42: #{generator_forward.7} parent=35 // pred_check_branch
        %570 = sbr.rel (%p568) target = $region44
      $region43: #{generator_forward.7} parent=35 // pred_region
        %v571 = vld [vmem:[#allocation2] sm:$0x1]
        %v572 = vrcp.pop 512.0
        %v573 = vmul.f32 %v571, %v572
        %v574 = vld [vmem:[#allocation3] sm:$0x1]
        %v575 = vmul.f32 %v574, %v572
        %v576 = vmul.f32 %v573, %v573
        %v577 = vsub.f32 %v575, %v576
        %v578 = vmax.f32 %v577, 0.0
        %v579 = vld [vmem:[%s2] sm:$0x1]
        %v580 = vadd.f32 %v578, 1e-05
        %v581 = vrsqrt.pop %v580
        %v582 = vmul.f32 %v579, %v581
        %v583 = vld [vmem:[%s3] sm:$0x1]
        %v584 = vmul.f32 %v573, %v582
        %v585 = vsub.f32 %v583, %v584
        %v586 = vld [vmem:[%s4] sm:$0xf]
        %v587 = vld [vmem:[%s4 + $0x4] sm:$0xf]
        %v588 = vld [vmem:[%s4 + $0x8] sm:$0xf]
        %v589 = vld [vmem:[%s4 + $0xc] sm:$0xf]
        %v590 = vld [vmem:[%s4 + $0x10] sm:$0xf]
        %v591 = vld [vmem:[%s4 + $0x14] sm:$0xf]
        %v592 = vld [vmem:[%s4 + $0x18] sm:$0xf]
        %v593 = vld [vmem:[%s4 + $0x1c] sm:$0xf]
        %v594 = vld [vmem:[%s4 + $0x20] sm:$0xf]
        %v595 = vld [vmem:[%s4 + $0x24] sm:$0xf]
        %v596 = vld [vmem:[%s4 + $0x28] sm:$0xf]
        %v597 = vld [vmem:[%s4 + $0x2c] sm:$0xf]
        %v598 = vld [vmem:[%s4 + $0x30] sm:$0xf]
        %v599 = vld [vmem:[%s4 + $0x34] sm:$0xf]
        %v600 = vld [vmem:[%s4 + $0x38] sm:$0xf]
        %v601 = vld [vmem:[%s4 + $0x3c] sm:$0xf]
        %v602 = vld [vmem:[%s4 + $0x40] sm:$0xf]
        %v603 = vld [vmem:[%s4 + $0x44] sm:$0xf]
        %v604 = vld [vmem:[%s4 + $0x48] sm:$0xf]
        %v605 = vld [vmem:[%s4 + $0x4c] sm:$0xf]
        %v606 = vld [vmem:[%s4 + $0x50] sm:$0xf]
        %v607 = vld [vmem:[%s4 + $0x54] sm:$0xf]
        %v608 = vld [vmem:[%s4 + $0x58] sm:$0xf]
        %v609 = vld [vmem:[%s4 + $0x5c] sm:$0xf]
        %v610 = vld [vmem:[%s4 + $0x60] sm:$0xf]
        %v611 = vld [vmem:[%s4 + $0x64] sm:$0xf]
        %v612 = vld [vmem:[%s4 + $0x68] sm:$0xf]
        %v613 = vld [vmem:[%s4 + $0x6c] sm:$0xf]
        %v614 = vld [vmem:[%s4 + $0x70] sm:$0xf]
        %v615 = vld [vmem:[%s4 + $0x74] sm:$0xf]
        %v616 = vld [vmem:[%s4 + $0x78] sm:$0xf]
        %v617 = vld [vmem:[%s4 + $0x7c] sm:$0xf]
        %v618 = vld [vmem:[%s4 + $0x80] sm:$0xf]
        %v619 = vld [vmem:[%s4 + $0x84] sm:$0xf]
        %v620 = vld [vmem:[%s4 + $0x88] sm:$0xf]
        %v621 = vld [vmem:[%s4 + $0x8c] sm:$0xf]
        %v622 = vld [vmem:[%s4 + $0x90] sm:$0xf]
        %v623 = vld [vmem:[%s4 + $0x94] sm:$0xf]
        %v624 = vld [vmem:[%s4 + $0x98] sm:$0xf]
        %v625 = vld [vmem:[%s4 + $0x9c] sm:$0xf]
        %v626 = vld [vmem:[%s4 + $0xa0] sm:$0xf]
        %v627 = vld [vmem:[%s4 + $0xa4] sm:$0xf]
        %v628 = vld [vmem:[%s4 + $0xa8] sm:$0xf]
        %v629 = vld [vmem:[%s4 + $0xac] sm:$0xf]
        %v630 = vld [vmem:[%s4 + $0xb0] sm:$0xf]
        %v631 = vld [vmem:[%s4 + $0xb4] sm:$0xf]
        %v632 = vld [vmem:[%s4 + $0xb8] sm:$0xf]
        %v633 = vld [vmem:[%s4 + $0xbc] sm:$0xf]
        %v634 = vld [vmem:[%s4 + $0xc0] sm:$0xf]
        %v635 = vld [vmem:[%s4 + $0xc4] sm:$0xf]
        %v636 = vld [vmem:[%s4 + $0xc8] sm:$0xf]
        %v637 = vld [vmem:[%s4 + $0xcc] sm:$0xf]
        %v638 = vld [vmem:[%s4 + $0xd0] sm:$0xf]
        %v639 = vld [vmem:[%s4 + $0xd4] sm:$0xf]
        %v640 = vld [vmem:[%s4 + $0xd8] sm:$0xf]
        %v641 = vld [vmem:[%s4 + $0xdc] sm:$0xf]
        %v642 = vld [vmem:[%s4 + $0xe0] sm:$0xf]
        %v643 = vld [vmem:[%s4 + $0xe4] sm:$0xf]
        %v644 = vld [vmem:[%s4 + $0xe8] sm:$0xf]
        %v645 = vld [vmem:[%s4 + $0xec] sm:$0xf]
        %v646 = vld [vmem:[%s4 + $0xf0] sm:$0xf]
        %v647 = vld [vmem:[%s4 + $0xf4] sm:$0xf]
        %v648 = vld [vmem:[%s4 + $0xf8] sm:$0xf]
        %v649 = vld [vmem:[%s4 + $0xfc] sm:$0xf]
        %v650 = vunpack.c.l.bf16 %v586
        %v651 = vunpack.c.l.bf16 %v587
        %v652 = vunpack.c.l.bf16 %v588
        %v653 = vunpack.c.l.bf16 %v589
        %v654 = vunpack.c.l.bf16 %v590
        %v655 = vunpack.c.l.bf16 %v591
        %v656 = vunpack.c.l.bf16 %v592
        %v657 = vunpack.c.l.bf16 %v593
        %v658 = vunpack.c.l.bf16 %v594
        %v659 = vunpack.c.l.bf16 %v595
        %v660 = vunpack.c.l.bf16 %v596
        %v661 = vunpack.c.l.bf16 %v597
        %v662 = vunpack.c.l.bf16 %v598
        %v663 = vunpack.c.l.bf16 %v599
        %v664 = vunpack.c.l.bf16 %v600
        %v665 = vunpack.c.l.bf16 %v601
        %v666 = vunpack.c.l.bf16 %v602
        %v667 = vunpack.c.l.bf16 %v603
        %v668 = vunpack.c.l.bf16 %v604
        %v669 = vunpack.c.l.bf16 %v605
        %v670 = vunpack.c.l.bf16 %v606
        %v671 = vunpack.c.l.bf16 %v607
        %v672 = vunpack.c.l.bf16 %v608
        %v673 = vunpack.c.l.bf16 %v609
        %v674 = vunpack.c.l.bf16 %v610
        %v675 = vunpack.c.l.bf16 %v611
        %v676 = vunpack.c.l.bf16 %v612
        %v677 = vunpack.c.l.bf16 %v613
        %v678 = vunpack.c.l.bf16 %v614
        %v679 = vunpack.c.l.bf16 %v615
        %v680 = vunpack.c.l.bf16 %v616
        %v681 = vunpack.c.l.bf16 %v617
        %v682 = vunpack.c.l.bf16 %v618
        %v683 = vunpack.c.l.bf16 %v619
        %v684 = vunpack.c.l.bf16 %v620
        %v685 = vunpack.c.l.bf16 %v621
        %v686 = vunpack.c.l.bf16 %v622
        %v687 = vunpack.c.l.bf16 %v623
        %v688 = vunpack.c.l.bf16 %v624
        %v689 = vunpack.c.l.bf16 %v625
        %v690 = vunpack.c.l.bf16 %v626
        %v691 = vunpack.c.l.bf16 %v627
        %v692 = vunpack.c.l.bf16 %v628
        %v693 = vunpack.c.l.bf16 %v629
        %v694 = vunpack.c.l.bf16 %v630
        %v695 = vunpack.c.l.bf16 %v631
        %v696 = vunpack.c.l.bf16 %v632
        %v697 = vunpack.c.l.bf16 %v633
        %v698 = vunpack.c.l.bf16 %v634
        %v699 = vunpack.c.l.bf16 %v635
        %v700 = vunpack.c.l.bf16 %v636
        %v701 = vunpack.c.l.bf16 %v637
        %v702 = vunpack.c.l.bf16 %v638
        %v703 = vunpack.c.l.bf16 %v639
        %v704 = vunpack.c.l.bf16 %v640
        %v705 = vunpack.c.l.bf16 %v641
        %v706 = vunpack.c.l.bf16 %v642
        %v707 = vunpack.c.l.bf16 %v643
        %v708 = vunpack.c.l.bf16 %v644
        %v709 = vunpack.c.l.bf16 %v645
        %v710 = vunpack.c.l.bf16 %v646
        %v711 = vunpack.c.l.bf16 %v647
        %v712 = vunpack.c.l.bf16 %v648
        %v713 = vunpack.c.l.bf16 %v649
        %v715 = vlaneseq
        %v716 = vshrl.u32 %v715, 7
        %v717 = vsub.s32 0, %v716
        %v718 = vrot.slane %v582, %v717
        %v720 = vmul.f32 %v650, %v718
        %v721 = vmul.f32 %v651, %v718
        %v722 = vmul.f32 %v652, %v718
        %v723 = vmul.f32 %v653, %v718
        %v724 = vmul.f32 %v654, %v718
        %v725 = vmul.f32 %v655, %v718
        %v726 = vmul.f32 %v656, %v718
        %v727 = vmul.f32 %v657, %v718
        %v728 = vmul.f32 %v658, %v718
        %v729 = vmul.f32 %v659, %v718
        %v730 = vmul.f32 %v660, %v718
        %v731 = vmul.f32 %v661, %v718
        %v732 = vmul.f32 %v662, %v718
        %v733 = vmul.f32 %v663, %v718
        %v734 = vmul.f32 %v664, %v718
        %v735 = vmul.f32 %v665, %v718
        %v736 = vmul.f32 %v666, %v718
        %v737 = vmul.f32 %v667, %v718
        %v738 = vmul.f32 %v668, %v718
        %v739 = vmul.f32 %v669, %v718
        %v740 = vmul.f32 %v670, %v718
        %v741 = vmul.f32 %v671, %v718
        %v742 = vmul.f32 %v672, %v718
        %v743 = vmul.f32 %v673, %v718
        %v744 = vmul.f32 %v674, %v718
        %v745 = vmul.f32 %v675, %v718
        %v746 = vmul.f32 %v676, %v718
        %v747 = vmul.f32 %v677, %v718
        %v748 = vmul.f32 %v678, %v718
        %v749 = vmul.f32 %v679, %v718
        %v750 = vmul.f32 %v680, %v718
        %v751 = vmul.f32 %v681, %v718
        %v752 = vmul.f32 %v682, %v718
        %v753 = vmul.f32 %v683, %v718
        %v754 = vmul.f32 %v684, %v718
        %v755 = vmul.f32 %v685, %v718
        %v756 = vmul.f32 %v686, %v718
        %v757 = vmul.f32 %v687, %v718
        %v758 = vmul.f32 %v688, %v718
        %v759 = vmul.f32 %v689, %v718
        %v760 = vmul.f32 %v690, %v718
        %v761 = vmul.f32 %v691, %v718
        %v762 = vmul.f32 %v692, %v718
        %v763 = vmul.f32 %v693, %v718
        %v764 = vmul.f32 %v694, %v718
        %v765 = vmul.f32 %v695, %v718
        %v766 = vmul.f32 %v696, %v718
        %v767 = vmul.f32 %v697, %v718
        %v768 = vmul.f32 %v698, %v718
        %v769 = vmul.f32 %v699, %v718
        %v770 = vmul.f32 %v700, %v718
        %v771 = vmul.f32 %v701, %v718
        %v772 = vmul.f32 %v702, %v718
        %v773 = vmul.f32 %v703, %v718
        %v774 = vmul.f32 %v704, %v718
        %v775 = vmul.f32 %v705, %v718
        %v776 = vmul.f32 %v706, %v718
        %v777 = vmul.f32 %v707, %v718
        %v778 = vmul.f32 %v708, %v718
        %v779 = vmul.f32 %v709, %v718
        %v780 = vmul.f32 %v710, %v718
        %v781 = vmul.f32 %v711, %v718
        %v782 = vmul.f32 %v712, %v718
        %v783 = vmul.f32 %v713, %v718
        %v785 = vlaneseq
        %v786 = vshrl.u32 %v785, 7
        %v787 = vsub.s32 0, %v786
        %v788 = vrot.slane %v585, %v787
        %v790 = vadd.f32 %v720, %v788
        %v791 = vadd.f32 %v721, %v788
        %v792 = vadd.f32 %v722, %v788
        %v793 = vadd.f32 %v723, %v788
        %v794 = vadd.f32 %v724, %v788
        %v795 = vadd.f32 %v725, %v788
        %v796 = vadd.f32 %v726, %v788
        %v797 = vadd.f32 %v727, %v788
        %v798 = vadd.f32 %v728, %v788
        %v799 = vadd.f32 %v729, %v788
        %v800 = vadd.f32 %v730, %v788
        %v801 = vadd.f32 %v731, %v788
        %v802 = vadd.f32 %v732, %v788
        %v803 = vadd.f32 %v733, %v788
        %v804 = vadd.f32 %v734, %v788
        %v805 = vadd.f32 %v735, %v788
        %v806 = vadd.f32 %v736, %v788
        %v807 = vadd.f32 %v737, %v788
        %v808 = vadd.f32 %v738, %v788
        %v809 = vadd.f32 %v739, %v788
        %v810 = vadd.f32 %v740, %v788
        %v811 = vadd.f32 %v741, %v788
        %v812 = vadd.f32 %v742, %v788
        %v813 = vadd.f32 %v743, %v788
        %v814 = vadd.f32 %v744, %v788
        %v815 = vadd.f32 %v745, %v788
        %v816 = vadd.f32 %v746, %v788
        %v817 = vadd.f32 %v747, %v788
        %v818 = vadd.f32 %v748, %v788
        %v819 = vadd.f32 %v749, %v788
        %v820 = vadd.f32 %v750, %v788
        %v821 = vadd.f32 %v751, %v788
        %v822 = vadd.f32 %v752, %v788
        %v823 = vadd.f32 %v753, %v788
        %v824 = vadd.f32 %v754, %v788
        %v825 = vadd.f32 %v755, %v788
        %v826 = vadd.f32 %v756, %v788
        %v827 = vadd.f32 %v757, %v788
        %v828 = vadd.f32 %v758, %v788
        %v829 = vadd.f32 %v759, %v788
        %v830 = vadd.f32 %v760, %v788
        %v831 = vadd.f32 %v761, %v788
        %v832 = vadd.f32 %v762, %v788
        %v833 = vadd.f32 %v763, %v788
        %v834 = vadd.f32 %v764, %v788
        %v835 = vadd.f32 %v765, %v788
        %v836 = vadd.f32 %v766, %v788
        %v837 = vadd.f32 %v767, %v788
        %v838 = vadd.f32 %v768, %v788
        %v839 = vadd.f32 %v769, %v788
        %v840 = vadd.f32 %v770, %v788
        %v841 = vadd.f32 %v771, %v788
        %v842 = vadd.f32 %v772, %v788
        %v843 = vadd.f32 %v773, %v788
        %v844 = vadd.f32 %v774, %v788
        %v845 = vadd.f32 %v775, %v788
        %v846 = vadd.f32 %v776, %v788
        %v847 = vadd.f32 %v777, %v788
        %v848 = vadd.f32 %v778, %v788
        %v849 = vadd.f32 %v779, %v788
        %v850 = vadd.f32 %v780, %v788
        %v851 = vadd.f32 %v781, %v788
        %v852 = vadd.f32 %v782, %v788
        %v853 = vadd.f32 %v783, %v788
        %v854 = vmax.f32 %v790, 0.0
        %v855 = vmax.f32 %v791, 0.0
        %v856 = vmax.f32 %v792, 0.0
        %v857 = vmax.f32 %v793, 0.0
        %v858 = vmax.f32 %v794, 0.0
        %v859 = vmax.f32 %v795, 0.0
        %v860 = vmax.f32 %v796, 0.0
        %v861 = vmax.f32 %v797, 0.0
        %v862 = vmax.f32 %v798, 0.0
        %v863 = vmax.f32 %v799, 0.0
        %v864 = vmax.f32 %v800, 0.0
        %v865 = vmax.f32 %v801, 0.0
        %v866 = vmax.f32 %v802, 0.0
        %v867 = vmax.f32 %v803, 0.0
        %v868 = vmax.f32 %v804, 0.0
        %v869 = vmax.f32 %v805, 0.0
        %v870 = vmax.f32 %v806, 0.0
        %v871 = vmax.f32 %v807, 0.0
        %v872 = vmax.f32 %v808, 0.0
        %v873 = vmax.f32 %v809, 0.0
        %v874 = vmax.f32 %v810, 0.0
        %v875 = vmax.f32 %v811, 0.0
        %v876 = vmax.f32 %v812, 0.0
        %v877 = vmax.f32 %v813, 0.0
        %v878 = vmax.f32 %v814, 0.0
        %v879 = vmax.f32 %v815, 0.0
        %v880 = vmax.f32 %v816, 0.0
        %v881 = vmax.f32 %v817, 0.0
        %v882 = vmax.f32 %v818, 0.0
        %v883 = vmax.f32 %v819, 0.0
        %v884 = vmax.f32 %v820, 0.0
        %v885 = vmax.f32 %v821, 0.0
        %v886 = vmax.f32 %v822, 0.0
        %v887 = vmax.f32 %v823, 0.0
        %v888 = vmax.f32 %v824, 0.0
        %v889 = vmax.f32 %v825, 0.0
        %v890 = vmax.f32 %v826, 0.0
        %v891 = vmax.f32 %v827, 0.0
        %v892 = vmax.f32 %v828, 0.0
        %v893 = vmax.f32 %v829, 0.0
        %v894 = vmax.f32 %v830, 0.0
        %v895 = vmax.f32 %v831, 0.0
        %v896 = vmax.f32 %v832, 0.0
        %v897 = vmax.f32 %v833, 0.0
        %v898 = vmax.f32 %v834, 0.0
        %v899 = vmax.f32 %v835, 0.0
        %v900 = vmax.f32 %v836, 0.0
        %v901 = vmax.f32 %v837, 0.0
        %v902 = vmax.f32 %v838, 0.0
        %v903 = vmax.f32 %v839, 0.0
        %v904 = vmax.f32 %v840, 0.0
        %v905 = vmax.f32 %v841, 0.0
        %v906 = vmax.f32 %v842, 0.0
        %v907 = vmax.f32 %v843, 0.0
        %v908 = vmax.f32 %v844, 0.0
        %v909 = vmax.f32 %v845, 0.0
        %v910 = vmax.f32 %v846, 0.0
        %v911 = vmax.f32 %v847, 0.0
        %v912 = vmax.f32 %v848, 0.0
        %v913 = vmax.f32 %v849, 0.0
        %v914 = vmax.f32 %v850, 0.0
        %v915 = vmax.f32 %v851, 0.0
        %v916 = vmax.f32 %v852, 0.0
        %v917 = vmax.f32 %v853, 0.0
        %v918 = vpack.c.bf16 %v855, %v854
        %v919 = vpack.c.bf16 %v857, %v856
        %v920 = vpack.c.bf16 %v859, %v858
        %v921 = vpack.c.bf16 %v861, %v860
        %v922 = vpack.c.bf16 %v863, %v862
        %v923 = vpack.c.bf16 %v865, %v864
        %v924 = vpack.c.bf16 %v867, %v866
        %v925 = vpack.c.bf16 %v869, %v868
        %v926 = vpack.c.bf16 %v871, %v870
        %v927 = vpack.c.bf16 %v873, %v872
        %v928 = vpack.c.bf16 %v875, %v874
        %v929 = vpack.c.bf16 %v877, %v876
        %v930 = vpack.c.bf16 %v879, %v878
        %v931 = vpack.c.bf16 %v881, %v880
        %v932 = vpack.c.bf16 %v883, %v882
        %v933 = vpack.c.bf16 %v885, %v884
        %v934 = vpack.c.bf16 %v887, %v886
        %v935 = vpack.c.bf16 %v889, %v888
        %v936 = vpack.c.bf16 %v891, %v890
        %v937 = vpack.c.bf16 %v893, %v892
        %v938 = vpack.c.bf16 %v895, %v894
        %v939 = vpack.c.bf16 %v897, %v896
        %v940 = vpack.c.bf16 %v899, %v898
        %v941 = vpack.c.bf16 %v901, %v900
        %v942 = vpack.c.bf16 %v903, %v902
        %v943 = vpack.c.bf16 %v905, %v904
        %v944 = vpack.c.bf16 %v907, %v906
        %v945 = vpack.c.bf16 %v909, %v908
        %v946 = vpack.c.bf16 %v911, %v910
        %v947 = vpack.c.bf16 %v913, %v912
        %v948 = vpack.c.bf16 %v915, %v914
        %v949 = vpack.c.bf16 %v917, %v916
        %v982 = vunpack.c.l.b16 %v918
        %v983 = vunpack.c.h.b16 %v918
        %v984 = vunpack.c.l.b16 %v919
        %v985 = vunpack.c.h.b16 %v919
        %v986 = vunpack.c.l.b16 %v920
        %v987 = vunpack.c.h.b16 %v920
        %v988 = vunpack.c.l.b16 %v921
        %v989 = vunpack.c.h.b16 %v921
        %v990 = vunpack.c.l.b16 %v922
        %v991 = vunpack.c.h.b16 %v922
        %v992 = vunpack.c.l.b16 %v923
        %v993 = vunpack.c.h.b16 %v923
        %v994 = vunpack.c.l.b16 %v924
        %v995 = vunpack.c.h.b16 %v924
        %v996 = vunpack.c.l.b16 %v925
        %v997 = vunpack.c.h.b16 %v925
        %v998 = vunpack.c.l.b16 %v926
        %v999 = vunpack.c.h.b16 %v926
        %v1000 = vunpack.c.l.b16 %v927
        %v1001 = vunpack.c.h.b16 %v927
        %v1002 = vunpack.c.l.b16 %v928
        %v1003 = vunpack.c.h.b16 %v928
        %v1004 = vunpack.c.l.b16 %v929
        %v1005 = vunpack.c.h.b16 %v929
        %v1006 = vunpack.c.l.b16 %v930
        %v1007 = vunpack.c.h.b16 %v930
        %v1008 = vunpack.c.l.b16 %v931
        %v1009 = vunpack.c.h.b16 %v931
        %v1010 = vunpack.c.l.b16 %v932
        %v1011 = vunpack.c.h.b16 %v932
        %v1012 = vunpack.c.l.b16 %v933
        %v1013 = vunpack.c.h.b16 %v933
        %v1014 = vunpack.c.l.b16 %v934
        %v1015 = vunpack.c.h.b16 %v934
        %v1016 = vunpack.c.l.b16 %v935
        %v1017 = vunpack.c.h.b16 %v935
        %v1018 = vunpack.c.l.b16 %v936
        %v1019 = vunpack.c.h.b16 %v936
        %v1020 = vunpack.c.l.b16 %v937
        %v1021 = vunpack.c.h.b16 %v937
        %v1022 = vunpack.c.l.b16 %v938
        %v1023 = vunpack.c.h.b16 %v938
        %v1024 = vunpack.c.l.b16 %v939
        %v1025 = vunpack.c.h.b16 %v939
        %v1026 = vunpack.c.l.b16 %v940
        %v1027 = vunpack.c.h.b16 %v940
        %v1028 = vunpack.c.l.b16 %v941
        %v1029 = vunpack.c.h.b16 %v941
        %v1030 = vunpack.c.l.b16 %v942
        %v1031 = vunpack.c.h.b16 %v942
        %v1032 = vunpack.c.l.b16 %v943
        %v1033 = vunpack.c.h.b16 %v943
        %v1034 = vunpack.c.l.b16 %v944
        %v1035 = vunpack.c.h.b16 %v944
        %v1036 = vunpack.c.l.b16 %v945
        %v1037 = vunpack.c.h.b16 %v945
        %v1038 = vunpack.c.l.b16 %v946
        %v1039 = vunpack.c.h.b16 %v946
        %v1040 = vunpack.c.l.b16 %v947
        %v1041 = vunpack.c.h.b16 %v947
        %v1042 = vunpack.c.l.b16 %v948
        %v1043 = vunpack.c.h.b16 %v948
        %v1044 = vunpack.c.l.b16 %v949
        %v1045 = vunpack.c.h.b16 %v949
        %v1046 = vpack.c.b16 %v982, %v982
        %v1047 = vpack.c.b16 %v983, %v983
        %v1048 = vpack.c.b16 %v984, %v984
        %v1049 = vpack.c.b16 %v985, %v985
        %v1050 = vpack.c.b16 %v986, %v986
        %v1051 = vpack.c.b16 %v987, %v987
        %v1052 = vpack.c.b16 %v988, %v988
        %v1053 = vpack.c.b16 %v989, %v989
        %v1054 = vpack.c.b16 %v990, %v990
        %v1055 = vpack.c.b16 %v991, %v991
        %v1056 = vpack.c.b16 %v992, %v992
        %v1057 = vpack.c.b16 %v993, %v993
        %v1058 = vpack.c.b16 %v994, %v994
        %v1059 = vpack.c.b16 %v995, %v995
        %v1060 = vpack.c.b16 %v996, %v996
        %v1061 = vpack.c.b16 %v997, %v997
        %v1062 = vpack.c.b16 %v998, %v998
        %v1063 = vpack.c.b16 %v999, %v999
        %v1064 = vpack.c.b16 %v1000, %v1000
        %v1065 = vpack.c.b16 %v1001, %v1001
        %v1066 = vpack.c.b16 %v1002, %v1002
        %v1067 = vpack.c.b16 %v1003, %v1003
        %v1068 = vpack.c.b16 %v1004, %v1004
        %v1069 = vpack.c.b16 %v1005, %v1005
        %v1070 = vpack.c.b16 %v1006, %v1006
        %v1071 = vpack.c.b16 %v1007, %v1007
        %v1072 = vpack.c.b16 %v1008, %v1008
        %v1073 = vpack.c.b16 %v1009, %v1009
        %v1074 = vpack.c.b16 %v1010, %v1010
        %v1075 = vpack.c.b16 %v1011, %v1011
        %v1076 = vpack.c.b16 %v1012, %v1012
        %v1077 = vpack.c.b16 %v1013, %v1013
        %v1078 = vpack.c.b16 %v1014, %v1014
        %v1079 = vpack.c.b16 %v1015, %v1015
        %v1080 = vpack.c.b16 %v1016, %v1016
        %v1081 = vpack.c.b16 %v1017, %v1017
        %v1082 = vpack.c.b16 %v1018, %v1018
        %v1083 = vpack.c.b16 %v1019, %v1019
        %v1084 = vpack.c.b16 %v1020, %v1020
        %v1085 = vpack.c.b16 %v1021, %v1021
        %v1086 = vpack.c.b16 %v1022, %v1022
        %v1087 = vpack.c.b16 %v1023, %v1023
        %v1088 = vpack.c.b16 %v1024, %v1024
        %v1089 = vpack.c.b16 %v1025, %v1025
        %v1090 = vpack.c.b16 %v1026, %v1026
        %v1091 = vpack.c.b16 %v1027, %v1027
        %v1092 = vpack.c.b16 %v1028, %v1028
        %v1093 = vpack.c.b16 %v1029, %v1029
        %v1094 = vpack.c.b16 %v1030, %v1030
        %v1095 = vpack.c.b16 %v1031, %v1031
        %v1096 = vpack.c.b16 %v1032, %v1032
        %v1097 = vpack.c.b16 %v1033, %v1033
        %v1098 = vpack.c.b16 %v1034, %v1034
        %v1099 = vpack.c.b16 %v1035, %v1035
        %v1100 = vpack.c.b16 %v1036, %v1036
        %v1101 = vpack.c.b16 %v1037, %v1037
        %v1102 = vpack.c.b16 %v1038, %v1038
        %v1103 = vpack.c.b16 %v1039, %v1039
        %v1104 = vpack.c.b16 %v1040, %v1040
        %v1105 = vpack.c.b16 %v1041, %v1041
        %v1106 = vpack.c.b16 %v1042, %v1042
        %v1107 = vpack.c.b16 %v1043, %v1043
        %v1108 = vpack.c.b16 %v1044, %v1044
        %v1109 = vpack.c.b16 %v1045, %v1045
        %1174 = vst [vmem:[%s4] sm:$0xf] %v1046
        %1175 = vst [vmem:[%s4 + $0x4] sm:$0xf] %v1047
        %1176 = vst [vmem:[%s4 + $0x8] sm:$0xf] %v1048
        %1177 = vst [vmem:[%s4 + $0xc] sm:$0xf] %v1049
        %1178 = vst [vmem:[%s4 + $0x10] sm:$0xf] %v1050
        %1179 = vst [vmem:[%s4 + $0x14] sm:$0xf] %v1051
        %1180 = vst [vmem:[%s4 + $0x18] sm:$0xf] %v1052
        %1181 = vst [vmem:[%s4 + $0x1c] sm:$0xf] %v1053
        %1182 = vst [vmem:[%s4 + $0x20] sm:$0xf] %v1054
        %1183 = vst [vmem:[%s4 + $0x24] sm:$0xf] %v1055
        %1184 = vst [vmem:[%s4 + $0x28] sm:$0xf] %v1056
        %1185 = vst [vmem:[%s4 + $0x2c] sm:$0xf] %v1057
        %1186 = vst [vmem:[%s4 + $0x30] sm:$0xf] %v1058
        %1187 = vst [vmem:[%s4 + $0x34] sm:$0xf] %v1059
        %1188 = vst [vmem:[%s4 + $0x38] sm:$0xf] %v1060
        %1189 = vst [vmem:[%s4 + $0x3c] sm:$0xf] %v1061
        %1190 = vst [vmem:[%s4 + $0x40] sm:$0xf] %v1062
        %1191 = vst [vmem:[%s4 + $0x44] sm:$0xf] %v1063
        %1192 = vst [vmem:[%s4 + $0x48] sm:$0xf] %v1064
        %1193 = vst [vmem:[%s4 + $0x4c] sm:$0xf] %v1065
        %1194 = vst [vmem:[%s4 + $0x50] sm:$0xf] %v1066
        %1195 = vst [vmem:[%s4 + $0x54] sm:$0xf] %v1067
        %1196 = vst [vmem:[%s4 + $0x58] sm:$0xf] %v1068
        %1197 = vst [vmem:[%s4 + $0x5c] sm:$0xf] %v1069
        %1198 = vst [vmem:[%s4 + $0x60] sm:$0xf] %v1070
        %1199 = vst [vmem:[%s4 + $0x64] sm:$0xf] %v1071
        %1200 = vst [vmem:[%s4 + $0x68] sm:$0xf] %v1072
        %1201 = vst [vmem:[%s4 + $0x6c] sm:$0xf] %v1073
        %1202 = vst [vmem:[%s4 + $0x70] sm:$0xf] %v1074
        %1203 = vst [vmem:[%s4 + $0x74] sm:$0xf] %v1075
        %1204 = vst [vmem:[%s4 + $0x78] sm:$0xf] %v1076
        %1205 = vst [vmem:[%s4 + $0x7c] sm:$0xf] %v1077
        %1206 = vst [vmem:[%s4 + $0x80] sm:$0xf] %v1078
        %1207 = vst [vmem:[%s4 + $0x84] sm:$0xf] %v1079
        %1208 = vst [vmem:[%s4 + $0x88] sm:$0xf] %v1080
        %1209 = vst [vmem:[%s4 + $0x8c] sm:$0xf] %v1081
        %1210 = vst [vmem:[%s4 + $0x90] sm:$0xf] %v1082
        %1211 = vst [vmem:[%s4 + $0x94] sm:$0xf] %v1083
        %1212 = vst [vmem:[%s4 + $0x98] sm:$0xf] %v1084
        %1213 = vst [vmem:[%s4 + $0x9c] sm:$0xf] %v1085
        %1214 = vst [vmem:[%s4 + $0xa0] sm:$0xf] %v1086
        %1215 = vst [vmem:[%s4 + $0xa4] sm:$0xf] %v1087
        %1216 = vst [vmem:[%s4 + $0xa8] sm:$0xf] %v1088
        %1217 = vst [vmem:[%s4 + $0xac] sm:$0xf] %v1089
        %1218 = vst [vmem:[%s4 + $0xb0] sm:$0xf] %v1090
        %1219 = vst [vmem:[%s4 + $0xb4] sm:$0xf] %v1091
        %1220 = vst [vmem:[%s4 + $0xb8] sm:$0xf] %v1092
        %1221 = vst [vmem:[%s4 + $0xbc] sm:$0xf] %v1093
        %1222 = vst [vmem:[%s4 + $0xc0] sm:$0xf] %v1094
        %1223 = vst [vmem:[%s4 + $0xc4] sm:$0xf] %v1095
        %1224 = vst [vmem:[%s4 + $0xc8] sm:$0xf] %v1096
        %1225 = vst [vmem:[%s4 + $0xcc] sm:$0xf] %v1097
        %1226 = vst [vmem:[%s4 + $0xd0] sm:$0xf] %v1098
        %1227 = vst [vmem:[%s4 + $0xd4] sm:$0xf] %v1099
        %1228 = vst [vmem:[%s4 + $0xd8] sm:$0xf] %v1100
        %1229 = vst [vmem:[%s4 + $0xdc] sm:$0xf] %v1101
        %1230 = vst [vmem:[%s4 + $0xe0] sm:$0xf] %v1102
        %1231 = vst [vmem:[%s4 + $0xe4] sm:$0xf] %v1103
        %1232 = vst [vmem:[%s4 + $0xe8] sm:$0xf] %v1104
        %1233 = vst [vmem:[%s4 + $0xec] sm:$0xf] %v1105
        %1234 = vst [vmem:[%s4 + $0xf0] sm:$0xf] %v1106
        %1235 = vst [vmem:[%s4 + $0xf4] sm:$0xf] %v1107
        %1236 = vst [vmem:[%s4 + $0xf8] sm:$0xf] %v1108
        %1237 = vst [vmem:[%s4 + $0xfc] sm:$0xf] %v1109
      $region44: #{generator_forward.7} parent=35 // pred_fallthru
        _
      // Predicated region
      $region45: #{generator_forward.7} parent=35 // pred_check
        %p1238 = pneg %p122
      $region46: #{generator_forward.7} parent=35 // pred_check_branch
        %1240 = sbr.rel (%p1238) target = $region48
      $region47: #{generator_forward.7} parent=35 // pred_region
        _
      $region48: #{generator_forward.7} parent=35 // pred_fallthru
        _
      // Predicated region
      $region49: #{generator_forward.7} parent=35 // pred_check
        %p1241 = pneg %p122
      $region50: #{generator_forward.7} parent=35 // pred_check_branch
        %1243 = sbr.rel (%p1241) target = $region52
      $region51: #{generator_forward.7} parent=35 // pred_region
        _
      $region52: #{generator_forward.7} parent=35 // pred_fallthru
        _
    $region36: #{generator_forward.7} parent=5 // pred_fallthru
      _
    %p1244 = scmp.le.s32.totalorder 2, %s10
    // Predicated region
    $region53: #{generator_forward.7} parent=5 // pred_check
      %p1245 = pneg %p1244
    $region54: #{generator_forward.7} parent=5 // pred_check_branch
      %1247 = sbr.rel (%p1245) target = $region56
    $region55: #{generator_forward.7} parent=5 // pred_region
      %s1248 = ssub.s32 %s10, 2
    $region56: #{generator_forward.7} parent=5 // pred_fallthru
      _
  $region6: #{generator_forward.7} parent=0 // loop_footer
    %s14 = sadd.s32 1, %s10
  $region7: #{generator_forward.7} parent=0 // loop_footer_branch
    %9 = sbr.rel target = $region3
  $region8: #{generator_forward.7} parent=0 // loop_exit
    _

// kernel: generator_forward.8
$region0: #{generator_forward.8}
  #allocation0 [shape = 'u32[]', space=smem, size = 0x4, offset = 0x4, fixed_abs, tag = 'smem constant byte address 0x4 - core index']
  #allocation1 [shape = 'u32[144,128]{1,0:T(1,128)}', space=vmem, size = 0x12000, scoped, tag = 'internal scratch']
  #allocation2 [shape = 'f32[1,128]{1,0:T(1,128)}', space=vmem, size = 0x200, scoped, tag = 'scratch operand']
  #allocation3 [shape = 'f32[1,128]{1,0:T(1,128)}', space=vmem, size = 0x200, scoped, tag = 'scratch operand']
  %s0 = inlined_call_operand.vmem [shape: bf16[4,512,32], index: 0, kind: input, shape index: {}]
  %s1 = inlined_call_operand.vmem [shape: bf16[4,32,128], index: 1, kind: input, shape index: {}]
  %s2 = inlined_call_operand.vmem [shape: f32[1,128], index: 2, kind: input, shape index: {}]
  %s3 = inlined_call_operand.vmem [shape: f32[1,128], index: 3, kind: input, shape index: {}]
  %s4 = inlined_call_operand.vmem [shape: bf16[4,512,128], index: 4, kind: output, shape index: {}]
  %s5 = sld [smem:[#allocation0]]
  $region57: #{generator_forward.8} parent=0
    _
  %s7 = ssub.s32 1, %s5
  %s8 = scalar_select 0, %s7, %s5
  loop: start=0, step=1, limit=6
  $region2: #{generator_forward.8} parent=0 // loop_pre_header
    _
  $region3: #{generator_forward.8} parent=0 // loop_header
    %s10 = sphi 0, %s14
    %p11 = scmp.ge.s32.totalorder %s10, 6
    %s20 = sphi 0, %s22
    %s23 = sphi 0, %s20
    %s24 = sphi 0, %s23
    %s40 = sphi 0, %s24
    %s46 = sphi 0, %s48
    %s49 = sphi 0, %s46
    %s50 = sphi 0, %s49
    %s66 = sphi 0, %s50
    %s70 = sphi 0, %s70
    %s72 = sphi 0, %s70
    %s73 = sphi 0, %s72
    %s87 = sphi 0, %s73
    %s91 = sphi 0, %s91
    %s93 = sphi 0, %s91
    %s94 = sphi 0, %s93
    %s108 = sphi 0, %s94
    %s112 = sphi 0, %s112
    %s114 = sphi 0, %s112
    %s115 = sphi 0, %s114
    %s129 = sphi 0, %s115
  $region4: #{generator_forward.8} parent=0 // loop_header_branch
    %13 = sbr.rel (%p11) target = $region8
  $region5: #{generator_forward.8} parent=0 // loop_body
    %s15 = ssub.s32 %s10, 1
    %s16 = ssub.s32 %s10, 2
    %s17 = sadd.s32 %s10, 1
    %s18 = ssub.s32 %s10, %s17
    %p19 = scmp.eq.s32.totalorder %s18, 0
    %s21 = sadd.s32 %s20, 1
    %s22 = scalar_select %p19, %s20, %s21
    %p25 = pneg %p19
    %p26 = scmp.eq.s32.totalorder %s10, 3
    %p27 = por %p25, %p26
    %p28 = scmp.ne.s32.totalorder %s20, %s23
    %p29 = scmp.eq.s32.totalorder %s10, 0
    %p30 = por %p28, %p29
    %p31 = scmp.ne.s32.totalorder %s20, %s23
    %p32 = scmp.eq.s32.totalorder %s15, 3
    %p33 = por %p31, %p32
    %p34 = scmp.ne.s32.totalorder %s23, %s24
    %p35 = scmp.eq.s32.totalorder %s15, 0
    %p36 = por %p34, %p35
    %p37 = scmp.ne.s32.totalorder %s23, %s24
    %p38 = scmp.eq.s32.totalorder %s16, 3
    %p39 = por %p37, %p38
    %p41 = scmp.ne.s32.totalorder %s24, %s40
    %p42 = scmp.eq.s32.totalorder %s16, 0
    %p43 = por %p41, %p42
    %s44 = ssub.s32 %s10, %s17
    %p45 = scmp.eq.s32.totalorder %s44, 0
    %s47 = sadd.s32 %s46, 1
    %s48 = scalar_select %p45, %s46, %s47
    %p51 = pneg %p45
    %p52 = scmp.eq.s32.totalorder %s10, 3
    %p53 = por %p51, %p52
    %p54 = scmp.ne.s32.totalorder %s46, %s49
    %p55 = scmp.eq.s32.totalorder %s10, 0
    %p56 = por %p54, %p55
    %p57 = scmp.ne.s32.totalorder %s46, %s49
    %p58 = scmp.eq.s32.totalorder %s15, 3
    %p59 = por %p57, %p58
    %p60 = scmp.ne.s32.totalorder %s49, %s50
    %p61 = scmp.eq.s32.totalorder %s15, 0
    %p62 = por %p60, %p61
    %p63 = scmp.ne.s32.totalorder %s49, %s50
    %p64 = scmp.eq.s32.totalorder %s16, 3
    %p65 = por %p63, %p64
    %p67 = scmp.ne.s32.totalorder %s50, %s66
    %p68 = scmp.eq.s32.totalorder %s16, 0
    %p69 = por %p67, %p68
    %s71 = sadd.s32 %s70, 1
    %p74 = scmp.eq.s32.totalorder %s10, 3
    %p75 = scmp.ne.s32.totalorder %s70, %s72
    %p76 = scmp.eq.s32.totalorder %s10, 0
    %p77 = por %p75, %p76
    %p78 = scmp.ne.s32.totalorder %s70, %s72
    %p79 = scmp.eq.s32.totalorder %s15, 3
    %p80 = por %p78, %p79
    %p81 = scmp.ne.s32.totalorder %s72, %s73
    %p82 = scmp.eq.s32.totalorder %s15, 0
    %p83 = por %p81, %p82
    %p84 = scmp.ne.s32.totalorder %s72, %s73
    %p85 = scmp.eq.s32.totalorder %s16, 3
    %p86 = por %p84, %p85
    %p88 = scmp.ne.s32.totalorder %s73, %s87
    %p89 = scmp.eq.s32.totalorder %s16, 0
    %p90 = por %p88, %p89
    %s92 = sadd.s32 %s91, 1
    %p95 = scmp.eq.s32.totalorder %s10, 3
    %p96 = scmp.ne.s32.totalorder %s91, %s93
    %p97 = scmp.eq.s32.totalorder %s10, 0
    %p98 = por %p96, %p97
    %p99 = scmp.ne.s32.totalorder %s91, %s93
    %p100 = scmp.eq.s32.totalorder %s15, 3
    %p101 = por %p99, %p100
    %p102 = scmp.ne.s32.totalorder %s93, %s94
    %p103 = scmp.eq.s32.totalorder %s15, 0
    %p104 = por %p102, %p103
    %p105 = scmp.ne.s32.totalorder %s93, %s94
    %p106 = scmp.eq.s32.totalorder %s16, 3
    %p107 = por %p105, %p106
    %p109 = scmp.ne.s32.totalorder %s94, %s108
    %p110 = scmp.eq.s32.totalorder %s16, 0
    %p111 = por %p109, %p110
    %s113 = sadd.s32 %s112, 1
    %p116 = scmp.eq.s32.totalorder %s10, 3
    %p117 = scmp.ne.s32.totalorder %s112, %s114
    %p118 = scmp.eq.s32.totalorder %s10, 0
    %p119 = por %p117, %p118
    %p120 = scmp.ne.s32.totalorder %s112, %s114
    %p121 = scmp.eq.s32.totalorder %s15, 3
    %p122 = por %p120, %p121
    %p123 = scmp.ne.s32.totalorder %s114, %s115
    %p124 = scmp.eq.s32.totalorder %s15, 0
    %p125 = por %p123, %p124
    %p126 = scmp.ne.s32.totalorder %s114, %s115
    %p127 = scmp.eq.s32.totalorder %s16, 3
    %p128 = por %p126, %p127
    %p130 = scmp.ne.s32.totalorder %s115, %s129
    %p131 = scmp.eq.s32.totalorder %s16, 0
    %p132 = por %p130, %p131
    %p133 = scmp.le.s32.totalorder 1, %s10
    %p134 = scmp.lt.s32.totalorder %s10, 5
    %p135 = pnand %p133, %p134
    %p136 = pneg %p135
    // Predicated region
    $region9: #{generator_forward.8} parent=5 // pred_check
      _
    $region10: #{generator_forward.8} parent=5 // pred_check_branch
      %138 = sbr.rel (%p135) target = $region12
    $region11: #{generator_forward.8} parent=5 // pred_region
      %s139 = ssub.s32 %s10, 1
      // Predicated region
      $region13: #{generator_forward.8} parent=11 // pred_check
        %p140 = pneg %p83
      $region14: #{generator_forward.8} parent=11 // pred_check_branch
        %142 = sbr.rel (%p140) target = $region16
      $region15: #{generator_forward.8} parent=11 // pred_region
        _
      $region16: #{generator_forward.8} parent=11 // pred_fallthru
        _
      // Predicated region
      $region17: #{generator_forward.8} parent=11 // pred_check
        %p143 = pneg %p104
      $region18: #{generator_forward.8} parent=11 // pred_check_branch
        %145 = sbr.rel (%p143) target = $region20
      $region19: #{generator_forward.8} parent=11 // pred_region
        _
      $region20: #{generator_forward.8} parent=11 // pred_fallthru
        _
    $region12: #{generator_forward.8} parent=5 // pred_fallthru
      _
    %p146 = scmp.lt.s32.totalorder %s10, 4
    // Predicated region
    $region21: #{generator_forward.8} parent=5 // pred_check
      %p147 = pneg %p146
    $region22: #{generator_forward.8} parent=5 // pred_check_branch
      %149 = sbr.rel (%p147) target = $region24
    $region23: #{generator_forward.8} parent=5 // pred_region
      // Predicated region
      $region25: #{generator_forward.8} parent=23 // pred_check
        %p150 = pneg %p30
      $region26: #{generator_forward.8} parent=23 // pred_check_branch
        %152 = sbr.rel (%p150) target = $region28
      $region27: #{generator_forward.8} parent=23 // pred_region
        %p153 = scmp.lt.s32.totalorder %s10, 3
        %s154 = scalar_select %p153, %s10, 3
        %s155 = smul.addr %s154, 64
        %s156 = smul.addr %s155, 4
        %s157 = scalar_lea.vmem %s0, %s156
      $region28: #{generator_forward.8} parent=23 // pred_fallthru
        _
      // Predicated region
      $region29: #{generator_forward.8} parent=23 // pred_check
        %p158 = pneg %p56
      $region30: #{generator_forward.8} parent=23 // pred_check_branch
        %160 = sbr.rel (%p158) target = $region32
      $region31: #{generator_forward.8} parent=23 // pred_region
        %p161 = scmp.lt.s32.totalorder %s10, 3
        %s162 = scalar_select %p161, %s10, 3
        %s163 = smul.addr %s162, 4
        %s164 = smul.addr %s163, 4
        %s165 = scalar_lea.vmem %s1, %s164
      $region32: #{generator_forward.8} parent=23 // pred_fallthru
        _
    $region24: #{generator_forward.8} parent=5 // pred_fallthru
      _
    %p166 = scmp.le.s32.totalorder 1, %s10
    %p167 = scmp.lt.s32.totalorder %s10, 5
    %p168 = pnand %p166, %p167
    %p169 = pneg %p168
    // Predicated region
    $region33: #{generator_forward.8} parent=5 // pred_check
      _
    $region34: #{generator_forward.8} parent=5 // pred_check_branch
      %171 = sbr.rel (%p168) target = $region36
    $region35: #{generator_forward.8} parent=5 // pred_region
      %s172 = ssub.s32 %s10, 1
      %p173 = scmp.lt.s32.totalorder %s15, 3
      %s174 = scalar_select %p173, %s15, 3
      %s175 = smul.addr %s174, 64
      %s176 = smul.addr %s175, 4
      %s177 = scalar_lea.vmem %s0, %s176
      %p178 = pneg %p36
      %p179 = pneg %p33
      %p180 = scmp.lt.s32.totalorder %s15, 3
      %s181 = scalar_select %p180, %s15, 3
      %s182 = smul.addr %s181, 4
      %s183 = smul.addr %s182, 4
      %s184 = scalar_lea.vmem %s1, %s183
      %p185 = pneg %p62
      %p186 = pneg %p59
      %p187 = pneg %p83
      %p188 = pneg %p80
      %p189 = pneg %p104
      %p190 = pneg %p101
      %p191 = pneg %p125
      %p192 = pneg %p122
      %p193 = scmp.lt.s32.totalorder %s15, 3
      %s194 = scalar_select %p193, %s15, 3
      %s195 = smul.addr %s194, 64
      %s196 = smul.addr %s195, 4
      %s197 = scalar_lea.vmem %s0, %s196
      %p198 = scmp.lt.s32.totalorder %s15, 3
      %s199 = scalar_select %p198, %s15, 3
      %s200 = smul.addr %s199, 4
      %s201 = smul.addr %s200, 4
      %s202 = scalar_lea.vmem %s1, %s201
      %v204 = vld [vmem:[%s197] sm:$0xf]
      %v205 = vld [vmem:[%s197 + $0x4] sm:$0xf]
      %v206 = vld [vmem:[%s197 + $0x8] sm:$0xf]
      %v207 = vld [vmem:[%s197 + $0xc] sm:$0xf]
      %v208 = vld [vmem:[%s197 + $0x10] sm:$0xf]
      %v209 = vld [vmem:[%s197 + $0x14] sm:$0xf]
      %v210 = vld [vmem:[%s197 + $0x18] sm:$0xf]
      %v211 = vld [vmem:[%s197 + $0x1c] sm:$0xf]
      %v212 = vld [vmem:[%s197 + $0x20] sm:$0xf]
      %v213 = vld [vmem:[%s197 + $0x24] sm:$0xf]
      %v214 = vld [vmem:[%s197 + $0x28] sm:$0xf]
      %v215 = vld [vmem:[%s197 + $0x2c] sm:$0xf]
      %v216 = vld [vmem:[%s197 + $0x30] sm:$0xf]
      %v217 = vld [vmem:[%s197 + $0x34] sm:$0xf]
      %v218 = vld [vmem:[%s197 + $0x38] sm:$0xf]
      %v219 = vld [vmem:[%s197 + $0x3c] sm:$0xf]
      %v220 = vld [vmem:[%s197 + $0x40] sm:$0xf]
      %v221 = vld [vmem:[%s197 + $0x44] sm:$0xf]
      %v222 = vld [vmem:[%s197 + $0x48] sm:$0xf]
      %v223 = vld [vmem:[%s197 + $0x4c] sm:$0xf]
      %v224 = vld [vmem:[%s197 + $0x50] sm:$0xf]
      %v225 = vld [vmem:[%s197 + $0x54] sm:$0xf]
      %v226 = vld [vmem:[%s197 + $0x58] sm:$0xf]
      %v227 = vld [vmem:[%s197 + $0x5c] sm:$0xf]
      %v228 = vld [vmem:[%s197 + $0x60] sm:$0xf]
      %v229 = vld [vmem:[%s197 + $0x64] sm:$0xf]
      %v230 = vld [vmem:[%s197 + $0x68] sm:$0xf]
      %v231 = vld [vmem:[%s197 + $0x6c] sm:$0xf]
      %v232 = vld [vmem:[%s197 + $0x70] sm:$0xf]
      %v233 = vld [vmem:[%s197 + $0x74] sm:$0xf]
      %v234 = vld [vmem:[%s197 + $0x78] sm:$0xf]
      %v235 = vld [vmem:[%s197 + $0x7c] sm:$0xf]
      %v236 = vld [vmem:[%s197 + $0x80] sm:$0xf]
      %v237 = vld [vmem:[%s197 + $0x84] sm:$0xf]
      %v238 = vld [vmem:[%s197 + $0x88] sm:$0xf]
      %v239 = vld [vmem:[%s197 + $0x8c] sm:$0xf]
      %v240 = vld [vmem:[%s197 + $0x90] sm:$0xf]
      %v241 = vld [vmem:[%s197 + $0x94] sm:$0xf]
      %v242 = vld [vmem:[%s197 + $0x98] sm:$0xf]
      %v243 = vld [vmem:[%s197 + $0x9c] sm:$0xf]
      %v244 = vld [vmem:[%s197 + $0xa0] sm:$0xf]
      %v245 = vld [vmem:[%s197 + $0xa4] sm:$0xf]
      %v246 = vld [vmem:[%s197 + $0xa8] sm:$0xf]
      %v247 = vld [vmem:[%s197 + $0xac] sm:$0xf]
      %v248 = vld [vmem:[%s197 + $0xb0] sm:$0xf]
      %v249 = vld [vmem:[%s197 + $0xb4] sm:$0xf]
      %v250 = vld [vmem:[%s197 + $0xb8] sm:$0xf]
      %v251 = vld [vmem:[%s197 + $0xbc] sm:$0xf]
      %v252 = vld [vmem:[%s197 + $0xc0] sm:$0xf]
      %v253 = vld [vmem:[%s197 + $0xc4] sm:$0xf]
      %v254 = vld [vmem:[%s197 + $0xc8] sm:$0xf]
      %v255 = vld [vmem:[%s197 + $0xcc] sm:$0xf]
      %v256 = vld [vmem:[%s197 + $0xd0] sm:$0xf]
      %v257 = vld [vmem:[%s197 + $0xd4] sm:$0xf]
      %v258 = vld [vmem:[%s197 + $0xd8] sm:$0xf]
      %v259 = vld [vmem:[%s197 + $0xdc] sm:$0xf]
      %v260 = vld [vmem:[%s197 + $0xe0] sm:$0xf]
      %v261 = vld [vmem:[%s197 + $0xe4] sm:$0xf]
      %v262 = vld [vmem:[%s197 + $0xe8] sm:$0xf]
      %v263 = vld [vmem:[%s197 + $0xec] sm:$0xf]
      %v264 = vld [vmem:[%s197 + $0xf0] sm:$0xf]
      %v265 = vld [vmem:[%s197 + $0xf4] sm:$0xf]
      %v266 = vld [vmem:[%s197 + $0xf8] sm:$0xf]
      %v267 = vld [vmem:[%s197 + $0xfc] sm:$0xf]
      %v268 = vld [vmem:[%s202] sm:$0xf]
      %v269 = vld [vmem:[%s202 + $0x4] sm:$0xf]
      %v270 = vld [vmem:[%s202 + $0x8] sm:$0xf]
      %v271 = vld [vmem:[%s202 + $0xc] sm:$0xf]
      %v336 = vunpack.c.l.b16 %v204
      %v337 = vunpack.c.l.b16 %v205
      %v338 = vunpack.c.l.b16 %v206
      %v339 = vunpack.c.l.b16 %v207
      %v340 = vunpack.c.l.b16 %v208
      %v341 = vunpack.c.l.b16 %v209
      %v342 = vunpack.c.l.b16 %v210
      %v343 = vunpack.c.l.b16 %v211
      %v344 = vunpack.c.l.b16 %v212
      %v345 = vunpack.c.l.b16 %v213
      %v346 = vunpack.c.l.b16 %v214
      %v347 = vunpack.c.l.b16 %v215
      %v348 = vunpack.c.l.b16 %v216
      %v349 = vunpack.c.l.b16 %v217
      %v350 = vunpack.c.l.b16 %v218
      %v351 = vunpack.c.l.b16 %v219
      %v352 = vunpack.c.l.b16 %v220
      %v353 = vunpack.c.l.b16 %v221
      %v354 = vunpack.c.l.b16 %v222
      %v355 = vunpack.c.l.b16 %v223
      %v356 = vunpack.c.l.b16 %v224
      %v357 = vunpack.c.l.b16 %v225
      %v358 = vunpack.c.l.b16 %v226
      %v359 = vunpack.c.l.b16 %v227
      %v360 = vunpack.c.l.b16 %v228
      %v361 = vunpack.c.l.b16 %v229
      %v362 = vunpack.c.l.b16 %v230
      %v363 = vunpack.c.l.b16 %v231
      %v364 = vunpack.c.l.b16 %v232
      %v365 = vunpack.c.l.b16 %v233
      %v366 = vunpack.c.l.b16 %v234
      %v367 = vunpack.c.l.b16 %v235
      %v368 = vunpack.c.l.b16 %v236
      %v369 = vunpack.c.l.b16 %v237
      %v370 = vunpack.c.l.b16 %v238
      %v371 = vunpack.c.l.b16 %v239
      %v372 = vunpack.c.l.b16 %v240
      %v373 = vunpack.c.l.b16 %v241
      %v374 = vunpack.c.l.b16 %v242
      %v375 = vunpack.c.l.b16 %v243
      %v376 = vunpack.c.l.b16 %v244
      %v377 = vunpack.c.l.b16 %v245
      %v378 = vunpack.c.l.b16 %v246
      %v379 = vunpack.c.l.b16 %v247
      %v380 = vunpack.c.l.b16 %v248
      %v381 = vunpack.c.l.b16 %v249
      %v382 = vunpack.c.l.b16 %v250
      %v383 = vunpack.c.l.b16 %v251
      %v384 = vunpack.c.l.b16 %v252
      %v385 = vunpack.c.l.b16 %v253
      %v386 = vunpack.c.l.b16 %v254
      %v387 = vunpack.c.l.b16 %v255
      %v388 = vunpack.c.l.b16 %v256
      %v389 = vunpack.c.l.b16 %v257
      %v390 = vunpack.c.l.b16 %v258
      %v391 = vunpack.c.l.b16 %v259
      %v392 = vunpack.c.l.b16 %v260
      %v393 = vunpack.c.l.b16 %v261
      %v394 = vunpack.c.l.b16 %v262
      %v395 = vunpack.c.l.b16 %v263
      %v396 = vunpack.c.l.b16 %v264
      %v397 = vunpack.c.l.b16 %v265
      %v398 = vunpack.c.l.b16 %v266
      %v399 = vunpack.c.l.b16 %v267
      %v400 = vpack.c.b16 %v337, %v336
      %v401 = vpack.c.b16 %v339, %v338
      %v402 = vpack.c.b16 %v341, %v340
      %v403 = vpack.c.b16 %v343, %v342
      %v404 = vpack.c.b16 %v345, %v344
      %v405 = vpack.c.b16 %v347, %v346
      %v406 = vpack.c.b16 %v349, %v348
      %v407 = vpack.c.b16 %v351, %v350
      %v408 = vpack.c.b16 %v353, %v352
      %v409 = vpack.c.b16 %v355, %v354
      %v410 = vpack.c.b16 %v357, %v356
      %v411 = vpack.c.b16 %v359, %v358
      %v412 = vpack.c.b16 %v361, %v360
      %v413 = vpack.c.b16 %v363, %v362
      %v414 = vpack.c.b16 %v365, %v364
      %v415 = vpack.c.b16 %v367, %v366
      %v416 = vpack.c.b16 %v369, %v368
      %v417 = vpack.c.b16 %v371, %v370
      %v418 = vpack.c.b16 %v373, %v372
      %v419 = vpack.c.b16 %v375, %v374
      %v420 = vpack.c.b16 %v377, %v376
      %v421 = vpack.c.b16 %v379, %v378
      %v422 = vpack.c.b16 %v381, %v380
      %v423 = vpack.c.b16 %v383, %v382
      %v424 = vpack.c.b16 %v385, %v384
      %v425 = vpack.c.b16 %v387, %v386
      %v426 = vpack.c.b16 %v389, %v388
      %v427 = vpack.c.b16 %v391, %v390
      %v428 = vpack.c.b16 %v393, %v392
      %v429 = vpack.c.b16 %v395, %v394
      %v430 = vpack.c.b16 %v397, %v396
      %v431 = vpack.c.b16 %v399, %v398
      %v436 = vunpack.c.l.b16 %v268
      %v437 = vunpack.c.l.b16 %v269
      %v438 = vunpack.c.l.b16 %v270
      %v439 = vunpack.c.l.b16 %v271
      %v440 = vpack.c.b16 %v437, %v436
      %v441 = vpack.c.b16 %v439, %v438
      %vm444 = vcmask 261120
      %v446 = vsel %vm444, %v400, 0
      %v449 = vsel %vm444, %v401, 0
      %v452 = vsel %vm444, %v402, 0
      %v455 = vsel %vm444, %v403, 0
      %v458 = vsel %vm444, %v404, 0
      %v461 = vsel %vm444, %v405, 0
      %v464 = vsel %vm444, %v406, 0
      %v467 = vsel %vm444, %v407, 0
      %v470 = vsel %vm444, %v408, 0
      %v473 = vsel %vm444, %v409, 0
      %v476 = vsel %vm444, %v410, 0
      %v479 = vsel %vm444, %v411, 0
      %v482 = vsel %vm444, %v412, 0
      %v485 = vsel %vm444, %v413, 0
      %v488 = vsel %vm444, %v414, 0
      %v491 = vsel %vm444, %v415, 0
      %v494 = vsel %vm444, %v416, 0
      %v497 = vsel %vm444, %v417, 0
      %v500 = vsel %vm444, %v418, 0
      %v503 = vsel %vm444, %v419, 0
      %v506 = vsel %vm444, %v420, 0
      %v509 = vsel %vm444, %v421, 0
      %v512 = vsel %vm444, %v422, 0
      %v515 = vsel %vm444, %v423, 0
      %v518 = vsel %vm444, %v424, 0
      %v521 = vsel %vm444, %v425, 0
      %v524 = vsel %vm444, %v426, 0
      %v527 = vsel %vm444, %v427, 0
      %v530 = vsel %vm444, %v428, 0
      %v533 = vsel %vm444, %v429, 0
      %v536 = vsel %vm444, %v430, 0
      %v539 = vsel %vm444, %v431, 0
      %541 = vmatprep.subr.bf16.mxu0 0
      %542 = vmatpush1.bf16.msra.mxu0 %v440
      %543 = vmatprep.subr.bf16.mxu0 0
      %544 = vmatpush1.bf16.msra.mxu0 %v441
      %545 = vmatprep.subr.bf16.mxu0 0
      %546 = vmatpush1.bf16.msra.mxu0 0
      %547 = vmatprep.subr.bf16.mxu0 0
      %548 = vmatpush1.bf16.msra.mxu0 0
      %549 = vmatprep.subr.bf16.mxu0 0
      %550 = vmatpush1.bf16.msra.mxu0 0
      %551 = vmatprep.subr.bf16.mxu0 0
      %552 = vmatpush1.bf16.msra.mxu0 0
      %553 = vmatprep.subr.bf16.mxu0 0
      %554 = vmatpush1.bf16.msra.mxu0 0
      %555 = vmatprep.subr.bf16.mxu0 0
      %556 = vmatpush1.bf16.msra.mxu0 0
      %557 = vmatprep.subr.bf16.mxu0 0
      %558 = vmatpush1.bf16.msra.mxu0 0
      %559 = vmatprep.subr.bf16.mxu0 0
      %560 = vmatpush1.bf16.msra.mxu0 0
      %561 = vmatprep.subr.bf16.mxu0 0
      %562 = vmatpush1.bf16.msra.mxu0 0
      %563 = vmatprep.subr.bf16.mxu0 0
      %564 = vmatpush1.bf16.msra.mxu0 0
      %565 = vmatprep.subr.bf16.mxu0 0
      %566 = vmatpush1.bf16.msra.mxu0 0
      %567 = vmatprep.subr.bf16.mxu0 0
      %568 = vmatpush1.bf16.msra.mxu0 0
      %569 = vmatprep.subr.bf16.mxu0 0
      %570 = vmatpush1.bf16.msra.mxu0 0
      %571 = vmatprep.subr.bf16.mxu0 0
      %572 = vmatpush1.bf16.msra.mxu0 0
      %573 = vmatprep.mubr.bf16.mxu0 0
      %574 = vmatmul.mubr.bf16.gmra.mrb[0].mxu0 %v446
      %v575 = vpop.f32.mrb[0].mxu0
      %v576 = vadd.f32 0.0, %v575
      %v577 = vpop.f32.mrb[0].mxu0
      %v578 = vpop.f32.mrb[0].mxu0
      %v579 = vadd.f32 0.0, %v578
      %v580 = vpop.f32.mrb[0].mxu0
      %581 = vmatprep.mubr.bf16.mxu0 0
      %582 = vmatmul.mubr.bf16.gmra.mrb[0].mxu0 %v449
      %v583 = vpop.f32.mrb[0].mxu0
      %v584 = vadd.f32 0.0, %v583
      %v585 = vpop.f32.mrb[0].mxu0
      %v586 = vpop.f32.mrb[0].mxu0
      %v587 = vadd.f32 0.0, %v586
      %v588 = vpop.f32.mrb[0].mxu0
      %589 = vmatprep.mubr.bf16.mxu0 0
      %590 = vmatmul.mubr.bf16.gmra.mrb[0].mxu0 %v452
      %v591 = vpop.f32.mrb[0].mxu0
      %v592 = vadd.f32 0.0, %v591
      %v593 = vpop.f32.mrb[0].mxu0
      %v594 = vpop.f32.mrb[0].mxu0
      %v595 = vadd.f32 0.0, %v594
      %v596 = vpop.f32.mrb[0].mxu0
      %597 = vmatprep.mubr.bf16.mxu0 0
      %598 = vmatmul.mubr.bf16.gmra.mrb[0].mxu0 %v455
      %v599 = vpop.f32.mrb[0].mxu0
      %v600 = vadd.f32 0.0, %v599
      %v601 = vpop.f32.mrb[0].mxu0
      %v602 = vpop.f32.mrb[0].mxu0
      %v603 = vadd.f32 0.0, %v602
      %v604 = vpop.f32.mrb[0].mxu0
      %605 = vmatprep.mubr.bf16.mxu0 0
      %606 = vmatmul.mubr.bf16.gmra.mrb[0].mxu0 %v458
      %v607 = vpop.f32.mrb[0].mxu0
      %v608 = vadd.f32 0.0, %v607
      %v609 = vpop.f32.mrb[0].mxu0
      %v610 = vpop.f32.mrb[0].mxu0
      %v611 = vadd.f32 0.0, %v610
      %v612 = vpop.f32.mrb[0].mxu0
      %613 = vmatprep.mubr.bf16.mxu0 0
      %614 = vmatmul.mubr.bf16.gmra.mrb[0].mxu0 %v461
      %v615 = vpop.f32.mrb[0].mxu0
      %v616 = vadd.f32 0.0, %v615
      %v617 = vpop.f32.mrb[0].mxu0
      %v618 = vpop.f32.mrb[0].mxu0
      %v619 = vadd.f32 0.0, %v618
      %v620 = vpop.f32.mrb[0].mxu0
      %621 = vmatprep.mubr.bf16.mxu0 0
      %622 = vmatmul.mubr.bf16.gmra.mrb[0].mxu0 %v464
      %v623 = vpop.f32.mrb[0].mxu0
      %v624 = vadd.f32 0.0, %v623
      %v625 = vpop.f32.mrb[0].mxu0
      %v626 = vpop.f32.mrb[0].mxu0
      %v627 = vadd.f32 0.0, %v626
      %v628 = vpop.f32.mrb[0].mxu0
      %629 = vmatprep.mubr.bf16.mxu0 0
      %630 = vmatmul.mubr.bf16.gmra.mrb[0].mxu0 %v467
      %v631 = vpop.f32.mrb[0].mxu0
      %v632 = vadd.f32 0.0, %v631
      %v633 = vpop.f32.mrb[0].mxu0
      %v634 = vpop.f32.mrb[0].mxu0
      %v635 = vadd.f32 0.0, %v634
      %v636 = vpop.f32.mrb[0].mxu0
      %637 = vmatprep.mubr.bf16.mxu0 0
      %638 = vmatmul.mubr.bf16.gmra.mrb[0].mxu0 %v470
      %v639 = vpop.f32.mrb[0].mxu0
      %v640 = vadd.f32 0.0, %v639
      %v641 = vpop.f32.mrb[0].mxu0
      %v642 = vpop.f32.mrb[0].mxu0
      %v643 = vadd.f32 0.0, %v642
      %v644 = vpop.f32.mrb[0].mxu0
      %645 = vmatprep.mubr.bf16.mxu0 0
      %646 = vmatmul.mubr.bf16.gmra.mrb[0].mxu0 %v473
      %v647 = vpop.f32.mrb[0].mxu0
      %v648 = vadd.f32 0.0, %v647
      %v649 = vpop.f32.mrb[0].mxu0
      %v650 = vpop.f32.mrb[0].mxu0
      %v651 = vadd.f32 0.0, %v650
      %v652 = vpop.f32.mrb[0].mxu0
      %653 = vmatprep.mubr.bf16.mxu0 0
      %654 = vmatmul.mubr.bf16.gmra.mrb[0].mxu0 %v476
      %v655 = vpop.f32.mrb[0].mxu0
      %v656 = vadd.f32 0.0, %v655
      %v657 = vpop.f32.mrb[0].mxu0
      %v658 = vpop.f32.mrb[0].mxu0
      %v659 = vadd.f32 0.0, %v658
      %v660 = vpop.f32.mrb[0].mxu0
      %661 = vmatprep.mubr.bf16.mxu0 0
      %662 = vmatmul.mubr.bf16.gmra.mrb[0].mxu0 %v479
      %v663 = vpop.f32.mrb[0].mxu0
      %v664 = vadd.f32 0.0, %v663
      %v665 = vpop.f32.mrb[0].mxu0
      %v666 = vpop.f32.mrb[0].mxu0
      %v667 = vadd.f32 0.0, %v666
      %v668 = vpop.f32.mrb[0].mxu0
      %669 = vmatprep.mubr.bf16.mxu0 0
      %670 = vmatmul.mubr.bf16.gmra.mrb[0].mxu0 %v482
      %v671 = vpop.f32.mrb[0].mxu0
      %v672 = vadd.f32 0.0, %v671
      %v673 = vpop.f32.mrb[0].mxu0
      %v674 = vpop.f32.mrb[0].mxu0
      %v675 = vadd.f32 0.0, %v674
      %v676 = vpop.f32.mrb[0].mxu0
      %677 = vmatprep.mubr.bf16.mxu0 0
      %678 = vmatmul.mubr.bf16.gmra.mrb[0].mxu0 %v485
      %v679 = vpop.f32.mrb[0].mxu0
      %v680 = vadd.f32 0.0, %v679
      %v681 = vpop.f32.mrb[0].mxu0
      %v682 = vpop.f32.mrb[0].mxu0
      %v683 = vadd.f32 0.0, %v682
      %v684 = vpop.f32.mrb[0].mxu0
      %685 = vmatprep.mubr.bf16.mxu0 0
      %686 = vmatmul.mubr.bf16.gmra.mrb[0].mxu0 %v488
      %v687 = vpop.f32.mrb[0].mxu0
      %v688 = vadd.f32 0.0, %v687
      %v689 = vpop.f32.mrb[0].mxu0
      %v690 = vpop.f32.mrb[0].mxu0
      %v691 = vadd.f32 0.0, %v690
      %v692 = vpop.f32.mrb[0].mxu0
      %693 = vmatprep.mubr.bf16.mxu0 0
      %694 = vmatmul.mubr.bf16.gmra.mrb[0].mxu0 %v491
      %v695 = vpop.f32.mrb[0].mxu0
      %v696 = vadd.f32 0.0, %v695
      %v697 = vpop.f32.mrb[0].mxu0
      %v698 = vpop.f32.mrb[0].mxu0
      %v699 = vadd.f32 0.0, %v698
      %v700 = vpop.f32.mrb[0].mxu0
      %701 = vmatprep.mubr.bf16.mxu0 0
      %702 = vmatmul.mubr.bf16.gmra.mrb[0].mxu0 %v494
      %v703 = vpop.f32.mrb[0].mxu0
      %v704 = vadd.f32 0.0, %v703
      %v705 = vpop.f32.mrb[0].mxu0
      %v706 = vpop.f32.mrb[0].mxu0
      %v707 = vadd.f32 0.0, %v706
      %v708 = vpop.f32.mrb[0].mxu0
      %709 = vmatprep.mubr.bf16.mxu0 0
      %710 = vmatmul.mubr.bf16.gmra.mrb[0].mxu0 %v497
      %v711 = vpop.f32.mrb[0].mxu0
      %v712 = vadd.f32 0.0, %v711
      %v713 = vpop.f32.mrb[0].mxu0
      %v714 = vpop.f32.mrb[0].mxu0
      %v715 = vadd.f32 0.0, %v714
      %v716 = vpop.f32.mrb[0].mxu0
      %717 = vmatprep.mubr.bf16.mxu0 0
      %718 = vmatmul.mubr.bf16.gmra.mrb[0].mxu0 %v500
      %v719 = vpop.f32.mrb[0].mxu0
      %v720 = vadd.f32 0.0, %v719
      %v721 = vpop.f32.mrb[0].mxu0
      %v722 = vpop.f32.mrb[0].mxu0
      %v723 = vadd.f32 0.0, %v722
      %v724 = vpop.f32.mrb[0].mxu0
      %725 = vmatprep.mubr.bf16.mxu0 0
      %726 = vmatmul.mubr.bf16.gmra.mrb[0].mxu0 %v503
      %v727 = vpop.f32.mrb[0].mxu0
      %v728 = vadd.f32 0.0, %v727
      %v729 = vpop.f32.mrb[0].mxu0
      %v730 = vpop.f32.mrb[0].mxu0
      %v731 = vadd.f32 0.0, %v730
      %v732 = vpop.f32.mrb[0].mxu0
      %733 = vmatprep.mubr.bf16.mxu0 0
      %734 = vmatmul.mubr.bf16.gmra.mrb[0].mxu0 %v506
      %v735 = vpop.f32.mrb[0].mxu0
      %v736 = vadd.f32 0.0, %v735
      %v737 = vpop.f32.mrb[0].mxu0
      %v738 = vpop.f32.mrb[0].mxu0
      %v739 = vadd.f32 0.0, %v738
      %v740 = vpop.f32.mrb[0].mxu0
      %741 = vmatprep.mubr.bf16.mxu0 0
      %742 = vmatmul.mubr.bf16.gmra.mrb[0].mxu0 %v509
      %v743 = vpop.f32.mrb[0].mxu0
      %v744 = vadd.f32 0.0, %v743
      %v745 = vpop.f32.mrb[0].mxu0
      %v746 = vpop.f32.mrb[0].mxu0
      %v747 = vadd.f32 0.0, %v746
      %v748 = vpop.f32.mrb[0].mxu0
      %749 = vmatprep.mubr.bf16.mxu0 0
      %750 = vmatmul.mubr.bf16.gmra.mrb[0].mxu0 %v512
      %v751 = vpop.f32.mrb[0].mxu0
      %v752 = vadd.f32 0.0, %v751
      %v753 = vpop.f32.mrb[0].mxu0
      %v754 = vpop.f32.mrb[0].mxu0
      %v755 = vadd.f32 0.0, %v754
      %v756 = vpop.f32.mrb[0].mxu0
      %757 = vmatprep.mubr.bf16.mxu0 0
      %758 = vmatmul.mubr.bf16.gmra.mrb[0].mxu0 %v515
      %v759 = vpop.f32.mrb[0].mxu0
      %v760 = vadd.f32 0.0, %v759
      %v761 = vpop.f32.mrb[0].mxu0
      %v762 = vpop.f32.mrb[0].mxu0
      %v763 = vadd.f32 0.0, %v762
      %v764 = vpop.f32.mrb[0].mxu0
      %765 = vmatprep.mubr.bf16.mxu0 0
      %766 = vmatmul.mubr.bf16.gmra.mrb[0].mxu0 %v518
      %v767 = vpop.f32.mrb[0].mxu0
      %v768 = vadd.f32 0.0, %v767
      %v769 = vpop.f32.mrb[0].mxu0
      %v770 = vpop.f32.mrb[0].mxu0
      %v771 = vadd.f32 0.0, %v770
      %v772 = vpop.f32.mrb[0].mxu0
      %773 = vmatprep.mubr.bf16.mxu0 0
      %774 = vmatmul.mubr.bf16.gmra.mrb[0].mxu0 %v521
      %v775 = vpop.f32.mrb[0].mxu0
      %v776 = vadd.f32 0.0, %v775
      %v777 = vpop.f32.mrb[0].mxu0
      %v778 = vpop.f32.mrb[0].mxu0
      %v779 = vadd.f32 0.0, %v778
      %v780 = vpop.f32.mrb[0].mxu0
      %781 = vmatprep.mubr.bf16.mxu0 0
      %782 = vmatmul.mubr.bf16.gmra.mrb[0].mxu0 %v524
      %v783 = vpop.f32.mrb[0].mxu0
      %v784 = vadd.f32 0.0, %v783
      %v785 = vpop.f32.mrb[0].mxu0
      %v786 = vpop.f32.mrb[0].mxu0
      %v787 = vadd.f32 0.0, %v786
      %v788 = vpop.f32.mrb[0].mxu0
      %789 = vmatprep.mubr.bf16.mxu0 0
      %790 = vmatmul.mubr.bf16.gmra.mrb[0].mxu0 %v527
      %v791 = vpop.f32.mrb[0].mxu0
      %v792 = vadd.f32 0.0, %v791
      %v793 = vpop.f32.mrb[0].mxu0
      %v794 = vpop.f32.mrb[0].mxu0
      %v795 = vadd.f32 0.0, %v794
      %v796 = vpop.f32.mrb[0].mxu0
      %797 = vmatprep.mubr.bf16.mxu0 0
      %798 = vmatmul.mubr.bf16.gmra.mrb[0].mxu0 %v530
      %v799 = vpop.f32.mrb[0].mxu0
      %v800 = vadd.f32 0.0, %v799
      %v801 = vpop.f32.mrb[0].mxu0
      %v802 = vpop.f32.mrb[0].mxu0
      %v803 = vadd.f32 0.0, %v802
      %v804 = vpop.f32.mrb[0].mxu0
      %805 = vmatprep.mubr.bf16.mxu0 0
      %806 = vmatmul.mubr.bf16.gmra.mrb[0].mxu0 %v533
      %v807 = vpop.f32.mrb[0].mxu0
      %v808 = vadd.f32 0.0, %v807
      %v809 = vpop.f32.mrb[0].mxu0
      %v810 = vpop.f32.mrb[0].mxu0
      %v811 = vadd.f32 0.0, %v810
      %v812 = vpop.f32.mrb[0].mxu0
      %813 = vmatprep.mubr.bf16.mxu0 0
      %814 = vmatmul.mubr.bf16.gmra.mrb[0].mxu0 %v536
      %v815 = vpop.f32.mrb[0].mxu0
      %v816 = vadd.f32 0.0, %v815
      %v817 = vpop.f32.mrb[0].mxu0
      %v818 = vpop.f32.mrb[0].mxu0
      %v819 = vadd.f32 0.0, %v818
      %v820 = vpop.f32.mrb[0].mxu0
      %821 = vmatprep.mubr.bf16.mxu0 0
      %822 = vmatmul.mubr.bf16.gmra.mrb[0].mxu0 %v539
      %v823 = vpop.f32.mrb[0].mxu0
      %v824 = vadd.f32 0.0, %v823
      %v825 = vpop.f32.mrb[0].mxu0
      %v826 = vpop.f32.mrb[0].mxu0
      %v827 = vadd.f32 0.0, %v826
      %v828 = vpop.f32.mrb[0].mxu0
      %829 = vdwg.mxu0
      %p830 = scmp.eq.s32.totalorder %s15, 0
      // Predicated region
      $region37: #{generator_forward.8} parent=35 // pred_check
        %p831 = pneg %p830
      $region38: #{generator_forward.8} parent=35 // pred_check_branch
        %833 = sbr.rel (%p831) target = $region40
      $region39: #{generator_forward.8} parent=35 // pred_region
        %834 = vst [vmem:[#allocation2] sm:$0x1] 0.0
        %835 = vst [vmem:[#allocation3] sm:$0x1] 0.0
      $region40: #{generator_forward.8} parent=35 // pred_fallthru
        _
      %v836 = vld [vmem:[#allocation2] sm:$0x1]
      %v837 = vadd.f32 %v576, %v579
      %v838 = vadd.f32 %v837, %v584
      %v839 = vadd.f32 %v838, %v587
      %v840 = vadd.f32 %v839, %v592
      %v841 = vadd.f32 %v840, %v595
      %v842 = vadd.f32 %v841, %v600
      %v843 = vadd.f32 %v842, %v603
      %v844 = vadd.f32 %v843, %v608
      %v845 = vadd.f32 %v844, %v611
      %v846 = vadd.f32 %v845, %v616
      %v847 = vadd.f32 %v846, %v619
      %v848 = vadd.f32 %v847, %v624
      %v849 = vadd.f32 %v848, %v627
      %v850 = vadd.f32 %v849, %v632
      %v851 = vadd.f32 %v850, %v635
      %v852 = vadd.f32 %v851, %v640
      %v853 = vadd.f32 %v852, %v643
      %v854 = vadd.f32 %v853, %v648
      %v855 = vadd.f32 %v854, %v651
      %v856 = vadd.f32 %v855, %v656
      %v857 = vadd.f32 %v856, %v659
      %v858 = vadd.f32 %v857, %v664
      %v859 = vadd.f32 %v858, %v667
      %v860 = vadd.f32 %v859, %v672
      %v861 = vadd.f32 %v860, %v675
      %v862 = vadd.f32 %v861, %v680
      %v863 = vadd.f32 %v862, %v683
      %v864 = vadd.f32 %v863, %v688
      %v865 = vadd.f32 %v864, %v691
      %v866 = vadd.f32 %v865, %v696
      %v867 = vadd.f32 %v866, %v699
      %v868 = vadd.f32 %v867, %v704
      %v869 = vadd.f32 %v868, %v707
      %v870 = vadd.f32 %v869, %v712
      %v871 = vadd.f32 %v870, %v715
      %v872 = vadd.f32 %v871, %v720
      %v873 = vadd.f32 %v872, %v723
      %v874 = vadd.f32 %v873, %v728
      %v875 = vadd.f32 %v874, %v731
      %v876 = vadd.f32 %v875, %v736
      %v877 = vadd.f32 %v876, %v739
      %v878 = vadd.f32 %v877, %v744
      %v879 = vadd.f32 %v878, %v747
      %v880 = vadd.f32 %v879, %v752
      %v881 = vadd.f32 %v880, %v755
      %v882 = vadd.f32 %v881, %v760
      %v883 = vadd.f32 %v882, %v763
      %v884 = vadd.f32 %v883, %v768
      %v885 = vadd.f32 %v884, %v771
      %v886 = vadd.f32 %v885, %v776
      %v887 = vadd.f32 %v886, %v779
      %v888 = vadd.f32 %v887, %v784
      %v889 = vadd.f32 %v888, %v787
      %v890 = vadd.f32 %v889, %v792
      %v891 = vadd.f32 %v890, %v795
      %v892 = vadd.f32 %v891, %v800
      %v893 = vadd.f32 %v892, %v803
      %v894 = vadd.f32 %v893, %v808
      %v895 = vadd.f32 %v894, %v811
      %v896 = vadd.f32 %v895, %v816
      %v897 = vadd.f32 %v896, %v819
      %v898 = vadd.f32 %v897, %v824
      %v899 = vadd.f32 %v898, %v827
      %v900 = vrot.slane %v899, 4
      %v901 = vadd.f32 %v899, %v900
      %v902 = vrot.slane %v901, 2
      %v903 = vadd.f32 %v901, %v902
      %v904 = vrot.slane %v903, 1
      %v905 = vadd.f32 %v903, %v904
      %v906 = vadd.f32 %v836, %v905
      %907 = vst [vmem:[#allocation2] sm:$0x1] %v906
      %v908 = vld [vmem:[#allocation3] sm:$0x1]
      %v909 = vmul.f32 %v576, %v576
      %v910 = vmul.f32 %v579, %v579
      %v911 = vmul.f32 %v584, %v584
      %v912 = vmul.f32 %v587, %v587
      %v913 = vmul.f32 %v592, %v592
      %v914 = vmul.f32 %v595, %v595
      %v915 = vmul.f32 %v600, %v600
      %v916 = vmul.f32 %v603, %v603
      %v917 = vmul.f32 %v608, %v608
      %v918 = vmul.f32 %v611, %v611
      %v919 = vmul.f32 %v616, %v616
      %v920 = vmul.f32 %v619, %v619
      %v921 = vmul.f32 %v624, %v624
      %v922 = vmul.f32 %v627, %v627
      %v923 = vmul.f32 %v632, %v632
      %v924 = vmul.f32 %v635, %v635
      %v925 = vmul.f32 %v640, %v640
      %v926 = vmul.f32 %v643, %v643
      %v927 = vmul.f32 %v648, %v648
      %v928 = vmul.f32 %v651, %v651
      %v929 = vmul.f32 %v656, %v656
      %v930 = vmul.f32 %v659, %v659
      %v931 = vmul.f32 %v664, %v664
      %v932 = vmul.f32 %v667, %v667
      %v933 = vmul.f32 %v672, %v672
      %v934 = vmul.f32 %v675, %v675
      %v935 = vmul.f32 %v680, %v680
      %v936 = vmul.f32 %v683, %v683
      %v937 = vmul.f32 %v688, %v688
      %v938 = vmul.f32 %v691, %v691
      %v939 = vmul.f32 %v696, %v696
      %v940 = vmul.f32 %v699, %v699
      %v941 = vmul.f32 %v704, %v704
      %v942 = vmul.f32 %v707, %v707
      %v943 = vmul.f32 %v712, %v712
      %v944 = vmul.f32 %v715, %v715
      %v945 = vmul.f32 %v720, %v720
      %v946 = vmul.f32 %v723, %v723
      %v947 = vmul.f32 %v728, %v728
      %v948 = vmul.f32 %v731, %v731
      %v949 = vmul.f32 %v736, %v736
      %v950 = vmul.f32 %v739, %v739
      %v951 = vmul.f32 %v744, %v744
      %v952 = vmul.f32 %v747, %v747
      %v953 = vmul.f32 %v752, %v752
      %v954 = vmul.f32 %v755, %v755
      %v955 = vmul.f32 %v760, %v760
      %v956 = vmul.f32 %v763, %v763
      %v957 = vmul.f32 %v768, %v768
      %v958 = vmul.f32 %v771, %v771
      %v959 = vmul.f32 %v776, %v776
      %v960 = vmul.f32 %v779, %v779
      %v961 = vmul.f32 %v784, %v784
      %v962 = vmul.f32 %v787, %v787
      %v963 = vmul.f32 %v792, %v792
      %v964 = vmul.f32 %v795, %v795
      %v965 = vmul.f32 %v800, %v800
      %v966 = vmul.f32 %v803, %v803
      %v967 = vmul.f32 %v808, %v808
      %v968 = vmul.f32 %v811, %v811
      %v969 = vmul.f32 %v816, %v816
      %v970 = vmul.f32 %v819, %v819
      %v971 = vmul.f32 %v824, %v824
      %v972 = vmul.f32 %v827, %v827
      %v973 = vadd.f32 %v909, %v910
      %v974 = vadd.f32 %v973, %v911
      %v975 = vadd.f32 %v974, %v912
      %v976 = vadd.f32 %v975, %v913
      %v977 = vadd.f32 %v976, %v914
      %v978 = vadd.f32 %v977, %v915
      %v979 = vadd.f32 %v978, %v916
      %v980 = vadd.f32 %v979, %v917
      %v981 = vadd.f32 %v980, %v918
      %v982 = vadd.f32 %v981, %v919
      %v983 = vadd.f32 %v982, %v920
      %v984 = vadd.f32 %v983, %v921
      %v985 = vadd.f32 %v984, %v922
      %v986 = vadd.f32 %v985, %v923
      %v987 = vadd.f32 %v986, %v924
      %v988 = vadd.f32 %v987, %v925
      %v989 = vadd.f32 %v988, %v926
      %v990 = vadd.f32 %v989, %v927
      %v991 = vadd.f32 %v990, %v928
      %v992 = vadd.f32 %v991, %v929
      %v993 = vadd.f32 %v992, %v930
      %v994 = vadd.f32 %v993, %v931
      %v995 = vadd.f32 %v994, %v932
      %v996 = vadd.f32 %v995, %v933
      %v997 = vadd.f32 %v996, %v934
      %v998 = vadd.f32 %v997, %v935
      %v999 = vadd.f32 %v998, %v936
      %v1000 = vadd.f32 %v999, %v937
      %v1001 = vadd.f32 %v1000, %v938
      %v1002 = vadd.f32 %v1001, %v939
      %v1003 = vadd.f32 %v1002, %v940
      %v1004 = vadd.f32 %v1003, %v941
      %v1005 = vadd.f32 %v1004, %v942
      %v1006 = vadd.f32 %v1005, %v943
      %v1007 = vadd.f32 %v1006, %v944
      %v1008 = vadd.f32 %v1007, %v945
      %v1009 = vadd.f32 %v1008, %v946
      %v1010 = vadd.f32 %v1009, %v947
      %v1011 = vadd.f32 %v1010, %v948
      %v1012 = vadd.f32 %v1011, %v949
      %v1013 = vadd.f32 %v1012, %v950
      %v1014 = vadd.f32 %v1013, %v951
      %v1015 = vadd.f32 %v1014, %v952
      %v1016 = vadd.f32 %v1015, %v953
      %v1017 = vadd.f32 %v1016, %v954
      %v1018 = vadd.f32 %v1017, %v955
      %v1019 = vadd.f32 %v1018, %v956
      %v1020 = vadd.f32 %v1019, %v957
      %v1021 = vadd.f32 %v1020, %v958
      %v1022 = vadd.f32 %v1021, %v959
      %v1023 = vadd.f32 %v1022, %v960
      %v1024 = vadd.f32 %v1023, %v961
      %v1025 = vadd.f32 %v1024, %v962
      %v1026 = vadd.f32 %v1025, %v963
      %v1027 = vadd.f32 %v1026, %v964
      %v1028 = vadd.f32 %v1027, %v965
      %v1029 = vadd.f32 %v1028, %v966
      %v1030 = vadd.f32 %v1029, %v967
      %v1031 = vadd.f32 %v1030, %v968
      %v1032 = vadd.f32 %v1031, %v969
      %v1033 = vadd.f32 %v1032, %v970
      %v1034 = vadd.f32 %v1033, %v971
      %v1035 = vadd.f32 %v1034, %v972
      %v1036 = vrot.slane %v1035, 4
      %v1037 = vadd.f32 %v1035, %v1036
      %v1038 = vrot.slane %v1037, 2
      %v1039 = vadd.f32 %v1037, %v1038
      %v1040 = vrot.slane %v1039, 1
      %v1041 = vadd.f32 %v1039, %v1040
      %v1042 = vadd.f32 %v908, %v1041
      %1043 = vst [vmem:[#allocation3] sm:$0x1] %v1042
      %v1044 = vpack.c.bf16 %v579, %v576
      %v1045 = vpack.c.bf16 %v587, %v584
      %v1046 = vpack.c.bf16 %v595, %v592
      %v1047 = vpack.c.bf16 %v603, %v600
      %v1048 = vpack.c.bf16 %v611, %v608
      %v1049 = vpack.c.bf16 %v619, %v616
      %v1050 = vpack.c.bf16 %v627, %v624
      %v1051 = vpack.c.bf16 %v635, %v632
      %v1052 = vpack.c.bf16 %v643, %v640
      %v1053 = vpack.c.bf16 %v651, %v648
      %v1054 = vpack.c.bf16 %v659, %v656
      %v1055 = vpack.c.bf16 %v667, %v664
      %v1056 = vpack.c.bf16 %v675, %v672
      %v1057 = vpack.c.bf16 %v683, %v680
      %v1058 = vpack.c.bf16 %v691, %v688
      %v1059 = vpack.c.bf16 %v699, %v696
      %v1060 = vpack.c.bf16 %v707, %v704
      %v1061 = vpack.c.bf16 %v715, %v712
      %v1062 = vpack.c.bf16 %v723, %v720
      %v1063 = vpack.c.bf16 %v731, %v728
      %v1064 = vpack.c.bf16 %v739, %v736
      %v1065 = vpack.c.bf16 %v747, %v744
      %v1066 = vpack.c.bf16 %v755, %v752
      %v1067 = vpack.c.bf16 %v763, %v760
      %v1068 = vpack.c.bf16 %v771, %v768
      %v1069 = vpack.c.bf16 %v779, %v776
      %v1070 = vpack.c.bf16 %v787, %v784
      %v1071 = vpack.c.bf16 %v795, %v792
      %v1072 = vpack.c.bf16 %v803, %v800
      %v1073 = vpack.c.bf16 %v811, %v808
      %v1074 = vpack.c.bf16 %v819, %v816
      %v1075 = vpack.c.bf16 %v827, %v824
      %v1108 = vunpack.c.l.b16 %v1044
      %v1109 = vunpack.c.h.b16 %v1044
      %v1110 = vunpack.c.l.b16 %v1045
      %v1111 = vunpack.c.h.b16 %v1045
      %v1112 = vunpack.c.l.b16 %v1046
      %v1113 = vunpack.c.h.b16 %v1046
      %v1114 = vunpack.c.l.b16 %v1047
      %v1115 = vunpack.c.h.b16 %v1047
      %v1116 = vunpack.c.l.b16 %v1048
      %v1117 = vunpack.c.h.b16 %v1048
      %v1118 = vunpack.c.l.b16 %v1049
      %v1119 = vunpack.c.h.b16 %v1049
      %v1120 = vunpack.c.l.b16 %v1050
      %v1121 = vunpack.c.h.b16 %v1050
      %v1122 = vunpack.c.l.b16 %v1051
      %v1123 = vunpack.c.h.b16 %v1051
      %v1124 = vunpack.c.l.b16 %v1052
      %v1125 = vunpack.c.h.b16 %v1052
      %v1126 = vunpack.c.l.b16 %v1053
      %v1127 = vunpack.c.h.b16 %v1053
      %v1128 = vunpack.c.l.b16 %v1054
      %v1129 = vunpack.c.h.b16 %v1054
      %v1130 = vunpack.c.l.b16 %v1055
      %v1131 = vunpack.c.h.b16 %v1055
      %v1132 = vunpack.c.l.b16 %v1056
      %v1133 = vunpack.c.h.b16 %v1056
      %v1134 = vunpack.c.l.b16 %v1057
      %v1135 = vunpack.c.h.b16 %v1057
      %v1136 = vunpack.c.l.b16 %v1058
      %v1137 = vunpack.c.h.b16 %v1058
      %v1138 = vunpack.c.l.b16 %v1059
      %v1139 = vunpack.c.h.b16 %v1059
      %v1140 = vunpack.c.l.b16 %v1060
      %v1141 = vunpack.c.h.b16 %v1060
      %v1142 = vunpack.c.l.b16 %v1061
      %v1143 = vunpack.c.h.b16 %v1061
      %v1144 = vunpack.c.l.b16 %v1062
      %v1145 = vunpack.c.h.b16 %v1062
      %v1146 = vunpack.c.l.b16 %v1063
      %v1147 = vunpack.c.h.b16 %v1063
      %v1148 = vunpack.c.l.b16 %v1064
      %v1149 = vunpack.c.h.b16 %v1064
      %v1150 = vunpack.c.l.b16 %v1065
      %v1151 = vunpack.c.h.b16 %v1065
      %v1152 = vunpack.c.l.b16 %v1066
      %v1153 = vunpack.c.h.b16 %v1066
      %v1154 = vunpack.c.l.b16 %v1067
      %v1155 = vunpack.c.h.b16 %v1067
      %v1156 = vunpack.c.l.b16 %v1068
      %v1157 = vunpack.c.h.b16 %v1068
      %v1158 = vunpack.c.l.b16 %v1069
      %v1159 = vunpack.c.h.b16 %v1069
      %v1160 = vunpack.c.l.b16 %v1070
      %v1161 = vunpack.c.h.b16 %v1070
      %v1162 = vunpack.c.l.b16 %v1071
      %v1163 = vunpack.c.h.b16 %v1071
      %v1164 = vunpack.c.l.b16 %v1072
      %v1165 = vunpack.c.h.b16 %v1072
      %v1166 = vunpack.c.l.b16 %v1073
      %v1167 = vunpack.c.h.b16 %v1073
      %v1168 = vunpack.c.l.b16 %v1074
      %v1169 = vunpack.c.h.b16 %v1074
      %v1170 = vunpack.c.l.b16 %v1075
      %v1171 = vunpack.c.h.b16 %v1075
      %v1172 = vpack.c.b16 %v1108, %v1108
      %v1173 = vpack.c.b16 %v1109, %v1109
      %v1174 = vpack.c.b16 %v1110, %v1110
      %v1175 = vpack.c.b16 %v1111, %v1111
      %v1176 = vpack.c.b16 %v1112, %v1112
      %v1177 = vpack.c.b16 %v1113, %v1113
      %v1178 = vpack.c.b16 %v1114, %v1114
      %v1179 = vpack.c.b16 %v1115, %v1115
      %v1180 = vpack.c.b16 %v1116, %v1116
      %v1181 = vpack.c.b16 %v1117, %v1117
      %v1182 = vpack.c.b16 %v1118, %v1118
      %v1183 = vpack.c.b16 %v1119, %v1119
      %v1184 = vpack.c.b16 %v1120, %v1120
      %v1185 = vpack.c.b16 %v1121, %v1121
      %v1186 = vpack.c.b16 %v1122, %v1122
      %v1187 = vpack.c.b16 %v1123, %v1123
      %v1188 = vpack.c.b16 %v1124, %v1124
      %v1189 = vpack.c.b16 %v1125, %v1125
      %v1190 = vpack.c.b16 %v1126, %v1126
      %v1191 = vpack.c.b16 %v1127, %v1127
      %v1192 = vpack.c.b16 %v1128, %v1128
      %v1193 = vpack.c.b16 %v1129, %v1129
      %v1194 = vpack.c.b16 %v1130, %v1130
      %v1195 = vpack.c.b16 %v1131, %v1131
      %v1196 = vpack.c.b16 %v1132, %v1132
      %v1197 = vpack.c.b16 %v1133, %v1133
      %v1198 = vpack.c.b16 %v1134, %v1134
      %v1199 = vpack.c.b16 %v1135, %v1135
      %v1200 = vpack.c.b16 %v1136, %v1136
      %v1201 = vpack.c.b16 %v1137, %v1137
      %v1202 = vpack.c.b16 %v1138, %v1138
      %v1203 = vpack.c.b16 %v1139, %v1139
      %v1204 = vpack.c.b16 %v1140, %v1140
      %v1205 = vpack.c.b16 %v1141, %v1141
      %v1206 = vpack.c.b16 %v1142, %v1142
      %v1207 = vpack.c.b16 %v1143, %v1143
      %v1208 = vpack.c.b16 %v1144, %v1144
      %v1209 = vpack.c.b16 %v1145, %v1145
      %v1210 = vpack.c.b16 %v1146, %v1146
      %v1211 = vpack.c.b16 %v1147, %v1147
      %v1212 = vpack.c.b16 %v1148, %v1148
      %v1213 = vpack.c.b16 %v1149, %v1149
      %v1214 = vpack.c.b16 %v1150, %v1150
      %v1215 = vpack.c.b16 %v1151, %v1151
      %v1216 = vpack.c.b16 %v1152, %v1152
      %v1217 = vpack.c.b16 %v1153, %v1153
      %v1218 = vpack.c.b16 %v1154, %v1154
      %v1219 = vpack.c.b16 %v1155, %v1155
      %v1220 = vpack.c.b16 %v1156, %v1156
      %v1221 = vpack.c.b16 %v1157, %v1157
      %v1222 = vpack.c.b16 %v1158, %v1158
      %v1223 = vpack.c.b16 %v1159, %v1159
      %v1224 = vpack.c.b16 %v1160, %v1160
      %v1225 = vpack.c.b16 %v1161, %v1161
      %v1226 = vpack.c.b16 %v1162, %v1162
      %v1227 = vpack.c.b16 %v1163, %v1163
      %v1228 = vpack.c.b16 %v1164, %v1164
      %v1229 = vpack.c.b16 %v1165, %v1165
      %v1230 = vpack.c.b16 %v1166, %v1166
      %v1231 = vpack.c.b16 %v1167, %v1167
      %v1232 = vpack.c.b16 %v1168, %v1168
      %v1233 = vpack.c.b16 %v1169, %v1169
      %v1234 = vpack.c.b16 %v1170, %v1170
      %v1235 = vpack.c.b16 %v1171, %v1171
      %s1300 = smul.u32 %s15, 64
      %s1301 = smul.addr %s1300, 4
      %s1302 = scalar_lea.vmem %s4, %s1301
      %1303 = vst [vmem:[%s1302] sm:$0xf] %v1172
      %1304 = vst [vmem:[%s1302 + $0x4] sm:$0xf] %v1173
      %1305 = vst [vmem:[%s1302 + $0x8] sm:$0xf] %v1174
      %1306 = vst [vmem:[%s1302 + $0xc] sm:$0xf] %v1175
      %1307 = vst [vmem:[%s1302 + $0x10] sm:$0xf] %v1176
      %1308 = vst [vmem:[%s1302 + $0x14] sm:$0xf] %v1177
      %1309 = vst [vmem:[%s1302 + $0x18] sm:$0xf] %v1178
      %1310 = vst [vmem:[%s1302 + $0x1c] sm:$0xf] %v1179
      %1311 = vst [vmem:[%s1302 + $0x20] sm:$0xf] %v1180
      %1312 = vst [vmem:[%s1302 + $0x24] sm:$0xf] %v1181
      %1313 = vst [vmem:[%s1302 + $0x28] sm:$0xf] %v1182
      %1314 = vst [vmem:[%s1302 + $0x2c] sm:$0xf] %v1183
      %1315 = vst [vmem:[%s1302 + $0x30] sm:$0xf] %v1184
      %1316 = vst [vmem:[%s1302 + $0x34] sm:$0xf] %v1185
      %1317 = vst [vmem:[%s1302 + $0x38] sm:$0xf] %v1186
      %1318 = vst [vmem:[%s1302 + $0x3c] sm:$0xf] %v1187
      %1319 = vst [vmem:[%s1302 + $0x40] sm:$0xf] %v1188
      %1320 = vst [vmem:[%s1302 + $0x44] sm:$0xf] %v1189
      %1321 = vst [vmem:[%s1302 + $0x48] sm:$0xf] %v1190
      %1322 = vst [vmem:[%s1302 + $0x4c] sm:$0xf] %v1191
      %1323 = vst [vmem:[%s1302 + $0x50] sm:$0xf] %v1192
      %1324 = vst [vmem:[%s1302 + $0x54] sm:$0xf] %v1193
      %1325 = vst [vmem:[%s1302 + $0x58] sm:$0xf] %v1194
      %1326 = vst [vmem:[%s1302 + $0x5c] sm:$0xf] %v1195
      %1327 = vst [vmem:[%s1302 + $0x60] sm:$0xf] %v1196
      %1328 = vst [vmem:[%s1302 + $0x64] sm:$0xf] %v1197
      %1329 = vst [vmem:[%s1302 + $0x68] sm:$0xf] %v1198
      %1330 = vst [vmem:[%s1302 + $0x6c] sm:$0xf] %v1199
      %1331 = vst [vmem:[%s1302 + $0x70] sm:$0xf] %v1200
      %1332 = vst [vmem:[%s1302 + $0x74] sm:$0xf] %v1201
      %1333 = vst [vmem:[%s1302 + $0x78] sm:$0xf] %v1202
      %1334 = vst [vmem:[%s1302 + $0x7c] sm:$0xf] %v1203
      %1335 = vst [vmem:[%s1302 + $0x80] sm:$0xf] %v1204
      %1336 = vst [vmem:[%s1302 + $0x84] sm:$0xf] %v1205
      %1337 = vst [vmem:[%s1302 + $0x88] sm:$0xf] %v1206
      %1338 = vst [vmem:[%s1302 + $0x8c] sm:$0xf] %v1207
      %1339 = vst [vmem:[%s1302 + $0x90] sm:$0xf] %v1208
      %1340 = vst [vmem:[%s1302 + $0x94] sm:$0xf] %v1209
      %1341 = vst [vmem:[%s1302 + $0x98] sm:$0xf] %v1210
      %1342 = vst [vmem:[%s1302 + $0x9c] sm:$0xf] %v1211
      %1343 = vst [vmem:[%s1302 + $0xa0] sm:$0xf] %v1212
      %1344 = vst [vmem:[%s1302 + $0xa4] sm:$0xf] %v1213
      %1345 = vst [vmem:[%s1302 + $0xa8] sm:$0xf] %v1214
      %1346 = vst [vmem:[%s1302 + $0xac] sm:$0xf] %v1215
      %1347 = vst [vmem:[%s1302 + $0xb0] sm:$0xf] %v1216
      %1348 = vst [vmem:[%s1302 + $0xb4] sm:$0xf] %v1217
      %1349 = vst [vmem:[%s1302 + $0xb8] sm:$0xf] %v1218
      %1350 = vst [vmem:[%s1302 + $0xbc] sm:$0xf] %v1219
      %1351 = vst [vmem:[%s1302 + $0xc0] sm:$0xf] %v1220
      %1352 = vst [vmem:[%s1302 + $0xc4] sm:$0xf] %v1221
      %1353 = vst [vmem:[%s1302 + $0xc8] sm:$0xf] %v1222
      %1354 = vst [vmem:[%s1302 + $0xcc] sm:$0xf] %v1223
      %1355 = vst [vmem:[%s1302 + $0xd0] sm:$0xf] %v1224
      %1356 = vst [vmem:[%s1302 + $0xd4] sm:$0xf] %v1225
      %1357 = vst [vmem:[%s1302 + $0xd8] sm:$0xf] %v1226
      %1358 = vst [vmem:[%s1302 + $0xdc] sm:$0xf] %v1227
      %1359 = vst [vmem:[%s1302 + $0xe0] sm:$0xf] %v1228
      %1360 = vst [vmem:[%s1302 + $0xe4] sm:$0xf] %v1229
      %1361 = vst [vmem:[%s1302 + $0xe8] sm:$0xf] %v1230
      %1362 = vst [vmem:[%s1302 + $0xec] sm:$0xf] %v1231
      %1363 = vst [vmem:[%s1302 + $0xf0] sm:$0xf] %v1232
      %1364 = vst [vmem:[%s1302 + $0xf4] sm:$0xf] %v1233
      %1365 = vst [vmem:[%s1302 + $0xf8] sm:$0xf] %v1234
      %1366 = vst [vmem:[%s1302 + $0xfc] sm:$0xf] %v1235
      %p1367 = scmp.eq.s32.totalorder %s15, 3
      // Predicated region
      $region41: #{generator_forward.8} parent=35 // pred_check
        %p1368 = pneg %p1367
      $region42: #{generator_forward.8} parent=35 // pred_check_branch
        %1370 = sbr.rel (%p1368) target = $region44
      $region43: #{generator_forward.8} parent=35 // pred_region
        %v1371 = vld [vmem:[#allocation2] sm:$0x1]
        %v1372 = vrcp.pop 2048.0
        %v1373 = vmul.f32 %v1371, %v1372
        %v1374 = vld [vmem:[#allocation3] sm:$0x1]
        %v1375 = vmul.f32 %v1374, %v1372
        %v1376 = vmul.f32 %v1373, %v1373
        %v1377 = vsub.f32 %v1375, %v1376
        %v1378 = vmax.f32 %v1377, 0.0
        %v1379 = vld [vmem:[%s2] sm:$0x1]
        %v1380 = vadd.f32 %v1378, 1e-05
        %v1381 = vrsqrt.pop %v1380
        %v1382 = vmul.f32 %v1379, %v1381
        %v1383 = vld [vmem:[%s3] sm:$0x1]
        %v1384 = vmul.f32 %v1373, %v1382
        %v1385 = vsub.f32 %v1383, %v1384
        %v1386 = vld [vmem:[%s4] sm:$0xf]
        %v1387 = vld [vmem:[%s4 + $0x4] sm:$0xf]
        %v1388 = vld [vmem:[%s4 + $0x8] sm:$0xf]
        %v1389 = vld [vmem:[%s4 + $0xc] sm:$0xf]
        %v1390 = vld [vmem:[%s4 + $0x10] sm:$0xf]
        %v1391 = vld [vmem:[%s4 + $0x14] sm:$0xf]
        %v1392 = vld [vmem:[%s4 + $0x18] sm:$0xf]
        %v1393 = vld [vmem:[%s4 + $0x1c] sm:$0xf]
        %v1394 = vld [vmem:[%s4 + $0x20] sm:$0xf]
        %v1395 = vld [vmem:[%s4 + $0x24] sm:$0xf]
        %v1396 = vld [vmem:[%s4 + $0x28] sm:$0xf]
        %v1397 = vld [vmem:[%s4 + $0x2c] sm:$0xf]
        %v1398 = vld [vmem:[%s4 + $0x30] sm:$0xf]
        %v1399 = vld [vmem:[%s4 + $0x34] sm:$0xf]
        %v1400 = vld [vmem:[%s4 + $0x38] sm:$0xf]
        %v1401 = vld [vmem:[%s4 + $0x3c] sm:$0xf]
        %v1402 = vld [vmem:[%s4 + $0x40] sm:$0xf]
        %v1403 = vld [vmem:[%s4 + $0x44] sm:$0xf]
        %v1404 = vld [vmem:[%s4 + $0x48] sm:$0xf]
        %v1405 = vld [vmem:[%s4 + $0x4c] sm:$0xf]
        %v1406 = vld [vmem:[%s4 + $0x50] sm:$0xf]
        %v1407 = vld [vmem:[%s4 + $0x54] sm:$0xf]
        %v1408 = vld [vmem:[%s4 + $0x58] sm:$0xf]
        %v1409 = vld [vmem:[%s4 + $0x5c] sm:$0xf]
        %v1410 = vld [vmem:[%s4 + $0x60] sm:$0xf]
        %v1411 = vld [vmem:[%s4 + $0x64] sm:$0xf]
        %v1412 = vld [vmem:[%s4 + $0x68] sm:$0xf]
        %v1413 = vld [vmem:[%s4 + $0x6c] sm:$0xf]
        %v1414 = vld [vmem:[%s4 + $0x70] sm:$0xf]
        %v1415 = vld [vmem:[%s4 + $0x74] sm:$0xf]
        %v1416 = vld [vmem:[%s4 + $0x78] sm:$0xf]
        %v1417 = vld [vmem:[%s4 + $0x7c] sm:$0xf]
        %v1418 = vld [vmem:[%s4 + $0x80] sm:$0xf]
        %v1419 = vld [vmem:[%s4 + $0x84] sm:$0xf]
        %v1420 = vld [vmem:[%s4 + $0x88] sm:$0xf]
        %v1421 = vld [vmem:[%s4 + $0x8c] sm:$0xf]
        %v1422 = vld [vmem:[%s4 + $0x90] sm:$0xf]
        %v1423 = vld [vmem:[%s4 + $0x94] sm:$0xf]
        %v1424 = vld [vmem:[%s4 + $0x98] sm:$0xf]
        %v1425 = vld [vmem:[%s4 + $0x9c] sm:$0xf]
        %v1426 = vld [vmem:[%s4 + $0xa0] sm:$0xf]
        %v1427 = vld [vmem:[%s4 + $0xa4] sm:$0xf]
        %v1428 = vld [vmem:[%s4 + $0xa8] sm:$0xf]
        %v1429 = vld [vmem:[%s4 + $0xac] sm:$0xf]
        %v1430 = vld [vmem:[%s4 + $0xb0] sm:$0xf]
        %v1431 = vld [vmem:[%s4 + $0xb4] sm:$0xf]
        %v1432 = vld [vmem:[%s4 + $0xb8] sm:$0xf]
        %v1433 = vld [vmem:[%s4 + $0xbc] sm:$0xf]
        %v1434 = vld [vmem:[%s4 + $0xc0] sm:$0xf]
        %v1435 = vld [vmem:[%s4 + $0xc4] sm:$0xf]
        %v1436 = vld [vmem:[%s4 + $0xc8] sm:$0xf]
        %v1437 = vld [vmem:[%s4 + $0xcc] sm:$0xf]
        %v1438 = vld [vmem:[%s4 + $0xd0] sm:$0xf]
        %v1439 = vld [vmem:[%s4 + $0xd4] sm:$0xf]
        %v1440 = vld [vmem:[%s4 + $0xd8] sm:$0xf]
        %v1441 = vld [vmem:[%s4 + $0xdc] sm:$0xf]
        %v1442 = vld [vmem:[%s4 + $0xe0] sm:$0xf]
        %v1443 = vld [vmem:[%s4 + $0xe4] sm:$0xf]
        %v1444 = vld [vmem:[%s4 + $0xe8] sm:$0xf]
        %v1445 = vld [vmem:[%s4 + $0xec] sm:$0xf]
        %v1446 = vld [vmem:[%s4 + $0xf0] sm:$0xf]
        %v1447 = vld [vmem:[%s4 + $0xf4] sm:$0xf]
        %v1448 = vld [vmem:[%s4 + $0xf8] sm:$0xf]
        %v1449 = vld [vmem:[%s4 + $0xfc] sm:$0xf]
        %v1450 = vld [vmem:[%s4 + $0x100] sm:$0xf]
        %v1451 = vld [vmem:[%s4 + $0x104] sm:$0xf]
        %v1452 = vld [vmem:[%s4 + $0x108] sm:$0xf]
        %v1453 = vld [vmem:[%s4 + $0x10c] sm:$0xf]
        %v1454 = vld [vmem:[%s4 + $0x110] sm:$0xf]
        %v1455 = vld [vmem:[%s4 + $0x114] sm:$0xf]
        %v1456 = vld [vmem:[%s4 + $0x118] sm:$0xf]
        %v1457 = vld [vmem:[%s4 + $0x11c] sm:$0xf]
        %v1458 = vld [vmem:[%s4 + $0x120] sm:$0xf]
        %v1459 = vld [vmem:[%s4 + $0x124] sm:$0xf]
        %v1460 = vld [vmem:[%s4 + $0x128] sm:$0xf]
        %v1461 = vld [vmem:[%s4 + $0x12c] sm:$0xf]
        %v1462 = vld [vmem:[%s4 + $0x130] sm:$0xf]
        %v1463 = vld [vmem:[%s4 + $0x134] sm:$0xf]
        %v1464 = vld [vmem:[%s4 + $0x138] sm:$0xf]
        %v1465 = vld [vmem:[%s4 + $0x13c] sm:$0xf]
        %v1466 = vld [vmem:[%s4 + $0x140] sm:$0xf]
        %v1467 = vld [vmem:[%s4 + $0x144] sm:$0xf]
        %v1468 = vld [vmem:[%s4 + $0x148] sm:$0xf]
        %v1469 = vld [vmem:[%s4 + $0x14c] sm:$0xf]
        %v1470 = vld [vmem:[%s4 + $0x150] sm:$0xf]
        %v1471 = vld [vmem:[%s4 + $0x154] sm:$0xf]
        %v1472 = vld [vmem:[%s4 + $0x158] sm:$0xf]
        %v1473 = vld [vmem:[%s4 + $0x15c] sm:$0xf]
        %v1474 = vld [vmem:[%s4 + $0x160] sm:$0xf]
        %v1475 = vld [vmem:[%s4 + $0x164] sm:$0xf]
        %v1476 = vld [vmem:[%s4 + $0x168] sm:$0xf]
        %v1477 = vld [vmem:[%s4 + $0x16c] sm:$0xf]
        %v1478 = vld [vmem:[%s4 + $0x170] sm:$0xf]
        %v1479 = vld [vmem:[%s4 + $0x174] sm:$0xf]
        %v1480 = vld [vmem:[%s4 + $0x178] sm:$0xf]
        %v1481 = vld [vmem:[%s4 + $0x17c] sm:$0xf]
        %v1482 = vld [vmem:[%s4 + $0x180] sm:$0xf]
        %v1483 = vld [vmem:[%s4 + $0x184] sm:$0xf]
        %v1484 = vld [vmem:[%s4 + $0x188] sm:$0xf]
        %v1485 = vld [vmem:[%s4 + $0x18c] sm:$0xf]
        %v1486 = vld [vmem:[%s4 + $0x190] sm:$0xf]
        %v1487 = vld [vmem:[%s4 + $0x194] sm:$0xf]
        %v1488 = vld [vmem:[%s4 + $0x198] sm:$0xf]
        %v1489 = vld [vmem:[%s4 + $0x19c] sm:$0xf]
        %v1490 = vld [vmem:[%s4 + $0x1a0] sm:$0xf]
        %v1491 = vld [vmem:[%s4 + $0x1a4] sm:$0xf]
        %v1492 = vld [vmem:[%s4 + $0x1a8] sm:$0xf]
        %v1493 = vld [vmem:[%s4 + $0x1ac] sm:$0xf]
        %v1494 = vld [vmem:[%s4 + $0x1b0] sm:$0xf]
        %v1495 = vld [vmem:[%s4 + $0x1b4] sm:$0xf]
        %v1496 = vld [vmem:[%s4 + $0x1b8] sm:$0xf]
        %v1497 = vld [vmem:[%s4 + $0x1bc] sm:$0xf]
        %v1498 = vld [vmem:[%s4 + $0x1c0] sm:$0xf]
        %v1499 = vld [vmem:[%s4 + $0x1c4] sm:$0xf]
        %v1500 = vld [vmem:[%s4 + $0x1c8] sm:$0xf]
        %v1501 = vld [vmem:[%s4 + $0x1cc] sm:$0xf]
        %v1502 = vld [vmem:[%s4 + $0x1d0] sm:$0xf]
        %v1503 = vld [vmem:[%s4 + $0x1d4] sm:$0xf]
        %v1504 = vld [vmem:[%s4 + $0x1d8] sm:$0xf]
        %v1505 = vld [vmem:[%s4 + $0x1dc] sm:$0xf]
        %v1506 = vld [vmem:[%s4 + $0x1e0] sm:$0xf]
        %v1507 = vld [vmem:[%s4 + $0x1e4] sm:$0xf]
        %v1508 = vld [vmem:[%s4 + $0x1e8] sm:$0xf]
        %v1509 = vld [vmem:[%s4 + $0x1ec] sm:$0xf]
        %v1510 = vld [vmem:[%s4 + $0x1f0] sm:$0xf]
        %v1511 = vld [vmem:[%s4 + $0x1f4] sm:$0xf]
        %v1512 = vld [vmem:[%s4 + $0x1f8] sm:$0xf]
        %v1513 = vld [vmem:[%s4 + $0x1fc] sm:$0xf]
        %v1514 = vld [vmem:[%s4 + $0x200] sm:$0xf]
        %v1515 = vld [vmem:[%s4 + $0x204] sm:$0xf]
        %v1516 = vld [vmem:[%s4 + $0x208] sm:$0xf]
        %v1517 = vld [vmem:[%s4 + $0x20c] sm:$0xf]
        %v1518 = vld [vmem:[%s4 + $0x210] sm:$0xf]
        %v1519 = vld [vmem:[%s4 + $0x214] sm:$0xf]
        %v1520 = vld [vmem:[%s4 + $0x218] sm:$0xf]
        %v1521 = vld [vmem:[%s4 + $0x21c] sm:$0xf]
        %v1522 = vld [vmem:[%s4 + $0x220] sm:$0xf]
        %v1523 = vld [vmem:[%s4 + $0x224] sm:$0xf]
        %v1524 = vld [vmem:[%s4 + $0x228] sm:$0xf]
        %v1525 = vld [vmem:[%s4 + $0x22c] sm:$0xf]
        %v1526 = vld [vmem:[%s4 + $0x230] sm:$0xf]
        %v1527 = vld [vmem:[%s4 + $0x234] sm:$0xf]
        %v1528 = vld [vmem:[%s4 + $0x238] sm:$0xf]
        %v1529 = vld [vmem:[%s4 + $0x23c] sm:$0xf]
        %v1530 = vld [vmem:[%s4 + $0x240] sm:$0xf]
        %v1531 = vld [vmem:[%s4 + $0x244] sm:$0xf]
        %v1532 = vld [vmem:[%s4 + $0x248] sm:$0xf]
        %v1533 = vld [vmem:[%s4 + $0x24c] sm:$0xf]
        %v1534 = vld [vmem:[%s4 + $0x250] sm:$0xf]
        %v1535 = vld [vmem:[%s4 + $0x254] sm:$0xf]
        %v1536 = vld [vmem:[%s4 + $0x258] sm:$0xf]
        %v1537 = vld [vmem:[%s4 + $0x25c] sm:$0xf]
        %v1538 = vld [vmem:[%s4 + $0x260] sm:$0xf]
        %v1539 = vld [vmem:[%s4 + $0x264] sm:$0xf]
        %v1540 = vld [vmem:[%s4 + $0x268] sm:$0xf]
        %v1541 = vld [vmem:[%s4 + $0x26c] sm:$0xf]
        %v1542 = vld [vmem:[%s4 + $0x270] sm:$0xf]
        %v1543 = vld [vmem:[%s4 + $0x274] sm:$0xf]
        %v1544 = vld [vmem:[%s4 + $0x278] sm:$0xf]
        %v1545 = vld [vmem:[%s4 + $0x27c] sm:$0xf]
        %v1546 = vld [vmem:[%s4 + $0x280] sm:$0xf]
        %v1547 = vld [vmem:[%s4 + $0x284] sm:$0xf]
        %v1548 = vld [vmem:[%s4 + $0x288] sm:$0xf]
        %v1549 = vld [vmem:[%s4 + $0x28c] sm:$0xf]
        %v1550 = vld [vmem:[%s4 + $0x290] sm:$0xf]
        %v1551 = vld [vmem:[%s4 + $0x294] sm:$0xf]
        %v1552 = vld [vmem:[%s4 + $0x298] sm:$0xf]
        %v1553 = vld [vmem:[%s4 + $0x29c] sm:$0xf]
        %v1554 = vld [vmem:[%s4 + $0x2a0] sm:$0xf]
        %v1555 = vld [vmem:[%s4 + $0x2a4] sm:$0xf]
        %v1556 = vld [vmem:[%s4 + $0x2a8] sm:$0xf]
        %v1557 = vld [vmem:[%s4 + $0x2ac] sm:$0xf]
        %v1558 = vld [vmem:[%s4 + $0x2b0] sm:$0xf]
        %v1559 = vld [vmem:[%s4 + $0x2b4] sm:$0xf]
        %v1560 = vld [vmem:[%s4 + $0x2b8] sm:$0xf]
        %v1561 = vld [vmem:[%s4 + $0x2bc] sm:$0xf]
        %v1562 = vld [vmem:[%s4 + $0x2c0] sm:$0xf]
        %v1563 = vld [vmem:[%s4 + $0x2c4] sm:$0xf]
        %v1564 = vld [vmem:[%s4 + $0x2c8] sm:$0xf]
        %v1565 = vld [vmem:[%s4 + $0x2cc] sm:$0xf]
        %v1566 = vld [vmem:[%s4 + $0x2d0] sm:$0xf]
        %v1567 = vld [vmem:[%s4 + $0x2d4] sm:$0xf]
        %v1568 = vld [vmem:[%s4 + $0x2d8] sm:$0xf]
        %v1569 = vld [vmem:[%s4 + $0x2dc] sm:$0xf]
        %v1570 = vld [vmem:[%s4 + $0x2e0] sm:$0xf]
        %v1571 = vld [vmem:[%s4 + $0x2e4] sm:$0xf]
        %v1572 = vld [vmem:[%s4 + $0x2e8] sm:$0xf]
        %v1573 = vld [vmem:[%s4 + $0x2ec] sm:$0xf]
        %v1574 = vld [vmem:[%s4 + $0x2f0] sm:$0xf]
        %v1575 = vld [vmem:[%s4 + $0x2f4] sm:$0xf]
        %v1576 = vld [vmem:[%s4 + $0x2f8] sm:$0xf]
        %v1577 = vld [vmem:[%s4 + $0x2fc] sm:$0xf]
        %v1578 = vld [vmem:[%s4 + $0x300] sm:$0xf]
        %v1579 = vld [vmem:[%s4 + $0x304] sm:$0xf]
        %v1580 = vld [vmem:[%s4 + $0x308] sm:$0xf]
        %v1581 = vld [vmem:[%s4 + $0x30c] sm:$0xf]
        %v1582 = vld [vmem:[%s4 + $0x310] sm:$0xf]
        %v1583 = vld [vmem:[%s4 + $0x314] sm:$0xf]
        %v1584 = vld [vmem:[%s4 + $0x318] sm:$0xf]
        %v1585 = vld [vmem:[%s4 + $0x31c] sm:$0xf]
        %v1586 = vld [vmem:[%s4 + $0x320] sm:$0xf]
        %v1587 = vld [vmem:[%s4 + $0x324] sm:$0xf]
        %v1588 = vld [vmem:[%s4 + $0x328] sm:$0xf]
        %v1589 = vld [vmem:[%s4 + $0x32c] sm:$0xf]
        %v1590 = vld [vmem:[%s4 + $0x330] sm:$0xf]
        %v1591 = vld [vmem:[%s4 + $0x334] sm:$0xf]
        %v1592 = vld [vmem:[%s4 + $0x338] sm:$0xf]
        %v1593 = vld [vmem:[%s4 + $0x33c] sm:$0xf]
        %v1594 = vld [vmem:[%s4 + $0x340] sm:$0xf]
        %v1595 = vld [vmem:[%s4 + $0x344] sm:$0xf]
        %v1596 = vld [vmem:[%s4 + $0x348] sm:$0xf]
        %v1597 = vld [vmem:[%s4 + $0x34c] sm:$0xf]
        %v1598 = vld [vmem:[%s4 + $0x350] sm:$0xf]
        %v1599 = vld [vmem:[%s4 + $0x354] sm:$0xf]
        %v1600 = vld [vmem:[%s4 + $0x358] sm:$0xf]
        %v1601 = vld [vmem:[%s4 + $0x35c] sm:$0xf]
        %v1602 = vld [vmem:[%s4 + $0x360] sm:$0xf]
        %v1603 = vld [vmem:[%s4 + $0x364] sm:$0xf]
        %v1604 = vld [vmem:[%s4 + $0x368] sm:$0xf]
        %v1605 = vld [vmem:[%s4 + $0x36c] sm:$0xf]
        %v1606 = vld [vmem:[%s4 + $0x370] sm:$0xf]
        %v1607 = vld [vmem:[%s4 + $0x374] sm:$0xf]
        %v1608 = vld [vmem:[%s4 + $0x378] sm:$0xf]
        %v1609 = vld [vmem:[%s4 + $0x37c] sm:$0xf]
        %v1610 = vld [vmem:[%s4 + $0x380] sm:$0xf]
        %v1611 = vld [vmem:[%s4 + $0x384] sm:$0xf]
        %v1612 = vld [vmem:[%s4 + $0x388] sm:$0xf]
        %v1613 = vld [vmem:[%s4 + $0x38c] sm:$0xf]
        %v1614 = vld [vmem:[%s4 + $0x390] sm:$0xf]
        %v1615 = vld [vmem:[%s4 + $0x394] sm:$0xf]
        %v1616 = vld [vmem:[%s4 + $0x398] sm:$0xf]
        %v1617 = vld [vmem:[%s4 + $0x39c] sm:$0xf]
        %v1618 = vld [vmem:[%s4 + $0x3a0] sm:$0xf]
        %v1619 = vld [vmem:[%s4 + $0x3a4] sm:$0xf]
        %v1620 = vld [vmem:[%s4 + $0x3a8] sm:$0xf]
        %v1621 = vld [vmem:[%s4 + $0x3ac] sm:$0xf]
        %v1622 = vld [vmem:[%s4 + $0x3b0] sm:$0xf]
        %v1623 = vld [vmem:[%s4 + $0x3b4] sm:$0xf]
        %v1624 = vld [vmem:[%s4 + $0x3b8] sm:$0xf]
        %v1625 = vld [vmem:[%s4 + $0x3bc] sm:$0xf]
        %v1626 = vld [vmem:[%s4 + $0x3c0] sm:$0xf]
        %v1627 = vld [vmem:[%s4 + $0x3c4] sm:$0xf]
        %v1628 = vld [vmem:[%s4 + $0x3c8] sm:$0xf]
        %v1629 = vld [vmem:[%s4 + $0x3cc] sm:$0xf]
        %v1630 = vld [vmem:[%s4 + $0x3d0] sm:$0xf]
        %v1631 = vld [vmem:[%s4 + $0x3d4] sm:$0xf]
        %v1632 = vld [vmem:[%s4 + $0x3d8] sm:$0xf]
        %v1633 = vld [vmem:[%s4 + $0x3dc] sm:$0xf]
        %v1634 = vld [vmem:[%s4 + $0x3e0] sm:$0xf]
        %v1635 = vld [vmem:[%s4 + $0x3e4] sm:$0xf]
        %v1636 = vld [vmem:[%s4 + $0x3e8] sm:$0xf]
        %v1637 = vld [vmem:[%s4 + $0x3ec] sm:$0xf]
        %v1638 = vld [vmem:[%s4 + $0x3f0] sm:$0xf]
        %v1639 = vld [vmem:[%s4 + $0x3f4] sm:$0xf]
        %v1640 = vld [vmem:[%s4 + $0x3f8] sm:$0xf]
        %v1641 = vld [vmem:[%s4 + $0x3fc] sm:$0xf]
        %v1642 = vunpack.c.l.bf16 %v1386
        %v1643 = vunpack.c.l.bf16 %v1387
        %v1644 = vunpack.c.l.bf16 %v1388
        %v1645 = vunpack.c.l.bf16 %v1389
        %v1646 = vunpack.c.l.bf16 %v1390
        %v1647 = vunpack.c.l.bf16 %v1391
        %v1648 = vunpack.c.l.bf16 %v1392
        %v1649 = vunpack.c.l.bf16 %v1393
        %v1650 = vunpack.c.l.bf16 %v1394
        %v1651 = vunpack.c.l.bf16 %v1395
        %v1652 = vunpack.c.l.bf16 %v1396
        %v1653 = vunpack.c.l.bf16 %v1397
        %v1654 = vunpack.c.l.bf16 %v1398
        %v1655 = vunpack.c.l.bf16 %v1399
        %v1656 = vunpack.c.l.bf16 %v1400
        %v1657 = vunpack.c.l.bf16 %v1401
        %v1658 = vunpack.c.l.bf16 %v1402
        %v1659 = vunpack.c.l.bf16 %v1403
        %v1660 = vunpack.c.l.bf16 %v1404
        %v1661 = vunpack.c.l.bf16 %v1405
        %v1662 = vunpack.c.l.bf16 %v1406
        %v1663 = vunpack.c.l.bf16 %v1407
        %v1664 = vunpack.c.l.bf16 %v1408
        %v1665 = vunpack.c.l.bf16 %v1409
        %v1666 = vunpack.c.l.bf16 %v1410
        %v1667 = vunpack.c.l.bf16 %v1411
        %v1668 = vunpack.c.l.bf16 %v1412
        %v1669 = vunpack.c.l.bf16 %v1413
        %v1670 = vunpack.c.l.bf16 %v1414
        %v1671 = vunpack.c.l.bf16 %v1415
        %v1672 = vunpack.c.l.bf16 %v1416
        %v1673 = vunpack.c.l.bf16 %v1417
        %v1674 = vunpack.c.l.bf16 %v1418
        %v1675 = vunpack.c.l.bf16 %v1419
        %v1676 = vunpack.c.l.bf16 %v1420
        %v1677 = vunpack.c.l.bf16 %v1421
        %v1678 = vunpack.c.l.bf16 %v1422
        %v1679 = vunpack.c.l.bf16 %v1423
        %v1680 = vunpack.c.l.bf16 %v1424
        %v1681 = vunpack.c.l.bf16 %v1425
        %v1682 = vunpack.c.l.bf16 %v1426
        %v1683 = vunpack.c.l.bf16 %v1427
        %v1684 = vunpack.c.l.bf16 %v1428
        %v1685 = vunpack.c.l.bf16 %v1429
        %v1686 = vunpack.c.l.bf16 %v1430
        %v1687 = vunpack.c.l.bf16 %v1431
        %v1688 = vunpack.c.l.bf16 %v1432
        %v1689 = vunpack.c.l.bf16 %v1433
        %v1690 = vunpack.c.l.bf16 %v1434
        %v1691 = vunpack.c.l.bf16 %v1435
        %v1692 = vunpack.c.l.bf16 %v1436
        %v1693 = vunpack.c.l.bf16 %v1437
        %v1694 = vunpack.c.l.bf16 %v1438
        %v1695 = vunpack.c.l.bf16 %v1439
        %v1696 = vunpack.c.l.bf16 %v1440
        %v1697 = vunpack.c.l.bf16 %v1441
        %v1698 = vunpack.c.l.bf16 %v1442
        %v1699 = vunpack.c.l.bf16 %v1443
        %v1700 = vunpack.c.l.bf16 %v1444
        %v1701 = vunpack.c.l.bf16 %v1445
        %v1702 = vunpack.c.l.bf16 %v1446
        %v1703 = vunpack.c.l.bf16 %v1447
        %v1704 = vunpack.c.l.bf16 %v1448
        %v1705 = vunpack.c.l.bf16 %v1449
        %v1706 = vunpack.c.l.bf16 %v1450
        %v1707 = vunpack.c.l.bf16 %v1451
        %v1708 = vunpack.c.l.bf16 %v1452
        %v1709 = vunpack.c.l.bf16 %v1453
        %v1710 = vunpack.c.l.bf16 %v1454
        %v1711 = vunpack.c.l.bf16 %v1455
        %v1712 = vunpack.c.l.bf16 %v1456
        %v1713 = vunpack.c.l.bf16 %v1457
        %v1714 = vunpack.c.l.bf16 %v1458
        %v1715 = vunpack.c.l.bf16 %v1459
        %v1716 = vunpack.c.l.bf16 %v1460
        %v1717 = vunpack.c.l.bf16 %v1461
        %v1718 = vunpack.c.l.bf16 %v1462
        %v1719 = vunpack.c.l.bf16 %v1463
        %v1720 = vunpack.c.l.bf16 %v1464
        %v1721 = vunpack.c.l.bf16 %v1465
        %v1722 = vunpack.c.l.bf16 %v1466
        %v1723 = vunpack.c.l.bf16 %v1467
        %v1724 = vunpack.c.l.bf16 %v1468
        %v1725 = vunpack.c.l.bf16 %v1469
        %v1726 = vunpack.c.l.bf16 %v1470
        %v1727 = vunpack.c.l.bf16 %v1471
        %v1728 = vunpack.c.l.bf16 %v1472
        %v1729 = vunpack.c.l.bf16 %v1473
        %v1730 = vunpack.c.l.bf16 %v1474
        %v1731 = vunpack.c.l.bf16 %v1475
        %v1732 = vunpack.c.l.bf16 %v1476
        %v1733 = vunpack.c.l.bf16 %v1477
        %v1734 = vunpack.c.l.bf16 %v1478
        %v1735 = vunpack.c.l.bf16 %v1479
        %v1736 = vunpack.c.l.bf16 %v1480
        %v1737 = vunpack.c.l.bf16 %v1481
        %v1738 = vunpack.c.l.bf16 %v1482
        %v1739 = vunpack.c.l.bf16 %v1483
        %v1740 = vunpack.c.l.bf16 %v1484
        %v1741 = vunpack.c.l.bf16 %v1485
        %v1742 = vunpack.c.l.bf16 %v1486
        %v1743 = vunpack.c.l.bf16 %v1487
        %v1744 = vunpack.c.l.bf16 %v1488
        %v1745 = vunpack.c.l.bf16 %v1489
        %v1746 = vunpack.c.l.bf16 %v1490
        %v1747 = vunpack.c.l.bf16 %v1491
        %v1748 = vunpack.c.l.bf16 %v1492
        %v1749 = vunpack.c.l.bf16 %v1493
        %v1750 = vunpack.c.l.bf16 %v1494
        %v1751 = vunpack.c.l.bf16 %v1495
        %v1752 = vunpack.c.l.bf16 %v1496
        %v1753 = vunpack.c.l.bf16 %v1497
        %v1754 = vunpack.c.l.bf16 %v1498
        %v1755 = vunpack.c.l.bf16 %v1499
        %v1756 = vunpack.c.l.bf16 %v1500
        %v1757 = vunpack.c.l.bf16 %v1501
        %v1758 = vunpack.c.l.bf16 %v1502
        %v1759 = vunpack.c.l.bf16 %v1503
        %v1760 = vunpack.c.l.bf16 %v1504
        %v1761 = vunpack.c.l.bf16 %v1505
        %v1762 = vunpack.c.l.bf16 %v1506
        %v1763 = vunpack.c.l.bf16 %v1507
        %v1764 = vunpack.c.l.bf16 %v1508
        %v1765 = vunpack.c.l.bf16 %v1509
        %v1766 = vunpack.c.l.bf16 %v1510
        %v1767 = vunpack.c.l.bf16 %v1511
        %v1768 = vunpack.c.l.bf16 %v1512
        %v1769 = vunpack.c.l.bf16 %v1513
        %v1770 = vunpack.c.l.bf16 %v1514
        %v1771 = vunpack.c.l.bf16 %v1515
        %v1772 = vunpack.c.l.bf16 %v1516
        %v1773 = vunpack.c.l.bf16 %v1517
        %v1774 = vunpack.c.l.bf16 %v1518
        %v1775 = vunpack.c.l.bf16 %v1519
        %v1776 = vunpack.c.l.bf16 %v1520
        %v1777 = vunpack.c.l.bf16 %v1521
        %v1778 = vunpack.c.l.bf16 %v1522
        %v1779 = vunpack.c.l.bf16 %v1523
        %v1780 = vunpack.c.l.bf16 %v1524
        %v1781 = vunpack.c.l.bf16 %v1525
        %v1782 = vunpack.c.l.bf16 %v1526
        %v1783 = vunpack.c.l.bf16 %v1527
        %v1784 = vunpack.c.l.bf16 %v1528
        %v1785 = vunpack.c.l.bf16 %v1529
        %v1786 = vunpack.c.l.bf16 %v1530
        %v1787 = vunpack.c.l.bf16 %v1531
        %v1788 = vunpack.c.l.bf16 %v1532
        %v1789 = vunpack.c.l.bf16 %v1533
        %v1790 = vunpack.c.l.bf16 %v1534
        %v1791 = vunpack.c.l.bf16 %v1535
        %v1792 = vunpack.c.l.bf16 %v1536
        %v1793 = vunpack.c.l.bf16 %v1537
        %v1794 = vunpack.c.l.bf16 %v1538
        %v1795 = vunpack.c.l.bf16 %v1539
        %v1796 = vunpack.c.l.bf16 %v1540
        %v1797 = vunpack.c.l.bf16 %v1541
        %v1798 = vunpack.c.l.bf16 %v1542
        %v1799 = vunpack.c.l.bf16 %v1543
        %v1800 = vunpack.c.l.bf16 %v1544
        %v1801 = vunpack.c.l.bf16 %v1545
        %v1802 = vunpack.c.l.bf16 %v1546
        %v1803 = vunpack.c.l.bf16 %v1547
        %v1804 = vunpack.c.l.bf16 %v1548
        %v1805 = vunpack.c.l.bf16 %v1549
        %v1806 = vunpack.c.l.bf16 %v1550
        %v1807 = vunpack.c.l.bf16 %v1551
        %v1808 = vunpack.c.l.bf16 %v1552
        %v1809 = vunpack.c.l.bf16 %v1553
        %v1810 = vunpack.c.l.bf16 %v1554
        %v1811 = vunpack.c.l.bf16 %v1555
        %v1812 = vunpack.c.l.bf16 %v1556
        %v1813 = vunpack.c.l.bf16 %v1557
        %v1814 = vunpack.c.l.bf16 %v1558
        %v1815 = vunpack.c.l.bf16 %v1559
        %v1816 = vunpack.c.l.bf16 %v1560
        %v1817 = vunpack.c.l.bf16 %v1561
        %v1818 = vunpack.c.l.bf16 %v1562
        %v1819 = vunpack.c.l.bf16 %v1563
        %v1820 = vunpack.c.l.bf16 %v1564
        %v1821 = vunpack.c.l.bf16 %v1565
        %v1822 = vunpack.c.l.bf16 %v1566
        %v1823 = vunpack.c.l.bf16 %v1567
        %v1824 = vunpack.c.l.bf16 %v1568
        %v1825 = vunpack.c.l.bf16 %v1569
        %v1826 = vunpack.c.l.bf16 %v1570
        %v1827 = vunpack.c.l.bf16 %v1571
        %v1828 = vunpack.c.l.bf16 %v1572
        %v1829 = vunpack.c.l.bf16 %v1573
        %v1830 = vunpack.c.l.bf16 %v1574
        %v1831 = vunpack.c.l.bf16 %v1575
        %v1832 = vunpack.c.l.bf16 %v1576
        %v1833 = vunpack.c.l.bf16 %v1577
        %v1834 = vunpack.c.l.bf16 %v1578
        %v1835 = vunpack.c.l.bf16 %v1579
        %v1836 = vunpack.c.l.bf16 %v1580
        %v1837 = vunpack.c.l.bf16 %v1581
        %v1838 = vunpack.c.l.bf16 %v1582
        %v1839 = vunpack.c.l.bf16 %v1583
        %v1840 = vunpack.c.l.bf16 %v1584
        %v1841 = vunpack.c.l.bf16 %v1585
        %v1842 = vunpack.c.l.bf16 %v1586
        %v1843 = vunpack.c.l.bf16 %v1587
        %v1844 = vunpack.c.l.bf16 %v1588
        %v1845 = vunpack.c.l.bf16 %v1589
        %v1846 = vunpack.c.l.bf16 %v1590
        %v1847 = vunpack.c.l.bf16 %v1591
        %v1848 = vunpack.c.l.bf16 %v1592
        %v1849 = vunpack.c.l.bf16 %v1593
        %v1850 = vunpack.c.l.bf16 %v1594
        %v1851 = vunpack.c.l.bf16 %v1595
        %v1852 = vunpack.c.l.bf16 %v1596
        %v1853 = vunpack.c.l.bf16 %v1597
        %v1854 = vunpack.c.l.bf16 %v1598
        %v1855 = vunpack.c.l.bf16 %v1599
        %v1856 = vunpack.c.l.bf16 %v1600
        %v1857 = vunpack.c.l.bf16 %v1601
        %v1858 = vunpack.c.l.bf16 %v1602
        %v1859 = vunpack.c.l.bf16 %v1603
        %v1860 = vunpack.c.l.bf16 %v1604
        %v1861 = vunpack.c.l.bf16 %v1605
        %v1862 = vunpack.c.l.bf16 %v1606
        %v1863 = vunpack.c.l.bf16 %v1607
        %v1864 = vunpack.c.l.bf16 %v1608
        %v1865 = vunpack.c.l.bf16 %v1609
        %v1866 = vunpack.c.l.bf16 %v1610
        %v1867 = vunpack.c.l.bf16 %v1611
        %v1868 = vunpack.c.l.bf16 %v1612
        %v1869 = vunpack.c.l.bf16 %v1613
        %v1870 = vunpack.c.l.bf16 %v1614
        %v1871 = vunpack.c.l.bf16 %v1615
        %v1872 = vunpack.c.l.bf16 %v1616
        %v1873 = vunpack.c.l.bf16 %v1617
        %v1874 = vunpack.c.l.bf16 %v1618
        %v1875 = vunpack.c.l.bf16 %v1619
        %v1876 = vunpack.c.l.bf16 %v1620
        %v1877 = vunpack.c.l.bf16 %v1621
        %v1878 = vunpack.c.l.bf16 %v1622
        %v1879 = vunpack.c.l.bf16 %v1623
        %v1880 = vunpack.c.l.bf16 %v1624
        %v1881 = vunpack.c.l.bf16 %v1625
        %v1882 = vunpack.c.l.bf16 %v1626
        %v1883 = vunpack.c.l.bf16 %v1627
        %v1884 = vunpack.c.l.bf16 %v1628
        %v1885 = vunpack.c.l.bf16 %v1629
        %v1886 = vunpack.c.l.bf16 %v1630
        %v1887 = vunpack.c.l.bf16 %v1631
        %v1888 = vunpack.c.l.bf16 %v1632
        %v1889 = vunpack.c.l.bf16 %v1633
        %v1890 = vunpack.c.l.bf16 %v1634
        %v1891 = vunpack.c.l.bf16 %v1635
        %v1892 = vunpack.c.l.bf16 %v1636
        %v1893 = vunpack.c.l.bf16 %v1637
        %v1894 = vunpack.c.l.bf16 %v1638
        %v1895 = vunpack.c.l.bf16 %v1639
        %v1896 = vunpack.c.l.bf16 %v1640
        %v1897 = vunpack.c.l.bf16 %v1641
        %v1899 = vlaneseq
        %v1900 = vshrl.u32 %v1899, 7
        %v1901 = vsub.s32 0, %v1900
        %v1902 = vrot.slane %v1382, %v1901
        %v1904 = vmul.f32 %v1642, %v1902
        %v1905 = vmul.f32 %v1643, %v1902
        %v1906 = vmul.f32 %v1644, %v1902
        %v1907 = vmul.f32 %v1645, %v1902
        %v1908 = vmul.f32 %v1646, %v1902
        %v1909 = vmul.f32 %v1647, %v1902
        %v1910 = vmul.f32 %v1648, %v1902
        %v1911 = vmul.f32 %v1649, %v1902
        %v1912 = vmul.f32 %v1650, %v1902
        %v1913 = vmul.f32 %v1651, %v1902
        %v1914 = vmul.f32 %v1652, %v1902
        %v1915 = vmul.f32 %v1653, %v1902
        %v1916 = vmul.f32 %v1654, %v1902
        %v1917 = vmul.f32 %v1655, %v1902
        %v1918 = vmul.f32 %v1656, %v1902
        %v1919 = vmul.f32 %v1657, %v1902
        %v1920 = vmul.f32 %v1658, %v1902
        %v1921 = vmul.f32 %v1659, %v1902
        %v1922 = vmul.f32 %v1660, %v1902
        %v1923 = vmul.f32 %v1661, %v1902
        %v1924 = vmul.f32 %v1662, %v1902
        %v1925 = vmul.f32 %v1663, %v1902
        %v1926 = vmul.f32 %v1664, %v1902
        %v1927 = vmul.f32 %v1665, %v1902
        %v1928 = vmul.f32 %v1666, %v1902
        %v1929 = vmul.f32 %v1667, %v1902
        %v1930 = vmul.f32 %v1668, %v1902
        %v1931 = vmul.f32 %v1669, %v1902
        %v1932 = vmul.f32 %v1670, %v1902
        %v1933 = vmul.f32 %v1671, %v1902
        %v1934 = vmul.f32 %v1672, %v1902
        %v1935 = vmul.f32 %v1673, %v1902
        %v1936 = vmul.f32 %v1674, %v1902
        %v1937 = vmul.f32 %v1675, %v1902
        %v1938 = vmul.f32 %v1676, %v1902
        %v1939 = vmul.f32 %v1677, %v1902
        %v1940 = vmul.f32 %v1678, %v1902
        %v1941 = vmul.f32 %v1679, %v1902
        %v1942 = vmul.f32 %v1680, %v1902
        %v1943 = vmul.f32 %v1681, %v1902
        %v1944 = vmul.f32 %v1682, %v1902
        %v1945 = vmul.f32 %v1683, %v1902
        %v1946 = vmul.f32 %v1684, %v1902
        %v1947 = vmul.f32 %v1685, %v1902
        %v1948 = vmul.f32 %v1686, %v1902
        %v1949 = vmul.f32 %v1687, %v1902
        %v1950 = vmul.f32 %v1688, %v1902
        %v1951 = vmul.f32 %v1689, %v1902
        %v1952 = vmul.f32 %v1690, %v1902
        %v1953 = vmul.f32 %v1691, %v1902
        %v1954 = vmul.f32 %v1692, %v1902
        %v1955 = vmul.f32 %v1693, %v1902
        %v1956 = vmul.f32 %v1694, %v1902
        %v1957 = vmul.f32 %v1695, %v1902
        %v1958 = vmul.f32 %v1696, %v1902
        %v1959 = vmul.f32 %v1697, %v1902
        %v1960 = vmul.f32 %v1698, %v1902
        %v1961 = vmul.f32 %v1699, %v1902
        %v1962 = vmul.f32 %v1700, %v1902
        %v1963 = vmul.f32 %v1701, %v1902
        %v1964 = vmul.f32 %v1702, %v1902
        %v1965 = vmul.f32 %v1703, %v1902
        %v1966 = vmul.f32 %v1704, %v1902
        %v1967 = vmul.f32 %v1705, %v1902
        %v1968 = vmul.f32 %v1706, %v1902
        %v1969 = vmul.f32 %v1707, %v1902
        %v1970 = vmul.f32 %v1708, %v1902
        %v1971 = vmul.f32 %v1709, %v1902
        %v1972 = vmul.f32 %v1710, %v1902
        %v1973 = vmul.f32 %v1711, %v1902
        %v1974 = vmul.f32 %v1712, %v1902
        %v1975 = vmul.f32 %v1713, %v1902
        %v1976 = vmul.f32 %v1714, %v1902
        %v1977 = vmul.f32 %v1715, %v1902
        %v1978 = vmul.f32 %v1716, %v1902
        %v1979 = vmul.f32 %v1717, %v1902
        %v1980 = vmul.f32 %v1718, %v1902
        %v1981 = vmul.f32 %v1719, %v1902
        %v1982 = vmul.f32 %v1720, %v1902
        %v1983 = vmul.f32 %v1721, %v1902
        %v1984 = vmul.f32 %v1722, %v1902
        %v1985 = vmul.f32 %v1723, %v1902
        %v1986 = vmul.f32 %v1724, %v1902
        %v1987 = vmul.f32 %v1725, %v1902
        %v1988 = vmul.f32 %v1726, %v1902
        %v1989 = vmul.f32 %v1727, %v1902
        %v1990 = vmul.f32 %v1728, %v1902
        %v1991 = vmul.f32 %v1729, %v1902
        %v1992 = vmul.f32 %v1730, %v1902
        %v1993 = vmul.f32 %v1731, %v1902
        %v1994 = vmul.f32 %v1732, %v1902
        %v1995 = vmul.f32 %v1733, %v1902
        %v1996 = vmul.f32 %v1734, %v1902
        %v1997 = vmul.f32 %v1735, %v1902
        %v1998 = vmul.f32 %v1736, %v1902
        %v1999 = vmul.f32 %v1737, %v1902
        %v2000 = vmul.f32 %v1738, %v1902
        %v2001 = vmul.f32 %v1739, %v1902
        %v2002 = vmul.f32 %v1740, %v1902
        %v2003 = vmul.f32 %v1741, %v1902
        %v2004 = vmul.f32 %v1742, %v1902
        %v2005 = vmul.f32 %v1743, %v1902
        %v2006 = vmul.f32 %v1744, %v1902
        %v2007 = vmul.f32 %v1745, %v1902
        %v2008 = vmul.f32 %v1746, %v1902
        %v2009 = vmul.f32 %v1747, %v1902
        %v2010 = vmul.f32 %v1748, %v1902
        %v2011 = vmul.f32 %v1749, %v1902
        %v2012 = vmul.f32 %v1750, %v1902
        %v2013 = vmul.f32 %v1751, %v1902
        %v2014 = vmul.f32 %v1752, %v1902
        %v2015 = vmul.f32 %v1753, %v1902
        %v2016 = vmul.f32 %v1754, %v1902
        %v2017 = vmul.f32 %v1755, %v1902
        %v2018 = vmul.f32 %v1756, %v1902
        %v2019 = vmul.f32 %v1757, %v1902
        %v2020 = vmul.f32 %v1758, %v1902
        %v2021 = vmul.f32 %v1759, %v1902
        %v2022 = vmul.f32 %v1760, %v1902
        %v2023 = vmul.f32 %v1761, %v1902
        %v2024 = vmul.f32 %v1762, %v1902
        %v2025 = vmul.f32 %v1763, %v1902
        %v2026 = vmul.f32 %v1764, %v1902
        %v2027 = vmul.f32 %v1765, %v1902
        %v2028 = vmul.f32 %v1766, %v1902
        %v2029 = vmul.f32 %v1767, %v1902
        %v2030 = vmul.f32 %v1768, %v1902
        %v2031 = vmul.f32 %v1769, %v1902
        %v2032 = vmul.f32 %v1770, %v1902
        %v2033 = vmul.f32 %v1771, %v1902
        %v2034 = vmul.f32 %v1772, %v1902
        %v2035 = vmul.f32 %v1773, %v1902
        %v2036 = vmul.f32 %v1774, %v1902
        %v2037 = vmul.f32 %v1775, %v1902
        %v2038 = vmul.f32 %v1776, %v1902
        %v2039 = vmul.f32 %v1777, %v1902
        %v2040 = vmul.f32 %v1778, %v1902
        %v2041 = vmul.f32 %v1779, %v1902
        %v2042 = vmul.f32 %v1780, %v1902
        %v2043 = vmul.f32 %v1781, %v1902
        %v2044 = vmul.f32 %v1782, %v1902
        %v2045 = vmul.f32 %v1783, %v1902
        %v2046 = vmul.f32 %v1784, %v1902
        %v2047 = vmul.f32 %v1785, %v1902
        %v2048 = vmul.f32 %v1786, %v1902
        %v2049 = vmul.f32 %v1787, %v1902
        %v2050 = vmul.f32 %v1788, %v1902
        %v2051 = vmul.f32 %v1789, %v1902
        %v2052 = vmul.f32 %v1790, %v1902
        %v2053 = vmul.f32 %v1791, %v1902
        %v2054 = vmul.f32 %v1792, %v1902
        %v2055 = vmul.f32 %v1793, %v1902
        %v2056 = vmul.f32 %v1794, %v1902
        %v2057 = vmul.f32 %v1795, %v1902
        %v2058 = vmul.f32 %v1796, %v1902
        %v2059 = vmul.f32 %v1797, %v1902
        %v2060 = vmul.f32 %v1798, %v1902
        %v2061 = vmul.f32 %v1799, %v1902
        %v2062 = vmul.f32 %v1800, %v1902
        %v2063 = vmul.f32 %v1801, %v1902
        %v2064 = vmul.f32 %v1802, %v1902
        %v2065 = vmul.f32 %v1803, %v1902
        %v2066 = vmul.f32 %v1804, %v1902
        %v2067 = vmul.f32 %v1805, %v1902
        %v2068 = vmul.f32 %v1806, %v1902
        %v2069 = vmul.f32 %v1807, %v1902
        %v2070 = vmul.f32 %v1808, %v1902
        %v2071 = vmul.f32 %v1809, %v1902
        %v2072 = vmul.f32 %v1810, %v1902
        %v2073 = vmul.f32 %v1811, %v1902
        %v2074 = vmul.f32 %v1812, %v1902
        %v2075 = vmul.f32 %v1813, %v1902
        %v2076 = vmul.f32 %v1814, %v1902
        %v2077 = vmul.f32 %v1815, %v1902
        %v2078 = vmul.f32 %v1816, %v1902
        %v2079 = vmul.f32 %v1817, %v1902
        %v2080 = vmul.f32 %v1818, %v1902
        %v2081 = vmul.f32 %v1819, %v1902
        %v2082 = vmul.f32 %v1820, %v1902
        %v2083 = vmul.f32 %v1821, %v1902
        %v2084 = vmul.f32 %v1822, %v1902
        %v2085 = vmul.f32 %v1823, %v1902
        %v2086 = vmul.f32 %v1824, %v1902
        %v2087 = vmul.f32 %v1825, %v1902
        %v2088 = vmul.f32 %v1826, %v1902
        %v2089 = vmul.f32 %v1827, %v1902
        %v2090 = vmul.f32 %v1828, %v1902
        %v2091 = vmul.f32 %v1829, %v1902
        %v2092 = vmul.f32 %v1830, %v1902
        %v2093 = vmul.f32 %v1831, %v1902
        %v2094 = vmul.f32 %v1832, %v1902
        %v2095 = vmul.f32 %v1833, %v1902
        %v2096 = vmul.f32 %v1834, %v1902
        %v2097 = vmul.f32 %v1835, %v1902
        %v2098 = vmul.f32 %v1836, %v1902
        %v2099 = vmul.f32 %v1837, %v1902
        %v2100 = vmul.f32 %v1838, %v1902
        %v2101 = vmul.f32 %v1839, %v1902
        %v2102 = vmul.f32 %v1840, %v1902
        %v2103 = vmul.f32 %v1841, %v1902
        %v2104 = vmul.f32 %v1842, %v1902
        %v2105 = vmul.f32 %v1843, %v1902
        %v2106 = vmul.f32 %v1844, %v1902
        %v2107 = vmul.f32 %v1845, %v1902
        %v2108 = vmul.f32 %v1846, %v1902
        %v2109 = vmul.f32 %v1847, %v1902
        %v2110 = vmul.f32 %v1848, %v1902
        %v2111 = vmul.f32 %v1849, %v1902
        %v2112 = vmul.f32 %v1850, %v1902
        %v2113 = vmul.f32 %v1851, %v1902
        %v2114 = vmul.f32 %v1852, %v1902
        %v2115 = vmul.f32 %v1853, %v1902
        %v2116 = vmul.f32 %v1854, %v1902
        %v2117 = vmul.f32 %v1855, %v1902
        %v2118 = vmul.f32 %v1856, %v1902
        %v2119 = vmul.f32 %v1857, %v1902
        %v2120 = vmul.f32 %v1858, %v1902
        %v2121 = vmul.f32 %v1859, %v1902
        %v2122 = vmul.f32 %v1860, %v1902
        %v2123 = vmul.f32 %v1861, %v1902
        %v2124 = vmul.f32 %v1862, %v1902
        %v2125 = vmul.f32 %v1863, %v1902
        %v2126 = vmul.f32 %v1864, %v1902
        %v2127 = vmul.f32 %v1865, %v1902
        %v2128 = vmul.f32 %v1866, %v1902
        %v2129 = vmul.f32 %v1867, %v1902
        %v2130 = vmul.f32 %v1868, %v1902
        %v2131 = vmul.f32 %v1869, %v1902
        %v2132 = vmul.f32 %v1870, %v1902
        %v2133 = vmul.f32 %v1871, %v1902
        %v2134 = vmul.f32 %v1872, %v1902
        %v2135 = vmul.f32 %v1873, %v1902
        %v2136 = vmul.f32 %v1874, %v1902
        %v2137 = vmul.f32 %v1875, %v1902
        %v2138 = vmul.f32 %v1876, %v1902
        %v2139 = vmul.f32 %v1877, %v1902
        %v2140 = vmul.f32 %v1878, %v1902
        %v2141 = vmul.f32 %v1879, %v1902
        %v2142 = vmul.f32 %v1880, %v1902
        %v2143 = vmul.f32 %v1881, %v1902
        %v2144 = vmul.f32 %v1882, %v1902
        %v2145 = vmul.f32 %v1883, %v1902
        %v2146 = vmul.f32 %v1884, %v1902
        %v2147 = vmul.f32 %v1885, %v1902
        %v2148 = vmul.f32 %v1886, %v1902
        %v2149 = vmul.f32 %v1887, %v1902
        %v2150 = vmul.f32 %v1888, %v1902
        %v2151 = vmul.f32 %v1889, %v1902
        %v2152 = vmul.f32 %v1890, %v1902
        %v2153 = vmul.f32 %v1891, %v1902
        %v2154 = vmul.f32 %v1892, %v1902
        %v2155 = vmul.f32 %v1893, %v1902
        %v2156 = vmul.f32 %v1894, %v1902
        %v2157 = vmul.f32 %v1895, %v1902
        %v2158 = vmul.f32 %v1896, %v1902
        %v2159 = vmul.f32 %v1897, %v1902
        %v2161 = vlaneseq
        %v2162 = vshrl.u32 %v2161, 7
        %v2163 = vsub.s32 0, %v2162
        %v2164 = vrot.slane %v1385, %v2163
        %v2166 = vadd.f32 %v1904, %v2164
        %v2167 = vadd.f32 %v1905, %v2164
        %v2168 = vadd.f32 %v1906, %v2164
        %v2169 = vadd.f32 %v1907, %v2164
        %v2170 = vadd.f32 %v1908, %v2164
        %v2171 = vadd.f32 %v1909, %v2164
        %v2172 = vadd.f32 %v1910, %v2164
        %v2173 = vadd.f32 %v1911, %v2164
        %v2174 = vadd.f32 %v1912, %v2164
        %v2175 = vadd.f32 %v1913, %v2164
        %v2176 = vadd.f32 %v1914, %v2164
        %v2177 = vadd.f32 %v1915, %v2164
        %v2178 = vadd.f32 %v1916, %v2164
        %v2179 = vadd.f32 %v1917, %v2164
        %v2180 = vadd.f32 %v1918, %v2164
        %v2181 = vadd.f32 %v1919, %v2164
        %v2182 = vadd.f32 %v1920, %v2164
        %v2183 = vadd.f32 %v1921, %v2164
        %v2184 = vadd.f32 %v1922, %v2164
        %v2185 = vadd.f32 %v1923, %v2164
        %v2186 = vadd.f32 %v1924, %v2164
        %v2187 = vadd.f32 %v1925, %v2164
        %v2188 = vadd.f32 %v1926, %v2164
        %v2189 = vadd.f32 %v1927, %v2164
        %v2190 = vadd.f32 %v1928, %v2164
        %v2191 = vadd.f32 %v1929, %v2164
        %v2192 = vadd.f32 %v1930, %v2164
        %v2193 = vadd.f32 %v1931, %v2164
        %v2194 = vadd.f32 %v1932, %v2164
        %v2195 = vadd.f32 %v1933, %v2164
        %v2196 = vadd.f32 %v1934, %v2164
        %v2197 = vadd.f32 %v1935, %v2164
        %v2198 = vadd.f32 %v1936, %v2164
        %v2199 = vadd.f32 %v1937, %v2164
        %v2200 = vadd.f32 %v1938, %v2164
        %v2201 = vadd.f32 %v1939, %v2164
        %v2202 = vadd.f32 %v1940, %v2164
        %v2203 = vadd.f32 %v1941, %v2164
        %v2204 = vadd.f32 %v1942, %v2164
        %v2205 = vadd.f32 %v1943, %v2164
        %v2206 = vadd.f32 %v1944, %v2164
        %v2207 = vadd.f32 %v1945, %v2164
        %v2208 = vadd.f32 %v1946, %v2164
        %v2209 = vadd.f32 %v1947, %v2164
        %v2210 = vadd.f32 %v1948, %v2164
        %v2211 = vadd.f32 %v1949, %v2164
        %v2212 = vadd.f32 %v1950, %v2164
        %v2213 = vadd.f32 %v1951, %v2164
        %v2214 = vadd.f32 %v1952, %v2164
        %v2215 = vadd.f32 %v1953, %v2164
        %v2216 = vadd.f32 %v1954, %v2164
        %v2217 = vadd.f32 %v1955, %v2164
        %v2218 = vadd.f32 %v1956, %v2164
        %v2219 = vadd.f32 %v1957, %v2164
        %v2220 = vadd.f32 %v1958, %v2164
        %v2221 = vadd.f32 %v1959, %v2164
        %v2222 = vadd.f32 %v1960, %v2164
        %v2223 = vadd.f32 %v1961, %v2164
        %v2224 = vadd.f32 %v1962, %v2164
        %v2225 = vadd.f32 %v1963, %v2164
        %v2226 = vadd.f32 %v1964, %v2164
        %v2227 = vadd.f32 %v1965, %v2164
        %v2228 = vadd.f32 %v1966, %v2164
        %v2229 = vadd.f32 %v1967, %v2164
        %v2230 = vadd.f32 %v1968, %v2164
        %v2231 = vadd.f32 %v1969, %v2164
        %v2232 = vadd.f32 %v1970, %v2164
        %v2233 = vadd.f32 %v1971, %v2164
        %v2234 = vadd.f32 %v1972, %v2164
        %v2235 = vadd.f32 %v1973, %v2164
        %v2236 = vadd.f32 %v1974, %v2164
        %v2237 = vadd.f32 %v1975, %v2164
        %v2238 = vadd.f32 %v1976, %v2164
        %v2239 = vadd.f32 %v1977, %v2164
        %v2240 = vadd.f32 %v1978, %v2164
        %v2241 = vadd.f32 %v1979, %v2164
        %v2242 = vadd.f32 %v1980, %v2164
        %v2243 = vadd.f32 %v1981, %v2164
        %v2244 = vadd.f32 %v1982, %v2164
        %v2245 = vadd.f32 %v1983, %v2164
        %v2246 = vadd.f32 %v1984, %v2164
        %v2247 = vadd.f32 %v1985, %v2164
        %v2248 = vadd.f32 %v1986, %v2164
        %v2249 = vadd.f32 %v1987, %v2164
        %v2250 = vadd.f32 %v1988, %v2164
        %v2251 = vadd.f32 %v1989, %v2164
        %v2252 = vadd.f32 %v1990, %v2164
        %v2253 = vadd.f32 %v1991, %v2164
        %v2254 = vadd.f32 %v1992, %v2164
        %v2255 = vadd.f32 %v1993, %v2164
        %v2256 = vadd.f32 %v1994, %v2164
        %v2257 = vadd.f32 %v1995, %v2164
        %v2258 = vadd.f32 %v1996, %v2164
        %v2259 = vadd.f32 %v1997, %v2164
        %v2260 = vadd.f32 %v1998, %v2164
        %v2261 = vadd.f32 %v1999, %v2164
        %v2262 = vadd.f32 %v2000, %v2164
        %v2263 = vadd.f32 %v2001, %v2164
        %v2264 = vadd.f32 %v2002, %v2164
        %v2265 = vadd.f32 %v2003, %v2164
        %v2266 = vadd.f32 %v2004, %v2164
        %v2267 = vadd.f32 %v2005, %v2164
        %v2268 = vadd.f32 %v2006, %v2164
        %v2269 = vadd.f32 %v2007, %v2164
        %v2270 = vadd.f32 %v2008, %v2164
        %v2271 = vadd.f32 %v2009, %v2164
        %v2272 = vadd.f32 %v2010, %v2164
        %v2273 = vadd.f32 %v2011, %v2164
        %v2274 = vadd.f32 %v2012, %v2164
        %v2275 = vadd.f32 %v2013, %v2164
        %v2276 = vadd.f32 %v2014, %v2164
        %v2277 = vadd.f32 %v2015, %v2164
        %v2278 = vadd.f32 %v2016, %v2164
        %v2279 = vadd.f32 %v2017, %v2164
        %v2280 = vadd.f32 %v2018, %v2164
        %v2281 = vadd.f32 %v2019, %v2164
        %v2282 = vadd.f32 %v2020, %v2164
        %v2283 = vadd.f32 %v2021, %v2164
        %v2284 = vadd.f32 %v2022, %v2164
        %v2285 = vadd.f32 %v2023, %v2164
        %v2286 = vadd.f32 %v2024, %v2164
        %v2287 = vadd.f32 %v2025, %v2164
        %v2288 = vadd.f32 %v2026, %v2164
        %v2289 = vadd.f32 %v2027, %v2164
        %v2290 = vadd.f32 %v2028, %v2164
        %v2291 = vadd.f32 %v2029, %v2164
        %v2292 = vadd.f32 %v2030, %v2164
        %v2293 = vadd.f32 %v2031, %v2164
        %v2294 = vadd.f32 %v2032, %v2164
        %v2295 = vadd.f32 %v2033, %v2164
        %v2296 = vadd.f32 %v2034, %v2164
        %v2297 = vadd.f32 %v2035, %v2164
        %v2298 = vadd.f32 %v2036, %v2164
        %v2299 = vadd.f32 %v2037, %v2164
        %v2300 = vadd.f32 %v2038, %v2164
        %v2301 = vadd.f32 %v2039, %v2164
        %v2302 = vadd.f32 %v2040, %v2164
        %v2303 = vadd.f32 %v2041, %v2164
        %v2304 = vadd.f32 %v2042, %v2164
        %v2305 = vadd.f32 %v2043, %v2164
        %v2306 = vadd.f32 %v2044, %v2164
        %v2307 = vadd.f32 %v2045, %v2164
        %v2308 = vadd.f32 %v2046, %v2164
        %v2309 = vadd.f32 %v2047, %v2164
        %v2310 = vadd.f32 %v2048, %v2164
        %v2311 = vadd.f32 %v2049, %v2164
        %v2312 = vadd.f32 %v2050, %v2164
        %v2313 = vadd.f32 %v2051, %v2164
        %v2314 = vadd.f32 %v2052, %v2164
        %v2315 = vadd.f32 %v2053, %v2164
        %v2316 = vadd.f32 %v2054, %v2164
        %v2317 = vadd.f32 %v2055, %v2164
        %v2318 = vadd.f32 %v2056, %v2164
        %v2319 = vadd.f32 %v2057, %v2164
        %v2320 = vadd.f32 %v2058, %v2164
        %v2321 = vadd.f32 %v2059, %v2164
        %v2322 = vadd.f32 %v2060, %v2164
        %v2323 = vadd.f32 %v2061, %v2164
        %v2324 = vadd.f32 %v2062, %v2164
        %v2325 = vadd.f32 %v2063, %v2164
        %v2326 = vadd.f32 %v2064, %v2164
        %v2327 = vadd.f32 %v2065, %v2164
        %v2328 = vadd.f32 %v2066, %v2164
        %v2329 = vadd.f32 %v2067, %v2164
        %v2330 = vadd.f32 %v2068, %v2164
        %v2331 = vadd.f32 %v2069, %v2164
        %v2332 = vadd.f32 %v2070, %v2164
        %v2333 = vadd.f32 %v2071, %v2164
        %v2334 = vadd.f32 %v2072, %v2164
        %v2335 = vadd.f32 %v2073, %v2164
        %v2336 = vadd.f32 %v2074, %v2164
        %v2337 = vadd.f32 %v2075, %v2164
        %v2338 = vadd.f32 %v2076, %v2164
        %v2339 = vadd.f32 %v2077, %v2164
        %v2340 = vadd.f32 %v2078, %v2164
        %v2341 = vadd.f32 %v2079, %v2164
        %v2342 = vadd.f32 %v2080, %v2164
        %v2343 = vadd.f32 %v2081, %v2164
        %v2344 = vadd.f32 %v2082, %v2164
        %v2345 = vadd.f32 %v2083, %v2164
        %v2346 = vadd.f32 %v2084, %v2164
        %v2347 = vadd.f32 %v2085, %v2164
        %v2348 = vadd.f32 %v2086, %v2164
        %v2349 = vadd.f32 %v2087, %v2164
        %v2350 = vadd.f32 %v2088, %v2164
        %v2351 = vadd.f32 %v2089, %v2164
        %v2352 = vadd.f32 %v2090, %v2164
        %v2353 = vadd.f32 %v2091, %v2164
        %v2354 = vadd.f32 %v2092, %v2164
        %v2355 = vadd.f32 %v2093, %v2164
        %v2356 = vadd.f32 %v2094, %v2164
        %v2357 = vadd.f32 %v2095, %v2164
        %v2358 = vadd.f32 %v2096, %v2164
        %v2359 = vadd.f32 %v2097, %v2164
        %v2360 = vadd.f32 %v2098, %v2164
        %v2361 = vadd.f32 %v2099, %v2164
        %v2362 = vadd.f32 %v2100, %v2164
        %v2363 = vadd.f32 %v2101, %v2164
        %v2364 = vadd.f32 %v2102, %v2164
        %v2365 = vadd.f32 %v2103, %v2164
        %v2366 = vadd.f32 %v2104, %v2164
        %v2367 = vadd.f32 %v2105, %v2164
        %v2368 = vadd.f32 %v2106, %v2164
        %v2369 = vadd.f32 %v2107, %v2164
        %v2370 = vadd.f32 %v2108, %v2164
        %v2371 = vadd.f32 %v2109, %v2164
        %v2372 = vadd.f32 %v2110, %v2164
        %v2373 = vadd.f32 %v2111, %v2164
        %v2374 = vadd.f32 %v2112, %v2164
        %v2375 = vadd.f32 %v2113, %v2164
        %v2376 = vadd.f32 %v2114, %v2164
        %v2377 = vadd.f32 %v2115, %v2164
        %v2378 = vadd.f32 %v2116, %v2164
        %v2379 = vadd.f32 %v2117, %v2164
        %v2380 = vadd.f32 %v2118, %v2164
        %v2381 = vadd.f32 %v2119, %v2164
        %v2382 = vadd.f32 %v2120, %v2164
        %v2383 = vadd.f32 %v2121, %v2164
        %v2384 = vadd.f32 %v2122, %v2164
        %v2385 = vadd.f32 %v2123, %v2164
        %v2386 = vadd.f32 %v2124, %v2164
        %v2387 = vadd.f32 %v2125, %v2164
        %v2388 = vadd.f32 %v2126, %v2164
        %v2389 = vadd.f32 %v2127, %v2164
        %v2390 = vadd.f32 %v2128, %v2164
        %v2391 = vadd.f32 %v2129, %v2164
        %v2392 = vadd.f32 %v2130, %v2164
        %v2393 = vadd.f32 %v2131, %v2164
        %v2394 = vadd.f32 %v2132, %v2164
        %v2395 = vadd.f32 %v2133, %v2164
        %v2396 = vadd.f32 %v2134, %v2164
        %v2397 = vadd.f32 %v2135, %v2164
        %v2398 = vadd.f32 %v2136, %v2164
        %v2399 = vadd.f32 %v2137, %v2164
        %v2400 = vadd.f32 %v2138, %v2164
        %v2401 = vadd.f32 %v2139, %v2164
        %v2402 = vadd.f32 %v2140, %v2164
        %v2403 = vadd.f32 %v2141, %v2164
        %v2404 = vadd.f32 %v2142, %v2164
        %v2405 = vadd.f32 %v2143, %v2164
        %v2406 = vadd.f32 %v2144, %v2164
        %v2407 = vadd.f32 %v2145, %v2164
        %v2408 = vadd.f32 %v2146, %v2164
        %v2409 = vadd.f32 %v2147, %v2164
        %v2410 = vadd.f32 %v2148, %v2164
        %v2411 = vadd.f32 %v2149, %v2164
        %v2412 = vadd.f32 %v2150, %v2164
        %v2413 = vadd.f32 %v2151, %v2164
        %v2414 = vadd.f32 %v2152, %v2164
        %v2415 = vadd.f32 %v2153, %v2164
        %v2416 = vadd.f32 %v2154, %v2164
        %v2417 = vadd.f32 %v2155, %v2164
        %v2418 = vadd.f32 %v2156, %v2164
        %v2419 = vadd.f32 %v2157, %v2164
        %v2420 = vadd.f32 %v2158, %v2164
        %v2421 = vadd.f32 %v2159, %v2164
        %v2422 = vmax.f32 %v2166, 0.0
        %v2423 = vmax.f32 %v2167, 0.0
        %v2424 = vmax.f32 %v2168, 0.0
        %v2425 = vmax.f32 %v2169, 0.0
        %v2426 = vmax.f32 %v2170, 0.0
        %v2427 = vmax.f32 %v2171, 0.0
        %v2428 = vmax.f32 %v2172, 0.0
        %v2429 = vmax.f32 %v2173, 0.0
        %v2430 = vmax.f32 %v2174, 0.0
        %v2431 = vmax.f32 %v2175, 0.0
        %v2432 = vmax.f32 %v2176, 0.0
        %v2433 = vmax.f32 %v2177, 0.0
        %v2434 = vmax.f32 %v2178, 0.0
        %v2435 = vmax.f32 %v2179, 0.0
        %v2436 = vmax.f32 %v2180, 0.0
        %v2437 = vmax.f32 %v2181, 0.0
        %v2438 = vmax.f32 %v2182, 0.0
        %v2439 = vmax.f32 %v2183, 0.0
        %v2440 = vmax.f32 %v2184, 0.0
        %v2441 = vmax.f32 %v2185, 0.0
        %v2442 = vmax.f32 %v2186, 0.0
        %v2443 = vmax.f32 %v2187, 0.0
        %v2444 = vmax.f32 %v2188, 0.0
        %v2445 = vmax.f32 %v2189, 0.0
        %v2446 = vmax.f32 %v2190, 0.0
        %v2447 = vmax.f32 %v2191, 0.0
        %v2448 = vmax.f32 %v2192, 0.0
        %v2449 = vmax.f32 %v2193, 0.0
        %v2450 = vmax.f32 %v2194, 0.0
        %v2451 = vmax.f32 %v2195, 0.0
        %v2452 = vmax.f32 %v2196, 0.0
        %v2453 = vmax.f32 %v2197, 0.0
        %v2454 = vmax.f32 %v2198, 0.0
        %v2455 = vmax.f32 %v2199, 0.0
        %v2456 = vmax.f32 %v2200, 0.0
        %v2457 = vmax.f32 %v2201, 0.0
        %v2458 = vmax.f32 %v2202, 0.0
        %v2459 = vmax.f32 %v2203, 0.0
        %v2460 = vmax.f32 %v2204, 0.0
        %v2461 = vmax.f32 %v2205, 0.0
        %v2462 = vmax.f32 %v2206, 0.0
        %v2463 = vmax.f32 %v2207, 0.0
        %v2464 = vmax.f32 %v2208, 0.0
        %v2465 = vmax.f32 %v2209, 0.0
        %v2466 = vmax.f32 %v2210, 0.0
        %v2467 = vmax.f32 %v2211, 0.0
        %v2468 = vmax.f32 %v2212, 0.0
        %v2469 = vmax.f32 %v2213, 0.0
        %v2470 = vmax.f32 %v2214, 0.0
        %v2471 = vmax.f32 %v2215, 0.0
        %v2472 = vmax.f32 %v2216, 0.0
        %v2473 = vmax.f32 %v2217, 0.0
        %v2474 = vmax.f32 %v2218, 0.0
        %v2475 = vmax.f32 %v2219, 0.0
        %v2476 = vmax.f32 %v2220, 0.0
        %v2477 = vmax.f32 %v2221, 0.0
        %v2478 = vmax.f32 %v2222, 0.0
        %v2479 = vmax.f32 %v2223, 0.0
        %v2480 = vmax.f32 %v2224, 0.0
        %v2481 = vmax.f32 %v2225, 0.0
        %v2482 = vmax.f32 %v2226, 0.0
        %v2483 = vmax.f32 %v2227, 0.0
        %v2484 = vmax.f32 %v2228, 0.0
        %v2485 = vmax.f32 %v2229, 0.0
        %v2486 = vmax.f32 %v2230, 0.0
        %v2487 = vmax.f32 %v2231, 0.0
        %v2488 = vmax.f32 %v2232, 0.0
        %v2489 = vmax.f32 %v2233, 0.0
        %v2490 = vmax.f32 %v2234, 0.0
        %v2491 = vmax.f32 %v2235, 0.0
        %v2492 = vmax.f32 %v2236, 0.0
        %v2493 = vmax.f32 %v2237, 0.0
        %v2494 = vmax.f32 %v2238, 0.0
        %v2495 = vmax.f32 %v2239, 0.0
        %v2496 = vmax.f32 %v2240, 0.0
        %v2497 = vmax.f32 %v2241, 0.0
        %v2498 = vmax.f32 %v2242, 0.0
        %v2499 = vmax.f32 %v2243, 0.0
        %v2500 = vmax.f32 %v2244, 0.0
        %v2501 = vmax.f32 %v2245, 0.0
        %v2502 = vmax.f32 %v2246, 0.0
        %v2503 = vmax.f32 %v2247, 0.0
        %v2504 = vmax.f32 %v2248, 0.0
        %v2505 = vmax.f32 %v2249, 0.0
        %v2506 = vmax.f32 %v2250, 0.0
        %v2507 = vmax.f32 %v2251, 0.0
        %v2508 = vmax.f32 %v2252, 0.0
        %v2509 = vmax.f32 %v2253, 0.0
        %v2510 = vmax.f32 %v2254, 0.0
        %v2511 = vmax.f32 %v2255, 0.0
        %v2512 = vmax.f32 %v2256, 0.0
        %v2513 = vmax.f32 %v2257, 0.0
        %v2514 = vmax.f32 %v2258, 0.0
        %v2515 = vmax.f32 %v2259, 0.0
        %v2516 = vmax.f32 %v2260, 0.0
        %v2517 = vmax.f32 %v2261, 0.0
        %v2518 = vmax.f32 %v2262, 0.0
        %v2519 = vmax.f32 %v2263, 0.0
        %v2520 = vmax.f32 %v2264, 0.0
        %v2521 = vmax.f32 %v2265, 0.0
        %v2522 = vmax.f32 %v2266, 0.0
        %v2523 = vmax.f32 %v2267, 0.0
        %v2524 = vmax.f32 %v2268, 0.0
        %v2525 = vmax.f32 %v2269, 0.0
        %v2526 = vmax.f32 %v2270, 0.0
        %v2527 = vmax.f32 %v2271, 0.0
        %v2528 = vmax.f32 %v2272, 0.0
        %v2529 = vmax.f32 %v2273, 0.0
        %v2530 = vmax.f32 %v2274, 0.0
        %v2531 = vmax.f32 %v2275, 0.0
        %v2532 = vmax.f32 %v2276, 0.0
        %v2533 = vmax.f32 %v2277, 0.0
        %v2534 = vmax.f32 %v2278, 0.0
        %v2535 = vmax.f32 %v2279, 0.0
        %v2536 = vmax.f32 %v2280, 0.0
        %v2537 = vmax.f32 %v2281, 0.0
        %v2538 = vmax.f32 %v2282, 0.0
        %v2539 = vmax.f32 %v2283, 0.0
        %v2540 = vmax.f32 %v2284, 0.0
        %v2541 = vmax.f32 %v2285, 0.0
        %v2542 = vmax.f32 %v2286, 0.0
        %v2543 = vmax.f32 %v2287, 0.0
        %v2544 = vmax.f32 %v2288, 0.0
        %v2545 = vmax.f32 %v2289, 0.0
        %v2546 = vmax.f32 %v2290, 0.0
        %v2547 = vmax.f32 %v2291, 0.0
        %v2548 = vmax.f32 %v2292, 0.0
        %v2549 = vmax.f32 %v2293, 0.0
        %v2550 = vmax.f32 %v2294, 0.0
        %v2551 = vmax.f32 %v2295, 0.0
        %v2552 = vmax.f32 %v2296, 0.0
        %v2553 = vmax.f32 %v2297, 0.0
        %v2554 = vmax.f32 %v2298, 0.0
        %v2555 = vmax.f32 %v2299, 0.0
        %v2556 = vmax.f32 %v2300, 0.0
        %v2557 = vmax.f32 %v2301, 0.0
        %v2558 = vmax.f32 %v2302, 0.0
        %v2559 = vmax.f32 %v2303, 0.0
        %v2560 = vmax.f32 %v2304, 0.0
        %v2561 = vmax.f32 %v2305, 0.0
        %v2562 = vmax.f32 %v2306, 0.0
        %v2563 = vmax.f32 %v2307, 0.0
        %v2564 = vmax.f32 %v2308, 0.0
        %v2565 = vmax.f32 %v2309, 0.0
        %v2566 = vmax.f32 %v2310, 0.0
        %v2567 = vmax.f32 %v2311, 0.0
        %v2568 = vmax.f32 %v2312, 0.0
        %v2569 = vmax.f32 %v2313, 0.0
        %v2570 = vmax.f32 %v2314, 0.0
        %v2571 = vmax.f32 %v2315, 0.0
        %v2572 = vmax.f32 %v2316, 0.0
        %v2573 = vmax.f32 %v2317, 0.0
        %v2574 = vmax.f32 %v2318, 0.0
        %v2575 = vmax.f32 %v2319, 0.0
        %v2576 = vmax.f32 %v2320, 0.0
        %v2577 = vmax.f32 %v2321, 0.0
        %v2578 = vmax.f32 %v2322, 0.0
        %v2579 = vmax.f32 %v2323, 0.0
        %v2580 = vmax.f32 %v2324, 0.0
        %v2581 = vmax.f32 %v2325, 0.0
        %v2582 = vmax.f32 %v2326, 0.0
        %v2583 = vmax.f32 %v2327, 0.0
        %v2584 = vmax.f32 %v2328, 0.0
        %v2585 = vmax.f32 %v2329, 0.0
        %v2586 = vmax.f32 %v2330, 0.0
        %v2587 = vmax.f32 %v2331, 0.0
        %v2588 = vmax.f32 %v2332, 0.0
        %v2589 = vmax.f32 %v2333, 0.0
        %v2590 = vmax.f32 %v2334, 0.0
        %v2591 = vmax.f32 %v2335, 0.0
        %v2592 = vmax.f32 %v2336, 0.0
        %v2593 = vmax.f32 %v2337, 0.0
        %v2594 = vmax.f32 %v2338, 0.0
        %v2595 = vmax.f32 %v2339, 0.0
        %v2596 = vmax.f32 %v2340, 0.0
        %v2597 = vmax.f32 %v2341, 0.0
        %v2598 = vmax.f32 %v2342, 0.0
        %v2599 = vmax.f32 %v2343, 0.0
        %v2600 = vmax.f32 %v2344, 0.0
        %v2601 = vmax.f32 %v2345, 0.0
        %v2602 = vmax.f32 %v2346, 0.0
        %v2603 = vmax.f32 %v2347, 0.0
        %v2604 = vmax.f32 %v2348, 0.0
        %v2605 = vmax.f32 %v2349, 0.0
        %v2606 = vmax.f32 %v2350, 0.0
        %v2607 = vmax.f32 %v2351, 0.0
        %v2608 = vmax.f32 %v2352, 0.0
        %v2609 = vmax.f32 %v2353, 0.0
        %v2610 = vmax.f32 %v2354, 0.0
        %v2611 = vmax.f32 %v2355, 0.0
        %v2612 = vmax.f32 %v2356, 0.0
        %v2613 = vmax.f32 %v2357, 0.0
        %v2614 = vmax.f32 %v2358, 0.0
        %v2615 = vmax.f32 %v2359, 0.0
        %v2616 = vmax.f32 %v2360, 0.0
        %v2617 = vmax.f32 %v2361, 0.0
        %v2618 = vmax.f32 %v2362, 0.0
        %v2619 = vmax.f32 %v2363, 0.0
        %v2620 = vmax.f32 %v2364, 0.0
        %v2621 = vmax.f32 %v2365, 0.0
        %v2622 = vmax.f32 %v2366, 0.0
        %v2623 = vmax.f32 %v2367, 0.0
        %v2624 = vmax.f32 %v2368, 0.0
        %v2625 = vmax.f32 %v2369, 0.0
        %v2626 = vmax.f32 %v2370, 0.0
        %v2627 = vmax.f32 %v2371, 0.0
        %v2628 = vmax.f32 %v2372, 0.0
        %v2629 = vmax.f32 %v2373, 0.0
        %v2630 = vmax.f32 %v2374, 0.0
        %v2631 = vmax.f32 %v2375, 0.0
        %v2632 = vmax.f32 %v2376, 0.0
        %v2633 = vmax.f32 %v2377, 0.0
        %v2634 = vmax.f32 %v2378, 0.0
        %v2635 = vmax.f32 %v2379, 0.0
        %v2636 = vmax.f32 %v2380, 0.0
        %v2637 = vmax.f32 %v2381, 0.0
        %v2638 = vmax.f32 %v2382, 0.0
        %v2639 = vmax.f32 %v2383, 0.0
        %v2640 = vmax.f32 %v2384, 0.0
        %v2641 = vmax.f32 %v2385, 0.0
        %v2642 = vmax.f32 %v2386, 0.0
        %v2643 = vmax.f32 %v2387, 0.0
        %v2644 = vmax.f32 %v2388, 0.0
        %v2645 = vmax.f32 %v2389, 0.0
        %v2646 = vmax.f32 %v2390, 0.0
        %v2647 = vmax.f32 %v2391, 0.0
        %v2648 = vmax.f32 %v2392, 0.0
        %v2649 = vmax.f32 %v2393, 0.0
        %v2650 = vmax.f32 %v2394, 0.0
        %v2651 = vmax.f32 %v2395, 0.0
        %v2652 = vmax.f32 %v2396, 0.0
        %v2653 = vmax.f32 %v2397, 0.0
        %v2654 = vmax.f32 %v2398, 0.0
        %v2655 = vmax.f32 %v2399, 0.0
        %v2656 = vmax.f32 %v2400, 0.0
        %v2657 = vmax.f32 %v2401, 0.0
        %v2658 = vmax.f32 %v2402, 0.0
        %v2659 = vmax.f32 %v2403, 0.0
        %v2660 = vmax.f32 %v2404, 0.0
        %v2661 = vmax.f32 %v2405, 0.0
        %v2662 = vmax.f32 %v2406, 0.0
        %v2663 = vmax.f32 %v2407, 0.0
        %v2664 = vmax.f32 %v2408, 0.0
        %v2665 = vmax.f32 %v2409, 0.0
        %v2666 = vmax.f32 %v2410, 0.0
        %v2667 = vmax.f32 %v2411, 0.0
        %v2668 = vmax.f32 %v2412, 0.0
        %v2669 = vmax.f32 %v2413, 0.0
        %v2670 = vmax.f32 %v2414, 0.0
        %v2671 = vmax.f32 %v2415, 0.0
        %v2672 = vmax.f32 %v2416, 0.0
        %v2673 = vmax.f32 %v2417, 0.0
        %v2674 = vmax.f32 %v2418, 0.0
        %v2675 = vmax.f32 %v2419, 0.0
        %v2676 = vmax.f32 %v2420, 0.0
        %v2677 = vmax.f32 %v2421, 0.0
        %v2678 = vpack.c.bf16 %v2423, %v2422
        %v2679 = vpack.c.bf16 %v2425, %v2424
        %v2680 = vpack.c.bf16 %v2427, %v2426
        %v2681 = vpack.c.bf16 %v2429, %v2428
        %v2682 = vpack.c.bf16 %v2431, %v2430
        %v2683 = vpack.c.bf16 %v2433, %v2432
        %v2684 = vpack.c.bf16 %v2435, %v2434
        %v2685 = vpack.c.bf16 %v2437, %v2436
        %v2686 = vpack.c.bf16 %v2439, %v2438
        %v2687 = vpack.c.bf16 %v2441, %v2440
        %v2688 = vpack.c.bf16 %v2443, %v2442
        %v2689 = vpack.c.bf16 %v2445, %v2444
        %v2690 = vpack.c.bf16 %v2447, %v2446
        %v2691 = vpack.c.bf16 %v2449, %v2448
        %v2692 = vpack.c.bf16 %v2451, %v2450
        %v2693 = vpack.c.bf16 %v2453, %v2452
        %v2694 = vpack.c.bf16 %v2455, %v2454
        %v2695 = vpack.c.bf16 %v2457, %v2456
        %v2696 = vpack.c.bf16 %v2459, %v2458
        %v2697 = vpack.c.bf16 %v2461, %v2460
        %v2698 = vpack.c.bf16 %v2463, %v2462
        %v2699 = vpack.c.bf16 %v2465, %v2464
        %v2700 = vpack.c.bf16 %v2467, %v2466
        %v2701 = vpack.c.bf16 %v2469, %v2468
        %v2702 = vpack.c.bf16 %v2471, %v2470
        %v2703 = vpack.c.bf16 %v2473, %v2472
        %v2704 = vpack.c.bf16 %v2475, %v2474
        %v2705 = vpack.c.bf16 %v2477, %v2476
        %v2706 = vpack.c.bf16 %v2479, %v2478
        %v2707 = vpack.c.bf16 %v2481, %v2480
        %v2708 = vpack.c.bf16 %v2483, %v2482
        %v2709 = vpack.c.bf16 %v2485, %v2484
        %v2710 = vpack.c.bf16 %v2487, %v2486
        %v2711 = vpack.c.bf16 %v2489, %v2488
        %v2712 = vpack.c.bf16 %v2491, %v2490
        %v2713 = vpack.c.bf16 %v2493, %v2492
        %v2714 = vpack.c.bf16 %v2495, %v2494
        %v2715 = vpack.c.bf16 %v2497, %v2496
        %v2716 = vpack.c.bf16 %v2499, %v2498
        %v2717 = vpack.c.bf16 %v2501, %v2500
        %v2718 = vpack.c.bf16 %v2503, %v2502
        %v2719 = vpack.c.bf16 %v2505, %v2504
        %v2720 = vpack.c.bf16 %v2507, %v2506
        %v2721 = vpack.c.bf16 %v2509, %v2508
        %v2722 = vpack.c.bf16 %v2511, %v2510
        %v2723 = vpack.c.bf16 %v2513, %v2512
        %v2724 = vpack.c.bf16 %v2515, %v2514
        %v2725 = vpack.c.bf16 %v2517, %v2516
        %v2726 = vpack.c.bf16 %v2519, %v2518
        %v2727 = vpack.c.bf16 %v2521, %v2520
        %v2728 = vpack.c.bf16 %v2523, %v2522
        %v2729 = vpack.c.bf16 %v2525, %v2524
        %v2730 = vpack.c.bf16 %v2527, %v2526
        %v2731 = vpack.c.bf16 %v2529, %v2528
        %v2732 = vpack.c.bf16 %v2531, %v2530
        %v2733 = vpack.c.bf16 %v2533, %v2532
        %v2734 = vpack.c.bf16 %v2535, %v2534
        %v2735 = vpack.c.bf16 %v2537, %v2536
        %v2736 = vpack.c.bf16 %v2539, %v2538
        %v2737 = vpack.c.bf16 %v2541, %v2540
        %v2738 = vpack.c.bf16 %v2543, %v2542
        %v2739 = vpack.c.bf16 %v2545, %v2544
        %v2740 = vpack.c.bf16 %v2547, %v2546
        %v2741 = vpack.c.bf16 %v2549, %v2548
        %v2742 = vpack.c.bf16 %v2551, %v2550
        %v2743 = vpack.c.bf16 %v2553, %v2552
        %v2744 = vpack.c.bf16 %v2555, %v2554
        %v2745 = vpack.c.bf16 %v2557, %v2556
        %v2746 = vpack.c.bf16 %v2559, %v2558
        %v2747 = vpack.c.bf16 %v2561, %v2560
        %v2748 = vpack.c.bf16 %v2563, %v2562
        %v2749 = vpack.c.bf16 %v2565, %v2564
        %v2750 = vpack.c.bf16 %v2567, %v2566
        %v2751 = vpack.c.bf16 %v2569, %v2568
        %v2752 = vpack.c.bf16 %v2571, %v2570
        %v2753 = vpack.c.bf16 %v2573, %v2572
        %v2754 = vpack.c.bf16 %v2575, %v2574
        %v2755 = vpack.c.bf16 %v2577, %v2576
        %v2756 = vpack.c.bf16 %v2579, %v2578
        %v2757 = vpack.c.bf16 %v2581, %v2580
        %v2758 = vpack.c.bf16 %v2583, %v2582
        %v2759 = vpack.c.bf16 %v2585, %v2584
        %v2760 = vpack.c.bf16 %v2587, %v2586
        %v2761 = vpack.c.bf16 %v2589, %v2588
        %v2762 = vpack.c.bf16 %v2591, %v2590
        %v2763 = vpack.c.bf16 %v2593, %v2592
        %v2764 = vpack.c.bf16 %v2595, %v2594
        %v2765 = vpack.c.bf16 %v2597, %v2596
        %v2766 = vpack.c.bf16 %v2599, %v2598
        %v2767 = vpack.c.bf16 %v2601, %v2600
        %v2768 = vpack.c.bf16 %v2603, %v2602
        %v2769 = vpack.c.bf16 %v2605, %v2604
        %v2770 = vpack.c.bf16 %v2607, %v2606
        %v2771 = vpack.c.bf16 %v2609, %v2608
        %v2772 = vpack.c.bf16 %v2611, %v2610
        %v2773 = vpack.c.bf16 %v2613, %v2612
        %v2774 = vpack.c.bf16 %v2615, %v2614
        %v2775 = vpack.c.bf16 %v2617, %v2616
        %v2776 = vpack.c.bf16 %v2619, %v2618
        %v2777 = vpack.c.bf16 %v2621, %v2620
        %v2778 = vpack.c.bf16 %v2623, %v2622
        %v2779 = vpack.c.bf16 %v2625, %v2624
        %v2780 = vpack.c.bf16 %v2627, %v2626
        %v2781 = vpack.c.bf16 %v2629, %v2628
        %v2782 = vpack.c.bf16 %v2631, %v2630
        %v2783 = vpack.c.bf16 %v2633, %v2632
        %v2784 = vpack.c.bf16 %v2635, %v2634
        %v2785 = vpack.c.bf16 %v2637, %v2636
        %v2786 = vpack.c.bf16 %v2639, %v2638
        %v2787 = vpack.c.bf16 %v2641, %v2640
        %v2788 = vpack.c.bf16 %v2643, %v2642
        %v2789 = vpack.c.bf16 %v2645, %v2644
        %v2790 = vpack.c.bf16 %v2647, %v2646
        %v2791 = vpack.c.bf16 %v2649, %v2648
        %v2792 = vpack.c.bf16 %v2651, %v2650
        %v2793 = vpack.c.bf16 %v2653, %v2652
        %v2794 = vpack.c.bf16 %v2655, %v2654
        %v2795 = vpack.c.bf16 %v2657, %v2656
        %v2796 = vpack.c.bf16 %v2659, %v2658
        %v2797 = vpack.c.bf16 %v2661, %v2660
        %v2798 = vpack.c.bf16 %v2663, %v2662
        %v2799 = vpack.c.bf16 %v2665, %v2664
        %v2800 = vpack.c.bf16 %v2667, %v2666
        %v2801 = vpack.c.bf16 %v2669, %v2668
        %v2802 = vpack.c.bf16 %v2671, %v2670
        %v2803 = vpack.c.bf16 %v2673, %v2672
        %v2804 = vpack.c.bf16 %v2675, %v2674
        %v2805 = vpack.c.bf16 %v2677, %v2676
        %v2934 = vunpack.c.l.b16 %v2678
        %v2935 = vunpack.c.h.b16 %v2678
        %v2936 = vunpack.c.l.b16 %v2679
        %v2937 = vunpack.c.h.b16 %v2679
        %v2938 = vunpack.c.l.b16 %v2680
        %v2939 = vunpack.c.h.b16 %v2680
        %v2940 = vunpack.c.l.b16 %v2681
        %v2941 = vunpack.c.h.b16 %v2681
        %v2942 = vunpack.c.l.b16 %v2682
        %v2943 = vunpack.c.h.b16 %v2682
        %v2944 = vunpack.c.l.b16 %v2683
        %v2945 = vunpack.c.h.b16 %v2683
        %v2946 = vunpack.c.l.b16 %v2684
        %v2947 = vunpack.c.h.b16 %v2684
        %v2948 = vunpack.c.l.b16 %v2685
        %v2949 = vunpack.c.h.b16 %v2685
        %v2950 = vunpack.c.l.b16 %v2686
        %v2951 = vunpack.c.h.b16 %v2686
        %v2952 = vunpack.c.l.b16 %v2687
        %v2953 = vunpack.c.h.b16 %v2687
        %v2954 = vunpack.c.l.b16 %v2688
        %v2955 = vunpack.c.h.b16 %v2688
        %v2956 = vunpack.c.l.b16 %v2689
        %v2957 = vunpack.c.h.b16 %v2689
        %v2958 = vunpack.c.l.b16 %v2690
        %v2959 = vunpack.c.h.b16 %v2690
        %v2960 = vunpack.c.l.b16 %v2691
        %v2961 = vunpack.c.h.b16 %v2691
        %v2962 = vunpack.c.l.b16 %v2692
        %v2963 = vunpack.c.h.b16 %v2692
        %v2964 = vunpack.c.l.b16 %v2693
        %v2965 = vunpack.c.h.b16 %v2693
        %v2966 = vunpack.c.l.b16 %v2694
        %v2967 = vunpack.c.h.b16 %v2694
        %v2968 = vunpack.c.l.b16 %v2695
        %v2969 = vunpack.c.h.b16 %v2695
        %v2970 = vunpack.c.l.b16 %v2696
        %v2971 = vunpack.c.h.b16 %v2696
        %v2972 = vunpack.c.l.b16 %v2697
        %v2973 = vunpack.c.h.b16 %v2697
        %v2974 = vunpack.c.l.b16 %v2698
        %v2975 = vunpack.c.h.b16 %v2698
        %v2976 = vunpack.c.l.b16 %v2699
        %v2977 = vunpack.c.h.b16 %v2699
        %v2978 = vunpack.c.l.b16 %v2700
        %v2979 = vunpack.c.h.b16 %v2700
        %v2980 = vunpack.c.l.b16 %v2701
        %v2981 = vunpack.c.h.b16 %v2701
        %v2982 = vunpack.c.l.b16 %v2702
        %v2983 = vunpack.c.h.b16 %v2702
        %v2984 = vunpack.c.l.b16 %v2703
        %v2985 = vunpack.c.h.b16 %v2703
        %v2986 = vunpack.c.l.b16 %v2704
        %v2987 = vunpack.c.h.b16 %v2704
        %v2988 = vunpack.c.l.b16 %v2705
        %v2989 = vunpack.c.h.b16 %v2705
        %v2990 = vunpack.c.l.b16 %v2706
        %v2991 = vunpack.c.h.b16 %v2706
        %v2992 = vunpack.c.l.b16 %v2707
        %v2993 = vunpack.c.h.b16 %v2707
        %v2994 = vunpack.c.l.b16 %v2708
        %v2995 = vunpack.c.h.b16 %v2708
        %v2996 = vunpack.c.l.b16 %v2709
        %v2997 = vunpack.c.h.b16 %v2709
        %v2998 = vunpack.c.l.b16 %v2710
        %v2999 = vunpack.c.h.b16 %v2710
        %v3000 = vunpack.c.l.b16 %v2711
        %v3001 = vunpack.c.h.b16 %v2711
        %v3002 = vunpack.c.l.b16 %v2712
        %v3003 = vunpack.c.h.b16 %v2712
        %v3004 = vunpack.c.l.b16 %v2713
        %v3005 = vunpack.c.h.b16 %v2713
        %v3006 = vunpack.c.l.b16 %v2714
        %v3007 = vunpack.c.h.b16 %v2714
        %v3008 = vunpack.c.l.b16 %v2715
        %v3009 = vunpack.c.h.b16 %v2715
        %v3010 = vunpack.c.l.b16 %v2716
        %v3011 = vunpack.c.h.b16 %v2716
        %v3012 = vunpack.c.l.b16 %v2717
        %v3013 = vunpack.c.h.b16 %v2717
        %v3014 = vunpack.c.l.b16 %v2718
        %v3015 = vunpack.c.h.b16 %v2718
        %v3016 = vunpack.c.l.b16 %v2719
        %v3017 = vunpack.c.h.b16 %v2719
        %v3018 = vunpack.c.l.b16 %v2720
        %v3019 = vunpack.c.h.b16 %v2720
        %v3020 = vunpack.c.l.b16 %v2721
        %v3021 = vunpack.c.h.b16 %v2721
        %v3022 = vunpack.c.l.b16 %v2722
        %v3023 = vunpack.c.h.b16 %v2722
        %v3024 = vunpack.c.l.b16 %v2723
        %v3025 = vunpack.c.h.b16 %v2723
        %v3026 = vunpack.c.l.b16 %v2724
        %v3027 = vunpack.c.h.b16 %v2724
        %v3028 = vunpack.c.l.b16 %v2725
        %v3029 = vunpack.c.h.b16 %v2725
        %v3030 = vunpack.c.l.b16 %v2726
        %v3031 = vunpack.c.h.b16 %v2726
        %v3032 = vunpack.c.l.b16 %v2727
        %v3033 = vunpack.c.h.b16 %v2727
        %v3034 = vunpack.c.l.b16 %v2728
        %v3035 = vunpack.c.h.b16 %v2728
        %v3036 = vunpack.c.l.b16 %v2729
        %v3037 = vunpack.c.h.b16 %v2729
        %v3038 = vunpack.c.l.b16 %v2730
        %v3039 = vunpack.c.h.b16 %v2730
        %v3040 = vunpack.c.l.b16 %v2731
        %v3041 = vunpack.c.h.b16 %v2731
        %v3042 = vunpack.c.l.b16 %v2732
        %v3043 = vunpack.c.h.b16 %v2732
        %v3044 = vunpack.c.l.b16 %v2733
        %v3045 = vunpack.c.h.b16 %v2733
        %v3046 = vunpack.c.l.b16 %v2734
        %v3047 = vunpack.c.h.b16 %v2734
        %v3048 = vunpack.c.l.b16 %v2735
        %v3049 = vunpack.c.h.b16 %v2735
        %v3050 = vunpack.c.l.b16 %v2736
        %v3051 = vunpack.c.h.b16 %v2736
        %v3052 = vunpack.c.l.b16 %v2737
        %v3053 = vunpack.c.h.b16 %v2737
        %v3054 = vunpack.c.l.b16 %v2738
        %v3055 = vunpack.c.h.b16 %v2738
        %v3056 = vunpack.c.l.b16 %v2739
        %v3057 = vunpack.c.h.b16 %v2739
        %v3058 = vunpack.c.l.b16 %v2740
        %v3059 = vunpack.c.h.b16 %v2740
        %v3060 = vunpack.c.l.b16 %v2741
        %v3061 = vunpack.c.h.b16 %v2741
        %v3062 = vunpack.c.l.b16 %v2742
        %v3063 = vunpack.c.h.b16 %v2742
        %v3064 = vunpack.c.l.b16 %v2743
        %v3065 = vunpack.c.h.b16 %v2743
        %v3066 = vunpack.c.l.b16 %v2744
        %v3067 = vunpack.c.h.b16 %v2744
        %v3068 = vunpack.c.l.b16 %v2745
        %v3069 = vunpack.c.h.b16 %v2745
        %v3070 = vunpack.c.l.b16 %v2746
        %v3071 = vunpack.c.h.b16 %v2746
        %v3072 = vunpack.c.l.b16 %v2747
        %v3073 = vunpack.c.h.b16 %v2747
        %v3074 = vunpack.c.l.b16 %v2748
        %v3075 = vunpack.c.h.b16 %v2748
        %v3076 = vunpack.c.l.b16 %v2749
        %v3077 = vunpack.c.h.b16 %v2749
        %v3078 = vunpack.c.l.b16 %v2750
        %v3079 = vunpack.c.h.b16 %v2750
        %v3080 = vunpack.c.l.b16 %v2751
        %v3081 = vunpack.c.h.b16 %v2751
        %v3082 = vunpack.c.l.b16 %v2752
        %v3083 = vunpack.c.h.b16 %v2752
        %v3084 = vunpack.c.l.b16 %v2753
        %v3085 = vunpack.c.h.b16 %v2753
        %v3086 = vunpack.c.l.b16 %v2754
        %v3087 = vunpack.c.h.b16 %v2754
        %v3088 = vunpack.c.l.b16 %v2755
        %v3089 = vunpack.c.h.b16 %v2755
        %v3090 = vunpack.c.l.b16 %v2756
        %v3091 = vunpack.c.h.b16 %v2756
        %v3092 = vunpack.c.l.b16 %v2757
        %v3093 = vunpack.c.h.b16 %v2757
        %v3094 = vunpack.c.l.b16 %v2758
        %v3095 = vunpack.c.h.b16 %v2758
        %v3096 = vunpack.c.l.b16 %v2759
        %v3097 = vunpack.c.h.b16 %v2759
        %v3098 = vunpack.c.l.b16 %v2760
        %v3099 = vunpack.c.h.b16 %v2760
        %v3100 = vunpack.c.l.b16 %v2761
        %v3101 = vunpack.c.h.b16 %v2761
        %v3102 = vunpack.c.l.b16 %v2762
        %v3103 = vunpack.c.h.b16 %v2762
        %v3104 = vunpack.c.l.b16 %v2763
        %v3105 = vunpack.c.h.b16 %v2763
        %v3106 = vunpack.c.l.b16 %v2764
        %v3107 = vunpack.c.h.b16 %v2764
        %v3108 = vunpack.c.l.b16 %v2765
        %v3109 = vunpack.c.h.b16 %v2765
        %v3110 = vunpack.c.l.b16 %v2766
        %v3111 = vunpack.c.h.b16 %v2766
        %v3112 = vunpack.c.l.b16 %v2767
        %v3113 = vunpack.c.h.b16 %v2767
        %v3114 = vunpack.c.l.b16 %v2768
        %v3115 = vunpack.c.h.b16 %v2768
        %v3116 = vunpack.c.l.b16 %v2769
        %v3117 = vunpack.c.h.b16 %v2769
        %v3118 = vunpack.c.l.b16 %v2770
        %v3119 = vunpack.c.h.b16 %v2770
        %v3120 = vunpack.c.l.b16 %v2771
        %v3121 = vunpack.c.h.b16 %v2771
        %v3122 = vunpack.c.l.b16 %v2772
        %v3123 = vunpack.c.h.b16 %v2772
        %v3124 = vunpack.c.l.b16 %v2773
        %v3125 = vunpack.c.h.b16 %v2773
        %v3126 = vunpack.c.l.b16 %v2774
        %v3127 = vunpack.c.h.b16 %v2774
        %v3128 = vunpack.c.l.b16 %v2775
        %v3129 = vunpack.c.h.b16 %v2775
        %v3130 = vunpack.c.l.b16 %v2776
        %v3131 = vunpack.c.h.b16 %v2776
        %v3132 = vunpack.c.l.b16 %v2777
        %v3133 = vunpack.c.h.b16 %v2777
        %v3134 = vunpack.c.l.b16 %v2778
        %v3135 = vunpack.c.h.b16 %v2778
        %v3136 = vunpack.c.l.b16 %v2779
        %v3137 = vunpack.c.h.b16 %v2779
        %v3138 = vunpack.c.l.b16 %v2780
        %v3139 = vunpack.c.h.b16 %v2780
        %v3140 = vunpack.c.l.b16 %v2781
        %v3141 = vunpack.c.h.b16 %v2781
        %v3142 = vunpack.c.l.b16 %v2782
        %v3143 = vunpack.c.h.b16 %v2782
        %v3144 = vunpack.c.l.b16 %v2783
        %v3145 = vunpack.c.h.b16 %v2783
        %v3146 = vunpack.c.l.b16 %v2784
        %v3147 = vunpack.c.h.b16 %v2784
        %v3148 = vunpack.c.l.b16 %v2785
        %v3149 = vunpack.c.h.b16 %v2785
        %v3150 = vunpack.c.l.b16 %v2786
        %v3151 = vunpack.c.h.b16 %v2786
        %v3152 = vunpack.c.l.b16 %v2787
        %v3153 = vunpack.c.h.b16 %v2787
        %v3154 = vunpack.c.l.b16 %v2788
        %v3155 = vunpack.c.h.b16 %v2788
        %v3156 = vunpack.c.l.b16 %v2789
        %v3157 = vunpack.c.h.b16 %v2789
        %v3158 = vunpack.c.l.b16 %v2790
        %v3159 = vunpack.c.h.b16 %v2790
        %v3160 = vunpack.c.l.b16 %v2791
        %v3161 = vunpack.c.h.b16 %v2791
        %v3162 = vunpack.c.l.b16 %v2792
        %v3163 = vunpack.c.h.b16 %v2792
        %v3164 = vunpack.c.l.b16 %v2793
        %v3165 = vunpack.c.h.b16 %v2793
        %v3166 = vunpack.c.l.b16 %v2794
        %v3167 = vunpack.c.h.b16 %v2794
        %v3168 = vunpack.c.l.b16 %v2795
        %v3169 = vunpack.c.h.b16 %v2795
        %v3170 = vunpack.c.l.b16 %v2796
        %v3171 = vunpack.c.h.b16 %v2796
        %v3172 = vunpack.c.l.b16 %v2797
        %v3173 = vunpack.c.h.b16 %v2797
        %v3174 = vunpack.c.l.b16 %v2798
        %v3175 = vunpack.c.h.b16 %v2798
        %v3176 = vunpack.c.l.b16 %v2799
        %v3177 = vunpack.c.h.b16 %v2799
        %v3178 = vunpack.c.l.b16 %v2800
        %v3179 = vunpack.c.h.b16 %v2800
        %v3180 = vunpack.c.l.b16 %v2801
        %v3181 = vunpack.c.h.b16 %v2801
        %v3182 = vunpack.c.l.b16 %v2802
        %v3183 = vunpack.c.h.b16 %v2802
        %v3184 = vunpack.c.l.b16 %v2803
        %v3185 = vunpack.c.h.b16 %v2803
        %v3186 = vunpack.c.l.b16 %v2804
        %v3187 = vunpack.c.h.b16 %v2804
        %v3188 = vunpack.c.l.b16 %v2805
        %v3189 = vunpack.c.h.b16 %v2805
        %v3190 = vpack.c.b16 %v2934, %v2934
        %v3191 = vpack.c.b16 %v2935, %v2935
        %v3192 = vpack.c.b16 %v2936, %v2936
        %v3193 = vpack.c.b16 %v2937, %v2937
        %v3194 = vpack.c.b16 %v2938, %v2938
        %v3195 = vpack.c.b16 %v2939, %v2939
        %v3196 = vpack.c.b16 %v2940, %v2940
        %v3197 = vpack.c.b16 %v2941, %v2941
        %v3198 = vpack.c.b16 %v2942, %v2942
        %v3199 = vpack.c.b16 %v2943, %v2943
        %v3200 = vpack.c.b16 %v2944, %v2944
        %v3201 = vpack.c.b16 %v2945, %v2945
        %v3202 = vpack.c.b16 %v2946, %v2946
        %v3203 = vpack.c.b16 %v2947, %v2947
        %v3204 = vpack.c.b16 %v2948, %v2948
        %v3205 = vpack.c.b16 %v2949, %v2949
        %v3206 = vpack.c.b16 %v2950, %v2950
        %v3207 = vpack.c.b16 %v2951, %v2951
        %v3208 = vpack.c.b16 %v2952, %v2952
        %v3209 = vpack.c.b16 %v2953, %v2953
        %v3210 = vpack.c.b16 %v2954, %v2954
        %v3211 = vpack.c.b16 %v2955, %v2955
        %v3212 = vpack.c.b16 %v2956, %v2956
        %v3213 = vpack.c.b16 %v2957, %v2957
        %v3214 = vpack.c.b16 %v2958, %v2958
        %v3215 = vpack.c.b16 %v2959, %v2959
        %v3216 = vpack.c.b16 %v2960, %v2960
        %v3217 = vpack.c.b16 %v2961, %v2961
        %v3218 = vpack.c.b16 %v2962, %v2962
        %v3219 = vpack.c.b16 %v2963, %v2963
        %v3220 = vpack.c.b16 %v2964, %v2964
        %v3221 = vpack.c.b16 %v2965, %v2965
        %v3222 = vpack.c.b16 %v2966, %v2966
        %v3223 = vpack.c.b16 %v2967, %v2967
        %v3224 = vpack.c.b16 %v2968, %v2968
        %v3225 = vpack.c.b16 %v2969, %v2969
        %v3226 = vpack.c.b16 %v2970, %v2970
        %v3227 = vpack.c.b16 %v2971, %v2971
        %v3228 = vpack.c.b16 %v2972, %v2972
        %v3229 = vpack.c.b16 %v2973, %v2973
        %v3230 = vpack.c.b16 %v2974, %v2974
        %v3231 = vpack.c.b16 %v2975, %v2975
        %v3232 = vpack.c.b16 %v2976, %v2976
        %v3233 = vpack.c.b16 %v2977, %v2977
        %v3234 = vpack.c.b16 %v2978, %v2978
        %v3235 = vpack.c.b16 %v2979, %v2979
        %v3236 = vpack.c.b16 %v2980, %v2980
        %v3237 = vpack.c.b16 %v2981, %v2981
        %v3238 = vpack.c.b16 %v2982, %v2982
        %v3239 = vpack.c.b16 %v2983, %v2983
        %v3240 = vpack.c.b16 %v2984, %v2984
        %v3241 = vpack.c.b16 %v2985, %v2985
        %v3242 = vpack.c.b16 %v2986, %v2986
        %v3243 = vpack.c.b16 %v2987, %v2987
        %v3244 = vpack.c.b16 %v2988, %v2988
        %v3245 = vpack.c.b16 %v2989, %v2989
        %v3246 = vpack.c.b16 %v2990, %v2990
        %v3247 = vpack.c.b16 %v2991, %v2991
        %v3248 = vpack.c.b16 %v2992, %v2992
        %v3249 = vpack.c.b16 %v2993, %v2993
        %v3250 = vpack.c.b16 %v2994, %v2994
        %v3251 = vpack.c.b16 %v2995, %v2995
        %v3252 = vpack.c.b16 %v2996, %v2996
        %v3253 = vpack.c.b16 %v2997, %v2997
        %v3254 = vpack.c.b16 %v2998, %v2998
        %v3255 = vpack.c.b16 %v2999, %v2999
        %v3256 = vpack.c.b16 %v3000, %v3000
        %v3257 = vpack.c.b16 %v3001, %v3001
        %v3258 = vpack.c.b16 %v3002, %v3002
        %v3259 = vpack.c.b16 %v3003, %v3003
        %v3260 = vpack.c.b16 %v3004, %v3004
        %v3261 = vpack.c.b16 %v3005, %v3005
        %v3262 = vpack.c.b16 %v3006, %v3006
        %v3263 = vpack.c.b16 %v3007, %v3007
        %v3264 = vpack.c.b16 %v3008, %v3008
        %v3265 = vpack.c.b16 %v3009, %v3009
        %v3266 = vpack.c.b16 %v3010, %v3010
        %v3267 = vpack.c.b16 %v3011, %v3011
        %v3268 = vpack.c.b16 %v3012, %v3012
        %v3269 = vpack.c.b16 %v3013, %v3013
        %v3270 = vpack.c.b16 %v3014, %v3014
        %v3271 = vpack.c.b16 %v3015, %v3015
        %v3272 = vpack.c.b16 %v3016, %v3016
        %v3273 = vpack.c.b16 %v3017, %v3017
        %v3274 = vpack.c.b16 %v3018, %v3018
        %v3275 = vpack.c.b16 %v3019, %v3019
        %v3276 = vpack.c.b16 %v3020, %v3020
        %v3277 = vpack.c.b16 %v3021, %v3021
        %v3278 = vpack.c.b16 %v3022, %v3022
        %v3279 = vpack.c.b16 %v3023, %v3023
        %v3280 = vpack.c.b16 %v3024, %v3024
        %v3281 = vpack.c.b16 %v3025, %v3025
        %v3282 = vpack.c.b16 %v3026, %v3026
        %v3283 = vpack.c.b16 %v3027, %v3027
        %v3284 = vpack.c.b16 %v3028, %v3028
        %v3285 = vpack.c.b16 %v3029, %v3029
        %v3286 = vpack.c.b16 %v3030, %v3030
        %v3287 = vpack.c.b16 %v3031, %v3031
        %v3288 = vpack.c.b16 %v3032, %v3032
        %v3289 = vpack.c.b16 %v3033, %v3033
        %v3290 = vpack.c.b16 %v3034, %v3034
        %v3291 = vpack.c.b16 %v3035, %v3035
        %v3292 = vpack.c.b16 %v3036, %v3036
        %v3293 = vpack.c.b16 %v3037, %v3037
        %v3294 = vpack.c.b16 %v3038, %v3038
        %v3295 = vpack.c.b16 %v3039, %v3039
        %v3296 = vpack.c.b16 %v3040, %v3040
        %v3297 = vpack.c.b16 %v3041, %v3041
        %v3298 = vpack.c.b16 %v3042, %v3042
        %v3299 = vpack.c.b16 %v3043, %v3043
        %v3300 = vpack.c.b16 %v3044, %v3044
        %v3301 = vpack.c.b16 %v3045, %v3045
        %v3302 = vpack.c.b16 %v3046, %v3046
        %v3303 = vpack.c.b16 %v3047, %v3047
        %v3304 = vpack.c.b16 %v3048, %v3048
        %v3305 = vpack.c.b16 %v3049, %v3049
        %v3306 = vpack.c.b16 %v3050, %v3050
        %v3307 = vpack.c.b16 %v3051, %v3051
        %v3308 = vpack.c.b16 %v3052, %v3052
        %v3309 = vpack.c.b16 %v3053, %v3053
        %v3310 = vpack.c.b16 %v3054, %v3054
        %v3311 = vpack.c.b16 %v3055, %v3055
        %v3312 = vpack.c.b16 %v3056, %v3056
        %v3313 = vpack.c.b16 %v3057, %v3057
        %v3314 = vpack.c.b16 %v3058, %v3058
        %v3315 = vpack.c.b16 %v3059, %v3059
        %v3316 = vpack.c.b16 %v3060, %v3060
        %v3317 = vpack.c.b16 %v3061, %v3061
        %v3318 = vpack.c.b16 %v3062, %v3062
        %v3319 = vpack.c.b16 %v3063, %v3063
        %v3320 = vpack.c.b16 %v3064, %v3064
        %v3321 = vpack.c.b16 %v3065, %v3065
        %v3322 = vpack.c.b16 %v3066, %v3066
        %v3323 = vpack.c.b16 %v3067, %v3067
        %v3324 = vpack.c.b16 %v3068, %v3068
        %v3325 = vpack.c.b16 %v3069, %v3069
        %v3326 = vpack.c.b16 %v3070, %v3070
        %v3327 = vpack.c.b16 %v3071, %v3071
        %v3328 = vpack.c.b16 %v3072, %v3072
        %v3329 = vpack.c.b16 %v3073, %v3073
        %v3330 = vpack.c.b16 %v3074, %v3074
        %v3331 = vpack.c.b16 %v3075, %v3075
        %v3332 = vpack.c.b16 %v3076, %v3076
        %v3333 = vpack.c.b16 %v3077, %v3077
        %v3334 = vpack.c.b16 %v3078, %v3078
        %v3335 = vpack.c.b16 %v3079, %v3079
        %v3336 = vpack.c.b16 %v3080, %v3080
        %v3337 = vpack.c.b16 %v3081, %v3081
        %v3338 = vpack.c.b16 %v3082, %v3082
        %v3339 = vpack.c.b16 %v3083, %v3083
        %v3340 = vpack.c.b16 %v3084, %v3084
        %v3341 = vpack.c.b16 %v3085, %v3085
        %v3342 = vpack.c.b16 %v3086, %v3086
        %v3343 = vpack.c.b16 %v3087, %v3087
        %v3344 = vpack.c.b16 %v3088, %v3088
        %v3345 = vpack.c.b16 %v3089, %v3089
        %v3346 = vpack.c.b16 %v3090, %v3090
        %v3347 = vpack.c.b16 %v3091, %v3091
        %v3348 = vpack.c.b16 %v3092, %v3092
        %v3349 = vpack.c.b16 %v3093, %v3093
        %v3350 = vpack.c.b16 %v3094, %v3094
        %v3351 = vpack.c.b16 %v3095, %v3095
        %v3352 = vpack.c.b16 %v3096, %v3096
        %v3353 = vpack.c.b16 %v3097, %v3097
        %v3354 = vpack.c.b16 %v3098, %v3098
        %v3355 = vpack.c.b16 %v3099, %v3099
        %v3356 = vpack.c.b16 %v3100, %v3100
        %v3357 = vpack.c.b16 %v3101, %v3101
        %v3358 = vpack.c.b16 %v3102, %v3102
        %v3359 = vpack.c.b16 %v3103, %v3103
        %v3360 = vpack.c.b16 %v3104, %v3104
        %v3361 = vpack.c.b16 %v3105, %v3105
        %v3362 = vpack.c.b16 %v3106, %v3106
        %v3363 = vpack.c.b16 %v3107, %v3107
        %v3364 = vpack.c.b16 %v3108, %v3108
        %v3365 = vpack.c.b16 %v3109, %v3109
        %v3366 = vpack.c.b16 %v3110, %v3110
        %v3367 = vpack.c.b16 %v3111, %v3111
        %v3368 = vpack.c.b16 %v3112, %v3112
        %v3369 = vpack.c.b16 %v3113, %v3113
        %v3370 = vpack.c.b16 %v3114, %v3114
        %v3371 = vpack.c.b16 %v3115, %v3115
        %v3372 = vpack.c.b16 %v3116, %v3116
        %v3373 = vpack.c.b16 %v3117, %v3117
        %v3374 = vpack.c.b16 %v3118, %v3118
        %v3375 = vpack.c.b16 %v3119, %v3119
        %v3376 = vpack.c.b16 %v3120, %v3120
        %v3377 = vpack.c.b16 %v3121, %v3121
        %v3378 = vpack.c.b16 %v3122, %v3122
        %v3379 = vpack.c.b16 %v3123, %v3123
        %v3380 = vpack.c.b16 %v3124, %v3124
        %v3381 = vpack.c.b16 %v3125, %v3125
        %v3382 = vpack.c.b16 %v3126, %v3126
        %v3383 = vpack.c.b16 %v3127, %v3127
        %v3384 = vpack.c.b16 %v3128, %v3128
        %v3385 = vpack.c.b16 %v3129, %v3129
        %v3386 = vpack.c.b16 %v3130, %v3130
        %v3387 = vpack.c.b16 %v3131, %v3131
        %v3388 = vpack.c.b16 %v3132, %v3132
        %v3389 = vpack.c.b16 %v3133, %v3133
        %v3390 = vpack.c.b16 %v3134, %v3134
        %v3391 = vpack.c.b16 %v3135, %v3135
        %v3392 = vpack.c.b16 %v3136, %v3136
        %v3393 = vpack.c.b16 %v3137, %v3137
        %v3394 = vpack.c.b16 %v3138, %v3138
        %v3395 = vpack.c.b16 %v3139, %v3139
        %v3396 = vpack.c.b16 %v3140, %v3140
        %v3397 = vpack.c.b16 %v3141, %v3141
        %v3398 = vpack.c.b16 %v3142, %v3142
        %v3399 = vpack.c.b16 %v3143, %v3143
        %v3400 = vpack.c.b16 %v3144, %v3144
        %v3401 = vpack.c.b16 %v3145, %v3145
        %v3402 = vpack.c.b16 %v3146, %v3146
        %v3403 = vpack.c.b16 %v3147, %v3147
        %v3404 = vpack.c.b16 %v3148, %v3148
        %v3405 = vpack.c.b16 %v3149, %v3149
        %v3406 = vpack.c.b16 %v3150, %v3150
        %v3407 = vpack.c.b16 %v3151, %v3151
        %v3408 = vpack.c.b16 %v3152, %v3152
        %v3409 = vpack.c.b16 %v3153, %v3153
        %v3410 = vpack.c.b16 %v3154, %v3154
        %v3411 = vpack.c.b16 %v3155, %v3155
        %v3412 = vpack.c.b16 %v3156, %v3156
        %v3413 = vpack.c.b16 %v3157, %v3157
        %v3414 = vpack.c.b16 %v3158, %v3158
        %v3415 = vpack.c.b16 %v3159, %v3159
        %v3416 = vpack.c.b16 %v3160, %v3160
        %v3417 = vpack.c.b16 %v3161, %v3161
        %v3418 = vpack.c.b16 %v3162, %v3162
        %v3419 = vpack.c.b16 %v3163, %v3163
        %v3420 = vpack.c.b16 %v3164, %v3164
        %v3421 = vpack.c.b16 %v3165, %v3165
        %v3422 = vpack.c.b16 %v3166, %v3166
        %v3423 = vpack.c.b16 %v3167, %v3167
        %v3424 = vpack.c.b16 %v3168, %v3168
        %v3425 = vpack.c.b16 %v3169, %v3169
        %v3426 = vpack.c.b16 %v3170, %v3170
        %v3427 = vpack.c.b16 %v3171, %v3171
        %v3428 = vpack.c.b16 %v3172, %v3172
        %v3429 = vpack.c.b16 %v3173, %v3173
        %v3430 = vpack.c.b16 %v3174, %v3174
        %v3431 = vpack.c.b16 %v3175, %v3175
        %v3432 = vpack.c.b16 %v3176, %v3176
        %v3433 = vpack.c.b16 %v3177, %v3177
        %v3434 = vpack.c.b16 %v3178, %v3178
        %v3435 = vpack.c.b16 %v3179, %v3179
        %v3436 = vpack.c.b16 %v3180, %v3180
        %v3437 = vpack.c.b16 %v3181, %v3181
        %v3438 = vpack.c.b16 %v3182, %v3182
        %v3439 = vpack.c.b16 %v3183, %v3183
        %v3440 = vpack.c.b16 %v3184, %v3184
        %v3441 = vpack.c.b16 %v3185, %v3185
        %v3442 = vpack.c.b16 %v3186, %v3186
        %v3443 = vpack.c.b16 %v3187, %v3187
        %v3444 = vpack.c.b16 %v3188, %v3188
        %v3445 = vpack.c.b16 %v3189, %v3189
        %3702 = vst [vmem:[%s4] sm:$0xf] %v3190
        %3703 = vst [vmem:[%s4 + $0x4] sm:$0xf] %v3191
        %3704 = vst [vmem:[%s4 + $0x8] sm:$0xf] %v3192
        %3705 = vst [vmem:[%s4 + $0xc] sm:$0xf] %v3193
        %3706 = vst [vmem:[%s4 + $0x10] sm:$0xf] %v3194
        %3707 = vst [vmem:[%s4 + $0x14] sm:$0xf] %v3195
        %3708 = vst [vmem:[%s4 + $0x18] sm:$0xf] %v3196
        %3709 = vst [vmem:[%s4 + $0x1c] sm:$0xf] %v3197
        %3710 = vst [vmem:[%s4 + $0x20] sm:$0xf] %v3198
        %3711 = vst [vmem:[%s4 + $0x24] sm:$0xf] %v3199
        %3712 = vst [vmem:[%s4 + $0x28] sm:$0xf] %v3200
        %3713 = vst [vmem:[%s4 + $0x2c] sm:$0xf] %v3201
        %3714 = vst [vmem:[%s4 + $0x30] sm:$0xf] %v3202
        %3715 = vst [vmem:[%s4 + $0x34] sm:$0xf] %v3203
        %3716 = vst [vmem:[%s4 + $0x38] sm:$0xf] %v3204
        %3717 = vst [vmem:[%s4 + $0x3c] sm:$0xf] %v3205
        %3718 = vst [vmem:[%s4 + $0x40] sm:$0xf] %v3206
        %3719 = vst [vmem:[%s4 + $0x44] sm:$0xf] %v3207
        %3720 = vst [vmem:[%s4 + $0x48] sm:$0xf] %v3208
        %3721 = vst [vmem:[%s4 + $0x4c] sm:$0xf] %v3209
        %3722 = vst [vmem:[%s4 + $0x50] sm:$0xf] %v3210
        %3723 = vst [vmem:[%s4 + $0x54] sm:$0xf] %v3211
        %3724 = vst [vmem:[%s4 + $0x58] sm:$0xf] %v3212
        %3725 = vst [vmem:[%s4 + $0x5c] sm:$0xf] %v3213
        %3726 = vst [vmem:[%s4 + $0x60] sm:$0xf] %v3214
        %3727 = vst [vmem:[%s4 + $0x64] sm:$0xf] %v3215
        %3728 = vst [vmem:[%s4 + $0x68] sm:$0xf] %v3216
        %3729 = vst [vmem:[%s4 + $0x6c] sm:$0xf] %v3217
        %3730 = vst [vmem:[%s4 + $0x70] sm:$0xf] %v3218
        %3731 = vst [vmem:[%s4 + $0x74] sm:$0xf] %v3219
        %3732 = vst [vmem:[%s4 + $0x78] sm:$0xf] %v3220
        %3733 = vst [vmem:[%s4 + $0x7c] sm:$0xf] %v3221
        %3734 = vst [vmem:[%s4 + $0x80] sm:$0xf] %v3222
        %3735 = vst [vmem:[%s4 + $0x84] sm:$0xf] %v3223
        %3736 = vst [vmem:[%s4 + $0x88] sm:$0xf] %v3224
        %3737 = vst [vmem:[%s4 + $0x8c] sm:$0xf] %v3225
        %3738 = vst [vmem:[%s4 + $0x90] sm:$0xf] %v3226
        %3739 = vst [vmem:[%s4 + $0x94] sm:$0xf] %v3227
        %3740 = vst [vmem:[%s4 + $0x98] sm:$0xf] %v3228
        %3741 = vst [vmem:[%s4 + $0x9c] sm:$0xf] %v3229
        %3742 = vst [vmem:[%s4 + $0xa0] sm:$0xf] %v3230
        %3743 = vst [vmem:[%s4 + $0xa4] sm:$0xf] %v3231
        %3744 = vst [vmem:[%s4 + $0xa8] sm:$0xf] %v3232
        %3745 = vst [vmem:[%s4 + $0xac] sm:$0xf] %v3233
        %3746 = vst [vmem:[%s4 + $0xb0] sm:$0xf] %v3234
        %3747 = vst [vmem:[%s4 + $0xb4] sm:$0xf] %v3235
        %3748 = vst [vmem:[%s4 + $0xb8] sm:$0xf] %v3236
        %3749 = vst [vmem:[%s4 + $0xbc] sm:$0xf] %v3237
        %3750 = vst [vmem:[%s4 + $0xc0] sm:$0xf] %v3238
        %3751 = vst [vmem:[%s4 + $0xc4] sm:$0xf] %v3239
        %3752 = vst [vmem:[%s4 + $0xc8] sm:$0xf] %v3240
        %3753 = vst [vmem:[%s4 + $0xcc] sm:$0xf] %v3241
        %3754 = vst [vmem:[%s4 + $0xd0] sm:$0xf] %v3242
        %3755 = vst [vmem:[%s4 + $0xd4] sm:$0xf] %v3243
        %3756 = vst [vmem:[%s4 + $0xd8] sm:$0xf] %v3244
        %3757 = vst [vmem:[%s4 + $0xdc] sm:$0xf] %v3245
        %3758 = vst [vmem:[%s4 + $0xe0] sm:$0xf] %v3246
        %3759 = vst [vmem:[%s4 + $0xe4] sm:$0xf] %v3247
        %3760 = vst [vmem:[%s4 + $0xe8] sm:$0xf] %v3248
        %3761 = vst [vmem:[%s4 + $0xec] sm:$0xf] %v3249
        %3762 = vst [vmem:[%s4 + $0xf0] sm:$0xf] %v3250
        %3763 = vst [vmem:[%s4 + $0xf4] sm:$0xf] %v3251
        %3764 = vst [vmem:[%s4 + $0xf8] sm:$0xf] %v3252
        %3765 = vst [vmem:[%s4 + $0xfc] sm:$0xf] %v3253
        %3766 = vst [vmem:[%s4 + $0x100] sm:$0xf] %v3254
        %3767 = vst [vmem:[%s4 + $0x104] sm:$0xf] %v3255
        %3768 = vst [vmem:[%s4 + $0x108] sm:$0xf] %v3256
        %3769 = vst [vmem:[%s4 + $0x10c] sm:$0xf] %v3257
        %3770 = vst [vmem:[%s4 + $0x110] sm:$0xf] %v3258
        %3771 = vst [vmem:[%s4 + $0x114] sm:$0xf] %v3259
        %3772 = vst [vmem:[%s4 + $0x118] sm:$0xf] %v3260
        %3773 = vst [vmem:[%s4 + $0x11c] sm:$0xf] %v3261
        %3774 = vst [vmem:[%s4 + $0x120] sm:$0xf] %v3262
        %3775 = vst [vmem:[%s4 + $0x124] sm:$0xf] %v3263
        %3776 = vst [vmem:[%s4 + $0x128] sm:$0xf] %v3264
        %3777 = vst [vmem:[%s4 + $0x12c] sm:$0xf] %v3265
        %3778 = vst [vmem:[%s4 + $0x130] sm:$0xf] %v3266
        %3779 = vst [vmem:[%s4 + $0x134] sm:$0xf] %v3267
        %3780 = vst [vmem:[%s4 + $0x138] sm:$0xf] %v3268
        %3781 = vst [vmem:[%s4 + $0x13c] sm:$0xf] %v3269
        %3782 = vst [vmem:[%s4 + $0x140] sm:$0xf] %v3270
        %3783 = vst [vmem:[%s4 + $0x144] sm:$0xf] %v3271
        %3784 = vst [vmem:[%s4 + $0x148] sm:$0xf] %v3272
        %3785 = vst [vmem:[%s4 + $0x14c] sm:$0xf] %v3273
        %3786 = vst [vmem:[%s4 + $0x150] sm:$0xf] %v3274
        %3787 = vst [vmem:[%s4 + $0x154] sm:$0xf] %v3275
        %3788 = vst [vmem:[%s4 + $0x158] sm:$0xf] %v3276
        %3789 = vst [vmem:[%s4 + $0x15c] sm:$0xf] %v3277
        %3790 = vst [vmem:[%s4 + $0x160] sm:$0xf] %v3278
        %3791 = vst [vmem:[%s4 + $0x164] sm:$0xf] %v3279
        %3792 = vst [vmem:[%s4 + $0x168] sm:$0xf] %v3280
        %3793 = vst [vmem:[%s4 + $0x16c] sm:$0xf] %v3281
        %3794 = vst [vmem:[%s4 + $0x170] sm:$0xf] %v3282
        %3795 = vst [vmem:[%s4 + $0x174] sm:$0xf] %v3283
        %3796 = vst [vmem:[%s4 + $0x178] sm:$0xf] %v3284
        %3797 = vst [vmem:[%s4 + $0x17c] sm:$0xf] %v3285
        %3798 = vst [vmem:[%s4 + $0x180] sm:$0xf] %v3286
        %3799 = vst [vmem:[%s4 + $0x184] sm:$0xf] %v3287
        %3800 = vst [vmem:[%s4 + $0x188] sm:$0xf] %v3288
        %3801 = vst [vmem:[%s4 + $0x18c] sm:$0xf] %v3289
        %3802 = vst [vmem:[%s4 + $0x190] sm:$0xf] %v3290
        %3803 = vst [vmem:[%s4 + $0x194] sm:$0xf] %v3291
        %3804 = vst [vmem:[%s4 + $0x198] sm:$0xf] %v3292
        %3805 = vst [vmem:[%s4 + $0x19c] sm:$0xf] %v3293
        %3806 = vst [vmem:[%s4 + $0x1a0] sm:$0xf] %v3294
        %3807 = vst [vmem:[%s4 + $0x1a4] sm:$0xf] %v3295
        %3808 = vst [vmem:[%s4 + $0x1a8] sm:$0xf] %v3296
        %3809 = vst [vmem:[%s4 + $0x1ac] sm:$0xf] %v3297
        %3810 = vst [vmem:[%s4 + $0x1b0] sm:$0xf] %v3298
        %3811 = vst [vmem:[%s4 + $0x1b4] sm:$0xf] %v3299
        %3812 = vst [vmem:[%s4 + $0x1b8] sm:$0xf] %v3300
        %3813 = vst [vmem:[%s4 + $0x1bc] sm:$0xf] %v3301
        %3814 = vst [vmem:[%s4 + $0x1c0] sm:$0xf] %v3302
        %3815 = vst [vmem:[%s4 + $0x1c4] sm:$0xf] %v3303
        %3816 = vst [vmem:[%s4 + $0x1c8] sm:$0xf] %v3304
        %3817 = vst [vmem:[%s4 + $0x1cc] sm:$0xf] %v3305
        %3818 = vst [vmem:[%s4 + $0x1d0] sm:$0xf] %v3306
        %3819 = vst [vmem:[%s4 + $0x1d4] sm:$0xf] %v3307
        %3820 = vst [vmem:[%s4 + $0x1d8] sm:$0xf] %v3308
        %3821 = vst [vmem:[%s4 + $0x1dc] sm:$0xf] %v3309
        %3822 = vst [vmem:[%s4 + $0x1e0] sm:$0xf] %v3310
        %3823 = vst [vmem:[%s4 + $0x1e4] sm:$0xf] %v3311
        %3824 = vst [vmem:[%s4 + $0x1e8] sm:$0xf] %v3312
        %3825 = vst [vmem:[%s4 + $0x1ec] sm:$0xf] %v3313
        %3826 = vst [vmem:[%s4 + $0x1f0] sm:$0xf] %v3314
        %3827 = vst [vmem:[%s4 + $0x1f4] sm:$0xf] %v3315
        %3828 = vst [vmem:[%s4 + $0x1f8] sm:$0xf] %v3316
        %3829 = vst [vmem:[%s4 + $0x1fc] sm:$0xf] %v3317
        %3830 = vst [vmem:[%s4 + $0x200] sm:$0xf] %v3318
        %3831 = vst [vmem:[%s4 + $0x204] sm:$0xf] %v3319
        %3832 = vst [vmem:[%s4 + $0x208] sm:$0xf] %v3320
        %3833 = vst [vmem:[%s4 + $0x20c] sm:$0xf] %v3321
        %3834 = vst [vmem:[%s4 + $0x210] sm:$0xf] %v3322
        %3835 = vst [vmem:[%s4 + $0x214] sm:$0xf] %v3323
        %3836 = vst [vmem:[%s4 + $0x218] sm:$0xf] %v3324
        %3837 = vst [vmem:[%s4 + $0x21c] sm:$0xf] %v3325
        %3838 = vst [vmem:[%s4 + $0x220] sm:$0xf] %v3326
        %3839 = vst [vmem:[%s4 + $0x224] sm:$0xf] %v3327
        %3840 = vst [vmem:[%s4 + $0x228] sm:$0xf] %v3328
        %3841 = vst [vmem:[%s4 + $0x22c] sm:$0xf] %v3329
        %3842 = vst [vmem:[%s4 + $0x230] sm:$0xf] %v3330
        %3843 = vst [vmem:[%s4 + $0x234] sm:$0xf] %v3331
        %3844 = vst [vmem:[%s4 + $0x238] sm:$0xf] %v3332
        %3845 = vst [vmem:[%s4 + $0x23c] sm:$0xf] %v3333
        %3846 = vst [vmem:[%s4 + $0x240] sm:$0xf] %v3334
        %3847 = vst [vmem:[%s4 + $0x244] sm:$0xf] %v3335
        %3848 = vst [vmem:[%s4 + $0x248] sm:$0xf] %v3336
        %3849 = vst [vmem:[%s4 + $0x24c] sm:$0xf] %v3337
        %3850 = vst [vmem:[%s4 + $0x250] sm:$0xf] %v3338
        %3851 = vst [vmem:[%s4 + $0x254] sm:$0xf] %v3339
        %3852 = vst [vmem:[%s4 + $0x258] sm:$0xf] %v3340
        %3853 = vst [vmem:[%s4 + $0x25c] sm:$0xf] %v3341
        %3854 = vst [vmem:[%s4 + $0x260] sm:$0xf] %v3342
        %3855 = vst [vmem:[%s4 + $0x264] sm:$0xf] %v3343
        %3856 = vst [vmem:[%s4 + $0x268] sm:$0xf] %v3344
        %3857 = vst [vmem:[%s4 + $0x26c] sm:$0xf] %v3345
        %3858 = vst [vmem:[%s4 + $0x270] sm:$0xf] %v3346
        %3859 = vst [vmem:[%s4 + $0x274] sm:$0xf] %v3347
        %3860 = vst [vmem:[%s4 + $0x278] sm:$0xf] %v3348
        %3861 = vst [vmem:[%s4 + $0x27c] sm:$0xf] %v3349
        %3862 = vst [vmem:[%s4 + $0x280] sm:$0xf] %v3350
        %3863 = vst [vmem:[%s4 + $0x284] sm:$0xf] %v3351
        %3864 = vst [vmem:[%s4 + $0x288] sm:$0xf] %v3352
        %3865 = vst [vmem:[%s4 + $0x28c] sm:$0xf] %v3353
        %3866 = vst [vmem:[%s4 + $0x290] sm:$0xf] %v3354
        %3867 = vst [vmem:[%s4 + $0x294] sm:$0xf] %v3355
        %3868 = vst [vmem:[%s4 + $0x298] sm:$0xf] %v3356
        %3869 = vst [vmem:[%s4 + $0x29c] sm:$0xf] %v3357
        %3870 = vst [vmem:[%s4 + $0x2a0] sm:$0xf] %v3358
        %3871 = vst [vmem:[%s4 + $0x2a4] sm:$0xf] %v3359
        %3872 = vst [vmem:[%s4 + $0x2a8] sm:$0xf] %v3360
        %3873 = vst [vmem:[%s4 + $0x2ac] sm:$0xf] %v3361
        %3874 = vst [vmem:[%s4 + $0x2b0] sm:$0xf] %v3362
        %3875 = vst [vmem:[%s4 + $0x2b4] sm:$0xf] %v3363
        %3876 = vst [vmem:[%s4 + $0x2b8] sm:$0xf] %v3364
        %3877 = vst [vmem:[%s4 + $0x2bc] sm:$0xf] %v3365
        %3878 = vst [vmem:[%s4 + $0x2c0] sm:$0xf] %v3366
        %3879 = vst [vmem:[%s4 + $0x2c4] sm:$0xf] %v3367
        %3880 = vst [vmem:[%s4 + $0x2c8] sm:$0xf] %v3368
        %3881 = vst [vmem:[%s4 + $0x2cc] sm:$0xf] %v3369
        %3882 = vst [vmem:[%s4 + $0x2d0] sm:$0xf] %v3370
        %3883 = vst [vmem:[%s4 + $0x2d4] sm:$0xf] %v3371
        %3884 = vst [vmem:[%s4 + $0x2d8] sm:$0xf] %v3372
        %3885 = vst [vmem:[%s4 + $0x2dc] sm:$0xf] %v3373
        %3886 = vst [vmem:[%s4 + $0x2e0] sm:$0xf] %v3374
        %3887 = vst [vmem:[%s4 + $0x2e4] sm:$0xf] %v3375
        %3888 = vst [vmem:[%s4 + $0x2e8] sm:$0xf] %v3376
        %3889 = vst [vmem:[%s4 + $0x2ec] sm:$0xf] %v3377
        %3890 = vst [vmem:[%s4 + $0x2f0] sm:$0xf] %v3378
        %3891 = vst [vmem:[%s4 + $0x2f4] sm:$0xf] %v3379
        %3892 = vst [vmem:[%s4 + $0x2f8] sm:$0xf] %v3380
        %3893 = vst [vmem:[%s4 + $0x2fc] sm:$0xf] %v3381
        %3894 = vst [vmem:[%s4 + $0x300] sm:$0xf] %v3382
        %3895 = vst [vmem:[%s4 + $0x304] sm:$0xf] %v3383
        %3896 = vst [vmem:[%s4 + $0x308] sm:$0xf] %v3384
        %3897 = vst [vmem:[%s4 + $0x30c] sm:$0xf] %v3385
        %3898 = vst [vmem:[%s4 + $0x310] sm:$0xf] %v3386
        %3899 = vst [vmem:[%s4 + $0x314] sm:$0xf] %v3387
        %3900 = vst [vmem:[%s4 + $0x318] sm:$0xf] %v3388
        %3901 = vst [vmem:[%s4 + $0x31c] sm:$0xf] %v3389
        %3902 = vst [vmem:[%s4 + $0x320] sm:$0xf] %v3390
        %3903 = vst [vmem:[%s4 + $0x324] sm:$0xf] %v3391
        %3904 = vst [vmem:[%s4 + $0x328] sm:$0xf] %v3392
        %3905 = vst [vmem:[%s4 + $0x32c] sm:$0xf] %v3393
        %3906 = vst [vmem:[%s4 + $0x330] sm:$0xf] %v3394
        %3907 = vst [vmem:[%s4 + $0x334] sm:$0xf] %v3395
        %3908 = vst [vmem:[%s4 + $0x338] sm:$0xf] %v3396
        %3909 = vst [vmem:[%s4 + $0x33c] sm:$0xf] %v3397
        %3910 = vst [vmem:[%s4 + $0x340] sm:$0xf] %v3398
        %3911 = vst [vmem:[%s4 + $0x344] sm:$0xf] %v3399
        %3912 = vst [vmem:[%s4 + $0x348] sm:$0xf] %v3400
        %3913 = vst [vmem:[%s4 + $0x34c] sm:$0xf] %v3401
        %3914 = vst [vmem:[%s4 + $0x350] sm:$0xf] %v3402
        %3915 = vst [vmem:[%s4 + $0x354] sm:$0xf] %v3403
        %3916 = vst [vmem:[%s4 + $0x358] sm:$0xf] %v3404
        %3917 = vst [vmem:[%s4 + $0x35c] sm:$0xf] %v3405
        %3918 = vst [vmem:[%s4 + $0x360] sm:$0xf] %v3406
        %3919 = vst [vmem:[%s4 + $0x364] sm:$0xf] %v3407
        %3920 = vst [vmem:[%s4 + $0x368] sm:$0xf] %v3408
        %3921 = vst [vmem:[%s4 + $0x36c] sm:$0xf] %v3409
        %3922 = vst [vmem:[%s4 + $0x370] sm:$0xf] %v3410
        %3923 = vst [vmem:[%s4 + $0x374] sm:$0xf] %v3411
        %3924 = vst [vmem:[%s4 + $0x378] sm:$0xf] %v3412
        %3925 = vst [vmem:[%s4 + $0x37c] sm:$0xf] %v3413
        %3926 = vst [vmem:[%s4 + $0x380] sm:$0xf] %v3414
        %3927 = vst [vmem:[%s4 + $0x384] sm:$0xf] %v3415
        %3928 = vst [vmem:[%s4 + $0x388] sm:$0xf] %v3416
        %3929 = vst [vmem:[%s4 + $0x38c] sm:$0xf] %v3417
        %3930 = vst [vmem:[%s4 + $0x390] sm:$0xf] %v3418
        %3931 = vst [vmem:[%s4 + $0x394] sm:$0xf] %v3419
        %3932 = vst [vmem:[%s4 + $0x398] sm:$0xf] %v3420
        %3933 = vst [vmem:[%s4 + $0x39c] sm:$0xf] %v3421
        %3934 = vst [vmem:[%s4 + $0x3a0] sm:$0xf] %v3422
        %3935 = vst [vmem:[%s4 + $0x3a4] sm:$0xf] %v3423
        %3936 = vst [vmem:[%s4 + $0x3a8] sm:$0xf] %v3424
        %3937 = vst [vmem:[%s4 + $0x3ac] sm:$0xf] %v3425
        %3938 = vst [vmem:[%s4 + $0x3b0] sm:$0xf] %v3426
        %3939 = vst [vmem:[%s4 + $0x3b4] sm:$0xf] %v3427
        %3940 = vst [vmem:[%s4 + $0x3b8] sm:$0xf] %v3428
        %3941 = vst [vmem:[%s4 + $0x3bc] sm:$0xf] %v3429
        %3942 = vst [vmem:[%s4 + $0x3c0] sm:$0xf] %v3430
        %3943 = vst [vmem:[%s4 + $0x3c4] sm:$0xf] %v3431
        %3944 = vst [vmem:[%s4 + $0x3c8] sm:$0xf] %v3432
        %3945 = vst [vmem:[%s4 + $0x3cc] sm:$0xf] %v3433
        %3946 = vst [vmem:[%s4 + $0x3d0] sm:$0xf] %v3434
        %3947 = vst [vmem:[%s4 + $0x3d4] sm:$0xf] %v3435
        %3948 = vst [vmem:[%s4 + $0x3d8] sm:$0xf] %v3436
        %3949 = vst [vmem:[%s4 + $0x3dc] sm:$0xf] %v3437
        %3950 = vst [vmem:[%s4 + $0x3e0] sm:$0xf] %v3438
        %3951 = vst [vmem:[%s4 + $0x3e4] sm:$0xf] %v3439
        %3952 = vst [vmem:[%s4 + $0x3e8] sm:$0xf] %v3440
        %3953 = vst [vmem:[%s4 + $0x3ec] sm:$0xf] %v3441
        %3954 = vst [vmem:[%s4 + $0x3f0] sm:$0xf] %v3442
        %3955 = vst [vmem:[%s4 + $0x3f4] sm:$0xf] %v3443
        %3956 = vst [vmem:[%s4 + $0x3f8] sm:$0xf] %v3444
        %3957 = vst [vmem:[%s4 + $0x3fc] sm:$0xf] %v3445
      $region44: #{generator_forward.8} parent=35 // pred_fallthru
        _
      // Predicated region
      $region45: #{generator_forward.8} parent=35 // pred_check
        %p3958 = pneg %p122
      $region46: #{generator_forward.8} parent=35 // pred_check_branch
        %3960 = sbr.rel (%p3958) target = $region48
      $region47: #{generator_forward.8} parent=35 // pred_region
        _
      $region48: #{generator_forward.8} parent=35 // pred_fallthru
        _
      // Predicated region
      $region49: #{generator_forward.8} parent=35 // pred_check
        %p3961 = pneg %p122
      $region50: #{generator_forward.8} parent=35 // pred_check_branch
        %3963 = sbr.rel (%p3961) target = $region52
      $region51: #{generator_forward.8} parent=35 // pred_region
        _
      $region52: #{generator_forward.8} parent=35 // pred_fallthru
        _
    $region36: #{generator_forward.8} parent=5 // pred_fallthru
      _
    %p3964 = scmp.le.s32.totalorder 2, %s10
    // Predicated region
    $region53: #{generator_forward.8} parent=5 // pred_check
      %p3965 = pneg %p3964
    $region54: #{generator_forward.8} parent=5 // pred_check_branch
      %3967 = sbr.rel (%p3965) target = $region56
    $region55: #{generator_forward.8} parent=5 // pred_region
      %s3968 = ssub.s32 %s10, 2
    $region56: #{generator_forward.8} parent=5 // pred_fallthru
      _
  $region6: #{generator_forward.8} parent=0 // loop_footer
    %s14 = sadd.s32 1, %s10
  $region7: #{generator_forward.8} parent=0 // loop_footer_branch
    %9 = sbr.rel target = $region3
  $region8: #{generator_forward.8} parent=0 // loop_exit
    _

// kernel: generator_forward.9
$region0: #{generator_forward.9}
  #allocation0 [shape = 'u32[]', space=smem, size = 0x4, offset = 0x4, fixed_abs, tag = 'smem constant byte address 0x4 - core index']
  #allocation1 [shape = 'u32[144,128]{1,0:T(1,128)}', space=vmem, size = 0x12000, scoped, tag = 'internal scratch']
  %s0 = inlined_call_operand.vmem [shape: bf16[4,2048,16], index: 0, kind: input, shape index: {}]
  %s1 = inlined_call_operand.vmem [shape: bf16[4,16,128], index: 1, kind: input, shape index: {}]
  %s2 = inlined_call_operand.vmem [shape: f32[4,2048,128], index: 2, kind: output, shape index: {}]
  %s3 = sld [smem:[#allocation0]]
  $region41: #{generator_forward.9} parent=0
    _
  %s5 = ssub.s32 1, %s3
  %s6 = scalar_select 0, %s5, %s3
  loop: start=0, step=1, limit=10
  $region2: #{generator_forward.9} parent=0 // loop_pre_header
    _
  $region3: #{generator_forward.9} parent=0 // loop_header
    %s8 = sphi 0, %s12
    %p9 = scmp.ge.s32.totalorder %s8, 10
    %s15 = sphi 0, %s27
    %s16 = sphi 0, %s23
    %s17 = sphi 0, %s15
    %s18 = sphi 0, %s16
    %s19 = sphi 0, %s17
    %s20 = sphi 0, %s18
    %s32 = sphi 0, %s34
    %s35 = sphi 0, %s32
    %s36 = sphi 0, %s35
    %s52 = sphi 0, %s36
    %s58 = sphi 0, %s60
    %s61 = sphi 0, %s58
    %s62 = sphi 0, %s61
    %s78 = sphi 0, %s62
    %s86 = sphi 0, %s88
    %s89 = sphi 0, %s86
    %s90 = sphi 0, %s89
    %s106 = sphi 0, %s90
  $region4: #{generator_forward.9} parent=0 // loop_header_branch
    %11 = sbr.rel (%p9) target = $region8
  $region5: #{generator_forward.9} parent=0 // loop_body
    %s13 = ssub.s32 %s8, 1
    %s14 = ssub.s32 %s8, 2
    %s21 = sadd.s32 1, %s16
    %p22 = scmp.ge.s32.totalorder %s21, 2
    %s23 = scalar_select %p22, 0, %s21
    %s24 = sadd.s32 1, %s15
    %s25 = scalar_select %p22, %s24, %s15
    %p26 = scmp.ge.s32.totalorder %s25, 4
    %s27 = scalar_select %p26, 0, %s25
    %s28 = ssub.s32 %s15, %s27
    %s29 = ssub.s32 %s16, %s23
    %s30 = sor.u32 %s28, %s29
    %p31 = scmp.eq.s32.totalorder %s30, 0
    %s33 = sadd.s32 %s32, 1
    %s34 = scalar_select %p31, %s32, %s33
    %p37 = pneg %p31
    %p38 = scmp.eq.s32.totalorder %s8, 7
    %p39 = por %p37, %p38
    %p40 = scmp.ne.s32.totalorder %s32, %s35
    %p41 = scmp.eq.s32.totalorder %s8, 0
    %p42 = por %p40, %p41
    %p43 = scmp.ne.s32.totalorder %s32, %s35
    %p44 = scmp.eq.s32.totalorder %s13, 7
    %p45 = por %p43, %p44
    %p46 = scmp.ne.s32.totalorder %s35, %s36
    %p47 = scmp.eq.s32.totalorder %s13, 0
    %p48 = por %p46, %p47
    %p49 = scmp.ne.s32.totalorder %s35, %s36
    %p50 = scmp.eq.s32.totalorder %s14, 7
    %p51 = por %p49, %p50
    %p53 = scmp.ne.s32.totalorder %s36, %s52
    %p54 = scmp.eq.s32.totalorder %s14, 0
    %p55 = por %p53, %p54
    %s56 = ssub.s32 %s15, %s27
    %p57 = scmp.eq.s32.totalorder %s56, 0
    %s59 = sadd.s32 %s58, 1
    %s60 = scalar_select %p57, %s58, %s59
    %p63 = pneg %p57
    %p64 = scmp.eq.s32.totalorder %s8, 7
    %p65 = por %p63, %p64
    %p66 = scmp.ne.s32.totalorder %s58, %s61
    %p67 = scmp.eq.s32.totalorder %s8, 0
    %p68 = por %p66, %p67
    %p69 = scmp.ne.s32.totalorder %s58, %s61
    %p70 = scmp.eq.s32.totalorder %s13, 7
    %p71 = por %p69, %p70
    %p72 = scmp.ne.s32.totalorder %s61, %s62
    %p73 = scmp.eq.s32.totalorder %s13, 0
    %p74 = por %p72, %p73
    %p75 = scmp.ne.s32.totalorder %s61, %s62
    %p76 = scmp.eq.s32.totalorder %s14, 7
    %p77 = por %p75, %p76
    %p79 = scmp.ne.s32.totalorder %s62, %s78
    %p80 = scmp.eq.s32.totalorder %s14, 0
    %p81 = por %p79, %p80
    %s82 = ssub.s32 %s15, %s27
    %s83 = ssub.s32 %s16, %s23
    %s84 = sor.u32 %s82, %s83
    %p85 = scmp.eq.s32.totalorder %s84, 0
    %s87 = sadd.s32 %s86, 1
    %s88 = scalar_select %p85, %s86, %s87
    %p91 = pneg %p85
    %p92 = scmp.eq.s32.totalorder %s8, 7
    %p93 = por %p91, %p92
    %p94 = scmp.ne.s32.totalorder %s86, %s89
    %p95 = scmp.eq.s32.totalorder %s8, 0
    %p96 = por %p94, %p95
    %p97 = scmp.ne.s32.totalorder %s86, %s89
    %p98 = scmp.eq.s32.totalorder %s13, 7
    %p99 = por %p97, %p98
    %p100 = scmp.ne.s32.totalorder %s89, %s90
    %p101 = scmp.eq.s32.totalorder %s13, 0
    %p102 = por %p100, %p101
    %p103 = scmp.ne.s32.totalorder %s89, %s90
    %p104 = scmp.eq.s32.totalorder %s14, 7
    %p105 = por %p103, %p104
    %p107 = scmp.ne.s32.totalorder %s90, %s106
    %p108 = scmp.eq.s32.totalorder %s14, 0
    %p109 = por %p107, %p108
    %p110 = scmp.le.s32.totalorder 1, %s8
    %p111 = scmp.lt.s32.totalorder %s8, 9
    %p112 = pnand %p110, %p111
    %p113 = pneg %p112
    // Predicated region
    $region9: #{generator_forward.9} parent=5 // pred_check
      _
    $region10: #{generator_forward.9} parent=5 // pred_check_branch
      %115 = sbr.rel (%p112) target = $region12
    $region11: #{generator_forward.9} parent=5 // pred_region
      %s116 = ssub.s32 %s8, 1
    $region12: #{generator_forward.9} parent=5 // pred_fallthru
      _
    %p117 = scmp.lt.s32.totalorder %s8, 8
    // Predicated region
    $region13: #{generator_forward.9} parent=5 // pred_check
      %p118 = pneg %p117
    $region14: #{generator_forward.9} parent=5 // pred_check_branch
      %120 = sbr.rel (%p118) target = $region16
    $region15: #{generator_forward.9} parent=5 // pred_region
      // Predicated region
      $region17: #{generator_forward.9} parent=15 // pred_check
        %p121 = pneg %p42
      $region18: #{generator_forward.9} parent=15 // pred_check_branch
        %123 = sbr.rel (%p121) target = $region20
      $region19: #{generator_forward.9} parent=15 // pred_region
        %s124 = smul.u32 128, %s16
        %p125 = scmp.lt.s32.totalorder %s15, 3
        %s126 = scalar_select %p125, %s15, 3
        %p127 = scmp.lt.s32.totalorder %s124, 255
        %s128 = scalar_select %p127, %s124, 255
        %s129 = smul.addr %s126, 256
        %s130 = sadd.s32 %s128, %s129
        %s131 = smul.addr %s130, 4
        %s132 = scalar_lea.vmem %s0, %s131
        %s133 = smul.u32 128, %s16
      $region20: #{generator_forward.9} parent=15 // pred_fallthru
        _
      // Predicated region
      $region21: #{generator_forward.9} parent=15 // pred_check
        %p134 = pneg %p68
      $region22: #{generator_forward.9} parent=15 // pred_check_branch
        %136 = sbr.rel (%p134) target = $region24
      $region23: #{generator_forward.9} parent=15 // pred_region
        %p137 = scmp.lt.s32.totalorder %s15, 3
        %s138 = scalar_select %p137, %s15, 3
        %s139 = smul.addr %s138, 2
        %s140 = smul.addr %s139, 4
        %s141 = scalar_lea.vmem %s1, %s140
      $region24: #{generator_forward.9} parent=15 // pred_fallthru
        _
    $region16: #{generator_forward.9} parent=5 // pred_fallthru
      _
    %p142 = scmp.le.s32.totalorder 1, %s8
    %p143 = scmp.lt.s32.totalorder %s8, 9
    %p144 = pnand %p142, %p143
    %p145 = pneg %p144
    // Predicated region
    $region25: #{generator_forward.9} parent=5 // pred_check
      _
    $region26: #{generator_forward.9} parent=5 // pred_check_branch
      %147 = sbr.rel (%p144) target = $region28
    $region27: #{generator_forward.9} parent=5 // pred_region
      %s148 = ssub.s32 %s8, 1
      %s149 = smul.u32 128, %s18
      %p150 = scmp.lt.s32.totalorder %s17, 3
      %s151 = scalar_select %p150, %s17, 3
      %p152 = scmp.lt.s32.totalorder %s149, 255
      %s153 = scalar_select %p152, %s149, 255
      %s154 = smul.addr %s151, 256
      %s155 = sadd.s32 %s153, %s154
      %s156 = smul.addr %s155, 4
      %s157 = scalar_lea.vmem %s0, %s156
      %p158 = pneg %p48
      %p159 = pneg %p45
      %p160 = scmp.lt.s32.totalorder %s17, 3
      %s161 = scalar_select %p160, %s17, 3
      %s162 = smul.addr %s161, 2
      %s163 = smul.addr %s162, 4
      %s164 = scalar_lea.vmem %s1, %s163
      %p165 = pneg %p74
      %p166 = pneg %p71
      %p167 = pneg %p102
      %p168 = pneg %p99
      %s169 = smul.u32 128, %s18
      %p170 = scmp.lt.s32.totalorder %s17, 3
      %s171 = scalar_select %p170, %s17, 3
      %p172 = scmp.lt.s32.totalorder %s169, 255
      %s173 = scalar_select %p172, %s169, 255
      %s174 = smul.addr %s171, 256
      %s175 = sadd.s32 %s173, %s174
      %s176 = smul.addr %s175, 8
      %s177 = scalar_lea.vmem %s2, %s176
      %s178 = smul.u32 128, %s18
      %p179 = scmp.lt.s32.totalorder %s17, 3
      %s180 = scalar_select %p179, %s17, 3
      %p181 = scmp.lt.s32.totalorder %s178, 255
      %s182 = scalar_select %p181, %s178, 255
      %s183 = smul.addr %s180, 256
      %s184 = sadd.s32 %s182, %s183
      %s185 = smul.addr %s184, 4
      %s186 = scalar_lea.vmem %s0, %s185
      %s187 = smul.u32 128, %s18
      %p188 = scmp.lt.s32.totalorder %s17, 3
      %s189 = scalar_select %p188, %s17, 3
      %s190 = smul.addr %s189, 2
      %s191 = smul.addr %s190, 4
      %s192 = scalar_lea.vmem %s1, %s191
      %s193 = smul.u32 128, %s18
      %p194 = scmp.lt.s32.totalorder %s17, 3
      %s195 = scalar_select %p194, %s17, 3
      %p196 = scmp.lt.s32.totalorder %s193, 255
      %s197 = scalar_select %p196, %s193, 255
      %s198 = smul.addr %s195, 256
      %s199 = sadd.s32 %s197, %s198
      %s200 = smul.addr %s199, 8
      %s201 = scalar_lea.vmem %s2, %s200
      %s202 = smul.u32 128, %s18
      %v204 = vld [vmem:[%s186] sm:$0xf]
      %v205 = vld [vmem:[%s186 + $0x4] sm:$0xf]
      %v206 = vld [vmem:[%s186 + $0x8] sm:$0xf]
      %v207 = vld [vmem:[%s186 + $0xc] sm:$0xf]
      %v208 = vld [vmem:[%s186 + $0x10] sm:$0xf]
      %v209 = vld [vmem:[%s186 + $0x14] sm:$0xf]
      %v210 = vld [vmem:[%s186 + $0x18] sm:$0xf]
      %v211 = vld [vmem:[%s186 + $0x1c] sm:$0xf]
      %v212 = vld [vmem:[%s186 + $0x20] sm:$0xf]
      %v213 = vld [vmem:[%s186 + $0x24] sm:$0xf]
      %v214 = vld [vmem:[%s186 + $0x28] sm:$0xf]
      %v215 = vld [vmem:[%s186 + $0x2c] sm:$0xf]
      %v216 = vld [vmem:[%s186 + $0x30] sm:$0xf]
      %v217 = vld [vmem:[%s186 + $0x34] sm:$0xf]
      %v218 = vld [vmem:[%s186 + $0x38] sm:$0xf]
      %v219 = vld [vmem:[%s186 + $0x3c] sm:$0xf]
      %v220 = vld [vmem:[%s186 + $0x40] sm:$0xf]
      %v221 = vld [vmem:[%s186 + $0x44] sm:$0xf]
      %v222 = vld [vmem:[%s186 + $0x48] sm:$0xf]
      %v223 = vld [vmem:[%s186 + $0x4c] sm:$0xf]
      %v224 = vld [vmem:[%s186 + $0x50] sm:$0xf]
      %v225 = vld [vmem:[%s186 + $0x54] sm:$0xf]
      %v226 = vld [vmem:[%s186 + $0x58] sm:$0xf]
      %v227 = vld [vmem:[%s186 + $0x5c] sm:$0xf]
      %v228 = vld [vmem:[%s186 + $0x60] sm:$0xf]
      %v229 = vld [vmem:[%s186 + $0x64] sm:$0xf]
      %v230 = vld [vmem:[%s186 + $0x68] sm:$0xf]
      %v231 = vld [vmem:[%s186 + $0x6c] sm:$0xf]
      %v232 = vld [vmem:[%s186 + $0x70] sm:$0xf]
      %v233 = vld [vmem:[%s186 + $0x74] sm:$0xf]
      %v234 = vld [vmem:[%s186 + $0x78] sm:$0xf]
      %v235 = vld [vmem:[%s186 + $0x7c] sm:$0xf]
      %v236 = vld [vmem:[%s186 + $0x80] sm:$0xf]
      %v237 = vld [vmem:[%s186 + $0x84] sm:$0xf]
      %v238 = vld [vmem:[%s186 + $0x88] sm:$0xf]
      %v239 = vld [vmem:[%s186 + $0x8c] sm:$0xf]
      %v240 = vld [vmem:[%s186 + $0x90] sm:$0xf]
      %v241 = vld [vmem:[%s186 + $0x94] sm:$0xf]
      %v242 = vld [vmem:[%s186 + $0x98] sm:$0xf]
      %v243 = vld [vmem:[%s186 + $0x9c] sm:$0xf]
      %v244 = vld [vmem:[%s186 + $0xa0] sm:$0xf]
      %v245 = vld [vmem:[%s186 + $0xa4] sm:$0xf]
      %v246 = vld [vmem:[%s186 + $0xa8] sm:$0xf]
      %v247 = vld [vmem:[%s186 + $0xac] sm:$0xf]
      %v248 = vld [vmem:[%s186 + $0xb0] sm:$0xf]
      %v249 = vld [vmem:[%s186 + $0xb4] sm:$0xf]
      %v250 = vld [vmem:[%s186 + $0xb8] sm:$0xf]
      %v251 = vld [vmem:[%s186 + $0xbc] sm:$0xf]
      %v252 = vld [vmem:[%s186 + $0xc0] sm:$0xf]
      %v253 = vld [vmem:[%s186 + $0xc4] sm:$0xf]
      %v254 = vld [vmem:[%s186 + $0xc8] sm:$0xf]
      %v255 = vld [vmem:[%s186 + $0xcc] sm:$0xf]
      %v256 = vld [vmem:[%s186 + $0xd0] sm:$0xf]
      %v257 = vld [vmem:[%s186 + $0xd4] sm:$0xf]
      %v258 = vld [vmem:[%s186 + $0xd8] sm:$0xf]
      %v259 = vld [vmem:[%s186 + $0xdc] sm:$0xf]
      %v260 = vld [vmem:[%s186 + $0xe0] sm:$0xf]
      %v261 = vld [vmem:[%s186 + $0xe4] sm:$0xf]
      %v262 = vld [vmem:[%s186 + $0xe8] sm:$0xf]
      %v263 = vld [vmem:[%s186 + $0xec] sm:$0xf]
      %v264 = vld [vmem:[%s186 + $0xf0] sm:$0xf]
      %v265 = vld [vmem:[%s186 + $0xf4] sm:$0xf]
      %v266 = vld [vmem:[%s186 + $0xf8] sm:$0xf]
      %v267 = vld [vmem:[%s186 + $0xfc] sm:$0xf]
      %v268 = vld [vmem:[%s186 + $0x100] sm:$0xf]
      %v269 = vld [vmem:[%s186 + $0x104] sm:$0xf]
      %v270 = vld [vmem:[%s186 + $0x108] sm:$0xf]
      %v271 = vld [vmem:[%s186 + $0x10c] sm:$0xf]
      %v272 = vld [vmem:[%s186 + $0x110] sm:$0xf]
      %v273 = vld [vmem:[%s186 + $0x114] sm:$0xf]
      %v274 = vld [vmem:[%s186 + $0x118] sm:$0xf]
      %v275 = vld [vmem:[%s186 + $0x11c] sm:$0xf]
      %v276 = vld [vmem:[%s186 + $0x120] sm:$0xf]
      %v277 = vld [vmem:[%s186 + $0x124] sm:$0xf]
      %v278 = vld [vmem:[%s186 + $0x128] sm:$0xf]
      %v279 = vld [vmem:[%s186 + $0x12c] sm:$0xf]
      %v280 = vld [vmem:[%s186 + $0x130] sm:$0xf]
      %v281 = vld [vmem:[%s186 + $0x134] sm:$0xf]
      %v282 = vld [vmem:[%s186 + $0x138] sm:$0xf]
      %v283 = vld [vmem:[%s186 + $0x13c] sm:$0xf]
      %v284 = vld [vmem:[%s186 + $0x140] sm:$0xf]
      %v285 = vld [vmem:[%s186 + $0x144] sm:$0xf]
      %v286 = vld [vmem:[%s186 + $0x148] sm:$0xf]
      %v287 = vld [vmem:[%s186 + $0x14c] sm:$0xf]
      %v288 = vld [vmem:[%s186 + $0x150] sm:$0xf]
      %v289 = vld [vmem:[%s186 + $0x154] sm:$0xf]
      %v290 = vld [vmem:[%s186 + $0x158] sm:$0xf]
      %v291 = vld [vmem:[%s186 + $0x15c] sm:$0xf]
      %v292 = vld [vmem:[%s186 + $0x160] sm:$0xf]
      %v293 = vld [vmem:[%s186 + $0x164] sm:$0xf]
      %v294 = vld [vmem:[%s186 + $0x168] sm:$0xf]
      %v295 = vld [vmem:[%s186 + $0x16c] sm:$0xf]
      %v296 = vld [vmem:[%s186 + $0x170] sm:$0xf]
      %v297 = vld [vmem:[%s186 + $0x174] sm:$0xf]
      %v298 = vld [vmem:[%s186 + $0x178] sm:$0xf]
      %v299 = vld [vmem:[%s186 + $0x17c] sm:$0xf]
      %v300 = vld [vmem:[%s186 + $0x180] sm:$0xf]
      %v301 = vld [vmem:[%s186 + $0x184] sm:$0xf]
      %v302 = vld [vmem:[%s186 + $0x188] sm:$0xf]
      %v303 = vld [vmem:[%s186 + $0x18c] sm:$0xf]
      %v304 = vld [vmem:[%s186 + $0x190] sm:$0xf]
      %v305 = vld [vmem:[%s186 + $0x194] sm:$0xf]
      %v306 = vld [vmem:[%s186 + $0x198] sm:$0xf]
      %v307 = vld [vmem:[%s186 + $0x19c] sm:$0xf]
      %v308 = vld [vmem:[%s186 + $0x1a0] sm:$0xf]
      %v309 = vld [vmem:[%s186 + $0x1a4] sm:$0xf]
      %v310 = vld [vmem:[%s186 + $0x1a8] sm:$0xf]
      %v311 = vld [vmem:[%s186 + $0x1ac] sm:$0xf]
      %v312 = vld [vmem:[%s186 + $0x1b0] sm:$0xf]
      %v313 = vld [vmem:[%s186 + $0x1b4] sm:$0xf]
      %v314 = vld [vmem:[%s186 + $0x1b8] sm:$0xf]
      %v315 = vld [vmem:[%s186 + $0x1bc] sm:$0xf]
      %v316 = vld [vmem:[%s186 + $0x1c0] sm:$0xf]
      %v317 = vld [vmem:[%s186 + $0x1c4] sm:$0xf]
      %v318 = vld [vmem:[%s186 + $0x1c8] sm:$0xf]
      %v319 = vld [vmem:[%s186 + $0x1cc] sm:$0xf]
      %v320 = vld [vmem:[%s186 + $0x1d0] sm:$0xf]
      %v321 = vld [vmem:[%s186 + $0x1d4] sm:$0xf]
      %v322 = vld [vmem:[%s186 + $0x1d8] sm:$0xf]
      %v323 = vld [vmem:[%s186 + $0x1dc] sm:$0xf]
      %v324 = vld [vmem:[%s186 + $0x1e0] sm:$0xf]
      %v325 = vld [vmem:[%s186 + $0x1e4] sm:$0xf]
      %v326 = vld [vmem:[%s186 + $0x1e8] sm:$0xf]
      %v327 = vld [vmem:[%s186 + $0x1ec] sm:$0xf]
      %v328 = vld [vmem:[%s186 + $0x1f0] sm:$0xf]
      %v329 = vld [vmem:[%s186 + $0x1f4] sm:$0xf]
      %v330 = vld [vmem:[%s186 + $0x1f8] sm:$0xf]
      %v331 = vld [vmem:[%s186 + $0x1fc] sm:$0xf]
      %v332 = vld [vmem:[%s192] sm:$0xf]
      %v333 = vld [vmem:[%s192 + $0x4] sm:$0xf]
      %v462 = vunpack.c.l.b16 %v204
      %v463 = vunpack.c.l.b16 %v205
      %v464 = vunpack.c.l.b16 %v206
      %v465 = vunpack.c.l.b16 %v207
      %v466 = vunpack.c.l.b16 %v208
      %v467 = vunpack.c.l.b16 %v209
      %v468 = vunpack.c.l.b16 %v210
      %v469 = vunpack.c.l.b16 %v211
      %v470 = vunpack.c.l.b16 %v212
      %v471 = vunpack.c.l.b16 %v213
      %v472 = vunpack.c.l.b16 %v214
      %v473 = vunpack.c.l.b16 %v215
      %v474 = vunpack.c.l.b16 %v216
      %v475 = vunpack.c.l.b16 %v217
      %v476 = vunpack.c.l.b16 %v218
      %v477 = vunpack.c.l.b16 %v219
      %v478 = vunpack.c.l.b16 %v220
      %v479 = vunpack.c.l.b16 %v221
      %v480 = vunpack.c.l.b16 %v222
      %v481 = vunpack.c.l.b16 %v223
      %v482 = vunpack.c.l.b16 %v224
      %v483 = vunpack.c.l.b16 %v225
      %v484 = vunpack.c.l.b16 %v226
      %v485 = vunpack.c.l.b16 %v227
      %v486 = vunpack.c.l.b16 %v228
      %v487 = vunpack.c.l.b16 %v229
      %v488 = vunpack.c.l.b16 %v230
      %v489 = vunpack.c.l.b16 %v231
      %v490 = vunpack.c.l.b16 %v232
      %v491 = vunpack.c.l.b16 %v233
      %v492 = vunpack.c.l.b16 %v234
      %v493 = vunpack.c.l.b16 %v235
      %v494 = vunpack.c.l.b16 %v236
      %v495 = vunpack.c.l.b16 %v237
      %v496 = vunpack.c.l.b16 %v238
      %v497 = vunpack.c.l.b16 %v239
      %v498 = vunpack.c.l.b16 %v240
      %v499 = vunpack.c.l.b16 %v241
      %v500 = vunpack.c.l.b16 %v242
      %v501 = vunpack.c.l.b16 %v243
      %v502 = vunpack.c.l.b16 %v244
      %v503 = vunpack.c.l.b16 %v245
      %v504 = vunpack.c.l.b16 %v246
      %v505 = vunpack.c.l.b16 %v247
      %v506 = vunpack.c.l.b16 %v248
      %v507 = vunpack.c.l.b16 %v249
      %v508 = vunpack.c.l.b16 %v250
      %v509 = vunpack.c.l.b16 %v251
      %v510 = vunpack.c.l.b16 %v252
      %v511 = vunpack.c.l.b16 %v253
      %v512 = vunpack.c.l.b16 %v254
      %v513 = vunpack.c.l.b16 %v255
      %v514 = vunpack.c.l.b16 %v256
      %v515 = vunpack.c.l.b16 %v257
      %v516 = vunpack.c.l.b16 %v258
      %v517 = vunpack.c.l.b16 %v259
      %v518 = vunpack.c.l.b16 %v260
      %v519 = vunpack.c.l.b16 %v261
      %v520 = vunpack.c.l.b16 %v262
      %v521 = vunpack.c.l.b16 %v263
      %v522 = vunpack.c.l.b16 %v264
      %v523 = vunpack.c.l.b16 %v265
      %v524 = vunpack.c.l.b16 %v266
      %v525 = vunpack.c.l.b16 %v267
      %v526 = vunpack.c.l.b16 %v268
      %v527 = vunpack.c.l.b16 %v269
      %v528 = vunpack.c.l.b16 %v270
      %v529 = vunpack.c.l.b16 %v271
      %v530 = vunpack.c.l.b16 %v272
      %v531 = vunpack.c.l.b16 %v273
      %v532 = vunpack.c.l.b16 %v274
      %v533 = vunpack.c.l.b16 %v275
      %v534 = vunpack.c.l.b16 %v276
      %v535 = vunpack.c.l.b16 %v277
      %v536 = vunpack.c.l.b16 %v278
      %v537 = vunpack.c.l.b16 %v279
      %v538 = vunpack.c.l.b16 %v280
      %v539 = vunpack.c.l.b16 %v281
      %v540 = vunpack.c.l.b16 %v282
      %v541 = vunpack.c.l.b16 %v283
      %v542 = vunpack.c.l.b16 %v284
      %v543 = vunpack.c.l.b16 %v285
      %v544 = vunpack.c.l.b16 %v286
      %v545 = vunpack.c.l.b16 %v287
      %v546 = vunpack.c.l.b16 %v288
      %v547 = vunpack.c.l.b16 %v289
      %v548 = vunpack.c.l.b16 %v290
      %v549 = vunpack.c.l.b16 %v291
      %v550 = vunpack.c.l.b16 %v292
      %v551 = vunpack.c.l.b16 %v293
      %v552 = vunpack.c.l.b16 %v294
      %v553 = vunpack.c.l.b16 %v295
      %v554 = vunpack.c.l.b16 %v296
      %v555 = vunpack.c.l.b16 %v297
      %v556 = vunpack.c.l.b16 %v298
      %v557 = vunpack.c.l.b16 %v299
      %v558 = vunpack.c.l.b16 %v300
      %v559 = vunpack.c.l.b16 %v301
      %v560 = vunpack.c.l.b16 %v302
      %v561 = vunpack.c.l.b16 %v303
      %v562 = vunpack.c.l.b16 %v304
      %v563 = vunpack.c.l.b16 %v305
      %v564 = vunpack.c.l.b16 %v306
      %v565 = vunpack.c.l.b16 %v307
      %v566 = vunpack.c.l.b16 %v308
      %v567 = vunpack.c.l.b16 %v309
      %v568 = vunpack.c.l.b16 %v310
      %v569 = vunpack.c.l.b16 %v311
      %v570 = vunpack.c.l.b16 %v312
      %v571 = vunpack.c.l.b16 %v313
      %v572 = vunpack.c.l.b16 %v314
      %v573 = vunpack.c.l.b16 %v315
      %v574 = vunpack.c.l.b16 %v316
      %v575 = vunpack.c.l.b16 %v317
      %v576 = vunpack.c.l.b16 %v318
      %v577 = vunpack.c.l.b16 %v319
      %v578 = vunpack.c.l.b16 %v320
      %v579 = vunpack.c.l.b16 %v321
      %v580 = vunpack.c.l.b16 %v322
      %v581 = vunpack.c.l.b16 %v323
      %v582 = vunpack.c.l.b16 %v324
      %v583 = vunpack.c.l.b16 %v325
      %v584 = vunpack.c.l.b16 %v326
      %v585 = vunpack.c.l.b16 %v327
      %v586 = vunpack.c.l.b16 %v328
      %v587 = vunpack.c.l.b16 %v329
      %v588 = vunpack.c.l.b16 %v330
      %v589 = vunpack.c.l.b16 %v331
      %v590 = vpack.c.b16 %v463, %v462
      %v591 = vpack.c.b16 %v465, %v464
      %v592 = vpack.c.b16 %v467, %v466
      %v593 = vpack.c.b16 %v469, %v468
      %v594 = vpack.c.b16 %v471, %v470
      %v595 = vpack.c.b16 %v473, %v472
      %v596 = vpack.c.b16 %v475, %v474
      %v597 = vpack.c.b16 %v477, %v476
      %v598 = vpack.c.b16 %v479, %v478
      %v599 = vpack.c.b16 %v481, %v480
      %v600 = vpack.c.b16 %v483, %v482
      %v601 = vpack.c.b16 %v485, %v484
      %v602 = vpack.c.b16 %v487, %v486
      %v603 = vpack.c.b16 %v489, %v488
      %v604 = vpack.c.b16 %v491, %v490
      %v605 = vpack.c.b16 %v493, %v492
      %v606 = vpack.c.b16 %v495, %v494
      %v607 = vpack.c.b16 %v497, %v496
      %v608 = vpack.c.b16 %v499, %v498
      %v609 = vpack.c.b16 %v501, %v500
      %v610 = vpack.c.b16 %v503, %v502
      %v611 = vpack.c.b16 %v505, %v504
      %v612 = vpack.c.b16 %v507, %v506
      %v613 = vpack.c.b16 %v509, %v508
      %v614 = vpack.c.b16 %v511, %v510
      %v615 = vpack.c.b16 %v513, %v512
      %v616 = vpack.c.b16 %v515, %v514
      %v617 = vpack.c.b16 %v517, %v516
      %v618 = vpack.c.b16 %v519, %v518
      %v619 = vpack.c.b16 %v521, %v520
      %v620 = vpack.c.b16 %v523, %v522
      %v621 = vpack.c.b16 %v525, %v524
      %v622 = vpack.c.b16 %v527, %v526
      %v623 = vpack.c.b16 %v529, %v528
      %v624 = vpack.c.b16 %v531, %v530
      %v625 = vpack.c.b16 %v533, %v532
      %v626 = vpack.c.b16 %v535, %v534
      %v627 = vpack.c.b16 %v537, %v536
      %v628 = vpack.c.b16 %v539, %v538
      %v629 = vpack.c.b16 %v541, %v540
      %v630 = vpack.c.b16 %v543, %v542
      %v631 = vpack.c.b16 %v545, %v544
      %v632 = vpack.c.b16 %v547, %v546
      %v633 = vpack.c.b16 %v549, %v548
      %v634 = vpack.c.b16 %v551, %v550
      %v635 = vpack.c.b16 %v553, %v552
      %v636 = vpack.c.b16 %v555, %v554
      %v637 = vpack.c.b16 %v557, %v556
      %v638 = vpack.c.b16 %v559, %v558
      %v639 = vpack.c.b16 %v561, %v560
      %v640 = vpack.c.b16 %v563, %v562
      %v641 = vpack.c.b16 %v565, %v564
      %v642 = vpack.c.b16 %v567, %v566
      %v643 = vpack.c.b16 %v569, %v568
      %v644 = vpack.c.b16 %v571, %v570
      %v645 = vpack.c.b16 %v573, %v572
      %v646 = vpack.c.b16 %v575, %v574
      %v647 = vpack.c.b16 %v577, %v576
      %v648 = vpack.c.b16 %v579, %v578
      %v649 = vpack.c.b16 %v581, %v580
      %v650 = vpack.c.b16 %v583, %v582
      %v651 = vpack.c.b16 %v585, %v584
      %v652 = vpack.c.b16 %v587, %v586
      %v653 = vpack.c.b16 %v589, %v588
      %v656 = vunpack.c.l.b16 %v332
      %v657 = vunpack.c.l.b16 %v333
      %v658 = vpack.c.b16 %v657, %v656
      %vm660 = vcmask 130048
      %v662 = vsel %vm660, %v590, 0
      %v665 = vsel %vm660, %v591, 0
      %v668 = vsel %vm660, %v592, 0
      %v671 = vsel %vm660, %v593, 0
      %v674 = vsel %vm660, %v594, 0
      %v677 = vsel %vm660, %v595, 0
      %v680 = vsel %vm660, %v596, 0
      %v683 = vsel %vm660, %v597, 0
      %v686 = vsel %vm660, %v598, 0
      %v689 = vsel %vm660, %v599, 0
      %v692 = vsel %vm660, %v600, 0
      %v695 = vsel %vm660, %v601, 0
      %v698 = vsel %vm660, %v602, 0
      %v701 = vsel %vm660, %v603, 0
      %v704 = vsel %vm660, %v604, 0
      %v707 = vsel %vm660, %v605, 0
      %v710 = vsel %vm660, %v606, 0
      %v713 = vsel %vm660, %v607, 0
      %v716 = vsel %vm660, %v608, 0
      %v719 = vsel %vm660, %v609, 0
      %v722 = vsel %vm660, %v610, 0
      %v725 = vsel %vm660, %v611, 0
      %v728 = vsel %vm660, %v612, 0
      %v731 = vsel %vm660, %v613, 0
      %v734 = vsel %vm660, %v614, 0
      %v737 = vsel %vm660, %v615, 0
      %v740 = vsel %vm660, %v616, 0
      %v743 = vsel %vm660, %v617, 0
      %v746 = vsel %vm660, %v618, 0
      %v749 = vsel %vm660, %v619, 0
      %v752 = vsel %vm660, %v620, 0
      %v755 = vsel %vm660, %v621, 0
      %v758 = vsel %vm660, %v622, 0
      %v761 = vsel %vm660, %v623, 0
      %v764 = vsel %vm660, %v624, 0
      %v767 = vsel %vm660, %v625, 0
      %v770 = vsel %vm660, %v626, 0
      %v773 = vsel %vm660, %v627, 0
      %v776 = vsel %vm660, %v628, 0
      %v779 = vsel %vm660, %v629, 0
      %v782 = vsel %vm660, %v630, 0
      %v785 = vsel %vm660, %v631, 0
      %v788 = vsel %vm660, %v632, 0
      %v791 = vsel %vm660, %v633, 0
      %v794 = vsel %vm660, %v634, 0
      %v797 = vsel %vm660, %v635, 0
      %v800 = vsel %vm660, %v636, 0
      %v803 = vsel %vm660, %v637, 0
      %v806 = vsel %vm660, %v638, 0
      %v809 = vsel %vm660, %v639, 0
      %v812 = vsel %vm660, %v640, 0
      %v815 = vsel %vm660, %v641, 0
      %v818 = vsel %vm660, %v642, 0
      %v821 = vsel %vm660, %v643, 0
      %v824 = vsel %vm660, %v644, 0
      %v827 = vsel %vm660, %v645, 0
      %v830 = vsel %vm660, %v646, 0
      %v833 = vsel %vm660, %v647, 0
      %v836 = vsel %vm660, %v648, 0
      %v839 = vsel %vm660, %v649, 0
      %v842 = vsel %vm660, %v650, 0
      %v845 = vsel %vm660, %v651, 0
      %v848 = vsel %vm660, %v652, 0
      %v851 = vsel %vm660, %v653, 0
      %853 = vmatprep.subr.bf16.mxu0 0
      %854 = vmatpush1.bf16.msra.mxu0 %v658
      %855 = vmatprep.subr.bf16.mxu0 0
      %856 = vmatpush1.bf16.msra.mxu0 0
      %857 = vmatprep.subr.bf16.mxu0 0
      %858 = vmatpush1.bf16.msra.mxu0 0
      %859 = vmatprep.subr.bf16.mxu0 0
      %860 = vmatpush1.bf16.msra.mxu0 0
      %861 = vmatprep.subr.bf16.mxu0 0
      %862 = vmatpush1.bf16.msra.mxu0 0
      %863 = vmatprep.subr.bf16.mxu0 0
      %864 = vmatpush1.bf16.msra.mxu0 0
      %865 = vmatprep.subr.bf16.mxu0 0
      %866 = vmatpush1.bf16.msra.mxu0 0
      %867 = vmatprep.subr.bf16.mxu0 0
      %868 = vmatpush1.bf16.msra.mxu0 0
      %869 = vmatprep.subr.bf16.mxu0 0
      %870 = vmatpush1.bf16.msra.mxu0 0
      %871 = vmatprep.subr.bf16.mxu0 0
      %872 = vmatpush1.bf16.msra.mxu0 0
      %873 = vmatprep.subr.bf16.mxu0 0
      %874 = vmatpush1.bf16.msra.mxu0 0
      %875 = vmatprep.subr.bf16.mxu0 0
      %876 = vmatpush1.bf16.msra.mxu0 0
      %877 = vmatprep.subr.bf16.mxu0 0
      %878 = vmatpush1.bf16.msra.mxu0 0
      %879 = vmatprep.subr.bf16.mxu0 0
      %880 = vmatpush1.bf16.msra.mxu0 0
      %881 = vmatprep.subr.bf16.mxu0 0
      %882 = vmatpush1.bf16.msra.mxu0 0
      %883 = vmatprep.subr.bf16.mxu0 0
      %884 = vmatpush1.bf16.msra.mxu0 0
      %885 = vmatprep.mubr.bf16.mxu0 0
      %886 = vmatmul.mubr.bf16.gmra.mrb[0].mxu0 %v662
      %v887 = vpop.f32.mrb[0].mxu0
      %v888 = vadd.f32 0.0, %v887
      %v889 = vpop.f32.mrb[0].mxu0
      %v890 = vpop.f32.mrb[0].mxu0
      %v891 = vadd.f32 0.0, %v890
      %v892 = vpop.f32.mrb[0].mxu0
      %893 = vmatprep.mubr.bf16.mxu0 0
      %894 = vmatmul.mubr.bf16.gmra.mrb[0].mxu0 %v665
      %v895 = vpop.f32.mrb[0].mxu0
      %v896 = vadd.f32 0.0, %v895
      %v897 = vpop.f32.mrb[0].mxu0
      %v898 = vpop.f32.mrb[0].mxu0
      %v899 = vadd.f32 0.0, %v898
      %v900 = vpop.f32.mrb[0].mxu0
      %901 = vmatprep.mubr.bf16.mxu0 0
      %902 = vmatmul.mubr.bf16.gmra.mrb[0].mxu0 %v668
      %v903 = vpop.f32.mrb[0].mxu0
      %v904 = vadd.f32 0.0, %v903
      %v905 = vpop.f32.mrb[0].mxu0
      %v906 = vpop.f32.mrb[0].mxu0
      %v907 = vadd.f32 0.0, %v906
      %v908 = vpop.f32.mrb[0].mxu0
      %909 = vmatprep.mubr.bf16.mxu0 0
      %910 = vmatmul.mubr.bf16.gmra.mrb[0].mxu0 %v671
      %v911 = vpop.f32.mrb[0].mxu0
      %v912 = vadd.f32 0.0, %v911
      %v913 = vpop.f32.mrb[0].mxu0
      %v914 = vpop.f32.mrb[0].mxu0
      %v915 = vadd.f32 0.0, %v914
      %v916 = vpop.f32.mrb[0].mxu0
      %917 = vmatprep.mubr.bf16.mxu0 0
      %918 = vmatmul.mubr.bf16.gmra.mrb[0].mxu0 %v674
      %v919 = vpop.f32.mrb[0].mxu0
      %v920 = vadd.f32 0.0, %v919
      %v921 = vpop.f32.mrb[0].mxu0
      %v922 = vpop.f32.mrb[0].mxu0
      %v923 = vadd.f32 0.0, %v922
      %v924 = vpop.f32.mrb[0].mxu0
      %925 = vmatprep.mubr.bf16.mxu0 0
      %926 = vmatmul.mubr.bf16.gmra.mrb[0].mxu0 %v677
      %v927 = vpop.f32.mrb[0].mxu0
      %v928 = vadd.f32 0.0, %v927
      %v929 = vpop.f32.mrb[0].mxu0
      %v930 = vpop.f32.mrb[0].mxu0
      %v931 = vadd.f32 0.0, %v930
      %v932 = vpop.f32.mrb[0].mxu0
      %933 = vmatprep.mubr.bf16.mxu0 0
      %934 = vmatmul.mubr.bf16.gmra.mrb[0].mxu0 %v680
      %v935 = vpop.f32.mrb[0].mxu0
      %v936 = vadd.f32 0.0, %v935
      %v937 = vpop.f32.mrb[0].mxu0
      %v938 = vpop.f32.mrb[0].mxu0
      %v939 = vadd.f32 0.0, %v938
      %v940 = vpop.f32.mrb[0].mxu0
      %941 = vmatprep.mubr.bf16.mxu0 0
      %942 = vmatmul.mubr.bf16.gmra.mrb[0].mxu0 %v683
      %v943 = vpop.f32.mrb[0].mxu0
      %v944 = vadd.f32 0.0, %v943
      %v945 = vpop.f32.mrb[0].mxu0
      %v946 = vpop.f32.mrb[0].mxu0
      %v947 = vadd.f32 0.0, %v946
      %v948 = vpop.f32.mrb[0].mxu0
      %949 = vmatprep.mubr.bf16.mxu0 0
      %950 = vmatmul.mubr.bf16.gmra.mrb[0].mxu0 %v686
      %v951 = vpop.f32.mrb[0].mxu0
      %v952 = vadd.f32 0.0, %v951
      %v953 = vpop.f32.mrb[0].mxu0
      %v954 = vpop.f32.mrb[0].mxu0
      %v955 = vadd.f32 0.0, %v954
      %v956 = vpop.f32.mrb[0].mxu0
      %957 = vmatprep.mubr.bf16.mxu0 0
      %958 = vmatmul.mubr.bf16.gmra.mrb[0].mxu0 %v689
      %v959 = vpop.f32.mrb[0].mxu0
      %v960 = vadd.f32 0.0, %v959
      %v961 = vpop.f32.mrb[0].mxu0
      %v962 = vpop.f32.mrb[0].mxu0
      %v963 = vadd.f32 0.0, %v962
      %v964 = vpop.f32.mrb[0].mxu0
      %965 = vmatprep.mubr.bf16.mxu0 0
      %966 = vmatmul.mubr.bf16.gmra.mrb[0].mxu0 %v692
      %v967 = vpop.f32.mrb[0].mxu0
      %v968 = vadd.f32 0.0, %v967
      %v969 = vpop.f32.mrb[0].mxu0
      %v970 = vpop.f32.mrb[0].mxu0
      %v971 = vadd.f32 0.0, %v970
      %v972 = vpop.f32.mrb[0].mxu0
      %973 = vmatprep.mubr.bf16.mxu0 0
      %974 = vmatmul.mubr.bf16.gmra.mrb[0].mxu0 %v695
      %v975 = vpop.f32.mrb[0].mxu0
      %v976 = vadd.f32 0.0, %v975
      %v977 = vpop.f32.mrb[0].mxu0
      %v978 = vpop.f32.mrb[0].mxu0
      %v979 = vadd.f32 0.0, %v978
      %v980 = vpop.f32.mrb[0].mxu0
      %981 = vmatprep.mubr.bf16.mxu0 0
      %982 = vmatmul.mubr.bf16.gmra.mrb[0].mxu0 %v698
      %v983 = vpop.f32.mrb[0].mxu0
      %v984 = vadd.f32 0.0, %v983
      %v985 = vpop.f32.mrb[0].mxu0
      %v986 = vpop.f32.mrb[0].mxu0
      %v987 = vadd.f32 0.0, %v986
      %v988 = vpop.f32.mrb[0].mxu0
      %989 = vmatprep.mubr.bf16.mxu0 0
      %990 = vmatmul.mubr.bf16.gmra.mrb[0].mxu0 %v701
      %v991 = vpop.f32.mrb[0].mxu0
      %v992 = vadd.f32 0.0, %v991
      %v993 = vpop.f32.mrb[0].mxu0
      %v994 = vpop.f32.mrb[0].mxu0
      %v995 = vadd.f32 0.0, %v994
      %v996 = vpop.f32.mrb[0].mxu0
      %997 = vmatprep.mubr.bf16.mxu0 0
      %998 = vmatmul.mubr.bf16.gmra.mrb[0].mxu0 %v704
      %v999 = vpop.f32.mrb[0].mxu0
      %v1000 = vadd.f32 0.0, %v999
      %v1001 = vpop.f32.mrb[0].mxu0
      %v1002 = vpop.f32.mrb[0].mxu0
      %v1003 = vadd.f32 0.0, %v1002
      %v1004 = vpop.f32.mrb[0].mxu0
      %1005 = vmatprep.mubr.bf16.mxu0 0
      %1006 = vmatmul.mubr.bf16.gmra.mrb[0].mxu0 %v707
      %v1007 = vpop.f32.mrb[0].mxu0
      %v1008 = vadd.f32 0.0, %v1007
      %v1009 = vpop.f32.mrb[0].mxu0
      %v1010 = vpop.f32.mrb[0].mxu0
      %v1011 = vadd.f32 0.0, %v1010
      %v1012 = vpop.f32.mrb[0].mxu0
      %1013 = vmatprep.mubr.bf16.mxu0 0
      %1014 = vmatmul.mubr.bf16.gmra.mrb[0].mxu0 %v710
      %v1015 = vpop.f32.mrb[0].mxu0
      %v1016 = vadd.f32 0.0, %v1015
      %v1017 = vpop.f32.mrb[0].mxu0
      %v1018 = vpop.f32.mrb[0].mxu0
      %v1019 = vadd.f32 0.0, %v1018
      %v1020 = vpop.f32.mrb[0].mxu0
      %1021 = vmatprep.mubr.bf16.mxu0 0
      %1022 = vmatmul.mubr.bf16.gmra.mrb[0].mxu0 %v713
      %v1023 = vpop.f32.mrb[0].mxu0
      %v1024 = vadd.f32 0.0, %v1023
      %v1025 = vpop.f32.mrb[0].mxu0
      %v1026 = vpop.f32.mrb[0].mxu0
      %v1027 = vadd.f32 0.0, %v1026
      %v1028 = vpop.f32.mrb[0].mxu0
      %1029 = vmatprep.mubr.bf16.mxu0 0
      %1030 = vmatmul.mubr.bf16.gmra.mrb[0].mxu0 %v716
      %v1031 = vpop.f32.mrb[0].mxu0
      %v1032 = vadd.f32 0.0, %v1031
      %v1033 = vpop.f32.mrb[0].mxu0
      %v1034 = vpop.f32.mrb[0].mxu0
      %v1035 = vadd.f32 0.0, %v1034
      %v1036 = vpop.f32.mrb[0].mxu0
      %1037 = vmatprep.mubr.bf16.mxu0 0
      %1038 = vmatmul.mubr.bf16.gmra.mrb[0].mxu0 %v719
      %v1039 = vpop.f32.mrb[0].mxu0
      %v1040 = vadd.f32 0.0, %v1039
      %v1041 = vpop.f32.mrb[0].mxu0
      %v1042 = vpop.f32.mrb[0].mxu0
      %v1043 = vadd.f32 0.0, %v1042
      %v1044 = vpop.f32.mrb[0].mxu0
      %1045 = vmatprep.mubr.bf16.mxu0 0
      %1046 = vmatmul.mubr.bf16.gmra.mrb[0].mxu0 %v722
      %v1047 = vpop.f32.mrb[0].mxu0
      %v1048 = vadd.f32 0.0, %v1047
      %v1049 = vpop.f32.mrb[0].mxu0
      %v1050 = vpop.f32.mrb[0].mxu0
      %v1051 = vadd.f32 0.0, %v1050
      %v1052 = vpop.f32.mrb[0].mxu0
      %1053 = vmatprep.mubr.bf16.mxu0 0
      %1054 = vmatmul.mubr.bf16.gmra.mrb[0].mxu0 %v725
      %v1055 = vpop.f32.mrb[0].mxu0
      %v1056 = vadd.f32 0.0, %v1055
      %v1057 = vpop.f32.mrb[0].mxu0
      %v1058 = vpop.f32.mrb[0].mxu0
      %v1059 = vadd.f32 0.0, %v1058
      %v1060 = vpop.f32.mrb[0].mxu0
      %1061 = vmatprep.mubr.bf16.mxu0 0
      %1062 = vmatmul.mubr.bf16.gmra.mrb[0].mxu0 %v728
      %v1063 = vpop.f32.mrb[0].mxu0
      %v1064 = vadd.f32 0.0, %v1063
      %v1065 = vpop.f32.mrb[0].mxu0
      %v1066 = vpop.f32.mrb[0].mxu0
      %v1067 = vadd.f32 0.0, %v1066
      %v1068 = vpop.f32.mrb[0].mxu0
      %1069 = vmatprep.mubr.bf16.mxu0 0
      %1070 = vmatmul.mubr.bf16.gmra.mrb[0].mxu0 %v731
      %v1071 = vpop.f32.mrb[0].mxu0
      %v1072 = vadd.f32 0.0, %v1071
      %v1073 = vpop.f32.mrb[0].mxu0
      %v1074 = vpop.f32.mrb[0].mxu0
      %v1075 = vadd.f32 0.0, %v1074
      %v1076 = vpop.f32.mrb[0].mxu0
      %1077 = vmatprep.mubr.bf16.mxu0 0
      %1078 = vmatmul.mubr.bf16.gmra.mrb[0].mxu0 %v734
      %v1079 = vpop.f32.mrb[0].mxu0
      %v1080 = vadd.f32 0.0, %v1079
      %v1081 = vpop.f32.mrb[0].mxu0
      %v1082 = vpop.f32.mrb[0].mxu0
      %v1083 = vadd.f32 0.0, %v1082
      %v1084 = vpop.f32.mrb[0].mxu0
      %1085 = vmatprep.mubr.bf16.mxu0 0
      %1086 = vmatmul.mubr.bf16.gmra.mrb[0].mxu0 %v737
      %v1087 = vpop.f32.mrb[0].mxu0
      %v1088 = vadd.f32 0.0, %v1087
      %v1089 = vpop.f32.mrb[0].mxu0
      %v1090 = vpop.f32.mrb[0].mxu0
      %v1091 = vadd.f32 0.0, %v1090
      %v1092 = vpop.f32.mrb[0].mxu0
      %1093 = vmatprep.mubr.bf16.mxu0 0
      %1094 = vmatmul.mubr.bf16.gmra.mrb[0].mxu0 %v740
      %v1095 = vpop.f32.mrb[0].mxu0
      %v1096 = vadd.f32 0.0, %v1095
      %v1097 = vpop.f32.mrb[0].mxu0
      %v1098 = vpop.f32.mrb[0].mxu0
      %v1099 = vadd.f32 0.0, %v1098
      %v1100 = vpop.f32.mrb[0].mxu0
      %1101 = vmatprep.mubr.bf16.mxu0 0
      %1102 = vmatmul.mubr.bf16.gmra.mrb[0].mxu0 %v743
      %v1103 = vpop.f32.mrb[0].mxu0
      %v1104 = vadd.f32 0.0, %v1103
      %v1105 = vpop.f32.mrb[0].mxu0
      %v1106 = vpop.f32.mrb[0].mxu0
      %v1107 = vadd.f32 0.0, %v1106
      %v1108 = vpop.f32.mrb[0].mxu0
      %1109 = vmatprep.mubr.bf16.mxu0 0
      %1110 = vmatmul.mubr.bf16.gmra.mrb[0].mxu0 %v746
      %v1111 = vpop.f32.mrb[0].mxu0
      %v1112 = vadd.f32 0.0, %v1111
      %v1113 = vpop.f32.mrb[0].mxu0
      %v1114 = vpop.f32.mrb[0].mxu0
      %v1115 = vadd.f32 0.0, %v1114
      %v1116 = vpop.f32.mrb[0].mxu0
      %1117 = vmatprep.mubr.bf16.mxu0 0
      %1118 = vmatmul.mubr.bf16.gmra.mrb[0].mxu0 %v749
      %v1119 = vpop.f32.mrb[0].mxu0
      %v1120 = vadd.f32 0.0, %v1119
      %v1121 = vpop.f32.mrb[0].mxu0
      %v1122 = vpop.f32.mrb[0].mxu0
      %v1123 = vadd.f32 0.0, %v1122
      %v1124 = vpop.f32.mrb[0].mxu0
      %1125 = vmatprep.mubr.bf16.mxu0 0
      %1126 = vmatmul.mubr.bf16.gmra.mrb[0].mxu0 %v752
      %v1127 = vpop.f32.mrb[0].mxu0
      %v1128 = vadd.f32 0.0, %v1127
      %v1129 = vpop.f32.mrb[0].mxu0
      %v1130 = vpop.f32.mrb[0].mxu0
      %v1131 = vadd.f32 0.0, %v1130
      %v1132 = vpop.f32.mrb[0].mxu0
      %1133 = vmatprep.mubr.bf16.mxu0 0
      %1134 = vmatmul.mubr.bf16.gmra.mrb[0].mxu0 %v755
      %v1135 = vpop.f32.mrb[0].mxu0
      %v1136 = vadd.f32 0.0, %v1135
      %v1137 = vpop.f32.mrb[0].mxu0
      %v1138 = vpop.f32.mrb[0].mxu0
      %v1139 = vadd.f32 0.0, %v1138
      %v1140 = vpop.f32.mrb[0].mxu0
      %1141 = vmatprep.mubr.bf16.mxu0 0
      %1142 = vmatmul.mubr.bf16.gmra.mrb[0].mxu0 %v758
      %v1143 = vpop.f32.mrb[0].mxu0
      %v1144 = vadd.f32 0.0, %v1143
      %v1145 = vpop.f32.mrb[0].mxu0
      %v1146 = vpop.f32.mrb[0].mxu0
      %v1147 = vadd.f32 0.0, %v1146
      %v1148 = vpop.f32.mrb[0].mxu0
      %1149 = vmatprep.mubr.bf16.mxu0 0
      %1150 = vmatmul.mubr.bf16.gmra.mrb[0].mxu0 %v761
      %v1151 = vpop.f32.mrb[0].mxu0
      %v1152 = vadd.f32 0.0, %v1151
      %v1153 = vpop.f32.mrb[0].mxu0
      %v1154 = vpop.f32.mrb[0].mxu0
      %v1155 = vadd.f32 0.0, %v1154
      %v1156 = vpop.f32.mrb[0].mxu0
      %1157 = vmatprep.mubr.bf16.mxu0 0
      %1158 = vmatmul.mubr.bf16.gmra.mrb[0].mxu0 %v764
      %v1159 = vpop.f32.mrb[0].mxu0
      %v1160 = vadd.f32 0.0, %v1159
      %v1161 = vpop.f32.mrb[0].mxu0
      %v1162 = vpop.f32.mrb[0].mxu0
      %v1163 = vadd.f32 0.0, %v1162
      %v1164 = vpop.f32.mrb[0].mxu0
      %1165 = vmatprep.mubr.bf16.mxu0 0
      %1166 = vmatmul.mubr.bf16.gmra.mrb[0].mxu0 %v767
      %v1167 = vpop.f32.mrb[0].mxu0
      %v1168 = vadd.f32 0.0, %v1167
      %v1169 = vpop.f32.mrb[0].mxu0
      %v1170 = vpop.f32.mrb[0].mxu0
      %v1171 = vadd.f32 0.0, %v1170
      %v1172 = vpop.f32.mrb[0].mxu0
      %1173 = vmatprep.mubr.bf16.mxu0 0
      %1174 = vmatmul.mubr.bf16.gmra.mrb[0].mxu0 %v770
      %v1175 = vpop.f32.mrb[0].mxu0
      %v1176 = vadd.f32 0.0, %v1175
      %v1177 = vpop.f32.mrb[0].mxu0
      %v1178 = vpop.f32.mrb[0].mxu0
      %v1179 = vadd.f32 0.0, %v1178
      %v1180 = vpop.f32.mrb[0].mxu0
      %1181 = vmatprep.mubr.bf16.mxu0 0
      %1182 = vmatmul.mubr.bf16.gmra.mrb[0].mxu0 %v773
      %v1183 = vpop.f32.mrb[0].mxu0
      %v1184 = vadd.f32 0.0, %v1183
      %v1185 = vpop.f32.mrb[0].mxu0
      %v1186 = vpop.f32.mrb[0].mxu0
      %v1187 = vadd.f32 0.0, %v1186
      %v1188 = vpop.f32.mrb[0].mxu0
      %1189 = vmatprep.mubr.bf16.mxu0 0
      %1190 = vmatmul.mubr.bf16.gmra.mrb[0].mxu0 %v776
      %v1191 = vpop.f32.mrb[0].mxu0
      %v1192 = vadd.f32 0.0, %v1191
      %v1193 = vpop.f32.mrb[0].mxu0
      %v1194 = vpop.f32.mrb[0].mxu0
      %v1195 = vadd.f32 0.0, %v1194
      %v1196 = vpop.f32.mrb[0].mxu0
      %1197 = vmatprep.mubr.bf16.mxu0 0
      %1198 = vmatmul.mubr.bf16.gmra.mrb[0].mxu0 %v779
      %v1199 = vpop.f32.mrb[0].mxu0
      %v1200 = vadd.f32 0.0, %v1199
      %v1201 = vpop.f32.mrb[0].mxu0
      %v1202 = vpop.f32.mrb[0].mxu0
      %v1203 = vadd.f32 0.0, %v1202
      %v1204 = vpop.f32.mrb[0].mxu0
      %1205 = vmatprep.mubr.bf16.mxu0 0
      %1206 = vmatmul.mubr.bf16.gmra.mrb[0].mxu0 %v782
      %v1207 = vpop.f32.mrb[0].mxu0
      %v1208 = vadd.f32 0.0, %v1207
      %v1209 = vpop.f32.mrb[0].mxu0
      %v1210 = vpop.f32.mrb[0].mxu0
      %v1211 = vadd.f32 0.0, %v1210
      %v1212 = vpop.f32.mrb[0].mxu0
      %1213 = vmatprep.mubr.bf16.mxu0 0
      %1214 = vmatmul.mubr.bf16.gmra.mrb[0].mxu0 %v785
      %v1215 = vpop.f32.mrb[0].mxu0
      %v1216 = vadd.f32 0.0, %v1215
      %v1217 = vpop.f32.mrb[0].mxu0
      %v1218 = vpop.f32.mrb[0].mxu0
      %v1219 = vadd.f32 0.0, %v1218
      %v1220 = vpop.f32.mrb[0].mxu0
      %1221 = vmatprep.mubr.bf16.mxu0 0
      %1222 = vmatmul.mubr.bf16.gmra.mrb[0].mxu0 %v788
      %v1223 = vpop.f32.mrb[0].mxu0
      %v1224 = vadd.f32 0.0, %v1223
      %v1225 = vpop.f32.mrb[0].mxu0
      %v1226 = vpop.f32.mrb[0].mxu0
      %v1227 = vadd.f32 0.0, %v1226
      %v1228 = vpop.f32.mrb[0].mxu0
      %1229 = vmatprep.mubr.bf16.mxu0 0
      %1230 = vmatmul.mubr.bf16.gmra.mrb[0].mxu0 %v791
      %v1231 = vpop.f32.mrb[0].mxu0
      %v1232 = vadd.f32 0.0, %v1231
      %v1233 = vpop.f32.mrb[0].mxu0
      %v1234 = vpop.f32.mrb[0].mxu0
      %v1235 = vadd.f32 0.0, %v1234
      %v1236 = vpop.f32.mrb[0].mxu0
      %1237 = vmatprep.mubr.bf16.mxu0 0
      %1238 = vmatmul.mubr.bf16.gmra.mrb[0].mxu0 %v794
      %v1239 = vpop.f32.mrb[0].mxu0
      %v1240 = vadd.f32 0.0, %v1239
      %v1241 = vpop.f32.mrb[0].mxu0
      %v1242 = vpop.f32.mrb[0].mxu0
      %v1243 = vadd.f32 0.0, %v1242
      %v1244 = vpop.f32.mrb[0].mxu0
      %1245 = vmatprep.mubr.bf16.mxu0 0
      %1246 = vmatmul.mubr.bf16.gmra.mrb[0].mxu0 %v797
      %v1247 = vpop.f32.mrb[0].mxu0
      %v1248 = vadd.f32 0.0, %v1247
      %v1249 = vpop.f32.mrb[0].mxu0
      %v1250 = vpop.f32.mrb[0].mxu0
      %v1251 = vadd.f32 0.0, %v1250
      %v1252 = vpop.f32.mrb[0].mxu0
      %1253 = vmatprep.mubr.bf16.mxu0 0
      %1254 = vmatmul.mubr.bf16.gmra.mrb[0].mxu0 %v800
      %v1255 = vpop.f32.mrb[0].mxu0
      %v1256 = vadd.f32 0.0, %v1255
      %v1257 = vpop.f32.mrb[0].mxu0
      %v1258 = vpop.f32.mrb[0].mxu0
      %v1259 = vadd.f32 0.0, %v1258
      %v1260 = vpop.f32.mrb[0].mxu0
      %1261 = vmatprep.mubr.bf16.mxu0 0
      %1262 = vmatmul.mubr.bf16.gmra.mrb[0].mxu0 %v803
      %v1263 = vpop.f32.mrb[0].mxu0
      %v1264 = vadd.f32 0.0, %v1263
      %v1265 = vpop.f32.mrb[0].mxu0
      %v1266 = vpop.f32.mrb[0].mxu0
      %v1267 = vadd.f32 0.0, %v1266
      %v1268 = vpop.f32.mrb[0].mxu0
      %1269 = vmatprep.mubr.bf16.mxu0 0
      %1270 = vmatmul.mubr.bf16.gmra.mrb[0].mxu0 %v806
      %v1271 = vpop.f32.mrb[0].mxu0
      %v1272 = vadd.f32 0.0, %v1271
      %v1273 = vpop.f32.mrb[0].mxu0
      %v1274 = vpop.f32.mrb[0].mxu0
      %v1275 = vadd.f32 0.0, %v1274
      %v1276 = vpop.f32.mrb[0].mxu0
      %1277 = vmatprep.mubr.bf16.mxu0 0
      %1278 = vmatmul.mubr.bf16.gmra.mrb[0].mxu0 %v809
      %v1279 = vpop.f32.mrb[0].mxu0
      %v1280 = vadd.f32 0.0, %v1279
      %v1281 = vpop.f32.mrb[0].mxu0
      %v1282 = vpop.f32.mrb[0].mxu0
      %v1283 = vadd.f32 0.0, %v1282
      %v1284 = vpop.f32.mrb[0].mxu0
      %1285 = vmatprep.mubr.bf16.mxu0 0
      %1286 = vmatmul.mubr.bf16.gmra.mrb[0].mxu0 %v812
      %v1287 = vpop.f32.mrb[0].mxu0
      %v1288 = vadd.f32 0.0, %v1287
      %v1289 = vpop.f32.mrb[0].mxu0
      %v1290 = vpop.f32.mrb[0].mxu0
      %v1291 = vadd.f32 0.0, %v1290
      %v1292 = vpop.f32.mrb[0].mxu0
      %1293 = vmatprep.mubr.bf16.mxu0 0
      %1294 = vmatmul.mubr.bf16.gmra.mrb[0].mxu0 %v815
      %v1295 = vpop.f32.mrb[0].mxu0
      %v1296 = vadd.f32 0.0, %v1295
      %v1297 = vpop.f32.mrb[0].mxu0
      %v1298 = vpop.f32.mrb[0].mxu0
      %v1299 = vadd.f32 0.0, %v1298
      %v1300 = vpop.f32.mrb[0].mxu0
      %1301 = vmatprep.mubr.bf16.mxu0 0
      %1302 = vmatmul.mubr.bf16.gmra.mrb[0].mxu0 %v818
      %v1303 = vpop.f32.mrb[0].mxu0
      %v1304 = vadd.f32 0.0, %v1303
      %v1305 = vpop.f32.mrb[0].mxu0
      %v1306 = vpop.f32.mrb[0].mxu0
      %v1307 = vadd.f32 0.0, %v1306
      %v1308 = vpop.f32.mrb[0].mxu0
      %1309 = vmatprep.mubr.bf16.mxu0 0
      %1310 = vmatmul.mubr.bf16.gmra.mrb[0].mxu0 %v821
      %v1311 = vpop.f32.mrb[0].mxu0
      %v1312 = vadd.f32 0.0, %v1311
      %v1313 = vpop.f32.mrb[0].mxu0
      %v1314 = vpop.f32.mrb[0].mxu0
      %v1315 = vadd.f32 0.0, %v1314
      %v1316 = vpop.f32.mrb[0].mxu0
      %1317 = vmatprep.mubr.bf16.mxu0 0
      %1318 = vmatmul.mubr.bf16.gmra.mrb[0].mxu0 %v824
      %v1319 = vpop.f32.mrb[0].mxu0
      %v1320 = vadd.f32 0.0, %v1319
      %v1321 = vpop.f32.mrb[0].mxu0
      %v1322 = vpop.f32.mrb[0].mxu0
      %v1323 = vadd.f32 0.0, %v1322
      %v1324 = vpop.f32.mrb[0].mxu0
      %1325 = vmatprep.mubr.bf16.mxu0 0
      %1326 = vmatmul.mubr.bf16.gmra.mrb[0].mxu0 %v827
      %v1327 = vpop.f32.mrb[0].mxu0
      %v1328 = vadd.f32 0.0, %v1327
      %v1329 = vpop.f32.mrb[0].mxu0
      %v1330 = vpop.f32.mrb[0].mxu0
      %v1331 = vadd.f32 0.0, %v1330
      %v1332 = vpop.f32.mrb[0].mxu0
      %1333 = vmatprep.mubr.bf16.mxu0 0
      %1334 = vmatmul.mubr.bf16.gmra.mrb[0].mxu0 %v830
      %v1335 = vpop.f32.mrb[0].mxu0
      %v1336 = vadd.f32 0.0, %v1335
      %v1337 = vpop.f32.mrb[0].mxu0
      %v1338 = vpop.f32.mrb[0].mxu0
      %v1339 = vadd.f32 0.0, %v1338
      %v1340 = vpop.f32.mrb[0].mxu0
      %1341 = vmatprep.mubr.bf16.mxu0 0
      %1342 = vmatmul.mubr.bf16.gmra.mrb[0].mxu0 %v833
      %v1343 = vpop.f32.mrb[0].mxu0
      %v1344 = vadd.f32 0.0, %v1343
      %v1345 = vpop.f32.mrb[0].mxu0
      %v1346 = vpop.f32.mrb[0].mxu0
      %v1347 = vadd.f32 0.0, %v1346
      %v1348 = vpop.f32.mrb[0].mxu0
      %1349 = vmatprep.mubr.bf16.mxu0 0
      %1350 = vmatmul.mubr.bf16.gmra.mrb[0].mxu0 %v836
      %v1351 = vpop.f32.mrb[0].mxu0
      %v1352 = vadd.f32 0.0, %v1351
      %v1353 = vpop.f32.mrb[0].mxu0
      %v1354 = vpop.f32.mrb[0].mxu0
      %v1355 = vadd.f32 0.0, %v1354
      %v1356 = vpop.f32.mrb[0].mxu0
      %1357 = vmatprep.mubr.bf16.mxu0 0
      %1358 = vmatmul.mubr.bf16.gmra.mrb[0].mxu0 %v839
      %v1359 = vpop.f32.mrb[0].mxu0
      %v1360 = vadd.f32 0.0, %v1359
      %v1361 = vpop.f32.mrb[0].mxu0
      %v1362 = vpop.f32.mrb[0].mxu0
      %v1363 = vadd.f32 0.0, %v1362
      %v1364 = vpop.f32.mrb[0].mxu0
      %1365 = vmatprep.mubr.bf16.mxu0 0
      %1366 = vmatmul.mubr.bf16.gmra.mrb[0].mxu0 %v842
      %v1367 = vpop.f32.mrb[0].mxu0
      %v1368 = vadd.f32 0.0, %v1367
      %v1369 = vpop.f32.mrb[0].mxu0
      %v1370 = vpop.f32.mrb[0].mxu0
      %v1371 = vadd.f32 0.0, %v1370
      %v1372 = vpop.f32.mrb[0].mxu0
      %1373 = vmatprep.mubr.bf16.mxu0 0
      %1374 = vmatmul.mubr.bf16.gmra.mrb[0].mxu0 %v845
      %v1375 = vpop.f32.mrb[0].mxu0
      %v1376 = vadd.f32 0.0, %v1375
      %v1377 = vpop.f32.mrb[0].mxu0
      %v1378 = vpop.f32.mrb[0].mxu0
      %v1379 = vadd.f32 0.0, %v1378
      %v1380 = vpop.f32.mrb[0].mxu0
      %1381 = vmatprep.mubr.bf16.mxu0 0
      %1382 = vmatmul.mubr.bf16.gmra.mrb[0].mxu0 %v848
      %v1383 = vpop.f32.mrb[0].mxu0
      %v1384 = vadd.f32 0.0, %v1383
      %v1385 = vpop.f32.mrb[0].mxu0
      %v1386 = vpop.f32.mrb[0].mxu0
      %v1387 = vadd.f32 0.0, %v1386
      %v1388 = vpop.f32.mrb[0].mxu0
      %1389 = vmatprep.mubr.bf16.mxu0 0
      %1390 = vmatmul.mubr.bf16.gmra.mrb[0].mxu0 %v851
      %v1391 = vpop.f32.mrb[0].mxu0
      %v1392 = vadd.f32 0.0, %v1391
      %v1393 = vpop.f32.mrb[0].mxu0
      %v1394 = vpop.f32.mrb[0].mxu0
      %v1395 = vadd.f32 0.0, %v1394
      %v1396 = vpop.f32.mrb[0].mxu0
      %1397 = vdwg.mxu0
      %v1398 = vtanh.pop %v888
      %v1399 = vtanh.pop %v891
      %v1400 = vtanh.pop %v896
      %v1401 = vtanh.pop %v899
      %v1402 = vtanh.pop %v904
      %v1403 = vtanh.pop %v907
      %v1404 = vtanh.pop %v912
      %v1405 = vtanh.pop %v915
      %v1406 = vtanh.pop %v920
      %v1407 = vtanh.pop %v923
      %v1408 = vtanh.pop %v928
      %v1409 = vtanh.pop %v931
      %v1410 = vtanh.pop %v936
      %v1411 = vtanh.pop %v939
      %v1412 = vtanh.pop %v944
      %v1413 = vtanh.pop %v947
      %v1414 = vtanh.pop %v952
      %v1415 = vtanh.pop %v955
      %v1416 = vtanh.pop %v960
      %v1417 = vtanh.pop %v963
      %v1418 = vtanh.pop %v968
      %v1419 = vtanh.pop %v971
      %v1420 = vtanh.pop %v976
      %v1421 = vtanh.pop %v979
      %v1422 = vtanh.pop %v984
      %v1423 = vtanh.pop %v987
      %v1424 = vtanh.pop %v992
      %v1425 = vtanh.pop %v995
      %v1426 = vtanh.pop %v1000
      %v1427 = vtanh.pop %v1003
      %v1428 = vtanh.pop %v1008
      %v1429 = vtanh.pop %v1011
      %v1430 = vtanh.pop %v1016
      %v1431 = vtanh.pop %v1019
      %v1432 = vtanh.pop %v1024
      %v1433 = vtanh.pop %v1027
      %v1434 = vtanh.pop %v1032
      %v1435 = vtanh.pop %v1035
      %v1436 = vtanh.pop %v1040
      %v1437 = vtanh.pop %v1043
      %v1438 = vtanh.pop %v1048
      %v1439 = vtanh.pop %v1051
      %v1440 = vtanh.pop %v1056
      %v1441 = vtanh.pop %v1059
      %v1442 = vtanh.pop %v1064
      %v1443 = vtanh.pop %v1067
      %v1444 = vtanh.pop %v1072
      %v1445 = vtanh.pop %v1075
      %v1446 = vtanh.pop %v1080
      %v1447 = vtanh.pop %v1083
      %v1448 = vtanh.pop %v1088
      %v1449 = vtanh.pop %v1091
      %v1450 = vtanh.pop %v1096
      %v1451 = vtanh.pop %v1099
      %v1452 = vtanh.pop %v1104
      %v1453 = vtanh.pop %v1107
      %v1454 = vtanh.pop %v1112
      %v1455 = vtanh.pop %v1115
      %v1456 = vtanh.pop %v1120
      %v1457 = vtanh.pop %v1123
      %v1458 = vtanh.pop %v1128
      %v1459 = vtanh.pop %v1131
      %v1460 = vtanh.pop %v1136
      %v1461 = vtanh.pop %v1139
      %v1462 = vtanh.pop %v1144
      %v1463 = vtanh.pop %v1147
      %v1464 = vtanh.pop %v1152
      %v1465 = vtanh.pop %v1155
      %v1466 = vtanh.pop %v1160
      %v1467 = vtanh.pop %v1163
      %v1468 = vtanh.pop %v1168
      %v1469 = vtanh.pop %v1171
      %v1470 = vtanh.pop %v1176
      %v1471 = vtanh.pop %v1179
      %v1472 = vtanh.pop %v1184
      %v1473 = vtanh.pop %v1187
      %v1474 = vtanh.pop %v1192
      %v1475 = vtanh.pop %v1195
      %v1476 = vtanh.pop %v1200
      %v1477 = vtanh.pop %v1203
      %v1478 = vtanh.pop %v1208
      %v1479 = vtanh.pop %v1211
      %v1480 = vtanh.pop %v1216
      %v1481 = vtanh.pop %v1219
      %v1482 = vtanh.pop %v1224
      %v1483 = vtanh.pop %v1227
      %v1484 = vtanh.pop %v1232
      %v1485 = vtanh.pop %v1235
      %v1486 = vtanh.pop %v1240
      %v1487 = vtanh.pop %v1243
      %v1488 = vtanh.pop %v1248
      %v1489 = vtanh.pop %v1251
      %v1490 = vtanh.pop %v1256
      %v1491 = vtanh.pop %v1259
      %v1492 = vtanh.pop %v1264
      %v1493 = vtanh.pop %v1267
      %v1494 = vtanh.pop %v1272
      %v1495 = vtanh.pop %v1275
      %v1496 = vtanh.pop %v1280
      %v1497 = vtanh.pop %v1283
      %v1498 = vtanh.pop %v1288
      %v1499 = vtanh.pop %v1291
      %v1500 = vtanh.pop %v1296
      %v1501 = vtanh.pop %v1299
      %v1502 = vtanh.pop %v1304
      %v1503 = vtanh.pop %v1307
      %v1504 = vtanh.pop %v1312
      %v1505 = vtanh.pop %v1315
      %v1506 = vtanh.pop %v1320
      %v1507 = vtanh.pop %v1323
      %v1508 = vtanh.pop %v1328
      %v1509 = vtanh.pop %v1331
      %v1510 = vtanh.pop %v1336
      %v1511 = vtanh.pop %v1339
      %v1512 = vtanh.pop %v1344
      %v1513 = vtanh.pop %v1347
      %v1514 = vtanh.pop %v1352
      %v1515 = vtanh.pop %v1355
      %v1516 = vtanh.pop %v1360
      %v1517 = vtanh.pop %v1363
      %v1518 = vtanh.pop %v1368
      %v1519 = vtanh.pop %v1371
      %v1520 = vtanh.pop %v1376
      %v1521 = vtanh.pop %v1379
      %v1522 = vtanh.pop %v1384
      %v1523 = vtanh.pop %v1387
      %v1524 = vtanh.pop %v1392
      %v1525 = vtanh.pop %v1395
      %1526 = vst [vmem:[%s201] sm:$0xff] %v1398
      %1527 = vst [vmem:[%s201 + $0x8] sm:$0xff] %v1399
      %1528 = vst [vmem:[%s201 + $0x10] sm:$0xff] %v1400
      %1529 = vst [vmem:[%s201 + $0x18] sm:$0xff] %v1401
      %1530 = vst [vmem:[%s201 + $0x20] sm:$0xff] %v1402
      %1531 = vst [vmem:[%s201 + $0x28] sm:$0xff] %v1403
      %1532 = vst [vmem:[%s201 + $0x30] sm:$0xff] %v1404
      %1533 = vst [vmem:[%s201 + $0x38] sm:$0xff] %v1405
      %1534 = vst [vmem:[%s201 + $0x40] sm:$0xff] %v1406
      %1535 = vst [vmem:[%s201 + $0x48] sm:$0xff] %v1407
      %1536 = vst [vmem:[%s201 + $0x50] sm:$0xff] %v1408
      %1537 = vst [vmem:[%s201 + $0x58] sm:$0xff] %v1409
      %1538 = vst [vmem:[%s201 + $0x60] sm:$0xff] %v1410
      %1539 = vst [vmem:[%s201 + $0x68] sm:$0xff] %v1411
      %1540 = vst [vmem:[%s201 + $0x70] sm:$0xff] %v1412
      %1541 = vst [vmem:[%s201 + $0x78] sm:$0xff] %v1413
      %1542 = vst [vmem:[%s201 + $0x80] sm:$0xff] %v1414
      %1543 = vst [vmem:[%s201 + $0x88] sm:$0xff] %v1415
      %1544 = vst [vmem:[%s201 + $0x90] sm:$0xff] %v1416
      %1545 = vst [vmem:[%s201 + $0x98] sm:$0xff] %v1417
      %1546 = vst [vmem:[%s201 + $0xa0] sm:$0xff] %v1418
      %1547 = vst [vmem:[%s201 + $0xa8] sm:$0xff] %v1419
      %1548 = vst [vmem:[%s201 + $0xb0] sm:$0xff] %v1420
      %1549 = vst [vmem:[%s201 + $0xb8] sm:$0xff] %v1421
      %1550 = vst [vmem:[%s201 + $0xc0] sm:$0xff] %v1422
      %1551 = vst [vmem:[%s201 + $0xc8] sm:$0xff] %v1423
      %1552 = vst [vmem:[%s201 + $0xd0] sm:$0xff] %v1424
      %1553 = vst [vmem:[%s201 + $0xd8] sm:$0xff] %v1425
      %1554 = vst [vmem:[%s201 + $0xe0] sm:$0xff] %v1426
      %1555 = vst [vmem:[%s201 + $0xe8] sm:$0xff] %v1427
      %1556 = vst [vmem:[%s201 + $0xf0] sm:$0xff] %v1428
      %1557 = vst [vmem:[%s201 + $0xf8] sm:$0xff] %v1429
      %1558 = vst [vmem:[%s201 + $0x100] sm:$0xff] %v1430
      %1559 = vst [vmem:[%s201 + $0x108] sm:$0xff] %v1431
      %1560 = vst [vmem:[%s201 + $0x110] sm:$0xff] %v1432
      %1561 = vst [vmem:[%s201 + $0x118] sm:$0xff] %v1433
      %1562 = vst [vmem:[%s201 + $0x120] sm:$0xff] %v1434
      %1563 = vst [vmem:[%s201 + $0x128] sm:$0xff] %v1435
      %1564 = vst [vmem:[%s201 + $0x130] sm:$0xff] %v1436
      %1565 = vst [vmem:[%s201 + $0x138] sm:$0xff] %v1437
      %1566 = vst [vmem:[%s201 + $0x140] sm:$0xff] %v1438
      %1567 = vst [vmem:[%s201 + $0x148] sm:$0xff] %v1439
      %1568 = vst [vmem:[%s201 + $0x150] sm:$0xff] %v1440
      %1569 = vst [vmem:[%s201 + $0x158] sm:$0xff] %v1441
      %1570 = vst [vmem:[%s201 + $0x160] sm:$0xff] %v1442
      %1571 = vst [vmem:[%s201 + $0x168] sm:$0xff] %v1443
      %1572 = vst [vmem:[%s201 + $0x170] sm:$0xff] %v1444
      %1573 = vst [vmem:[%s201 + $0x178] sm:$0xff] %v1445
      %1574 = vst [vmem:[%s201 + $0x180] sm:$0xff] %v1446
      %1575 = vst [vmem:[%s201 + $0x188] sm:$0xff] %v1447
      %1576 = vst [vmem:[%s201 + $0x190] sm:$0xff] %v1448
      %1577 = vst [vmem:[%s201 + $0x198] sm:$0xff] %v1449
      %1578 = vst [vmem:[%s201 + $0x1a0] sm:$0xff] %v1450
      %1579 = vst [vmem:[%s201 + $0x1a8] sm:$0xff] %v1451
      %1580 = vst [vmem:[%s201 + $0x1b0] sm:$0xff] %v1452
      %1581 = vst [vmem:[%s201 + $0x1b8] sm:$0xff] %v1453
      %1582 = vst [vmem:[%s201 + $0x1c0] sm:$0xff] %v1454
      %1583 = vst [vmem:[%s201 + $0x1c8] sm:$0xff] %v1455
      %1584 = vst [vmem:[%s201 + $0x1d0] sm:$0xff] %v1456
      %1585 = vst [vmem:[%s201 + $0x1d8] sm:$0xff] %v1457
      %1586 = vst [vmem:[%s201 + $0x1e0] sm:$0xff] %v1458
      %1587 = vst [vmem:[%s201 + $0x1e8] sm:$0xff] %v1459
      %1588 = vst [vmem:[%s201 + $0x1f0] sm:$0xff] %v1460
      %1589 = vst [vmem:[%s201 + $0x1f8] sm:$0xff] %v1461
      %1590 = vst [vmem:[%s201 + $0x200] sm:$0xff] %v1462
      %1591 = vst [vmem:[%s201 + $0x208] sm:$0xff] %v1463
      %1592 = vst [vmem:[%s201 + $0x210] sm:$0xff] %v1464
      %1593 = vst [vmem:[%s201 + $0x218] sm:$0xff] %v1465
      %1594 = vst [vmem:[%s201 + $0x220] sm:$0xff] %v1466
      %1595 = vst [vmem:[%s201 + $0x228] sm:$0xff] %v1467
      %1596 = vst [vmem:[%s201 + $0x230] sm:$0xff] %v1468
      %1597 = vst [vmem:[%s201 + $0x238] sm:$0xff] %v1469
      %1598 = vst [vmem:[%s201 + $0x240] sm:$0xff] %v1470
      %1599 = vst [vmem:[%s201 + $0x248] sm:$0xff] %v1471
      %1600 = vst [vmem:[%s201 + $0x250] sm:$0xff] %v1472
      %1601 = vst [vmem:[%s201 + $0x258] sm:$0xff] %v1473
      %1602 = vst [vmem:[%s201 + $0x260] sm:$0xff] %v1474
      %1603 = vst [vmem:[%s201 + $0x268] sm:$0xff] %v1475
      %1604 = vst [vmem:[%s201 + $0x270] sm:$0xff] %v1476
      %1605 = vst [vmem:[%s201 + $0x278] sm:$0xff] %v1477
      %1606 = vst [vmem:[%s201 + $0x280] sm:$0xff] %v1478
      %1607 = vst [vmem:[%s201 + $0x288] sm:$0xff] %v1479
      %1608 = vst [vmem:[%s201 + $0x290] sm:$0xff] %v1480
      %1609 = vst [vmem:[%s201 + $0x298] sm:$0xff] %v1481
      %1610 = vst [vmem:[%s201 + $0x2a0] sm:$0xff] %v1482
      %1611 = vst [vmem:[%s201 + $0x2a8] sm:$0xff] %v1483
      %1612 = vst [vmem:[%s201 + $0x2b0] sm:$0xff] %v1484
      %1613 = vst [vmem:[%s201 + $0x2b8] sm:$0xff] %v1485
      %1614 = vst [vmem:[%s201 + $0x2c0] sm:$0xff] %v1486
      %1615 = vst [vmem:[%s201 + $0x2c8] sm:$0xff] %v1487
      %1616 = vst [vmem:[%s201 + $0x2d0] sm:$0xff] %v1488
      %1617 = vst [vmem:[%s201 + $0x2d8] sm:$0xff] %v1489
      %1618 = vst [vmem:[%s201 + $0x2e0] sm:$0xff] %v1490
      %1619 = vst [vmem:[%s201 + $0x2e8] sm:$0xff] %v1491
      %1620 = vst [vmem:[%s201 + $0x2f0] sm:$0xff] %v1492
      %1621 = vst [vmem:[%s201 + $0x2f8] sm:$0xff] %v1493
      %1622 = vst [vmem:[%s201 + $0x300] sm:$0xff] %v1494
      %1623 = vst [vmem:[%s201 + $0x308] sm:$0xff] %v1495
      %1624 = vst [vmem:[%s201 + $0x310] sm:$0xff] %v1496
      %1625 = vst [vmem:[%s201 + $0x318] sm:$0xff] %v1497
      %1626 = vst [vmem:[%s201 + $0x320] sm:$0xff] %v1498
      %1627 = vst [vmem:[%s201 + $0x328] sm:$0xff] %v1499
      %1628 = vst [vmem:[%s201 + $0x330] sm:$0xff] %v1500
      %1629 = vst [vmem:[%s201 + $0x338] sm:$0xff] %v1501
      %1630 = vst [vmem:[%s201 + $0x340] sm:$0xff] %v1502
      %1631 = vst [vmem:[%s201 + $0x348] sm:$0xff] %v1503
      %1632 = vst [vmem:[%s201 + $0x350] sm:$0xff] %v1504
      %1633 = vst [vmem:[%s201 + $0x358] sm:$0xff] %v1505
      %1634 = vst [vmem:[%s201 + $0x360] sm:$0xff] %v1506
      %1635 = vst [vmem:[%s201 + $0x368] sm:$0xff] %v1507
      %1636 = vst [vmem:[%s201 + $0x370] sm:$0xff] %v1508
      %1637 = vst [vmem:[%s201 + $0x378] sm:$0xff] %v1509
      %1638 = vst [vmem:[%s201 + $0x380] sm:$0xff] %v1510
      %1639 = vst [vmem:[%s201 + $0x388] sm:$0xff] %v1511
      %1640 = vst [vmem:[%s201 + $0x390] sm:$0xff] %v1512
      %1641 = vst [vmem:[%s201 + $0x398] sm:$0xff] %v1513
      %1642 = vst [vmem:[%s201 + $0x3a0] sm:$0xff] %v1514
      %1643 = vst [vmem:[%s201 + $0x3a8] sm:$0xff] %v1515
      %1644 = vst [vmem:[%s201 + $0x3b0] sm:$0xff] %v1516
      %1645 = vst [vmem:[%s201 + $0x3b8] sm:$0xff] %v1517
      %1646 = vst [vmem:[%s201 + $0x3c0] sm:$0xff] %v1518
      %1647 = vst [vmem:[%s201 + $0x3c8] sm:$0xff] %v1519
      %1648 = vst [vmem:[%s201 + $0x3d0] sm:$0xff] %v1520
      %1649 = vst [vmem:[%s201 + $0x3d8] sm:$0xff] %v1521
      %1650 = vst [vmem:[%s201 + $0x3e0] sm:$0xff] %v1522
      %1651 = vst [vmem:[%s201 + $0x3e8] sm:$0xff] %v1523
      %1652 = vst [vmem:[%s201 + $0x3f0] sm:$0xff] %v1524
      %1653 = vst [vmem:[%s201 + $0x3f8] sm:$0xff] %v1525
      %s1654 = smul.u32 128, %s18
      %p1655 = scmp.lt.s32.totalorder %s17, 3
      %s1656 = scalar_select %p1655, %s17, 3
      %p1657 = scmp.lt.s32.totalorder %s1654, 255
      %s1658 = scalar_select %p1657, %s1654, 255
      %s1659 = smul.addr %s1656, 256
      %s1660 = sadd.s32 %s1658, %s1659
      %s1661 = smul.addr %s1660, 8
      %s1662 = scalar_lea.vmem %s2, %s1661
      // Predicated region
      $region29: #{generator_forward.9} parent=27 // pred_check
        %p1663 = pneg %p99
      $region30: #{generator_forward.9} parent=27 // pred_check_branch
        %1665 = sbr.rel (%p1663) target = $region32
      $region31: #{generator_forward.9} parent=27 // pred_region
        %s1666 = smul.u32 128, %s18
      $region32: #{generator_forward.9} parent=27 // pred_fallthru
        _
    $region28: #{generator_forward.9} parent=5 // pred_fallthru
      _
    %p1667 = scmp.le.s32.totalorder 2, %s8
    // Predicated region
    $region33: #{generator_forward.9} parent=5 // pred_check
      %p1668 = pneg %p1667
    $region34: #{generator_forward.9} parent=5 // pred_check_branch
      %1670 = sbr.rel (%p1668) target = $region36
    $region35: #{generator_forward.9} parent=5 // pred_region
      %s1671 = ssub.s32 %s8, 2
      // Predicated region
      $region37: #{generator_forward.9} parent=35 // pred_check
        %p1672 = pneg %p105
      $region38: #{generator_forward.9} parent=35 // pred_check_branch
        %1674 = sbr.rel (%p1672) target = $region40
      $region39: #{generator_forward.9} parent=35 // pred_region
        %s1675 = smul.u32 128, %s20
        %p1676 = scmp.lt.s32.totalorder %s19, 3
        %s1677 = scalar_select %p1676, %s19, 3
        %p1678 = scmp.lt.s32.totalorder %s1675, 255
        %s1679 = scalar_select %p1678, %s1675, 255
        %s1680 = smul.addr %s1677, 256
        %s1681 = sadd.s32 %s1679, %s1680
        %s1682 = smul.addr %s1681, 8
        %s1683 = scalar_lea.vmem %s2, %s1682
      $region40: #{generator_forward.9} parent=35 // pred_fallthru
        _
    $region36: #{generator_forward.9} parent=5 // pred_fallthru
      _
  $region6: #{generator_forward.9} parent=0 // loop_footer
    %s12 = sadd.s32 1, %s8
  $region7: #{generator_forward.9} parent=0 // loop_footer_branch
    %7 = sbr.rel target = $region3
  $region8: #{generator_forward.9} parent=0 // loop_exit
    _

</llo_original>
